<compile_context>
chip_gen: v5e
topology: v5e:2x2
jax: 0.10.0
libtpu: 0.0.40
codegen_flags: <defaults>
</compile_context>

<pallas_src>
import functools

import jax
import jax.numpy as jnp
from jax import lax
from jax.experimental import pallas as pl
from jax.experimental.pallas import tpu as pltpu


# -----------------------------------------------------------------------------
# Model configuration (matches the PyTorch CNN config).
# -----------------------------------------------------------------------------
FILTERS = [64, 64, 128, 128]          # output channels per block (input channels prepended)
KERNELS = [5, 5, 3, 3]
POOLS = [(2, 2), (2, 1), (2, 1), (2, 1)]
LEAKY = 0.2
BN_EPS = 1e-5


def _round_up(x, m):
    return (x + m - 1) // m * m


# -----------------------------------------------------------------------------
# Shared epilogue: folded-BN shift + LeakyReLU on the f32 accumulator, cast, MaxPool.
# -----------------------------------------------------------------------------
def _bn_act_pool(acc, shift, alpha, imgs, H, W, pool, out_dtype):
    """acc: (imgs*H*W, cout) f32 matmul accumulator -> (imgs, H//ph, W//pw, cout) out_dtype."""
    ph, pw = pool
    cout = acc.shape[-1]
    y = acc + shift                              # BN scale already folded into the weights
    y = jnp.where(y > 0, y, alpha * y)           # LeakyReLU (f32, VPU)
    y = y.astype(out_dtype)                      # bf16 for layers feeding another conv
    y = y.reshape(imgs, H, W, cout)
    # MaxPool(kernel=stride=(ph, pw)) via pairwise maxima (max commutes with bf16 rounding).
    if pw > 1:
        y = y.reshape(imgs, H, W // pw, pw, cout)
        m = y[:, :, :, 0, :]
        for j in range(1, pw):
            m = jnp.maximum(m, y[:, :, :, j, :])
        y = m
    if ph > 1:
        Wc = y.shape[2]
        y = y.reshape(imgs, H // ph, ph, Wc, cout)
        m = y[:, :, 0]
        for j in range(1, ph):
            m = jnp.maximum(m, y[:, :, j])
        y = m
    return y                                     # (imgs, H//ph, W//pw, cout)


# -----------------------------------------------------------------------------
# One conv block (layers 2..4), computed entirely on VMEM-resident values.
# -----------------------------------------------------------------------------
def _conv_block(x, w_flat, shift, k, pool, alpha, out_dtype):
    """x: (imgs, H, W, Cin) bf16; w_flat: (k*k*Cin, Cout) bf16 (BN scale folded);
    shift: (1, Cout) f32.  Returns (imgs, H//ph, W//pw, Cout)."""
    imgs, H, W, cin = x.shape
    ph, pw = pool
    assert k % 2 == 1, "'same' padding here assumes odd kernels (PyTorch parity)"
    assert H % ph == 0 and W % pw == 0, "MaxPool requires divisible spatial dims"
    p = (k - 1) // 2

    # In-kernel 'same' zero padding (bf16, stays in VMEM).
    if p:
        zw = jnp.zeros((imgs, H, p, cin), x.dtype)
        xpad = jnp.concatenate([zw, x, zw], axis=2)            # pad W
        zh = jnp.zeros((imgs, p, W + 2 * p, cin), x.dtype)
        xpad = jnp.concatenate([zh, xpad, zh], axis=1)         # pad H
    else:
        xpad = x

    # im2col in bf16, batch folded into M.  Taps are grouped into 128-lane-aligned
    # chunks (two 64-wide taps -> one 128-lane block) before the big concat so the
    # final concat is plain vreg copies at 128-lane offsets.
    taps = [xpad[:, dy:dy + H, dx:dx + W, :].reshape(imgs * H * W, cin)
            for dy in range(k) for dx in range(k)]
    group = max(1, 128 // cin)
    if group > 1:
        chunks = [jnp.concatenate(taps[i:i + group], axis=-1)
                  for i in range(0, len(taps), group)]
    else:
        chunks = taps
    patches = chunks[0] if len(chunks) == 1 else jnp.concatenate(chunks, axis=-1)

    # One MXU matmul per layer, bf16 inputs, f32 accumulation.
    acc = jnp.dot(patches, w_flat, preferred_element_type=jnp.float32)  # (imgs*H*W, cout)
    return _bn_act_pool(acc, shift, alpha, imgs, H, W, pool, out_dtype)


# -----------------------------------------------------------------------------
# Fused kernel: all 4 blocks for a pack of images per grid step.
# -----------------------------------------------------------------------------
def cnn_fused_kernel(p0_ref, *refs, img_hw, kernels, pools, alpha):
    o_ref = refs[-1]
    prm = refs[:-1]                      # (w_flat, shift) per layer, flattened

    H, W = img_hw
    imgs = p0_ref.shape[0]
    n_layers = len(kernels)

    # ---- Layer 1: patch matrix precomputed in the wrapper (bf16, K padded to 128) ----
    w0 = prm[0][...]
    b0 = prm[1][...]
    acc = jnp.dot(p0_ref[...].reshape(imgs * H * W, p0_ref.shape[-1]), w0,
                  preferred_element_type=jnp.float32)
    x = _bn_act_pool(acc, b0, alpha, imgs, H, W, pools[0], out_dtype=jnp.bfloat16)

    # ---- Layers 2..4: in-kernel bf16 im2col + one MXU matmul each ----
    for i in range(1, n_layers):
        w = prm[2 * i][...]
        b = prm[2 * i + 1][...]
        last = i == n_layers - 1
        x = _conv_block(x, w, b, kernels[i], pools[i], alpha,
                        out_dtype=jnp.float32 if last else jnp.bfloat16)

    # Final activation has Cout=128 -> lane-dense f32 store; the only HBM writeback.
    o_ref[...] = x.astype(o_ref.dtype)


# -----------------------------------------------------------------------------
# Wrapper helpers.
# -----------------------------------------------------------------------------
def _im2col_first_layer(x_nhwc, k, k_pad):
    """Layer-1 im2col hoisted to XLA: (N, H*W, k_pad) bf16 patch matrix."""
    N, H, W, C = x_nhwc.shape
    p = (k - 1) // 2
    xb = x_nhwc.astype(jnp.bfloat16)                     # same rounding point as the MXU feed
    xp = jnp.pad(xb, ((0, 0), (p, p), (p, p), (0, 0)))   # 'same' zero padding
    taps = [xp[:, dy:dy + H, dx:dx + W, :] for dy in range(k) for dx in range(k)]
    patches = jnp.concatenate(taps, axis=-1).reshape(N, H * W, k * k * C)
    K = k * k * C
    if k_pad > K:                                        # pad K to a full 128-lane MXU feed
        patches = jnp.pad(patches, ((0, 0), (0, 0), (0, k_pad - K)))
    return patches


def _choose_imgs_per_step(n, min_rows_per_img, target_m=128, min_steps=2):
    """Pack images so the smallest (last-layer) matmul presents ~target_m rows to the MXU,
    but keep >= min_steps grid steps (v7x: two TensorCores) when the batch allows it."""
    want = max(1, -(-target_m // min_rows_per_img))      # cdiv
    cap = want if n >= min_steps * want else n           # small batch: pack it all
    cap = max(1, min(cap, n))
    for d in range(cap, 0, -1):                          # largest divisor of n <= cap
        if n % d == 0:
            return d
    return 1


# -----------------------------------------------------------------------------
# Fused forward pass. Input/output follow the PyTorch NCHW convention.
# -----------------------------------------------------------------------------
def cnn_forward(x_nchw, params, imgs_per_step=None):
    x = jnp.transpose(x_nchw, (0, 2, 3, 1)).astype(jnp.float32)   # NCHW -> NHWC
    N, H, W, C0 = x.shape

    Ho, Wo = H, W
    for ph, pw in POOLS:
        Ho, Wo = Ho // ph, Wo // pw
    cout_last = params[-1]["w_flat"].shape[-1]

    # Per-image M rows of the last (smallest) conv matmul -> drives the packing factor.
    h, w_ = H, W
    for ph, pw in POOLS[:-1]:
        h, w_ = h // ph, w_ // pw
    last_rows = h * w_

    if imgs_per_step is None:
        imgs_per_step = _choose_imgs_per_step(N, last_rows)
    assert N % imgs_per_step == 0
    steps = N // imgs_per_step

    # Layer-1 im2col hoisted to XLA (Cin=4 lane-misaligned taps don't belong in-kernel).
    k0 = KERNELS[0]
    K0 = k0 * k0 * C0
    K0pad = _round_up(K0, 128)
    patches0 = _im2col_first_layer(x, k0, K0pad)                   # (N, H*W, K0pad) bf16
    w0_pad = jnp.pad(params[0]["w_flat"], ((0, K0pad - K0), (0, 0)))  # matching zero K rows

    inputs = [patches0, w0_pad, params[0]["shift"]]
    for prm in params[1:]:
        inputs.extend([prm["w_flat"], prm["shift"]])

    in_specs = [pl.BlockSpec((imgs_per_step, H * W, K0pad), lambda n: (n, 0, 0))]
    for arr in inputs[1:]:                 # weights / shifts: whole (small) arrays in VMEM
        in_specs.append(pl.BlockSpec(arr.shape, lambda n: (0, 0)))

    # Advisory cost estimate for XLA's scheduler around the custom call.
    flops = 0
    hh, ww, cin = H, W, C0
    for prm, k, (ph, pw) in zip(params, KERNELS, POOLS):
        co = prm["w_flat"].shape[-1]
        flops += 2 * N * hh * ww * (k * k * cin) * co
        hh, ww, cin = hh // ph, ww // pw, co
    bytes_accessed = (sum(int(a.size) * a.dtype.itemsize for a in inputs)
                      + N * Ho * Wo * cout_last * 4)

    kernel = functools.partial(
        cnn_fused_kernel, img_hw=(H, W), kernels=tuple(KERNELS),
        pools=tuple(tuple(p) for p in POOLS), alpha=LEAKY)

    out = pl.pallas_call(
        kernel,
        out_shape=jax.ShapeDtypeStruct((N, Ho, Wo, cout_last), jnp.float32),
        grid=(steps,),                     # packed images per step; parallel across TCs on v7x
        in_specs=in_specs,
        out_specs=pl.BlockSpec((imgs_per_step, Ho, Wo, cout_last), lambda n: (n, 0, 0, 0)),
        compiler_params=pltpu.CompilerParams(
            dimension_semantics=("parallel",),
            vmem_limit_bytes=32 * 1024 * 1024),   # explicit; safe on v5e/v6e/v7x
        cost_estimate=pl.CostEstimate(flops=int(flops), transcendentals=0,
                                      bytes_accessed=int(bytes_accessed)),
    )(*inputs)
    return jnp.transpose(out, (0, 3, 1, 2))                        # NHWC -> NCHW


# -----------------------------------------------------------------------------
# Parameter construction (deterministic, matches CNN.__init__ shapes).
# BatchNorm is inference-mode; its scale is folded into the conv weights (exact in f32).
# TODO(synk): training-mode BatchNorm (batch statistics + running-stat updates) is not implemented.
# -----------------------------------------------------------------------------
def make_params(num_channels, key):
    filters = [num_channels] + FILTERS
    params = []
    for i in range(4):
        cin, cout, k = filters[i], filters[i + 1], KERNELS[i]
        key, kw_, kg, kb, km, kv = jax.random.split(key, 6)
        fan_in = cin * k * k
        w = jax.random.normal(kw_, (k, k, cin, cout), jnp.float32) / jnp.sqrt(fan_in)
        gamma = 1.0 + 0.1 * jax.random.normal(kg, (cout,), jnp.float32)
        beta = 0.1 * jax.random.normal(kb, (cout,), jnp.float32)
        running_mean = 0.1 * jax.random.normal(km, (cout,), jnp.float32)
        running_var = 1.0 + 0.1 * jax.random.uniform(kv, (cout,), jnp.float32)
        scale = gamma / jnp.sqrt(running_var + BN_EPS)
        shift = beta - running_mean * scale
        # Fold BN scale into the weights in f32 (exact), THEN round to bf16 for the MXU.
        w_fold = (w * scale).astype(jnp.bfloat16)                  # (k,k,cin,cout) HWIO bf16
        params.append(dict(
            w=w,                                                   # pristine f32 (PyTorch semantics)
            w_fold=w_fold.astype(jnp.float32),                     # folded + bf16-rounded (reference)
            w_flat=w_fold.reshape(k * k * cin, cout),              # bf16, kernel / MXU operand
            scale=scale,                                           # for the pure-f32 reference
            shift=shift.reshape(1, cout).astype(jnp.float32)))
    return params


# -----------------------------------------------------------------------------
# Plain-JAX reference (for correctness check only).
# -----------------------------------------------------------------------------
def cnn_reference(x_nchw, params, match_kernel_numerics):
    """XLA reference.  With match_kernel_numerics=True it applies the same bf16 rounding of
    conv inputs / folded weights / inter-layer activations that the kernel's MXU path uses."""
    x = jnp.transpose(x_nchw, (0, 2, 3, 1)).astype(jnp.float32)
    for prm, (ph, pw) in zip(params, POOLS):
        if match_kernel_numerics:
            xin = x.astype(jnp.bfloat16).astype(jnp.float32)
            y = lax.conv_general_dilated(
                xin, prm["w_fold"], window_strides=(1, 1), padding="SAME",
                dimension_numbers=("NHWC", "HWIO", "NHWC"),
                precision=lax.Precision.HIGHEST)
            y = y + prm["shift"].reshape(1, 1, 1, -1)
        else:
            y = lax.conv_general_dilated(
                x, prm["w"], window_strides=(1, 1), padding="SAME",
                dimension_numbers=("NHWC", "HWIO", "NHWC"),
                precision=lax.Precision.HIGHEST)
            y = y * prm["scale"].reshape(1, 1, 1, -1) + prm["shift"].reshape(1, 1, 1, -1)
        y = jnp.where(y > 0, y, LEAKY * y)
        x = lax.reduce_window(y, -jnp.inf, lax.max,
                              (1, ph, pw, 1), (1, ph, pw, 1), "VALID")
    return jnp.transpose(x, (0, 3, 1, 2))


if __name__ == "__main__":
    key = jax.random.PRNGKey(0)
    num_channels, img_height, img_width, batch = 4, 16, 16, 2

    key, kx = jax.random.split(key)
    x = jax.random.normal(kx, (batch, num_channels, img_height, img_width), jnp.float32)
    params = make_params(num_channels, key)

    fwd = jax.jit(cnn_forward)
    out = jax.block_until_ready(fwd(x, params))

    # height_reduction = prod(pool_h) = 16, width_reduction = prod(pool_w) = 2, out_channels = 128
    assert out.shape == (batch, 128, img_height // 16, img_width // 2), out.shape

    # Tight check vs a reference with identical numerics (bf16 folded weights, bf16-rounded
    # conv inputs / inter-layer activations, f32 accumulation).
    ref_bf16 = cnn_reference(x, params, match_kernel_numerics=True)
    assert jnp.allclose(out, ref_bf16, rtol=1e-3, atol=1e-3), "mismatch vs bf16-numerics reference"

    # Looser sanity check vs the pure-f32 model: bounds the total bf16 rounding effect.
    ref_f32 = cnn_reference(x, params, match_kernel_numerics=False)
    assert jnp.allclose(out, ref_f32, rtol=3e-2, atol=3e-2), "mismatch vs f32 reference"

    print("KERNEL_OK")
</pallas_src>

<mosaic_0001>
module attributes {stable_mosaic.version = 11 : i64} {
  func.func @cnn_fused_kernel(%arg0: i32, %arg1: memref<2x256x128xbf16, #tpu.memory_space<vmem>>, %arg2: memref<128x64xbf16, #tpu.memory_space<vmem>>, %arg3: memref<1x64xf32, #tpu.memory_space<vmem>>, %arg4: memref<1600x64xbf16, #tpu.memory_space<vmem>>, %arg5: memref<1x64xf32, #tpu.memory_space<vmem>>, %arg6: memref<576x128xbf16, #tpu.memory_space<vmem>>, %arg7: memref<1x128xf32, #tpu.memory_space<vmem>>, %arg8: memref<1152x128xbf16, #tpu.memory_space<vmem>>, %arg9: memref<1x128xf32, #tpu.memory_space<vmem>>, %arg10: memref<2x1x8x128xf32, #tpu.memory_space<vmem>>) attributes {dimension_semantics = [#tpu.dimension_semantics<parallel>], iteration_bounds = array<i64: 1>, scalar_prefetch = 0 : i64, scratch_operands = 0 : i64, tpu.core_type = #tpu.core_type<tc>, window_params = [{transform_indices = @transform_0, window_bounds = array<i64: 2, 256, 128>}, {pipeline_mode = #tpu.pipeline_mode<synchronous>, transform_indices = @transform_1, window_bounds = array<i64: 128, 64>}, {pipeline_mode = #tpu.pipeline_mode<synchronous>, transform_indices = @transform_2, window_bounds = array<i64: 1, 64>}, {pipeline_mode = #tpu.pipeline_mode<synchronous>, transform_indices = @transform_3, window_bounds = array<i64: 1600, 64>}, {pipeline_mode = #tpu.pipeline_mode<synchronous>, transform_indices = @transform_4, window_bounds = array<i64: 1, 64>}, {pipeline_mode = #tpu.pipeline_mode<synchronous>, transform_indices = @transform_5, window_bounds = array<i64: 576, 128>}, {pipeline_mode = #tpu.pipeline_mode<synchronous>, transform_indices = @transform_6, window_bounds = array<i64: 1, 128>}, {pipeline_mode = #tpu.pipeline_mode<synchronous>, transform_indices = @transform_7, window_bounds = array<i64: 1152, 128>}, {pipeline_mode = #tpu.pipeline_mode<synchronous>, transform_indices = @transform_8, window_bounds = array<i64: 1, 128>}, {transform_indices = @transform_9, window_bounds = array<i64: 2, 1, 8, 128>}]} {
    %c0 = arith.constant 0 : index
    %c0_0 = arith.constant 0 : index
    %0 = vector.load %arg2[%c0, %c0_0] : memref<128x64xbf16, #tpu.memory_space<vmem>>, vector<128x64xbf16>
    %c0_1 = arith.constant 0 : index
    %c0_2 = arith.constant 0 : index
    %1 = vector.load %arg3[%c0_1, %c0_2] : memref<1x64xf32, #tpu.memory_space<vmem>>, vector<1x64xf32>
    %c0_3 = arith.constant 0 : index
    %c0_4 = arith.constant 0 : index
    %c0_5 = arith.constant 0 : index
    %2 = vector.load %arg1[%c0_3, %c0_4, %c0_5] : memref<2x256x128xbf16, #tpu.memory_space<vmem>>, vector<2x256x128xbf16>
    %3 = vector.shape_cast %2 : vector<2x256x128xbf16> to vector<512x128xbf16>
    %cst = arith.constant dense<0.000000e+00> : vector<512x64xf32>
    %4 = tpu.matmul %3, %0, %cst {dimension_numbers = #tpu.dot_dimension_numbers<[1], [0], [0], [1], [0, 0, 1, 1], [], []>} : vector<512x128xbf16>, vector<128x64xbf16>, vector<512x64xf32> -> vector<512x64xf32>
    %5 = vector.broadcast %1 : vector<1x64xf32> to vector<512x64xf32>
    %6 = arith.addf %4, %5 : vector<512x64xf32>
    %cst_6 = arith.constant 0.000000e+00 : f32
    %7 = vector.broadcast %cst_6 : f32 to vector<512x64xf32>
    %8 = arith.cmpf ogt, %6, %7 : vector<512x64xf32>
    %cst_7 = arith.constant 2.000000e-01 : f32
    %9 = vector.broadcast %cst_7 : f32 to vector<512x64xf32>
    %10 = arith.mulf %9, %6 : vector<512x64xf32>
    %11 = arith.select %8, %6, %10 : vector<512x64xi1>, vector<512x64xf32>
    %12 = arith.truncf %11 : vector<512x64xf32> to vector<512x64xbf16>
    %13 = vector.shape_cast %12 : vector<512x64xbf16> to vector<2x16x16x64xbf16>
    %14 = vector.shape_cast %13 : vector<2x16x16x64xbf16> to vector<2x16x8x2x64xbf16>
    %15 = vector.extract_strided_slice %14 {offsets = [0, 0, 0, 0, 0], sizes = [2, 16, 8, 1, 64], strides = [1, 1, 1, 1, 1]} : vector<2x16x8x2x64xbf16> to vector<2x16x8x1x64xbf16>
    %16 = vector.shape_cast %15 : vector<2x16x8x1x64xbf16> to vector<2x16x8x64xbf16>
    %17 = vector.extract_strided_slice %14 {offsets = [0, 0, 0, 1, 0], sizes = [2, 16, 8, 1, 64], strides = [1, 1, 1, 1, 1]} : vector<2x16x8x2x64xbf16> to vector<2x16x8x1x64xbf16>
    %18 = vector.shape_cast %17 : vector<2x16x8x1x64xbf16> to vector<2x16x8x64xbf16>
    %19 = arith.maximumf %16, %18 : vector<2x16x8x64xbf16>
    %20 = vector.shape_cast %19 : vector<2x16x8x64xbf16> to vector<2x8x2x8x64xbf16>
    %21 = vector.extract_strided_slice %20 {offsets = [0, 0, 0, 0, 0], sizes = [2, 8, 1, 8, 64], strides = [1, 1, 1, 1, 1]} : vector<2x8x2x8x64xbf16> to vector<2x8x1x8x64xbf16>
    %22 = vector.shape_cast %21 : vector<2x8x1x8x64xbf16> to vector<2x8x8x64xbf16>
    %23 = vector.extract_strided_slice %20 {offsets = [0, 0, 1, 0, 0], sizes = [2, 8, 1, 8, 64], strides = [1, 1, 1, 1, 1]} : vector<2x8x2x8x64xbf16> to vector<2x8x1x8x64xbf16>
    %24 = vector.shape_cast %23 : vector<2x8x1x8x64xbf16> to vector<2x8x8x64xbf16>
    %25 = arith.maximumf %22, %24 : vector<2x8x8x64xbf16>
    %c0_8 = arith.constant 0 : index
    %c0_9 = arith.constant 0 : index
    %26 = vector.load %arg4[%c0_8, %c0_9] : memref<1600x64xbf16, #tpu.memory_space<vmem>>, vector<1600x64xbf16>
    %c0_10 = arith.constant 0 : index
    %c0_11 = arith.constant 0 : index
    %27 = vector.load %arg5[%c0_10, %c0_11] : memref<1x64xf32, #tpu.memory_space<vmem>>, vector<1x64xf32>
    %cst_12 = arith.constant 0.000000e+00 : bf16
    %28 = vector.broadcast %cst_12 : bf16 to vector<2x8x2x64xbf16>
    %29 = tpu.concatenate %28, %25, %28 in 2 : vector<2x8x2x64xbf16>, vector<2x8x8x64xbf16>, vector<2x8x2x64xbf16> -> vector<2x8x12x64xbf16>
    %cst_13 = arith.constant 0.000000e+00 : bf16
    %30 = vector.broadcast %cst_13 : bf16 to vector<2x2x12x64xbf16>
    %31 = tpu.concatenate %30, %29, %30 in 1 : vector<2x2x12x64xbf16>, vector<2x8x12x64xbf16>, vector<2x2x12x64xbf16> -> vector<2x12x12x64xbf16>
    %32 = vector.extract_strided_slice %31 {offsets = [0, 0, 0, 0], sizes = [2, 8, 8, 64], strides = [1, 1, 1, 1]} : vector<2x12x12x64xbf16> to vector<2x8x8x64xbf16>
    %33 = vector.shape_cast %32 : vector<2x8x8x64xbf16> to vector<128x64xbf16>
    %34 = vector.extract_strided_slice %31 {offsets = [0, 0, 1, 0], sizes = [2, 8, 8, 64], strides = [1, 1, 1, 1]} : vector<2x12x12x64xbf16> to vector<2x8x8x64xbf16>
    %35 = vector.shape_cast %34 : vector<2x8x8x64xbf16> to vector<128x64xbf16>
    %36 = vector.extract_strided_slice %31 {offsets = [0, 0, 2, 0], sizes = [2, 8, 8, 64], strides = [1, 1, 1, 1]} : vector<2x12x12x64xbf16> to vector<2x8x8x64xbf16>
    %37 = vector.shape_cast %36 : vector<2x8x8x64xbf16> to vector<128x64xbf16>
    %38 = vector.extract_strided_slice %31 {offsets = [0, 0, 3, 0], sizes = [2, 8, 8, 64], strides = [1, 1, 1, 1]} : vector<2x12x12x64xbf16> to vector<2x8x8x64xbf16>
    %39 = vector.shape_cast %38 : vector<2x8x8x64xbf16> to vector<128x64xbf16>
    %40 = vector.extract_strided_slice %31 {offsets = [0, 0, 4, 0], sizes = [2, 8, 8, 64], strides = [1, 1, 1, 1]} : vector<2x12x12x64xbf16> to vector<2x8x8x64xbf16>
    %41 = vector.shape_cast %40 : vector<2x8x8x64xbf16> to vector<128x64xbf16>
    %42 = vector.extract_strided_slice %31 {offsets = [0, 1, 0, 0], sizes = [2, 8, 8, 64], strides = [1, 1, 1, 1]} : vector<2x12x12x64xbf16> to vector<2x8x8x64xbf16>
    %43 = vector.shape_cast %42 : vector<2x8x8x64xbf16> to vector<128x64xbf16>
    %44 = vector.extract_strided_slice %31 {offsets = [0, 1, 1, 0], sizes = [2, 8, 8, 64], strides = [1, 1, 1, 1]} : vector<2x12x12x64xbf16> to vector<2x8x8x64xbf16>
    %45 = vector.shape_cast %44 : vector<2x8x8x64xbf16> to vector<128x64xbf16>
    %46 = vector.extract_strided_slice %31 {offsets = [0, 1, 2, 0], sizes = [2, 8, 8, 64], strides = [1, 1, 1, 1]} : vector<2x12x12x64xbf16> to vector<2x8x8x64xbf16>
    %47 = vector.shape_cast %46 : vector<2x8x8x64xbf16> to vector<128x64xbf16>
    %48 = vector.extract_strided_slice %31 {offsets = [0, 1, 3, 0], sizes = [2, 8, 8, 64], strides = [1, 1, 1, 1]} : vector<2x12x12x64xbf16> to vector<2x8x8x64xbf16>
    %49 = vector.shape_cast %48 : vector<2x8x8x64xbf16> to vector<128x64xbf16>
    %50 = vector.extract_strided_slice %31 {offsets = [0, 1, 4, 0], sizes = [2, 8, 8, 64], strides = [1, 1, 1, 1]} : vector<2x12x12x64xbf16> to vector<2x8x8x64xbf16>
    %51 = vector.shape_cast %50 : vector<2x8x8x64xbf16> to vector<128x64xbf16>
    %52 = vector.extract_strided_slice %31 {offsets = [0, 2, 0, 0], sizes = [2, 8, 8, 64], strides = [1, 1, 1, 1]} : vector<2x12x12x64xbf16> to vector<2x8x8x64xbf16>
    %53 = vector.shape_cast %52 : vector<2x8x8x64xbf16> to vector<128x64xbf16>
    %54 = vector.extract_strided_slice %31 {offsets = [0, 2, 1, 0], sizes = [2, 8, 8, 64], strides = [1, 1, 1, 1]} : vector<2x12x12x64xbf16> to vector<2x8x8x64xbf16>
    %55 = vector.shape_cast %54 : vector<2x8x8x64xbf16> to vector<128x64xbf16>
    %56 = vector.extract_strided_slice %31 {offsets = [0, 2, 2, 0], sizes = [2, 8, 8, 64], strides = [1, 1, 1, 1]} : vector<2x12x12x64xbf16> to vector<2x8x8x64xbf16>
    %57 = vector.shape_cast %56 : vector<2x8x8x64xbf16> to vector<128x64xbf16>
    %58 = vector.extract_strided_slice %31 {offsets = [0, 2, 3, 0], sizes = [2, 8, 8, 64], strides = [1, 1, 1, 1]} : vector<2x12x12x64xbf16> to vector<2x8x8x64xbf16>
    %59 = vector.shape_cast %58 : vector<2x8x8x64xbf16> to vector<128x64xbf16>
    %60 = vector.extract_strided_slice %31 {offsets = [0, 2, 4, 0], sizes = [2, 8, 8, 64], strides = [1, 1, 1, 1]} : vector<2x12x12x64xbf16> to vector<2x8x8x64xbf16>
    %61 = vector.shape_cast %60 : vector<2x8x8x64xbf16> to vector<128x64xbf16>
    %62 = vector.extract_strided_slice %31 {offsets = [0, 3, 0, 0], sizes = [2, 8, 8, 64], strides = [1, 1, 1, 1]} : vector<2x12x12x64xbf16> to vector<2x8x8x64xbf16>
    %63 = vector.shape_cast %62 : vector<2x8x8x64xbf16> to vector<128x64xbf16>
    %64 = vector.extract_strided_slice %31 {offsets = [0, 3, 1, 0], sizes = [2, 8, 8, 64], strides = [1, 1, 1, 1]} : vector<2x12x12x64xbf16> to vector<2x8x8x64xbf16>
    %65 = vector.shape_cast %64 : vector<2x8x8x64xbf16> to vector<128x64xbf16>
    %66 = vector.extract_strided_slice %31 {offsets = [0, 3, 2, 0], sizes = [2, 8, 8, 64], strides = [1, 1, 1, 1]} : vector<2x12x12x64xbf16> to vector<2x8x8x64xbf16>
    %67 = vector.shape_cast %66 : vector<2x8x8x64xbf16> to vector<128x64xbf16>
    %68 = vector.extract_strided_slice %31 {offsets = [0, 3, 3, 0], sizes = [2, 8, 8, 64], strides = [1, 1, 1, 1]} : vector<2x12x12x64xbf16> to vector<2x8x8x64xbf16>
    %69 = vector.shape_cast %68 : vector<2x8x8x64xbf16> to vector<128x64xbf16>
    %70 = vector.extract_strided_slice %31 {offsets = [0, 3, 4, 0], sizes = [2, 8, 8, 64], strides = [1, 1, 1, 1]} : vector<2x12x12x64xbf16> to vector<2x8x8x64xbf16>
    %71 = vector.shape_cast %70 : vector<2x8x8x64xbf16> to vector<128x64xbf16>
    %72 = vector.extract_strided_slice %31 {offsets = [0, 4, 0, 0], sizes = [2, 8, 8, 64], strides = [1, 1, 1, 1]} : vector<2x12x12x64xbf16> to vector<2x8x8x64xbf16>
    %73 = vector.shape_cast %72 : vector<2x8x8x64xbf16> to vector<128x64xbf16>
    %74 = vector.extract_strided_slice %31 {offsets = [0, 4, 1, 0], sizes = [2, 8, 8, 64], strides = [1, 1, 1, 1]} : vector<2x12x12x64xbf16> to vector<2x8x8x64xbf16>
    %75 = vector.shape_cast %74 : vector<2x8x8x64xbf16> to vector<128x64xbf16>
    %76 = vector.extract_strided_slice %31 {offsets = [0, 4, 2, 0], sizes = [2, 8, 8, 64], strides = [1, 1, 1, 1]} : vector<2x12x12x64xbf16> to vector<2x8x8x64xbf16>
    %77 = vector.shape_cast %76 : vector<2x8x8x64xbf16> to vector<128x64xbf16>
    %78 = vector.extract_strided_slice %31 {offsets = [0, 4, 3, 0], sizes = [2, 8, 8, 64], strides = [1, 1, 1, 1]} : vector<2x12x12x64xbf16> to vector<2x8x8x64xbf16>
    %79 = vector.shape_cast %78 : vector<2x8x8x64xbf16> to vector<128x64xbf16>
    %80 = vector.extract_strided_slice %31 {offsets = [0, 4, 4, 0], sizes = [2, 8, 8, 64], strides = [1, 1, 1, 1]} : vector<2x12x12x64xbf16> to vector<2x8x8x64xbf16>
    %81 = vector.shape_cast %80 : vector<2x8x8x64xbf16> to vector<128x64xbf16>
    %82 = tpu.concatenate %33, %35 in 1 : vector<128x64xbf16>, vector<128x64xbf16> -> vector<128x128xbf16>
    %83 = tpu.concatenate %37, %39 in 1 : vector<128x64xbf16>, vector<128x64xbf16> -> vector<128x128xbf16>
    %84 = tpu.concatenate %41, %43 in 1 : vector<128x64xbf16>, vector<128x64xbf16> -> vector<128x128xbf16>
    %85 = tpu.concatenate %45, %47 in 1 : vector<128x64xbf16>, vector<128x64xbf16> -> vector<128x128xbf16>
    %86 = tpu.concatenate %49, %51 in 1 : vector<128x64xbf16>, vector<128x64xbf16> -> vector<128x128xbf16>
    %87 = tpu.concatenate %53, %55 in 1 : vector<128x64xbf16>, vector<128x64xbf16> -> vector<128x128xbf16>
    %88 = tpu.concatenate %57, %59 in 1 : vector<128x64xbf16>, vector<128x64xbf16> -> vector<128x128xbf16>
    %89 = tpu.concatenate %61, %63 in 1 : vector<128x64xbf16>, vector<128x64xbf16> -> vector<128x128xbf16>
    %90 = tpu.concatenate %65, %67 in 1 : vector<128x64xbf16>, vector<128x64xbf16> -> vector<128x128xbf16>
    %91 = tpu.concatenate %69, %71 in 1 : vector<128x64xbf16>, vector<128x64xbf16> -> vector<128x128xbf16>
    %92 = tpu.concatenate %73, %75 in 1 : vector<128x64xbf16>, vector<128x64xbf16> -> vector<128x128xbf16>
    %93 = tpu.concatenate %77, %79 in 1 : vector<128x64xbf16>, vector<128x64xbf16> -> vector<128x128xbf16>
    %94 = tpu.concatenate %82, %83, %84, %85, %86, %87, %88, %89, %90, %91, %92, %93, %81 in 1 : vector<128x128xbf16>, vector<128x128xbf16>, vector<128x128xbf16>, vector<128x128xbf16>, vector<128x128xbf16>, vector<128x128xbf16>, vector<128x128xbf16>, vector<128x128xbf16>, vector<128x128xbf16>, vector<128x128xbf16>, vector<128x128xbf16>, vector<128x128xbf16>, vector<128x64xbf16> -> vector<128x1600xbf16>
    %cst_14 = arith.constant dense<0.000000e+00> : vector<128x64xf32>
    %95 = tpu.matmul %94, %26, %cst_14 {dimension_numbers = #tpu.dot_dimension_numbers<[1], [0], [0], [1], [0, 0, 1, 1], [], []>} : vector<128x1600xbf16>, vector<1600x64xbf16>, vector<128x64xf32> -> vector<128x64xf32>
    %96 = vector.broadcast %27 : vector<1x64xf32> to vector<128x64xf32>
    %97 = arith.addf %95, %96 : vector<128x64xf32>
    %cst_15 = arith.constant 0.000000e+00 : f32
    %98 = vector.broadcast %cst_15 : f32 to vector<128x64xf32>
    %99 = arith.cmpf ogt, %97, %98 : vector<128x64xf32>
    %cst_16 = arith.constant 2.000000e-01 : f32
    %100 = vector.broadcast %cst_16 : f32 to vector<128x64xf32>
    %101 = arith.mulf %100, %97 : vector<128x64xf32>
    %102 = arith.select %99, %97, %101 : vector<128x64xi1>, vector<128x64xf32>
    %103 = arith.truncf %102 : vector<128x64xf32> to vector<128x64xbf16>
    %104 = vector.shape_cast %103 : vector<128x64xbf16> to vector<2x8x8x64xbf16>
    %105 = vector.shape_cast %104 : vector<2x8x8x64xbf16> to vector<2x4x2x8x64xbf16>
    %106 = vector.extract_strided_slice %105 {offsets = [0, 0, 0, 0, 0], sizes = [2, 4, 1, 8, 64], strides = [1, 1, 1, 1, 1]} : vector<2x4x2x8x64xbf16> to vector<2x4x1x8x64xbf16>
    %107 = vector.shape_cast %106 : vector<2x4x1x8x64xbf16> to vector<2x4x8x64xbf16>
    %108 = vector.extract_strided_slice %105 {offsets = [0, 0, 1, 0, 0], sizes = [2, 4, 1, 8, 64], strides = [1, 1, 1, 1, 1]} : vector<2x4x2x8x64xbf16> to vector<2x4x1x8x64xbf16>
    %109 = vector.shape_cast %108 : vector<2x4x1x8x64xbf16> to vector<2x4x8x64xbf16>
    %110 = arith.maximumf %107, %109 : vector<2x4x8x64xbf16>
    %c0_17 = arith.constant 0 : index
    %c0_18 = arith.constant 0 : index
    %111 = vector.load %arg6[%c0_17, %c0_18] : memref<576x128xbf16, #tpu.memory_space<vmem>>, vector<576x128xbf16>
    %c0_19 = arith.constant 0 : index
    %c0_20 = arith.constant 0 : index
    %112 = vector.load %arg7[%c0_19, %c0_20] : memref<1x128xf32, #tpu.memory_space<vmem>>, vector<1x128xf32>
    %cst_21 = arith.constant 0.000000e+00 : bf16
    %113 = vector.broadcast %cst_21 : bf16 to vector<2x4x1x64xbf16>
    %114 = tpu.concatenate %113, %110, %113 in 2 : vector<2x4x1x64xbf16>, vector<2x4x8x64xbf16>, vector<2x4x1x64xbf16> -> vector<2x4x10x64xbf16>
    %cst_22 = arith.constant 0.000000e+00 : bf16
    %115 = vector.broadcast %cst_22 : bf16 to vector<2x1x10x64xbf16>
    %116 = tpu.concatenate %115, %114, %115 in 1 : vector<2x1x10x64xbf16>, vector<2x4x10x64xbf16>, vector<2x1x10x64xbf16> -> vector<2x6x10x64xbf16>
    %117 = vector.extract_strided_slice %116 {offsets = [0, 0, 0, 0], sizes = [2, 4, 8, 64], strides = [1, 1, 1, 1]} : vector<2x6x10x64xbf16> to vector<2x4x8x64xbf16>
    %118 = vector.shape_cast %117 : vector<2x4x8x64xbf16> to vector<64x64xbf16>
    %119 = vector.extract_strided_slice %116 {offsets = [0, 0, 1, 0], sizes = [2, 4, 8, 64], strides = [1, 1, 1, 1]} : vector<2x6x10x64xbf16> to vector<2x4x8x64xbf16>
    %120 = vector.shape_cast %119 : vector<2x4x8x64xbf16> to vector<64x64xbf16>
    %121 = vector.extract_strided_slice %116 {offsets = [0, 0, 2, 0], sizes = [2, 4, 8, 64], strides = [1, 1, 1, 1]} : vector<2x6x10x64xbf16> to vector<2x4x8x64xbf16>
    %122 = vector.shape_cast %121 : vector<2x4x8x64xbf16> to vector<64x64xbf16>
    %123 = vector.extract_strided_slice %116 {offsets = [0, 1, 0, 0], sizes = [2, 4, 8, 64], strides = [1, 1, 1, 1]} : vector<2x6x10x64xbf16> to vector<2x4x8x64xbf16>
    %124 = vector.shape_cast %123 : vector<2x4x8x64xbf16> to vector<64x64xbf16>
    %125 = vector.extract_strided_slice %116 {offsets = [0, 1, 1, 0], sizes = [2, 4, 8, 64], strides = [1, 1, 1, 1]} : vector<2x6x10x64xbf16> to vector<2x4x8x64xbf16>
    %126 = vector.shape_cast %125 : vector<2x4x8x64xbf16> to vector<64x64xbf16>
    %127 = vector.extract_strided_slice %116 {offsets = [0, 1, 2, 0], sizes = [2, 4, 8, 64], strides = [1, 1, 1, 1]} : vector<2x6x10x64xbf16> to vector<2x4x8x64xbf16>
    %128 = vector.shape_cast %127 : vector<2x4x8x64xbf16> to vector<64x64xbf16>
    %129 = vector.extract_strided_slice %116 {offsets = [0, 2, 0, 0], sizes = [2, 4, 8, 64], strides = [1, 1, 1, 1]} : vector<2x6x10x64xbf16> to vector<2x4x8x64xbf16>
    %130 = vector.shape_cast %129 : vector<2x4x8x64xbf16> to vector<64x64xbf16>
    %131 = vector.extract_strided_slice %116 {offsets = [0, 2, 1, 0], sizes = [2, 4, 8, 64], strides = [1, 1, 1, 1]} : vector<2x6x10x64xbf16> to vector<2x4x8x64xbf16>
    %132 = vector.shape_cast %131 : vector<2x4x8x64xbf16> to vector<64x64xbf16>
    %133 = vector.extract_strided_slice %116 {offsets = [0, 2, 2, 0], sizes = [2, 4, 8, 64], strides = [1, 1, 1, 1]} : vector<2x6x10x64xbf16> to vector<2x4x8x64xbf16>
    %134 = vector.shape_cast %133 : vector<2x4x8x64xbf16> to vector<64x64xbf16>
    %135 = tpu.concatenate %118, %120 in 1 : vector<64x64xbf16>, vector<64x64xbf16> -> vector<64x128xbf16>
    %136 = tpu.concatenate %122, %124 in 1 : vector<64x64xbf16>, vector<64x64xbf16> -> vector<64x128xbf16>
    %137 = tpu.concatenate %126, %128 in 1 : vector<64x64xbf16>, vector<64x64xbf16> -> vector<64x128xbf16>
    %138 = tpu.concatenate %130, %132 in 1 : vector<64x64xbf16>, vector<64x64xbf16> -> vector<64x128xbf16>
    %139 = tpu.concatenate %135, %136, %137, %138, %134 in 1 : vector<64x128xbf16>, vector<64x128xbf16>, vector<64x128xbf16>, vector<64x128xbf16>, vector<64x64xbf16> -> vector<64x576xbf16>
    %cst_23 = arith.constant dense<0.000000e+00> : vector<64x128xf32>
    %140 = tpu.matmul %139, %111, %cst_23 {dimension_numbers = #tpu.dot_dimension_numbers<[1], [0], [0], [1], [0, 0, 1, 1], [], []>} : vector<64x576xbf16>, vector<576x128xbf16>, vector<64x128xf32> -> vector<64x128xf32>
    %141 = vector.broadcast %112 : vector<1x128xf32> to vector<64x128xf32>
    %142 = arith.addf %140, %141 : vector<64x128xf32>
    %cst_24 = arith.constant 0.000000e+00 : f32
    %143 = vector.broadcast %cst_24 : f32 to vector<64x128xf32>
    %144 = arith.cmpf ogt, %142, %143 : vector<64x128xf32>
    %cst_25 = arith.constant 2.000000e-01 : f32
    %145 = vector.broadcast %cst_25 : f32 to vector<64x128xf32>
    %146 = arith.mulf %145, %142 : vector<64x128xf32>
    %147 = arith.select %144, %142, %146 : vector<64x128xi1>, vector<64x128xf32>
    %148 = arith.truncf %147 : vector<64x128xf32> to vector<64x128xbf16>
    %149 = vector.shape_cast %148 : vector<64x128xbf16> to vector<2x4x8x128xbf16>
    %150 = vector.shape_cast %149 : vector<2x4x8x128xbf16> to vector<2x2x2x8x128xbf16>
    %151 = vector.extract_strided_slice %150 {offsets = [0, 0, 0, 0, 0], sizes = [2, 2, 1, 8, 128], strides = [1, 1, 1, 1, 1]} : vector<2x2x2x8x128xbf16> to vector<2x2x1x8x128xbf16>
    %152 = vector.shape_cast %151 : vector<2x2x1x8x128xbf16> to vector<2x2x8x128xbf16>
    %153 = vector.extract_strided_slice %150 {offsets = [0, 0, 1, 0, 0], sizes = [2, 2, 1, 8, 128], strides = [1, 1, 1, 1, 1]} : vector<2x2x2x8x128xbf16> to vector<2x2x1x8x128xbf16>
    %154 = vector.shape_cast %153 : vector<2x2x1x8x128xbf16> to vector<2x2x8x128xbf16>
    %155 = arith.maximumf %152, %154 : vector<2x2x8x128xbf16>
    %c0_26 = arith.constant 0 : index
    %c0_27 = arith.constant 0 : index
    %156 = vector.load %arg8[%c0_26, %c0_27] : memref<1152x128xbf16, #tpu.memory_space<vmem>>, vector<1152x128xbf16>
    %c0_28 = arith.constant 0 : index
    %c0_29 = arith.constant 0 : index
    %157 = vector.load %arg9[%c0_28, %c0_29] : memref<1x128xf32, #tpu.memory_space<vmem>>, vector<1x128xf32>
    %cst_30 = arith.constant 0.000000e+00 : bf16
    %158 = vector.broadcast %cst_30 : bf16 to vector<2x2x1x128xbf16>
    %159 = tpu.concatenate %158, %155, %158 in 2 : vector<2x2x1x128xbf16>, vector<2x2x8x128xbf16>, vector<2x2x1x128xbf16> -> vector<2x2x10x128xbf16>
    %cst_31 = arith.constant 0.000000e+00 : bf16
    %160 = vector.broadcast %cst_31 : bf16 to vector<2x1x10x128xbf16>
    %161 = tpu.concatenate %160, %159, %160 in 1 : vector<2x1x10x128xbf16>, vector<2x2x10x128xbf16>, vector<2x1x10x128xbf16> -> vector<2x4x10x128xbf16>
    %162 = vector.extract_strided_slice %161 {offsets = [0, 0, 0, 0], sizes = [2, 2, 8, 128], strides = [1, 1, 1, 1]} : vector<2x4x10x128xbf16> to vector<2x2x8x128xbf16>
    %163 = vector.shape_cast %162 : vector<2x2x8x128xbf16> to vector<32x128xbf16>
    %164 = vector.extract_strided_slice %161 {offsets = [0, 0, 1, 0], sizes = [2, 2, 8, 128], strides = [1, 1, 1, 1]} : vector<2x4x10x128xbf16> to vector<2x2x8x128xbf16>
    %165 = vector.shape_cast %164 : vector<2x2x8x128xbf16> to vector<32x128xbf16>
    %166 = vector.extract_strided_slice %161 {offsets = [0, 0, 2, 0], sizes = [2, 2, 8, 128], strides = [1, 1, 1, 1]} : vector<2x4x10x128xbf16> to vector<2x2x8x128xbf16>
    %167 = vector.shape_cast %166 : vector<2x2x8x128xbf16> to vector<32x128xbf16>
    %168 = vector.extract_strided_slice %161 {offsets = [0, 1, 0, 0], sizes = [2, 2, 8, 128], strides = [1, 1, 1, 1]} : vector<2x4x10x128xbf16> to vector<2x2x8x128xbf16>
    %169 = vector.shape_cast %168 : vector<2x2x8x128xbf16> to vector<32x128xbf16>
    %170 = vector.extract_strided_slice %161 {offsets = [0, 1, 1, 0], sizes = [2, 2, 8, 128], strides = [1, 1, 1, 1]} : vector<2x4x10x128xbf16> to vector<2x2x8x128xbf16>
    %171 = vector.shape_cast %170 : vector<2x2x8x128xbf16> to vector<32x128xbf16>
    %172 = vector.extract_strided_slice %161 {offsets = [0, 1, 2, 0], sizes = [2, 2, 8, 128], strides = [1, 1, 1, 1]} : vector<2x4x10x128xbf16> to vector<2x2x8x128xbf16>
    %173 = vector.shape_cast %172 : vector<2x2x8x128xbf16> to vector<32x128xbf16>
    %174 = vector.extract_strided_slice %161 {offsets = [0, 2, 0, 0], sizes = [2, 2, 8, 128], strides = [1, 1, 1, 1]} : vector<2x4x10x128xbf16> to vector<2x2x8x128xbf16>
    %175 = vector.shape_cast %174 : vector<2x2x8x128xbf16> to vector<32x128xbf16>
    %176 = vector.extract_strided_slice %161 {offsets = [0, 2, 1, 0], sizes = [2, 2, 8, 128], strides = [1, 1, 1, 1]} : vector<2x4x10x128xbf16> to vector<2x2x8x128xbf16>
    %177 = vector.shape_cast %176 : vector<2x2x8x128xbf16> to vector<32x128xbf16>
    %178 = vector.extract_strided_slice %161 {offsets = [0, 2, 2, 0], sizes = [2, 2, 8, 128], strides = [1, 1, 1, 1]} : vector<2x4x10x128xbf16> to vector<2x2x8x128xbf16>
    %179 = vector.shape_cast %178 : vector<2x2x8x128xbf16> to vector<32x128xbf16>
    %180 = tpu.concatenate %163, %165, %167, %169, %171, %173, %175, %177, %179 in 1 : vector<32x128xbf16>, vector<32x128xbf16>, vector<32x128xbf16>, vector<32x128xbf16>, vector<32x128xbf16>, vector<32x128xbf16>, vector<32x128xbf16>, vector<32x128xbf16>, vector<32x128xbf16> -> vector<32x1152xbf16>
    %cst_32 = arith.constant dense<0.000000e+00> : vector<32x128xf32>
    %181 = tpu.matmul %180, %156, %cst_32 {dimension_numbers = #tpu.dot_dimension_numbers<[1], [0], [0], [1], [0, 0, 1, 1], [], []>} : vector<32x1152xbf16>, vector<1152x128xbf16>, vector<32x128xf32> -> vector<32x128xf32>
    %182 = vector.broadcast %157 : vector<1x128xf32> to vector<32x128xf32>
    %183 = arith.addf %181, %182 : vector<32x128xf32>
    %cst_33 = arith.constant 0.000000e+00 : f32
    %184 = vector.broadcast %cst_33 : f32 to vector<32x128xf32>
    %185 = arith.cmpf ogt, %183, %184 : vector<32x128xf32>
    %cst_34 = arith.constant 2.000000e-01 : f32
    %186 = vector.broadcast %cst_34 : f32 to vector<32x128xf32>
    %187 = arith.mulf %186, %183 : vector<32x128xf32>
    %188 = arith.select %185, %183, %187 : vector<32x128xi1>, vector<32x128xf32>
    %189 = vector.shape_cast %188 : vector<32x128xf32> to vector<2x2x8x128xf32>
    %190 = vector.shape_cast %189 : vector<2x2x8x128xf32> to vector<2x1x2x8x128xf32>
    %191 = vector.extract_strided_slice %190 {offsets = [0, 0, 0, 0, 0], sizes = [2, 1, 1, 8, 128], strides = [1, 1, 1, 1, 1]} : vector<2x1x2x8x128xf32> to vector<2x1x1x8x128xf32>
    %192 = vector.shape_cast %191 : vector<2x1x1x8x128xf32> to vector<2x1x8x128xf32>
    %193 = vector.extract_strided_slice %190 {offsets = [0, 0, 1, 0, 0], sizes = [2, 1, 1, 8, 128], strides = [1, 1, 1, 1, 1]} : vector<2x1x2x8x128xf32> to vector<2x1x1x8x128xf32>
    %194 = vector.shape_cast %193 : vector<2x1x1x8x128xf32> to vector<2x1x8x128xf32>
    %195 = arith.maximumf %192, %194 : vector<2x1x8x128xf32>
    %c0_35 = arith.constant 0 : index
    %c0_36 = arith.constant 0 : index
    %c0_37 = arith.constant 0 : index
    %c0_38 = arith.constant 0 : index
    %196 = vector.load %arg10[%c0_35, %c0_36, %c0_37, %c0_38] : memref<2x1x8x128xf32, #tpu.memory_space<vmem>>, vector<2x1x8x128xf32>
    tpu.vector_store %arg10[%c0_35, %c0_36, %c0_37, %c0_38], %195 {strides = array<i32>} : memref<2x1x8x128xf32, #tpu.memory_space<vmem>>, vector<2x1x8x128xf32>,
    return
  }
  func.func @transform_0(%arg0: i32) -> (i32, i32, i32) {
    %c0_i32 = arith.constant 0 : i32
    %c0_i32_0 = arith.constant 0 : i32
    %c0_i32_1 = arith.constant 0 : i32
    return %arg0, %c0_i32, %c0_i32_0 : i32, i32, i32
  }
  func.func @transform_1(%arg0: i32) -> (i32, i32) {
    %c0_i32 = arith.constant 0 : i32
    %c0_i32_0 = arith.constant 0 : i32
    %c0_i32_1 = arith.constant 0 : i32
    return %c0_i32, %c0_i32_0 : i32, i32
  }
  func.func @transform_2(%arg0: i32) -> (i32, i32) {
    %c0_i32 = arith.constant 0 : i32
    %c0_i32_0 = arith.constant 0 : i32
    %c0_i32_1 = arith.constant 0 : i32
    return %c0_i32, %c0_i32_0 : i32, i32
  }
  func.func @transform_3(%arg0: i32) -> (i32, i32) {
    %c0_i32 = arith.constant 0 : i32
    %c0_i32_0 = arith.constant 0 : i32
    %c0_i32_1 = arith.constant 0 : i32
    return %c0_i32, %c0_i32_0 : i32, i32
  }
  func.func @transform_4(%arg0: i32) -> (i32, i32) {
    %c0_i32 = arith.constant 0 : i32
    %c0_i32_0 = arith.constant 0 : i32
    %c0_i32_1 = arith.constant 0 : i32
    return %c0_i32, %c0_i32_0 : i32, i32
  }
  func.func @transform_5(%arg0: i32) -> (i32, i32) {
    %c0_i32 = arith.constant 0 : i32
    %c0_i32_0 = arith.constant 0 : i32
    %c0_i32_1 = arith.constant 0 : i32
    return %c0_i32, %c0_i32_0 : i32, i32
  }
  func.func @transform_6(%arg0: i32) -> (i32, i32) {
    %c0_i32 = arith.constant 0 : i32
    %c0_i32_0 = arith.constant 0 : i32
    %c0_i32_1 = arith.constant 0 : i32
    return %c0_i32, %c0_i32_0 : i32, i32
  }
  func.func @transform_7(%arg0: i32) -> (i32, i32) {
    %c0_i32 = arith.constant 0 : i32
    %c0_i32_0 = arith.constant 0 : i32
    %c0_i32_1 = arith.constant 0 : i32
    return %c0_i32, %c0_i32_0 : i32, i32
  }
  func.func @transform_8(%arg0: i32) -> (i32, i32) {
    %c0_i32 = arith.constant 0 : i32
    %c0_i32_0 = arith.constant 0 : i32
    %c0_i32_1 = arith.constant 0 : i32
    return %c0_i32, %c0_i32_0 : i32, i32
  }
  func.func @transform_9(%arg0: i32) -> (i32, i32, i32, i32) {
    %c0_i32 = arith.constant 0 : i32
    %c0_i32_0 = arith.constant 0 : i32
    %c0_i32_1 = arith.constant 0 : i32
    %c0_i32_2 = arith.constant 0 : i32
    return %arg0, %c0_i32, %c0_i32_0, %c0_i32_1 : i32, i32, i32, i32
  }
}

</mosaic_0001>

<llo_original>
// kernel: cnn_forward.1
$region0: #{cnn_forward.1}
  #allocation0 [shape = 'u32[]', space=smem, size = 0x4, offset = 0x4, fixed_abs, tag = 'smem constant byte address 0x4 - core index']
  #allocation1 [shape = 'u32[72,128]{1,0:T(1,128)}', space=vmem, size = 0x9000, scoped, tag = 'internal scratch']
  %s0 = inlined_call_operand.vmem [shape: bf16[2,256,128], index: 0, kind: input, shape index: {}]
  %s1 = inlined_call_operand.vmem [shape: bf16[128,64], index: 1, kind: input, shape index: {}]
  %s2 = inlined_call_operand.vmem [shape: f32[1,64], index: 2, kind: input, shape index: {}]
  %s3 = inlined_call_operand.vmem [shape: bf16[1600,64], index: 3, kind: input, shape index: {}]
  %s4 = inlined_call_operand.vmem [shape: f32[1,64], index: 4, kind: input, shape index: {}]
  %s5 = inlined_call_operand.vmem [shape: bf16[576,128], index: 5, kind: input, shape index: {}]
  %s6 = inlined_call_operand.vmem [shape: f32[1,128], index: 6, kind: input, shape index: {}]
  %s7 = inlined_call_operand.vmem [shape: bf16[1152,128], index: 7, kind: input, shape index: {}]
  %s8 = inlined_call_operand.vmem [shape: f32[1,128], index: 8, kind: input, shape index: {}]
  %s9 = inlined_call_operand.hbm [shape: f32[2,1,8,128], index: 9, kind: output, shape index: {}]
  %s10 = sld [smem:[#allocation0]]
  $region46: #{cnn_forward.1} parent=0
    _
  %s12 = ssub.s32 1, %s10
  %s13 = scalar_select 0, %s12, %s10
  $region1: #{cnn_forward.1} parent=0
    #allocation2 [shape = 'u8[8192]{0}', space=vmem, size = 0x2000, scoped, tag = 'output window, operand 0, single buffered']
    #allocation3 [shape = 's32[1]{0}', space=sflag, size = 0x4, scoped, tag = 'scoped memory for cnn_forward.1']
    %14 = vsyncpa [#allocation3], 0
    // Predicated region
    $region2: #{cnn_forward.1} parent=1 // pred_check
      _
    $region3: #{cnn_forward.1} parent=1 // pred_check_branch
      %16 = sbr.rel (0) target = $region5
    $region4: #{cnn_forward.1} parent=1 // pred_region
      _
    $region5: #{cnn_forward.1} parent=1 // pred_fallthru
      _
    // Predicated region
    $region6: #{cnn_forward.1} parent=1 // pred_check
      _
    $region7: #{cnn_forward.1} parent=1 // pred_check_branch
      %18 = sbr.rel (0) target = $region9
    $region8: #{cnn_forward.1} parent=1 // pred_region
      _
    $region9: #{cnn_forward.1} parent=1 // pred_fallthru
      _
    // Predicated region
    $region10: #{cnn_forward.1} parent=1 // pred_check
      _
    $region11: #{cnn_forward.1} parent=1 // pred_check_branch
      %20 = sbr.rel (0) target = $region13
    $region12: #{cnn_forward.1} parent=1 // pred_region
      _
    $region13: #{cnn_forward.1} parent=1 // pred_fallthru
      _
    // Predicated region
    $region14: #{cnn_forward.1} parent=1 // pred_check
      _
    $region15: #{cnn_forward.1} parent=1 // pred_check_branch
      %22 = sbr.rel (0) target = $region17
    $region16: #{cnn_forward.1} parent=1 // pred_region
      _
    $region17: #{cnn_forward.1} parent=1 // pred_fallthru
      _
    // Predicated region
    $region18: #{cnn_forward.1} parent=1 // pred_check
      _
    $region19: #{cnn_forward.1} parent=1 // pred_check_branch
      %24 = sbr.rel (0) target = $region21
    $region20: #{cnn_forward.1} parent=1 // pred_region
      _
    $region21: #{cnn_forward.1} parent=1 // pred_fallthru
      _
    // Predicated region
    $region22: #{cnn_forward.1} parent=1 // pred_check
      _
    $region23: #{cnn_forward.1} parent=1 // pred_check_branch
      %26 = sbr.rel (0) target = $region25
    $region24: #{cnn_forward.1} parent=1 // pred_region
      _
    $region25: #{cnn_forward.1} parent=1 // pred_fallthru
      _
    // Predicated region
    $region26: #{cnn_forward.1} parent=1 // pred_check
      _
    $region27: #{cnn_forward.1} parent=1 // pred_check_branch
      %28 = sbr.rel (0) target = $region29
    $region28: #{cnn_forward.1} parent=1 // pred_region
      _
    $region29: #{cnn_forward.1} parent=1 // pred_fallthru
      _
    // Predicated region
    $region30: #{cnn_forward.1} parent=1 // pred_check
      _
    $region31: #{cnn_forward.1} parent=1 // pred_check_branch
      %30 = sbr.rel (0) target = $region33
    $region32: #{cnn_forward.1} parent=1 // pred_region
      _
    $region33: #{cnn_forward.1} parent=1 // pred_fallthru
      _
    // Predicated region
    $region34: #{cnn_forward.1} parent=1 // pred_check
      _
    $region35: #{cnn_forward.1} parent=1 // pred_check_branch
      %32 = sbr.rel (0) target = $region37
    $region36: #{cnn_forward.1} parent=1 // pred_region
      _
    $region37: #{cnn_forward.1} parent=1 // pred_fallthru
      _
    %v34 = vld [vmem:[%s1] sm:$0xf]
    %v35 = vld [vmem:[%s1 + $0x4] sm:$0xf]
    %v36 = vld [vmem:[%s1 + $0x8] sm:$0xf]
    %v37 = vld [vmem:[%s1 + $0xc] sm:$0xf]
    %v38 = vld [vmem:[%s1 + $0x10] sm:$0xf]
    %v39 = vld [vmem:[%s1 + $0x14] sm:$0xf]
    %v40 = vld [vmem:[%s1 + $0x18] sm:$0xf]
    %v41 = vld [vmem:[%s1 + $0x1c] sm:$0xf]
    %v42 = vld [vmem:[%s1 + $0x20] sm:$0xf]
    %v43 = vld [vmem:[%s1 + $0x24] sm:$0xf]
    %v44 = vld [vmem:[%s1 + $0x28] sm:$0xf]
    %v45 = vld [vmem:[%s1 + $0x2c] sm:$0xf]
    %v46 = vld [vmem:[%s1 + $0x30] sm:$0xf]
    %v47 = vld [vmem:[%s1 + $0x34] sm:$0xf]
    %v48 = vld [vmem:[%s1 + $0x38] sm:$0xf]
    %v49 = vld [vmem:[%s1 + $0x3c] sm:$0xf]
    %v50 = vld [vmem:[%s2] sm:$0x1]
    %v51 = vld [vmem:[%s0] sm:$0xf]
    %v52 = vld [vmem:[%s0 + $0x4] sm:$0xf]
    %v53 = vld [vmem:[%s0 + $0x8] sm:$0xf]
    %v54 = vld [vmem:[%s0 + $0xc] sm:$0xf]
    %v55 = vld [vmem:[%s0 + $0x10] sm:$0xf]
    %v56 = vld [vmem:[%s0 + $0x14] sm:$0xf]
    %v57 = vld [vmem:[%s0 + $0x18] sm:$0xf]
    %v58 = vld [vmem:[%s0 + $0x1c] sm:$0xf]
    %v59 = vld [vmem:[%s0 + $0x20] sm:$0xf]
    %v60 = vld [vmem:[%s0 + $0x24] sm:$0xf]
    %v61 = vld [vmem:[%s0 + $0x28] sm:$0xf]
    %v62 = vld [vmem:[%s0 + $0x2c] sm:$0xf]
    %v63 = vld [vmem:[%s0 + $0x30] sm:$0xf]
    %v64 = vld [vmem:[%s0 + $0x34] sm:$0xf]
    %v65 = vld [vmem:[%s0 + $0x38] sm:$0xf]
    %v66 = vld [vmem:[%s0 + $0x3c] sm:$0xf]
    %v67 = vld [vmem:[%s0 + $0x40] sm:$0xf]
    %v68 = vld [vmem:[%s0 + $0x44] sm:$0xf]
    %v69 = vld [vmem:[%s0 + $0x48] sm:$0xf]
    %v70 = vld [vmem:[%s0 + $0x4c] sm:$0xf]
    %v71 = vld [vmem:[%s0 + $0x50] sm:$0xf]
    %v72 = vld [vmem:[%s0 + $0x54] sm:$0xf]
    %v73 = vld [vmem:[%s0 + $0x58] sm:$0xf]
    %v74 = vld [vmem:[%s0 + $0x5c] sm:$0xf]
    %v75 = vld [vmem:[%s0 + $0x60] sm:$0xf]
    %v76 = vld [vmem:[%s0 + $0x64] sm:$0xf]
    %v77 = vld [vmem:[%s0 + $0x68] sm:$0xf]
    %v78 = vld [vmem:[%s0 + $0x6c] sm:$0xf]
    %v79 = vld [vmem:[%s0 + $0x70] sm:$0xf]
    %v80 = vld [vmem:[%s0 + $0x74] sm:$0xf]
    %v81 = vld [vmem:[%s0 + $0x78] sm:$0xf]
    %v82 = vld [vmem:[%s0 + $0x7c] sm:$0xf]
    %v83 = vld [vmem:[%s0 + $0x80] sm:$0xf]
    %v84 = vld [vmem:[%s0 + $0x84] sm:$0xf]
    %v85 = vld [vmem:[%s0 + $0x88] sm:$0xf]
    %v86 = vld [vmem:[%s0 + $0x8c] sm:$0xf]
    %v87 = vld [vmem:[%s0 + $0x90] sm:$0xf]
    %v88 = vld [vmem:[%s0 + $0x94] sm:$0xf]
    %v89 = vld [vmem:[%s0 + $0x98] sm:$0xf]
    %v90 = vld [vmem:[%s0 + $0x9c] sm:$0xf]
    %v91 = vld [vmem:[%s0 + $0xa0] sm:$0xf]
    %v92 = vld [vmem:[%s0 + $0xa4] sm:$0xf]
    %v93 = vld [vmem:[%s0 + $0xa8] sm:$0xf]
    %v94 = vld [vmem:[%s0 + $0xac] sm:$0xf]
    %v95 = vld [vmem:[%s0 + $0xb0] sm:$0xf]
    %v96 = vld [vmem:[%s0 + $0xb4] sm:$0xf]
    %v97 = vld [vmem:[%s0 + $0xb8] sm:$0xf]
    %v98 = vld [vmem:[%s0 + $0xbc] sm:$0xf]
    %v99 = vld [vmem:[%s0 + $0xc0] sm:$0xf]
    %v100 = vld [vmem:[%s0 + $0xc4] sm:$0xf]
    %v101 = vld [vmem:[%s0 + $0xc8] sm:$0xf]
    %v102 = vld [vmem:[%s0 + $0xcc] sm:$0xf]
    %v103 = vld [vmem:[%s0 + $0xd0] sm:$0xf]
    %v104 = vld [vmem:[%s0 + $0xd4] sm:$0xf]
    %v105 = vld [vmem:[%s0 + $0xd8] sm:$0xf]
    %v106 = vld [vmem:[%s0 + $0xdc] sm:$0xf]
    %v107 = vld [vmem:[%s0 + $0xe0] sm:$0xf]
    %v108 = vld [vmem:[%s0 + $0xe4] sm:$0xf]
    %v109 = vld [vmem:[%s0 + $0xe8] sm:$0xf]
    %v110 = vld [vmem:[%s0 + $0xec] sm:$0xf]
    %v111 = vld [vmem:[%s0 + $0xf0] sm:$0xf]
    %v112 = vld [vmem:[%s0 + $0xf4] sm:$0xf]
    %v113 = vld [vmem:[%s0 + $0xf8] sm:$0xf]
    %v114 = vld [vmem:[%s0 + $0xfc] sm:$0xf]
    %v116 = vperm.slane %v50, 0
    %v182 = vunpack.c.l.b16 %v51
    %v183 = vunpack.c.l.b16 %v52
    %v184 = vunpack.c.l.b16 %v53
    %v185 = vunpack.c.l.b16 %v54
    %v186 = vunpack.c.l.b16 %v55
    %v187 = vunpack.c.l.b16 %v56
    %v188 = vunpack.c.l.b16 %v57
    %v189 = vunpack.c.l.b16 %v58
    %v190 = vunpack.c.l.b16 %v59
    %v191 = vunpack.c.l.b16 %v60
    %v192 = vunpack.c.l.b16 %v61
    %v193 = vunpack.c.l.b16 %v62
    %v194 = vunpack.c.l.b16 %v63
    %v195 = vunpack.c.l.b16 %v64
    %v196 = vunpack.c.l.b16 %v65
    %v197 = vunpack.c.l.b16 %v66
    %v198 = vunpack.c.l.b16 %v67
    %v199 = vunpack.c.l.b16 %v68
    %v200 = vunpack.c.l.b16 %v69
    %v201 = vunpack.c.l.b16 %v70
    %v202 = vunpack.c.l.b16 %v71
    %v203 = vunpack.c.l.b16 %v72
    %v204 = vunpack.c.l.b16 %v73
    %v205 = vunpack.c.l.b16 %v74
    %v206 = vunpack.c.l.b16 %v75
    %v207 = vunpack.c.l.b16 %v76
    %v208 = vunpack.c.l.b16 %v77
    %v209 = vunpack.c.l.b16 %v78
    %v210 = vunpack.c.l.b16 %v79
    %v211 = vunpack.c.l.b16 %v80
    %v212 = vunpack.c.l.b16 %v81
    %v213 = vunpack.c.l.b16 %v82
    %v214 = vunpack.c.l.b16 %v83
    %v215 = vunpack.c.l.b16 %v84
    %v216 = vunpack.c.l.b16 %v85
    %v217 = vunpack.c.l.b16 %v86
    %v218 = vunpack.c.l.b16 %v87
    %v219 = vunpack.c.l.b16 %v88
    %v220 = vunpack.c.l.b16 %v89
    %v221 = vunpack.c.l.b16 %v90
    %v222 = vunpack.c.l.b16 %v91
    %v223 = vunpack.c.l.b16 %v92
    %v224 = vunpack.c.l.b16 %v93
    %v225 = vunpack.c.l.b16 %v94
    %v226 = vunpack.c.l.b16 %v95
    %v227 = vunpack.c.l.b16 %v96
    %v228 = vunpack.c.l.b16 %v97
    %v229 = vunpack.c.l.b16 %v98
    %v230 = vunpack.c.l.b16 %v99
    %v231 = vunpack.c.l.b16 %v100
    %v232 = vunpack.c.l.b16 %v101
    %v233 = vunpack.c.l.b16 %v102
    %v234 = vunpack.c.l.b16 %v103
    %v235 = vunpack.c.l.b16 %v104
    %v236 = vunpack.c.l.b16 %v105
    %v237 = vunpack.c.l.b16 %v106
    %v238 = vunpack.c.l.b16 %v107
    %v239 = vunpack.c.l.b16 %v108
    %v240 = vunpack.c.l.b16 %v109
    %v241 = vunpack.c.l.b16 %v110
    %v242 = vunpack.c.l.b16 %v111
    %v243 = vunpack.c.l.b16 %v112
    %v244 = vunpack.c.l.b16 %v113
    %v245 = vunpack.c.l.b16 %v114
    %v246 = vpack.c.b16 %v183, %v182
    %v247 = vpack.c.b16 %v185, %v184
    %v248 = vpack.c.b16 %v187, %v186
    %v249 = vpack.c.b16 %v189, %v188
    %v250 = vpack.c.b16 %v191, %v190
    %v251 = vpack.c.b16 %v193, %v192
    %v252 = vpack.c.b16 %v195, %v194
    %v253 = vpack.c.b16 %v197, %v196
    %v254 = vpack.c.b16 %v199, %v198
    %v255 = vpack.c.b16 %v201, %v200
    %v256 = vpack.c.b16 %v203, %v202
    %v257 = vpack.c.b16 %v205, %v204
    %v258 = vpack.c.b16 %v207, %v206
    %v259 = vpack.c.b16 %v209, %v208
    %v260 = vpack.c.b16 %v211, %v210
    %v261 = vpack.c.b16 %v213, %v212
    %v262 = vpack.c.b16 %v215, %v214
    %v263 = vpack.c.b16 %v217, %v216
    %v264 = vpack.c.b16 %v219, %v218
    %v265 = vpack.c.b16 %v221, %v220
    %v266 = vpack.c.b16 %v223, %v222
    %v267 = vpack.c.b16 %v225, %v224
    %v268 = vpack.c.b16 %v227, %v226
    %v269 = vpack.c.b16 %v229, %v228
    %v270 = vpack.c.b16 %v231, %v230
    %v271 = vpack.c.b16 %v233, %v232
    %v272 = vpack.c.b16 %v235, %v234
    %v273 = vpack.c.b16 %v237, %v236
    %v274 = vpack.c.b16 %v239, %v238
    %v275 = vpack.c.b16 %v241, %v240
    %v276 = vpack.c.b16 %v243, %v242
    %v277 = vpack.c.b16 %v245, %v244
    %v326 = vunpack.c.l.b16 %v34
    %v327 = vunpack.c.l.b16 %v35
    %v328 = vunpack.c.l.b16 %v36
    %v329 = vunpack.c.l.b16 %v37
    %v330 = vunpack.c.l.b16 %v38
    %v331 = vunpack.c.l.b16 %v39
    %v332 = vunpack.c.l.b16 %v40
    %v333 = vunpack.c.l.b16 %v41
    %v334 = vunpack.c.l.b16 %v42
    %v335 = vunpack.c.l.b16 %v43
    %v336 = vunpack.c.l.b16 %v44
    %v337 = vunpack.c.l.b16 %v45
    %v338 = vunpack.c.l.b16 %v46
    %v339 = vunpack.c.l.b16 %v47
    %v340 = vunpack.c.l.b16 %v48
    %v341 = vunpack.c.l.b16 %v49
    %v342 = vpack.c.b16 %v327, %v326
    %v343 = vpack.c.b16 %v329, %v328
    %v344 = vpack.c.b16 %v331, %v330
    %v345 = vpack.c.b16 %v333, %v332
    %v346 = vpack.c.b16 %v335, %v334
    %v347 = vpack.c.b16 %v337, %v336
    %v348 = vpack.c.b16 %v339, %v338
    %v349 = vpack.c.b16 %v341, %v340
    %358 = vmatpush.bf16.msra.mxu0 %v349
    %359 = vmatpush.bf16.msra.mxu0 %v348
    %360 = vmatpush.bf16.msra.mxu0 %v347
    %361 = vmatpush.bf16.msra.mxu0 %v346
    %362 = vmatpush.bf16.msra.mxu0 %v345
    %363 = vmatpush.bf16.msra.mxu0 %v344
    %364 = vmatpush.bf16.msra.mxu0 %v343
    %365 = vmatpush.bf16.msra.mxu0 %v342
    %366 = vmatmul.bf16.gmra.mxu0 %v246
    %v367 = vpop.f32.mrf.mxu0
    %v368 = vadd.f32 %v116, %v367
    %v369 = vpop.f32.mrf.mxu0
    %v370 = vadd.f32 %v116, %v369
    %371 = vmatmul.bf16.gmra.mxu0 %v247
    %v372 = vpop.f32.mrf.mxu0
    %v373 = vadd.f32 %v116, %v372
    %v374 = vpop.f32.mrf.mxu0
    %v375 = vadd.f32 %v116, %v374
    %376 = vmatmul.bf16.gmra.mxu0 %v248
    %v377 = vpop.f32.mrf.mxu0
    %v378 = vadd.f32 %v116, %v377
    %v379 = vpop.f32.mrf.mxu0
    %v380 = vadd.f32 %v116, %v379
    %381 = vmatmul.bf16.gmra.mxu0 %v249
    %v382 = vpop.f32.mrf.mxu0
    %v383 = vadd.f32 %v116, %v382
    %v384 = vpop.f32.mrf.mxu0
    %v385 = vadd.f32 %v116, %v384
    %386 = vmatmul.bf16.gmra.mxu0 %v250
    %v387 = vpop.f32.mrf.mxu0
    %v388 = vadd.f32 %v116, %v387
    %v389 = vpop.f32.mrf.mxu0
    %v390 = vadd.f32 %v116, %v389
    %391 = vmatmul.bf16.gmra.mxu0 %v251
    %v392 = vpop.f32.mrf.mxu0
    %v393 = vadd.f32 %v116, %v392
    %v394 = vpop.f32.mrf.mxu0
    %v395 = vadd.f32 %v116, %v394
    %396 = vmatmul.bf16.gmra.mxu0 %v252
    %v397 = vpop.f32.mrf.mxu0
    %v398 = vadd.f32 %v116, %v397
    %v399 = vpop.f32.mrf.mxu0
    %v400 = vadd.f32 %v116, %v399
    %401 = vmatmul.bf16.gmra.mxu0 %v253
    %v402 = vpop.f32.mrf.mxu0
    %v403 = vadd.f32 %v116, %v402
    %v404 = vpop.f32.mrf.mxu0
    %v405 = vadd.f32 %v116, %v404
    %406 = vmatmul.bf16.gmra.mxu0 %v254
    %v407 = vpop.f32.mrf.mxu0
    %v408 = vadd.f32 %v116, %v407
    %v409 = vpop.f32.mrf.mxu0
    %v410 = vadd.f32 %v116, %v409
    %411 = vmatmul.bf16.gmra.mxu0 %v255
    %v412 = vpop.f32.mrf.mxu0
    %v413 = vadd.f32 %v116, %v412
    %v414 = vpop.f32.mrf.mxu0
    %v415 = vadd.f32 %v116, %v414
    %416 = vmatmul.bf16.gmra.mxu0 %v256
    %v417 = vpop.f32.mrf.mxu0
    %v418 = vadd.f32 %v116, %v417
    %v419 = vpop.f32.mrf.mxu0
    %v420 = vadd.f32 %v116, %v419
    %421 = vmatmul.bf16.gmra.mxu0 %v257
    %v422 = vpop.f32.mrf.mxu0
    %v423 = vadd.f32 %v116, %v422
    %v424 = vpop.f32.mrf.mxu0
    %v425 = vadd.f32 %v116, %v424
    %426 = vmatmul.bf16.gmra.mxu0 %v258
    %v427 = vpop.f32.mrf.mxu0
    %v428 = vadd.f32 %v116, %v427
    %v429 = vpop.f32.mrf.mxu0
    %v430 = vadd.f32 %v116, %v429
    %431 = vmatmul.bf16.gmra.mxu0 %v259
    %v432 = vpop.f32.mrf.mxu0
    %v433 = vadd.f32 %v116, %v432
    %v434 = vpop.f32.mrf.mxu0
    %v435 = vadd.f32 %v116, %v434
    %436 = vmatmul.bf16.gmra.mxu0 %v260
    %v437 = vpop.f32.mrf.mxu0
    %v438 = vadd.f32 %v116, %v437
    %v439 = vpop.f32.mrf.mxu0
    %v440 = vadd.f32 %v116, %v439
    %441 = vmatmul.bf16.gmra.mxu0 %v261
    %v442 = vpop.f32.mrf.mxu0
    %v443 = vadd.f32 %v116, %v442
    %v444 = vpop.f32.mrf.mxu0
    %v445 = vadd.f32 %v116, %v444
    %446 = vmatmul.bf16.gmra.mxu0 %v262
    %v447 = vpop.f32.mrf.mxu0
    %v448 = vadd.f32 %v116, %v447
    %v449 = vpop.f32.mrf.mxu0
    %v450 = vadd.f32 %v116, %v449
    %451 = vmatmul.bf16.gmra.mxu0 %v263
    %v452 = vpop.f32.mrf.mxu0
    %v453 = vadd.f32 %v116, %v452
    %v454 = vpop.f32.mrf.mxu0
    %v455 = vadd.f32 %v116, %v454
    %456 = vmatmul.bf16.gmra.mxu0 %v264
    %v457 = vpop.f32.mrf.mxu0
    %v458 = vadd.f32 %v116, %v457
    %v459 = vpop.f32.mrf.mxu0
    %v460 = vadd.f32 %v116, %v459
    %461 = vmatmul.bf16.gmra.mxu0 %v265
    %v462 = vpop.f32.mrf.mxu0
    %v463 = vadd.f32 %v116, %v462
    %v464 = vpop.f32.mrf.mxu0
    %v465 = vadd.f32 %v116, %v464
    %466 = vmatmul.bf16.gmra.mxu0 %v266
    %v467 = vpop.f32.mrf.mxu0
    %v468 = vadd.f32 %v116, %v467
    %v469 = vpop.f32.mrf.mxu0
    %v470 = vadd.f32 %v116, %v469
    %471 = vmatmul.bf16.gmra.mxu0 %v267
    %v472 = vpop.f32.mrf.mxu0
    %v473 = vadd.f32 %v116, %v472
    %v474 = vpop.f32.mrf.mxu0
    %v475 = vadd.f32 %v116, %v474
    %476 = vmatmul.bf16.gmra.mxu0 %v268
    %v477 = vpop.f32.mrf.mxu0
    %v478 = vadd.f32 %v116, %v477
    %v479 = vpop.f32.mrf.mxu0
    %v480 = vadd.f32 %v116, %v479
    %481 = vmatmul.bf16.gmra.mxu0 %v269
    %v482 = vpop.f32.mrf.mxu0
    %v483 = vadd.f32 %v116, %v482
    %v484 = vpop.f32.mrf.mxu0
    %v485 = vadd.f32 %v116, %v484
    %486 = vmatmul.bf16.gmra.mxu0 %v270
    %v487 = vpop.f32.mrf.mxu0
    %v488 = vadd.f32 %v116, %v487
    %v489 = vpop.f32.mrf.mxu0
    %v490 = vadd.f32 %v116, %v489
    %491 = vmatmul.bf16.gmra.mxu0 %v271
    %v492 = vpop.f32.mrf.mxu0
    %v493 = vadd.f32 %v116, %v492
    %v494 = vpop.f32.mrf.mxu0
    %v495 = vadd.f32 %v116, %v494
    %496 = vmatmul.bf16.gmra.mxu0 %v272
    %v497 = vpop.f32.mrf.mxu0
    %v498 = vadd.f32 %v116, %v497
    %v499 = vpop.f32.mrf.mxu0
    %v500 = vadd.f32 %v116, %v499
    %501 = vmatmul.bf16.gmra.mxu0 %v273
    %v502 = vpop.f32.mrf.mxu0
    %v503 = vadd.f32 %v116, %v502
    %v504 = vpop.f32.mrf.mxu0
    %v505 = vadd.f32 %v116, %v504
    %506 = vmatmul.bf16.gmra.mxu0 %v274
    %v507 = vpop.f32.mrf.mxu0
    %v508 = vadd.f32 %v116, %v507
    %v509 = vpop.f32.mrf.mxu0
    %v510 = vadd.f32 %v116, %v509
    %511 = vmatmul.bf16.gmra.mxu0 %v275
    %v512 = vpop.f32.mrf.mxu0
    %v513 = vadd.f32 %v116, %v512
    %v514 = vpop.f32.mrf.mxu0
    %v515 = vadd.f32 %v116, %v514
    %516 = vmatmul.bf16.gmra.mxu0 %v276
    %v517 = vpop.f32.mrf.mxu0
    %v518 = vadd.f32 %v116, %v517
    %v519 = vpop.f32.mrf.mxu0
    %v520 = vadd.f32 %v116, %v519
    %521 = vmatmul.bf16.gmra.mxu0 %v277
    %v522 = vpop.f32.mrf.mxu0
    %v523 = vadd.f32 %v116, %v522
    %v524 = vpop.f32.mrf.mxu0
    %v525 = vadd.f32 %v116, %v524
    %526 = vdwg.mxu0
    %vm527 = vcmp.gt.f32.partialorder %v368, 0.0
    %vm528 = vcmp.gt.f32.partialorder %v370, 0.0
    %vm529 = vcmp.gt.f32.partialorder %v373, 0.0
    %vm530 = vcmp.gt.f32.partialorder %v375, 0.0
    %vm531 = vcmp.gt.f32.partialorder %v378, 0.0
    %vm532 = vcmp.gt.f32.partialorder %v380, 0.0
    %vm533 = vcmp.gt.f32.partialorder %v383, 0.0
    %vm534 = vcmp.gt.f32.partialorder %v385, 0.0
    %vm535 = vcmp.gt.f32.partialorder %v388, 0.0
    %vm536 = vcmp.gt.f32.partialorder %v390, 0.0
    %vm537 = vcmp.gt.f32.partialorder %v393, 0.0
    %vm538 = vcmp.gt.f32.partialorder %v395, 0.0
    %vm539 = vcmp.gt.f32.partialorder %v398, 0.0
    %vm540 = vcmp.gt.f32.partialorder %v400, 0.0
    %vm541 = vcmp.gt.f32.partialorder %v403, 0.0
    %vm542 = vcmp.gt.f32.partialorder %v405, 0.0
    %vm543 = vcmp.gt.f32.partialorder %v408, 0.0
    %vm544 = vcmp.gt.f32.partialorder %v410, 0.0
    %vm545 = vcmp.gt.f32.partialorder %v413, 0.0
    %vm546 = vcmp.gt.f32.partialorder %v415, 0.0
    %vm547 = vcmp.gt.f32.partialorder %v418, 0.0
    %vm548 = vcmp.gt.f32.partialorder %v420, 0.0
    %vm549 = vcmp.gt.f32.partialorder %v423, 0.0
    %vm550 = vcmp.gt.f32.partialorder %v425, 0.0
    %vm551 = vcmp.gt.f32.partialorder %v428, 0.0
    %vm552 = vcmp.gt.f32.partialorder %v430, 0.0
    %vm553 = vcmp.gt.f32.partialorder %v433, 0.0
    %vm554 = vcmp.gt.f32.partialorder %v435, 0.0
    %vm555 = vcmp.gt.f32.partialorder %v438, 0.0
    %vm556 = vcmp.gt.f32.partialorder %v440, 0.0
    %vm557 = vcmp.gt.f32.partialorder %v443, 0.0
    %vm558 = vcmp.gt.f32.partialorder %v445, 0.0
    %vm559 = vcmp.gt.f32.partialorder %v448, 0.0
    %vm560 = vcmp.gt.f32.partialorder %v450, 0.0
    %vm561 = vcmp.gt.f32.partialorder %v453, 0.0
    %vm562 = vcmp.gt.f32.partialorder %v455, 0.0
    %vm563 = vcmp.gt.f32.partialorder %v458, 0.0
    %vm564 = vcmp.gt.f32.partialorder %v460, 0.0
    %vm565 = vcmp.gt.f32.partialorder %v463, 0.0
    %vm566 = vcmp.gt.f32.partialorder %v465, 0.0
    %vm567 = vcmp.gt.f32.partialorder %v468, 0.0
    %vm568 = vcmp.gt.f32.partialorder %v470, 0.0
    %vm569 = vcmp.gt.f32.partialorder %v473, 0.0
    %vm570 = vcmp.gt.f32.partialorder %v475, 0.0
    %vm571 = vcmp.gt.f32.partialorder %v478, 0.0
    %vm572 = vcmp.gt.f32.partialorder %v480, 0.0
    %vm573 = vcmp.gt.f32.partialorder %v483, 0.0
    %vm574 = vcmp.gt.f32.partialorder %v485, 0.0
    %vm575 = vcmp.gt.f32.partialorder %v488, 0.0
    %vm576 = vcmp.gt.f32.partialorder %v490, 0.0
    %vm577 = vcmp.gt.f32.partialorder %v493, 0.0
    %vm578 = vcmp.gt.f32.partialorder %v495, 0.0
    %vm579 = vcmp.gt.f32.partialorder %v498, 0.0
    %vm580 = vcmp.gt.f32.partialorder %v500, 0.0
    %vm581 = vcmp.gt.f32.partialorder %v503, 0.0
    %vm582 = vcmp.gt.f32.partialorder %v505, 0.0
    %vm583 = vcmp.gt.f32.partialorder %v508, 0.0
    %vm584 = vcmp.gt.f32.partialorder %v510, 0.0
    %vm585 = vcmp.gt.f32.partialorder %v513, 0.0
    %vm586 = vcmp.gt.f32.partialorder %v515, 0.0
    %vm587 = vcmp.gt.f32.partialorder %v518, 0.0
    %vm588 = vcmp.gt.f32.partialorder %v520, 0.0
    %vm589 = vcmp.gt.f32.partialorder %v523, 0.0
    %vm590 = vcmp.gt.f32.partialorder %v525, 0.0
    %v591 = vmul.f32 %v368, 0.2
    %v592 = vmul.f32 %v370, 0.2
    %v593 = vmul.f32 %v373, 0.2
    %v594 = vmul.f32 %v375, 0.2
    %v595 = vmul.f32 %v378, 0.2
    %v596 = vmul.f32 %v380, 0.2
    %v597 = vmul.f32 %v383, 0.2
    %v598 = vmul.f32 %v385, 0.2
    %v599 = vmul.f32 %v388, 0.2
    %v600 = vmul.f32 %v390, 0.2
    %v601 = vmul.f32 %v393, 0.2
    %v602 = vmul.f32 %v395, 0.2
    %v603 = vmul.f32 %v398, 0.2
    %v604 = vmul.f32 %v400, 0.2
    %v605 = vmul.f32 %v403, 0.2
    %v606 = vmul.f32 %v405, 0.2
    %v607 = vmul.f32 %v408, 0.2
    %v608 = vmul.f32 %v410, 0.2
    %v609 = vmul.f32 %v413, 0.2
    %v610 = vmul.f32 %v415, 0.2
    %v611 = vmul.f32 %v418, 0.2
    %v612 = vmul.f32 %v420, 0.2
    %v613 = vmul.f32 %v423, 0.2
    %v614 = vmul.f32 %v425, 0.2
    %v615 = vmul.f32 %v428, 0.2
    %v616 = vmul.f32 %v430, 0.2
    %v617 = vmul.f32 %v433, 0.2
    %v618 = vmul.f32 %v435, 0.2
    %v619 = vmul.f32 %v438, 0.2
    %v620 = vmul.f32 %v440, 0.2
    %v621 = vmul.f32 %v443, 0.2
    %v622 = vmul.f32 %v445, 0.2
    %v623 = vmul.f32 %v448, 0.2
    %v624 = vmul.f32 %v450, 0.2
    %v625 = vmul.f32 %v453, 0.2
    %v626 = vmul.f32 %v455, 0.2
    %v627 = vmul.f32 %v458, 0.2
    %v628 = vmul.f32 %v460, 0.2
    %v629 = vmul.f32 %v463, 0.2
    %v630 = vmul.f32 %v465, 0.2
    %v631 = vmul.f32 %v468, 0.2
    %v632 = vmul.f32 %v470, 0.2
    %v633 = vmul.f32 %v473, 0.2
    %v634 = vmul.f32 %v475, 0.2
    %v635 = vmul.f32 %v478, 0.2
    %v636 = vmul.f32 %v480, 0.2
    %v637 = vmul.f32 %v483, 0.2
    %v638 = vmul.f32 %v485, 0.2
    %v639 = vmul.f32 %v488, 0.2
    %v640 = vmul.f32 %v490, 0.2
    %v641 = vmul.f32 %v493, 0.2
    %v642 = vmul.f32 %v495, 0.2
    %v643 = vmul.f32 %v498, 0.2
    %v644 = vmul.f32 %v500, 0.2
    %v645 = vmul.f32 %v503, 0.2
    %v646 = vmul.f32 %v505, 0.2
    %v647 = vmul.f32 %v508, 0.2
    %v648 = vmul.f32 %v510, 0.2
    %v649 = vmul.f32 %v513, 0.2
    %v650 = vmul.f32 %v515, 0.2
    %v651 = vmul.f32 %v518, 0.2
    %v652 = vmul.f32 %v520, 0.2
    %v653 = vmul.f32 %v523, 0.2
    %v654 = vmul.f32 %v525, 0.2
    %v655 = vsel %vm527, %v368, %v591
    %v656 = vsel %vm528, %v370, %v592
    %v657 = vsel %vm529, %v373, %v593
    %v658 = vsel %vm530, %v375, %v594
    %v659 = vsel %vm531, %v378, %v595
    %v660 = vsel %vm532, %v380, %v596
    %v661 = vsel %vm533, %v383, %v597
    %v662 = vsel %vm534, %v385, %v598
    %v663 = vsel %vm535, %v388, %v599
    %v664 = vsel %vm536, %v390, %v600
    %v665 = vsel %vm537, %v393, %v601
    %v666 = vsel %vm538, %v395, %v602
    %v667 = vsel %vm539, %v398, %v603
    %v668 = vsel %vm540, %v400, %v604
    %v669 = vsel %vm541, %v403, %v605
    %v670 = vsel %vm542, %v405, %v606
    %v671 = vsel %vm543, %v408, %v607
    %v672 = vsel %vm544, %v410, %v608
    %v673 = vsel %vm545, %v413, %v609
    %v674 = vsel %vm546, %v415, %v610
    %v675 = vsel %vm547, %v418, %v611
    %v676 = vsel %vm548, %v420, %v612
    %v677 = vsel %vm549, %v423, %v613
    %v678 = vsel %vm550, %v425, %v614
    %v679 = vsel %vm551, %v428, %v615
    %v680 = vsel %vm552, %v430, %v616
    %v681 = vsel %vm553, %v433, %v617
    %v682 = vsel %vm554, %v435, %v618
    %v683 = vsel %vm555, %v438, %v619
    %v684 = vsel %vm556, %v440, %v620
    %v685 = vsel %vm557, %v443, %v621
    %v686 = vsel %vm558, %v445, %v622
    %v687 = vsel %vm559, %v448, %v623
    %v688 = vsel %vm560, %v450, %v624
    %v689 = vsel %vm561, %v453, %v625
    %v690 = vsel %vm562, %v455, %v626
    %v691 = vsel %vm563, %v458, %v627
    %v692 = vsel %vm564, %v460, %v628
    %v693 = vsel %vm565, %v463, %v629
    %v694 = vsel %vm566, %v465, %v630
    %v695 = vsel %vm567, %v468, %v631
    %v696 = vsel %vm568, %v470, %v632
    %v697 = vsel %vm569, %v473, %v633
    %v698 = vsel %vm570, %v475, %v634
    %v699 = vsel %vm571, %v478, %v635
    %v700 = vsel %vm572, %v480, %v636
    %v701 = vsel %vm573, %v483, %v637
    %v702 = vsel %vm574, %v485, %v638
    %v703 = vsel %vm575, %v488, %v639
    %v704 = vsel %vm576, %v490, %v640
    %v705 = vsel %vm577, %v493, %v641
    %v706 = vsel %vm578, %v495, %v642
    %v707 = vsel %vm579, %v498, %v643
    %v708 = vsel %vm580, %v500, %v644
    %v709 = vsel %vm581, %v503, %v645
    %v710 = vsel %vm582, %v505, %v646
    %v711 = vsel %vm583, %v508, %v647
    %v712 = vsel %vm584, %v510, %v648
    %v713 = vsel %vm585, %v513, %v649
    %v714 = vsel %vm586, %v515, %v650
    %v715 = vsel %vm587, %v518, %v651
    %v716 = vsel %vm588, %v520, %v652
    %v717 = vsel %vm589, %v523, %v653
    %v718 = vsel %vm590, %v525, %v654
    %v719 = vpack.c.bf16 %v655, %v655
    %v720 = vpack.c.bf16 %v656, %v656
    %v721 = vpack.c.bf16 %v657, %v657
    %v722 = vpack.c.bf16 %v658, %v658
    %v723 = vpack.c.bf16 %v659, %v659
    %v724 = vpack.c.bf16 %v660, %v660
    %v725 = vpack.c.bf16 %v661, %v661
    %v726 = vpack.c.bf16 %v662, %v662
    %v727 = vpack.c.bf16 %v663, %v663
    %v728 = vpack.c.bf16 %v664, %v664
    %v729 = vpack.c.bf16 %v665, %v665
    %v730 = vpack.c.bf16 %v666, %v666
    %v731 = vpack.c.bf16 %v667, %v667
    %v732 = vpack.c.bf16 %v668, %v668
    %v733 = vpack.c.bf16 %v669, %v669
    %v734 = vpack.c.bf16 %v670, %v670
    %v735 = vpack.c.bf16 %v671, %v671
    %v736 = vpack.c.bf16 %v672, %v672
    %v737 = vpack.c.bf16 %v673, %v673
    %v738 = vpack.c.bf16 %v674, %v674
    %v739 = vpack.c.bf16 %v675, %v675
    %v740 = vpack.c.bf16 %v676, %v676
    %v741 = vpack.c.bf16 %v677, %v677
    %v742 = vpack.c.bf16 %v678, %v678
    %v743 = vpack.c.bf16 %v679, %v679
    %v744 = vpack.c.bf16 %v680, %v680
    %v745 = vpack.c.bf16 %v681, %v681
    %v746 = vpack.c.bf16 %v682, %v682
    %v747 = vpack.c.bf16 %v683, %v683
    %v748 = vpack.c.bf16 %v684, %v684
    %v749 = vpack.c.bf16 %v685, %v685
    %v750 = vpack.c.bf16 %v686, %v686
    %v751 = vpack.c.bf16 %v687, %v687
    %v752 = vpack.c.bf16 %v688, %v688
    %v753 = vpack.c.bf16 %v689, %v689
    %v754 = vpack.c.bf16 %v690, %v690
    %v755 = vpack.c.bf16 %v691, %v691
    %v756 = vpack.c.bf16 %v692, %v692
    %v757 = vpack.c.bf16 %v693, %v693
    %v758 = vpack.c.bf16 %v694, %v694
    %v759 = vpack.c.bf16 %v695, %v695
    %v760 = vpack.c.bf16 %v696, %v696
    %v761 = vpack.c.bf16 %v697, %v697
    %v762 = vpack.c.bf16 %v698, %v698
    %v763 = vpack.c.bf16 %v699, %v699
    %v764 = vpack.c.bf16 %v700, %v700
    %v765 = vpack.c.bf16 %v701, %v701
    %v766 = vpack.c.bf16 %v702, %v702
    %v767 = vpack.c.bf16 %v703, %v703
    %v768 = vpack.c.bf16 %v704, %v704
    %v769 = vpack.c.bf16 %v705, %v705
    %v770 = vpack.c.bf16 %v706, %v706
    %v771 = vpack.c.bf16 %v707, %v707
    %v772 = vpack.c.bf16 %v708, %v708
    %v773 = vpack.c.bf16 %v709, %v709
    %v774 = vpack.c.bf16 %v710, %v710
    %v775 = vpack.c.bf16 %v711, %v711
    %v776 = vpack.c.bf16 %v712, %v712
    %v777 = vpack.c.bf16 %v713, %v713
    %v778 = vpack.c.bf16 %v714, %v714
    %v779 = vpack.c.bf16 %v715, %v715
    %v780 = vpack.c.bf16 %v716, %v716
    %v781 = vpack.c.bf16 %v717, %v717
    %v782 = vpack.c.bf16 %v718, %v718
    %v847 = vrot.slane %v719, 3
    %v848 = vrot.slane %v720, 3
    %v849 = vrot.slane %v721, 3
    %v850 = vrot.slane %v722, 3
    %v851 = vrot.slane %v723, 3
    %v852 = vrot.slane %v724, 3
    %v853 = vrot.slane %v725, 3
    %v854 = vrot.slane %v726, 3
    %v855 = vrot.slane %v727, 3
    %v856 = vrot.slane %v728, 3
    %v857 = vrot.slane %v729, 3
    %v858 = vrot.slane %v730, 3
    %v859 = vrot.slane %v731, 3
    %v860 = vrot.slane %v732, 3
    %v861 = vrot.slane %v733, 3
    %v862 = vrot.slane %v734, 3
    %v863 = vrot.slane %v735, 3
    %v864 = vrot.slane %v736, 3
    %v865 = vrot.slane %v737, 3
    %v866 = vrot.slane %v738, 3
    %v867 = vrot.slane %v739, 3
    %v868 = vrot.slane %v740, 3
    %v869 = vrot.slane %v741, 3
    %v870 = vrot.slane %v742, 3
    %v871 = vrot.slane %v743, 3
    %v872 = vrot.slane %v744, 3
    %v873 = vrot.slane %v745, 3
    %v874 = vrot.slane %v746, 3
    %v875 = vrot.slane %v747, 3
    %v876 = vrot.slane %v748, 3
    %v877 = vrot.slane %v749, 3
    %v878 = vrot.slane %v750, 3
    %v879 = vrot.slane %v751, 3
    %v880 = vrot.slane %v752, 3
    %v881 = vrot.slane %v753, 3
    %v882 = vrot.slane %v754, 3
    %v883 = vrot.slane %v755, 3
    %v884 = vrot.slane %v756, 3
    %v885 = vrot.slane %v757, 3
    %v886 = vrot.slane %v758, 3
    %v887 = vrot.slane %v759, 3
    %v888 = vrot.slane %v760, 3
    %v889 = vrot.slane %v761, 3
    %v890 = vrot.slane %v762, 3
    %v891 = vrot.slane %v763, 3
    %v892 = vrot.slane %v764, 3
    %v893 = vrot.slane %v765, 3
    %v894 = vrot.slane %v766, 3
    %v895 = vrot.slane %v767, 3
    %v896 = vrot.slane %v768, 3
    %v897 = vrot.slane %v769, 3
    %v898 = vrot.slane %v770, 3
    %v899 = vrot.slane %v771, 3
    %v900 = vrot.slane %v772, 3
    %v901 = vrot.slane %v773, 3
    %v902 = vrot.slane %v774, 3
    %v903 = vrot.slane %v775, 3
    %v904 = vrot.slane %v776, 3
    %v905 = vrot.slane %v777, 3
    %v906 = vrot.slane %v778, 3
    %v907 = vrot.slane %v779, 3
    %v908 = vrot.slane %v780, 3
    %v909 = vrot.slane %v781, 3
    %v910 = vrot.slane %v782, 3
    %vm911 = vcmask 1040384
    %v914 = vsel %vm911, %v719, %v847
    %vm915 = vcmask 1041409
    %v916 = vsel %vm915, %v719, %v847
    %v918 = vrot.slane %v916, 1
    %vm919 = vcmask 1042434
    %v920 = vsel %vm919, %v719, %v847
    %v922 = vrot.slane %v920, 2
    %vm923 = vcmask 1043459
    %v924 = vsel %vm923, %v719, %v847
    %v926 = vrot.slane %v924, 3
    %v929 = vsel %vm911, %v720, %v848
    %v930 = vsel %vm915, %v720, %v848
    %v932 = vrot.slane %v930, 1
    %v933 = vsel %vm919, %v720, %v848
    %v935 = vrot.slane %v933, 2
    %v936 = vsel %vm923, %v720, %v848
    %v938 = vrot.slane %v936, 3
    %v941 = vsel %vm911, %v721, %v849
    %v942 = vsel %vm915, %v721, %v849
    %v944 = vrot.slane %v942, 1
    %v945 = vsel %vm919, %v721, %v849
    %v947 = vrot.slane %v945, 2
    %v948 = vsel %vm923, %v721, %v849
    %v950 = vrot.slane %v948, 3
    %v953 = vsel %vm911, %v722, %v850
    %v954 = vsel %vm915, %v722, %v850
    %v956 = vrot.slane %v954, 1
    %v957 = vsel %vm919, %v722, %v850
    %v959 = vrot.slane %v957, 2
    %v960 = vsel %vm923, %v722, %v850
    %v962 = vrot.slane %v960, 3
    %v965 = vsel %vm911, %v723, %v851
    %v966 = vsel %vm915, %v723, %v851
    %v968 = vrot.slane %v966, 1
    %v969 = vsel %vm919, %v723, %v851
    %v971 = vrot.slane %v969, 2
    %v972 = vsel %vm923, %v723, %v851
    %v974 = vrot.slane %v972, 3
    %v977 = vsel %vm911, %v724, %v852
    %v978 = vsel %vm915, %v724, %v852
    %v980 = vrot.slane %v978, 1
    %v981 = vsel %vm919, %v724, %v852
    %v983 = vrot.slane %v981, 2
    %v984 = vsel %vm923, %v724, %v852
    %v986 = vrot.slane %v984, 3
    %v989 = vsel %vm911, %v725, %v853
    %v990 = vsel %vm915, %v725, %v853
    %v992 = vrot.slane %v990, 1
    %v993 = vsel %vm919, %v725, %v853
    %v995 = vrot.slane %v993, 2
    %v996 = vsel %vm923, %v725, %v853
    %v998 = vrot.slane %v996, 3
    %v1001 = vsel %vm911, %v726, %v854
    %v1002 = vsel %vm915, %v726, %v854
    %v1004 = vrot.slane %v1002, 1
    %v1005 = vsel %vm919, %v726, %v854
    %v1007 = vrot.slane %v1005, 2
    %v1008 = vsel %vm923, %v726, %v854
    %v1010 = vrot.slane %v1008, 3
    %v1013 = vsel %vm911, %v727, %v855
    %v1014 = vsel %vm915, %v727, %v855
    %v1016 = vrot.slane %v1014, 1
    %v1017 = vsel %vm919, %v727, %v855
    %v1019 = vrot.slane %v1017, 2
    %v1020 = vsel %vm923, %v727, %v855
    %v1022 = vrot.slane %v1020, 3
    %v1025 = vsel %vm911, %v728, %v856
    %v1026 = vsel %vm915, %v728, %v856
    %v1028 = vrot.slane %v1026, 1
    %v1029 = vsel %vm919, %v728, %v856
    %v1031 = vrot.slane %v1029, 2
    %v1032 = vsel %vm923, %v728, %v856
    %v1034 = vrot.slane %v1032, 3
    %v1037 = vsel %vm911, %v729, %v857
    %v1038 = vsel %vm915, %v729, %v857
    %v1040 = vrot.slane %v1038, 1
    %v1041 = vsel %vm919, %v729, %v857
    %v1043 = vrot.slane %v1041, 2
    %v1044 = vsel %vm923, %v729, %v857
    %v1046 = vrot.slane %v1044, 3
    %v1049 = vsel %vm911, %v730, %v858
    %v1050 = vsel %vm915, %v730, %v858
    %v1052 = vrot.slane %v1050, 1
    %v1053 = vsel %vm919, %v730, %v858
    %v1055 = vrot.slane %v1053, 2
    %v1056 = vsel %vm923, %v730, %v858
    %v1058 = vrot.slane %v1056, 3
    %v1061 = vsel %vm911, %v731, %v859
    %v1062 = vsel %vm915, %v731, %v859
    %v1064 = vrot.slane %v1062, 1
    %v1065 = vsel %vm919, %v731, %v859
    %v1067 = vrot.slane %v1065, 2
    %v1068 = vsel %vm923, %v731, %v859
    %v1070 = vrot.slane %v1068, 3
    %v1073 = vsel %vm911, %v732, %v860
    %v1074 = vsel %vm915, %v732, %v860
    %v1076 = vrot.slane %v1074, 1
    %v1077 = vsel %vm919, %v732, %v860
    %v1079 = vrot.slane %v1077, 2
    %v1080 = vsel %vm923, %v732, %v860
    %v1082 = vrot.slane %v1080, 3
    %v1085 = vsel %vm911, %v733, %v861
    %v1086 = vsel %vm915, %v733, %v861
    %v1088 = vrot.slane %v1086, 1
    %v1089 = vsel %vm919, %v733, %v861
    %v1091 = vrot.slane %v1089, 2
    %v1092 = vsel %vm923, %v733, %v861
    %v1094 = vrot.slane %v1092, 3
    %v1097 = vsel %vm911, %v734, %v862
    %v1098 = vsel %vm915, %v734, %v862
    %v1100 = vrot.slane %v1098, 1
    %v1101 = vsel %vm919, %v734, %v862
    %v1103 = vrot.slane %v1101, 2
    %v1104 = vsel %vm923, %v734, %v862
    %v1106 = vrot.slane %v1104, 3
    %v1109 = vsel %vm911, %v735, %v863
    %v1110 = vsel %vm915, %v735, %v863
    %v1112 = vrot.slane %v1110, 1
    %v1113 = vsel %vm919, %v735, %v863
    %v1115 = vrot.slane %v1113, 2
    %v1116 = vsel %vm923, %v735, %v863
    %v1118 = vrot.slane %v1116, 3
    %v1121 = vsel %vm911, %v736, %v864
    %v1122 = vsel %vm915, %v736, %v864
    %v1124 = vrot.slane %v1122, 1
    %v1125 = vsel %vm919, %v736, %v864
    %v1127 = vrot.slane %v1125, 2
    %v1128 = vsel %vm923, %v736, %v864
    %v1130 = vrot.slane %v1128, 3
    %v1133 = vsel %vm911, %v737, %v865
    %v1134 = vsel %vm915, %v737, %v865
    %v1136 = vrot.slane %v1134, 1
    %v1137 = vsel %vm919, %v737, %v865
    %v1139 = vrot.slane %v1137, 2
    %v1140 = vsel %vm923, %v737, %v865
    %v1142 = vrot.slane %v1140, 3
    %v1145 = vsel %vm911, %v738, %v866
    %v1146 = vsel %vm915, %v738, %v866
    %v1148 = vrot.slane %v1146, 1
    %v1149 = vsel %vm919, %v738, %v866
    %v1151 = vrot.slane %v1149, 2
    %v1152 = vsel %vm923, %v738, %v866
    %v1154 = vrot.slane %v1152, 3
    %v1157 = vsel %vm911, %v739, %v867
    %v1158 = vsel %vm915, %v739, %v867
    %v1160 = vrot.slane %v1158, 1
    %v1161 = vsel %vm919, %v739, %v867
    %v1163 = vrot.slane %v1161, 2
    %v1164 = vsel %vm923, %v739, %v867
    %v1166 = vrot.slane %v1164, 3
    %v1169 = vsel %vm911, %v740, %v868
    %v1170 = vsel %vm915, %v740, %v868
    %v1172 = vrot.slane %v1170, 1
    %v1173 = vsel %vm919, %v740, %v868
    %v1175 = vrot.slane %v1173, 2
    %v1176 = vsel %vm923, %v740, %v868
    %v1178 = vrot.slane %v1176, 3
    %v1181 = vsel %vm911, %v741, %v869
    %v1182 = vsel %vm915, %v741, %v869
    %v1184 = vrot.slane %v1182, 1
    %v1185 = vsel %vm919, %v741, %v869
    %v1187 = vrot.slane %v1185, 2
    %v1188 = vsel %vm923, %v741, %v869
    %v1190 = vrot.slane %v1188, 3
    %v1193 = vsel %vm911, %v742, %v870
    %v1194 = vsel %vm915, %v742, %v870
    %v1196 = vrot.slane %v1194, 1
    %v1197 = vsel %vm919, %v742, %v870
    %v1199 = vrot.slane %v1197, 2
    %v1200 = vsel %vm923, %v742, %v870
    %v1202 = vrot.slane %v1200, 3
    %v1205 = vsel %vm911, %v743, %v871
    %v1206 = vsel %vm915, %v743, %v871
    %v1208 = vrot.slane %v1206, 1
    %v1209 = vsel %vm919, %v743, %v871
    %v1211 = vrot.slane %v1209, 2
    %v1212 = vsel %vm923, %v743, %v871
    %v1214 = vrot.slane %v1212, 3
    %v1217 = vsel %vm911, %v744, %v872
    %v1218 = vsel %vm915, %v744, %v872
    %v1220 = vrot.slane %v1218, 1
    %v1221 = vsel %vm919, %v744, %v872
    %v1223 = vrot.slane %v1221, 2
    %v1224 = vsel %vm923, %v744, %v872
    %v1226 = vrot.slane %v1224, 3
    %v1229 = vsel %vm911, %v745, %v873
    %v1230 = vsel %vm915, %v745, %v873
    %v1232 = vrot.slane %v1230, 1
    %v1233 = vsel %vm919, %v745, %v873
    %v1235 = vrot.slane %v1233, 2
    %v1236 = vsel %vm923, %v745, %v873
    %v1238 = vrot.slane %v1236, 3
    %v1241 = vsel %vm911, %v746, %v874
    %v1242 = vsel %vm915, %v746, %v874
    %v1244 = vrot.slane %v1242, 1
    %v1245 = vsel %vm919, %v746, %v874
    %v1247 = vrot.slane %v1245, 2
    %v1248 = vsel %vm923, %v746, %v874
    %v1250 = vrot.slane %v1248, 3
    %v1253 = vsel %vm911, %v747, %v875
    %v1254 = vsel %vm915, %v747, %v875
    %v1256 = vrot.slane %v1254, 1
    %v1257 = vsel %vm919, %v747, %v875
    %v1259 = vrot.slane %v1257, 2
    %v1260 = vsel %vm923, %v747, %v875
    %v1262 = vrot.slane %v1260, 3
    %v1265 = vsel %vm911, %v748, %v876
    %v1266 = vsel %vm915, %v748, %v876
    %v1268 = vrot.slane %v1266, 1
    %v1269 = vsel %vm919, %v748, %v876
    %v1271 = vrot.slane %v1269, 2
    %v1272 = vsel %vm923, %v748, %v876
    %v1274 = vrot.slane %v1272, 3
    %v1277 = vsel %vm911, %v749, %v877
    %v1278 = vsel %vm915, %v749, %v877
    %v1280 = vrot.slane %v1278, 1
    %v1281 = vsel %vm919, %v749, %v877
    %v1283 = vrot.slane %v1281, 2
    %v1284 = vsel %vm923, %v749, %v877
    %v1286 = vrot.slane %v1284, 3
    %v1289 = vsel %vm911, %v750, %v878
    %v1290 = vsel %vm915, %v750, %v878
    %v1292 = vrot.slane %v1290, 1
    %v1293 = vsel %vm919, %v750, %v878
    %v1295 = vrot.slane %v1293, 2
    %v1296 = vsel %vm923, %v750, %v878
    %v1298 = vrot.slane %v1296, 3
    %v1301 = vsel %vm911, %v751, %v879
    %v1302 = vsel %vm915, %v751, %v879
    %v1304 = vrot.slane %v1302, 1
    %v1305 = vsel %vm919, %v751, %v879
    %v1307 = vrot.slane %v1305, 2
    %v1308 = vsel %vm923, %v751, %v879
    %v1310 = vrot.slane %v1308, 3
    %v1313 = vsel %vm911, %v752, %v880
    %v1314 = vsel %vm915, %v752, %v880
    %v1316 = vrot.slane %v1314, 1
    %v1317 = vsel %vm919, %v752, %v880
    %v1319 = vrot.slane %v1317, 2
    %v1320 = vsel %vm923, %v752, %v880
    %v1322 = vrot.slane %v1320, 3
    %v1325 = vsel %vm911, %v753, %v881
    %v1326 = vsel %vm915, %v753, %v881
    %v1328 = vrot.slane %v1326, 1
    %v1329 = vsel %vm919, %v753, %v881
    %v1331 = vrot.slane %v1329, 2
    %v1332 = vsel %vm923, %v753, %v881
    %v1334 = vrot.slane %v1332, 3
    %v1337 = vsel %vm911, %v754, %v882
    %v1338 = vsel %vm915, %v754, %v882
    %v1340 = vrot.slane %v1338, 1
    %v1341 = vsel %vm919, %v754, %v882
    %v1343 = vrot.slane %v1341, 2
    %v1344 = vsel %vm923, %v754, %v882
    %v1346 = vrot.slane %v1344, 3
    %v1349 = vsel %vm911, %v755, %v883
    %v1350 = vsel %vm915, %v755, %v883
    %v1352 = vrot.slane %v1350, 1
    %v1353 = vsel %vm919, %v755, %v883
    %v1355 = vrot.slane %v1353, 2
    %v1356 = vsel %vm923, %v755, %v883
    %v1358 = vrot.slane %v1356, 3
    %v1361 = vsel %vm911, %v756, %v884
    %v1362 = vsel %vm915, %v756, %v884
    %v1364 = vrot.slane %v1362, 1
    %v1365 = vsel %vm919, %v756, %v884
    %v1367 = vrot.slane %v1365, 2
    %v1368 = vsel %vm923, %v756, %v884
    %v1370 = vrot.slane %v1368, 3
    %v1373 = vsel %vm911, %v757, %v885
    %v1374 = vsel %vm915, %v757, %v885
    %v1376 = vrot.slane %v1374, 1
    %v1377 = vsel %vm919, %v757, %v885
    %v1379 = vrot.slane %v1377, 2
    %v1380 = vsel %vm923, %v757, %v885
    %v1382 = vrot.slane %v1380, 3
    %v1385 = vsel %vm911, %v758, %v886
    %v1386 = vsel %vm915, %v758, %v886
    %v1388 = vrot.slane %v1386, 1
    %v1389 = vsel %vm919, %v758, %v886
    %v1391 = vrot.slane %v1389, 2
    %v1392 = vsel %vm923, %v758, %v886
    %v1394 = vrot.slane %v1392, 3
    %v1397 = vsel %vm911, %v759, %v887
    %v1398 = vsel %vm915, %v759, %v887
    %v1400 = vrot.slane %v1398, 1
    %v1401 = vsel %vm919, %v759, %v887
    %v1403 = vrot.slane %v1401, 2
    %v1404 = vsel %vm923, %v759, %v887
    %v1406 = vrot.slane %v1404, 3
    %v1409 = vsel %vm911, %v760, %v888
    %v1410 = vsel %vm915, %v760, %v888
    %v1412 = vrot.slane %v1410, 1
    %v1413 = vsel %vm919, %v760, %v888
    %v1415 = vrot.slane %v1413, 2
    %v1416 = vsel %vm923, %v760, %v888
    %v1418 = vrot.slane %v1416, 3
    %v1421 = vsel %vm911, %v761, %v889
    %v1422 = vsel %vm915, %v761, %v889
    %v1424 = vrot.slane %v1422, 1
    %v1425 = vsel %vm919, %v761, %v889
    %v1427 = vrot.slane %v1425, 2
    %v1428 = vsel %vm923, %v761, %v889
    %v1430 = vrot.slane %v1428, 3
    %v1433 = vsel %vm911, %v762, %v890
    %v1434 = vsel %vm915, %v762, %v890
    %v1436 = vrot.slane %v1434, 1
    %v1437 = vsel %vm919, %v762, %v890
    %v1439 = vrot.slane %v1437, 2
    %v1440 = vsel %vm923, %v762, %v890
    %v1442 = vrot.slane %v1440, 3
    %v1445 = vsel %vm911, %v763, %v891
    %v1446 = vsel %vm915, %v763, %v891
    %v1448 = vrot.slane %v1446, 1
    %v1449 = vsel %vm919, %v763, %v891
    %v1451 = vrot.slane %v1449, 2
    %v1452 = vsel %vm923, %v763, %v891
    %v1454 = vrot.slane %v1452, 3
    %v1457 = vsel %vm911, %v764, %v892
    %v1458 = vsel %vm915, %v764, %v892
    %v1460 = vrot.slane %v1458, 1
    %v1461 = vsel %vm919, %v764, %v892
    %v1463 = vrot.slane %v1461, 2
    %v1464 = vsel %vm923, %v764, %v892
    %v1466 = vrot.slane %v1464, 3
    %v1469 = vsel %vm911, %v765, %v893
    %v1470 = vsel %vm915, %v765, %v893
    %v1472 = vrot.slane %v1470, 1
    %v1473 = vsel %vm919, %v765, %v893
    %v1475 = vrot.slane %v1473, 2
    %v1476 = vsel %vm923, %v765, %v893
    %v1478 = vrot.slane %v1476, 3
    %v1481 = vsel %vm911, %v766, %v894
    %v1482 = vsel %vm915, %v766, %v894
    %v1484 = vrot.slane %v1482, 1
    %v1485 = vsel %vm919, %v766, %v894
    %v1487 = vrot.slane %v1485, 2
    %v1488 = vsel %vm923, %v766, %v894
    %v1490 = vrot.slane %v1488, 3
    %v1493 = vsel %vm911, %v767, %v895
    %v1494 = vsel %vm915, %v767, %v895
    %v1496 = vrot.slane %v1494, 1
    %v1497 = vsel %vm919, %v767, %v895
    %v1499 = vrot.slane %v1497, 2
    %v1500 = vsel %vm923, %v767, %v895
    %v1502 = vrot.slane %v1500, 3
    %v1505 = vsel %vm911, %v768, %v896
    %v1506 = vsel %vm915, %v768, %v896
    %v1508 = vrot.slane %v1506, 1
    %v1509 = vsel %vm919, %v768, %v896
    %v1511 = vrot.slane %v1509, 2
    %v1512 = vsel %vm923, %v768, %v896
    %v1514 = vrot.slane %v1512, 3
    %v1517 = vsel %vm911, %v769, %v897
    %v1518 = vsel %vm915, %v769, %v897
    %v1520 = vrot.slane %v1518, 1
    %v1521 = vsel %vm919, %v769, %v897
    %v1523 = vrot.slane %v1521, 2
    %v1524 = vsel %vm923, %v769, %v897
    %v1526 = vrot.slane %v1524, 3
    %v1529 = vsel %vm911, %v770, %v898
    %v1530 = vsel %vm915, %v770, %v898
    %v1532 = vrot.slane %v1530, 1
    %v1533 = vsel %vm919, %v770, %v898
    %v1535 = vrot.slane %v1533, 2
    %v1536 = vsel %vm923, %v770, %v898
    %v1538 = vrot.slane %v1536, 3
    %v1541 = vsel %vm911, %v771, %v899
    %v1542 = vsel %vm915, %v771, %v899
    %v1544 = vrot.slane %v1542, 1
    %v1545 = vsel %vm919, %v771, %v899
    %v1547 = vrot.slane %v1545, 2
    %v1548 = vsel %vm923, %v771, %v899
    %v1550 = vrot.slane %v1548, 3
    %v1553 = vsel %vm911, %v772, %v900
    %v1554 = vsel %vm915, %v772, %v900
    %v1556 = vrot.slane %v1554, 1
    %v1557 = vsel %vm919, %v772, %v900
    %v1559 = vrot.slane %v1557, 2
    %v1560 = vsel %vm923, %v772, %v900
    %v1562 = vrot.slane %v1560, 3
    %v1565 = vsel %vm911, %v773, %v901
    %v1566 = vsel %vm915, %v773, %v901
    %v1568 = vrot.slane %v1566, 1
    %v1569 = vsel %vm919, %v773, %v901
    %v1571 = vrot.slane %v1569, 2
    %v1572 = vsel %vm923, %v773, %v901
    %v1574 = vrot.slane %v1572, 3
    %v1577 = vsel %vm911, %v774, %v902
    %v1578 = vsel %vm915, %v774, %v902
    %v1580 = vrot.slane %v1578, 1
    %v1581 = vsel %vm919, %v774, %v902
    %v1583 = vrot.slane %v1581, 2
    %v1584 = vsel %vm923, %v774, %v902
    %v1586 = vrot.slane %v1584, 3
    %v1589 = vsel %vm911, %v775, %v903
    %v1590 = vsel %vm915, %v775, %v903
    %v1592 = vrot.slane %v1590, 1
    %v1593 = vsel %vm919, %v775, %v903
    %v1595 = vrot.slane %v1593, 2
    %v1596 = vsel %vm923, %v775, %v903
    %v1598 = vrot.slane %v1596, 3
    %v1601 = vsel %vm911, %v776, %v904
    %v1602 = vsel %vm915, %v776, %v904
    %v1604 = vrot.slane %v1602, 1
    %v1605 = vsel %vm919, %v776, %v904
    %v1607 = vrot.slane %v1605, 2
    %v1608 = vsel %vm923, %v776, %v904
    %v1610 = vrot.slane %v1608, 3
    %v1613 = vsel %vm911, %v777, %v905
    %v1614 = vsel %vm915, %v777, %v905
    %v1616 = vrot.slane %v1614, 1
    %v1617 = vsel %vm919, %v777, %v905
    %v1619 = vrot.slane %v1617, 2
    %v1620 = vsel %vm923, %v777, %v905
    %v1622 = vrot.slane %v1620, 3
    %v1625 = vsel %vm911, %v778, %v906
    %v1626 = vsel %vm915, %v778, %v906
    %v1628 = vrot.slane %v1626, 1
    %v1629 = vsel %vm919, %v778, %v906
    %v1631 = vrot.slane %v1629, 2
    %v1632 = vsel %vm923, %v778, %v906
    %v1634 = vrot.slane %v1632, 3
    %v1637 = vsel %vm911, %v779, %v907
    %v1638 = vsel %vm915, %v779, %v907
    %v1640 = vrot.slane %v1638, 1
    %v1641 = vsel %vm919, %v779, %v907
    %v1643 = vrot.slane %v1641, 2
    %v1644 = vsel %vm923, %v779, %v907
    %v1646 = vrot.slane %v1644, 3
    %v1649 = vsel %vm911, %v780, %v908
    %v1650 = vsel %vm915, %v780, %v908
    %v1652 = vrot.slane %v1650, 1
    %v1653 = vsel %vm919, %v780, %v908
    %v1655 = vrot.slane %v1653, 2
    %v1656 = vsel %vm923, %v780, %v908
    %v1658 = vrot.slane %v1656, 3
    %v1661 = vsel %vm911, %v781, %v909
    %v1662 = vsel %vm915, %v781, %v909
    %v1664 = vrot.slane %v1662, 1
    %v1665 = vsel %vm919, %v781, %v909
    %v1667 = vrot.slane %v1665, 2
    %v1668 = vsel %vm923, %v781, %v909
    %v1670 = vrot.slane %v1668, 3
    %v1673 = vsel %vm911, %v782, %v910
    %v1674 = vsel %vm915, %v782, %v910
    %v1676 = vrot.slane %v1674, 1
    %v1677 = vsel %vm919, %v782, %v910
    %v1679 = vrot.slane %v1677, 2
    %v1680 = vsel %vm923, %v782, %v910
    %v1682 = vrot.slane %v1680, 3
    %v1939 = vunpack.c.l.bf16 %v914
    %v1940 = vunpack.c.l.bf16 %v918
    %v1941 = vunpack.c.l.bf16 %v922
    %v1942 = vunpack.c.l.bf16 %v926
    %v1943 = vunpack.c.l.bf16 %v929
    %v1944 = vunpack.c.l.bf16 %v932
    %v1945 = vunpack.c.l.bf16 %v935
    %v1946 = vunpack.c.l.bf16 %v938
    %v1947 = vunpack.c.l.bf16 %v941
    %v1948 = vunpack.c.l.bf16 %v944
    %v1949 = vunpack.c.l.bf16 %v947
    %v1950 = vunpack.c.l.bf16 %v950
    %v1951 = vunpack.c.l.bf16 %v953
    %v1952 = vunpack.c.l.bf16 %v956
    %v1953 = vunpack.c.l.bf16 %v959
    %v1954 = vunpack.c.l.bf16 %v962
    %v1955 = vunpack.c.l.bf16 %v965
    %v1956 = vunpack.c.l.bf16 %v968
    %v1957 = vunpack.c.l.bf16 %v971
    %v1958 = vunpack.c.l.bf16 %v974
    %v1959 = vunpack.c.l.bf16 %v977
    %v1960 = vunpack.c.l.bf16 %v980
    %v1961 = vunpack.c.l.bf16 %v983
    %v1962 = vunpack.c.l.bf16 %v986
    %v1963 = vunpack.c.l.bf16 %v989
    %v1964 = vunpack.c.l.bf16 %v992
    %v1965 = vunpack.c.l.bf16 %v995
    %v1966 = vunpack.c.l.bf16 %v998
    %v1967 = vunpack.c.l.bf16 %v1001
    %v1968 = vunpack.c.l.bf16 %v1004
    %v1969 = vunpack.c.l.bf16 %v1007
    %v1970 = vunpack.c.l.bf16 %v1010
    %v1971 = vunpack.c.l.bf16 %v1013
    %v1972 = vunpack.c.l.bf16 %v1016
    %v1973 = vunpack.c.l.bf16 %v1019
    %v1974 = vunpack.c.l.bf16 %v1022
    %v1975 = vunpack.c.l.bf16 %v1025
    %v1976 = vunpack.c.l.bf16 %v1028
    %v1977 = vunpack.c.l.bf16 %v1031
    %v1978 = vunpack.c.l.bf16 %v1034
    %v1979 = vunpack.c.l.bf16 %v1037
    %v1980 = vunpack.c.l.bf16 %v1040
    %v1981 = vunpack.c.l.bf16 %v1043
    %v1982 = vunpack.c.l.bf16 %v1046
    %v1983 = vunpack.c.l.bf16 %v1049
    %v1984 = vunpack.c.l.bf16 %v1052
    %v1985 = vunpack.c.l.bf16 %v1055
    %v1986 = vunpack.c.l.bf16 %v1058
    %v1987 = vunpack.c.l.bf16 %v1061
    %v1988 = vunpack.c.l.bf16 %v1064
    %v1989 = vunpack.c.l.bf16 %v1067
    %v1990 = vunpack.c.l.bf16 %v1070
    %v1991 = vunpack.c.l.bf16 %v1073
    %v1992 = vunpack.c.l.bf16 %v1076
    %v1993 = vunpack.c.l.bf16 %v1079
    %v1994 = vunpack.c.l.bf16 %v1082
    %v1995 = vunpack.c.l.bf16 %v1085
    %v1996 = vunpack.c.l.bf16 %v1088
    %v1997 = vunpack.c.l.bf16 %v1091
    %v1998 = vunpack.c.l.bf16 %v1094
    %v1999 = vunpack.c.l.bf16 %v1097
    %v2000 = vunpack.c.l.bf16 %v1100
    %v2001 = vunpack.c.l.bf16 %v1103
    %v2002 = vunpack.c.l.bf16 %v1106
    %v2003 = vunpack.c.l.bf16 %v1109
    %v2004 = vunpack.c.l.bf16 %v1112
    %v2005 = vunpack.c.l.bf16 %v1115
    %v2006 = vunpack.c.l.bf16 %v1118
    %v2007 = vunpack.c.l.bf16 %v1121
    %v2008 = vunpack.c.l.bf16 %v1124
    %v2009 = vunpack.c.l.bf16 %v1127
    %v2010 = vunpack.c.l.bf16 %v1130
    %v2011 = vunpack.c.l.bf16 %v1133
    %v2012 = vunpack.c.l.bf16 %v1136
    %v2013 = vunpack.c.l.bf16 %v1139
    %v2014 = vunpack.c.l.bf16 %v1142
    %v2015 = vunpack.c.l.bf16 %v1145
    %v2016 = vunpack.c.l.bf16 %v1148
    %v2017 = vunpack.c.l.bf16 %v1151
    %v2018 = vunpack.c.l.bf16 %v1154
    %v2019 = vunpack.c.l.bf16 %v1157
    %v2020 = vunpack.c.l.bf16 %v1160
    %v2021 = vunpack.c.l.bf16 %v1163
    %v2022 = vunpack.c.l.bf16 %v1166
    %v2023 = vunpack.c.l.bf16 %v1169
    %v2024 = vunpack.c.l.bf16 %v1172
    %v2025 = vunpack.c.l.bf16 %v1175
    %v2026 = vunpack.c.l.bf16 %v1178
    %v2027 = vunpack.c.l.bf16 %v1181
    %v2028 = vunpack.c.l.bf16 %v1184
    %v2029 = vunpack.c.l.bf16 %v1187
    %v2030 = vunpack.c.l.bf16 %v1190
    %v2031 = vunpack.c.l.bf16 %v1193
    %v2032 = vunpack.c.l.bf16 %v1196
    %v2033 = vunpack.c.l.bf16 %v1199
    %v2034 = vunpack.c.l.bf16 %v1202
    %v2035 = vunpack.c.l.bf16 %v1205
    %v2036 = vunpack.c.l.bf16 %v1208
    %v2037 = vunpack.c.l.bf16 %v1211
    %v2038 = vunpack.c.l.bf16 %v1214
    %v2039 = vunpack.c.l.bf16 %v1217
    %v2040 = vunpack.c.l.bf16 %v1220
    %v2041 = vunpack.c.l.bf16 %v1223
    %v2042 = vunpack.c.l.bf16 %v1226
    %v2043 = vunpack.c.l.bf16 %v1229
    %v2044 = vunpack.c.l.bf16 %v1232
    %v2045 = vunpack.c.l.bf16 %v1235
    %v2046 = vunpack.c.l.bf16 %v1238
    %v2047 = vunpack.c.l.bf16 %v1241
    %v2048 = vunpack.c.l.bf16 %v1244
    %v2049 = vunpack.c.l.bf16 %v1247
    %v2050 = vunpack.c.l.bf16 %v1250
    %v2051 = vunpack.c.l.bf16 %v1253
    %v2052 = vunpack.c.l.bf16 %v1256
    %v2053 = vunpack.c.l.bf16 %v1259
    %v2054 = vunpack.c.l.bf16 %v1262
    %v2055 = vunpack.c.l.bf16 %v1265
    %v2056 = vunpack.c.l.bf16 %v1268
    %v2057 = vunpack.c.l.bf16 %v1271
    %v2058 = vunpack.c.l.bf16 %v1274
    %v2059 = vunpack.c.l.bf16 %v1277
    %v2060 = vunpack.c.l.bf16 %v1280
    %v2061 = vunpack.c.l.bf16 %v1283
    %v2062 = vunpack.c.l.bf16 %v1286
    %v2063 = vunpack.c.l.bf16 %v1289
    %v2064 = vunpack.c.l.bf16 %v1292
    %v2065 = vunpack.c.l.bf16 %v1295
    %v2066 = vunpack.c.l.bf16 %v1298
    %v2067 = vunpack.c.l.bf16 %v1301
    %v2068 = vunpack.c.l.bf16 %v1304
    %v2069 = vunpack.c.l.bf16 %v1307
    %v2070 = vunpack.c.l.bf16 %v1310
    %v2071 = vunpack.c.l.bf16 %v1313
    %v2072 = vunpack.c.l.bf16 %v1316
    %v2073 = vunpack.c.l.bf16 %v1319
    %v2074 = vunpack.c.l.bf16 %v1322
    %v2075 = vunpack.c.l.bf16 %v1325
    %v2076 = vunpack.c.l.bf16 %v1328
    %v2077 = vunpack.c.l.bf16 %v1331
    %v2078 = vunpack.c.l.bf16 %v1334
    %v2079 = vunpack.c.l.bf16 %v1337
    %v2080 = vunpack.c.l.bf16 %v1340
    %v2081 = vunpack.c.l.bf16 %v1343
    %v2082 = vunpack.c.l.bf16 %v1346
    %v2083 = vunpack.c.l.bf16 %v1349
    %v2084 = vunpack.c.l.bf16 %v1352
    %v2085 = vunpack.c.l.bf16 %v1355
    %v2086 = vunpack.c.l.bf16 %v1358
    %v2087 = vunpack.c.l.bf16 %v1361
    %v2088 = vunpack.c.l.bf16 %v1364
    %v2089 = vunpack.c.l.bf16 %v1367
    %v2090 = vunpack.c.l.bf16 %v1370
    %v2091 = vunpack.c.l.bf16 %v1373
    %v2092 = vunpack.c.l.bf16 %v1376
    %v2093 = vunpack.c.l.bf16 %v1379
    %v2094 = vunpack.c.l.bf16 %v1382
    %v2095 = vunpack.c.l.bf16 %v1385
    %v2096 = vunpack.c.l.bf16 %v1388
    %v2097 = vunpack.c.l.bf16 %v1391
    %v2098 = vunpack.c.l.bf16 %v1394
    %v2099 = vunpack.c.l.bf16 %v1397
    %v2100 = vunpack.c.l.bf16 %v1400
    %v2101 = vunpack.c.l.bf16 %v1403
    %v2102 = vunpack.c.l.bf16 %v1406
    %v2103 = vunpack.c.l.bf16 %v1409
    %v2104 = vunpack.c.l.bf16 %v1412
    %v2105 = vunpack.c.l.bf16 %v1415
    %v2106 = vunpack.c.l.bf16 %v1418
    %v2107 = vunpack.c.l.bf16 %v1421
    %v2108 = vunpack.c.l.bf16 %v1424
    %v2109 = vunpack.c.l.bf16 %v1427
    %v2110 = vunpack.c.l.bf16 %v1430
    %v2111 = vunpack.c.l.bf16 %v1433
    %v2112 = vunpack.c.l.bf16 %v1436
    %v2113 = vunpack.c.l.bf16 %v1439
    %v2114 = vunpack.c.l.bf16 %v1442
    %v2115 = vunpack.c.l.bf16 %v1445
    %v2116 = vunpack.c.l.bf16 %v1448
    %v2117 = vunpack.c.l.bf16 %v1451
    %v2118 = vunpack.c.l.bf16 %v1454
    %v2119 = vunpack.c.l.bf16 %v1457
    %v2120 = vunpack.c.l.bf16 %v1460
    %v2121 = vunpack.c.l.bf16 %v1463
    %v2122 = vunpack.c.l.bf16 %v1466
    %v2123 = vunpack.c.l.bf16 %v1469
    %v2124 = vunpack.c.l.bf16 %v1472
    %v2125 = vunpack.c.l.bf16 %v1475
    %v2126 = vunpack.c.l.bf16 %v1478
    %v2127 = vunpack.c.l.bf16 %v1481
    %v2128 = vunpack.c.l.bf16 %v1484
    %v2129 = vunpack.c.l.bf16 %v1487
    %v2130 = vunpack.c.l.bf16 %v1490
    %v2131 = vunpack.c.l.bf16 %v1493
    %v2132 = vunpack.c.l.bf16 %v1496
    %v2133 = vunpack.c.l.bf16 %v1499
    %v2134 = vunpack.c.l.bf16 %v1502
    %v2135 = vunpack.c.l.bf16 %v1505
    %v2136 = vunpack.c.l.bf16 %v1508
    %v2137 = vunpack.c.l.bf16 %v1511
    %v2138 = vunpack.c.l.bf16 %v1514
    %v2139 = vunpack.c.l.bf16 %v1517
    %v2140 = vunpack.c.l.bf16 %v1520
    %v2141 = vunpack.c.l.bf16 %v1523
    %v2142 = vunpack.c.l.bf16 %v1526
    %v2143 = vunpack.c.l.bf16 %v1529
    %v2144 = vunpack.c.l.bf16 %v1532
    %v2145 = vunpack.c.l.bf16 %v1535
    %v2146 = vunpack.c.l.bf16 %v1538
    %v2147 = vunpack.c.l.bf16 %v1541
    %v2148 = vunpack.c.l.bf16 %v1544
    %v2149 = vunpack.c.l.bf16 %v1547
    %v2150 = vunpack.c.l.bf16 %v1550
    %v2151 = vunpack.c.l.bf16 %v1553
    %v2152 = vunpack.c.l.bf16 %v1556
    %v2153 = vunpack.c.l.bf16 %v1559
    %v2154 = vunpack.c.l.bf16 %v1562
    %v2155 = vunpack.c.l.bf16 %v1565
    %v2156 = vunpack.c.l.bf16 %v1568
    %v2157 = vunpack.c.l.bf16 %v1571
    %v2158 = vunpack.c.l.bf16 %v1574
    %v2159 = vunpack.c.l.bf16 %v1577
    %v2160 = vunpack.c.l.bf16 %v1580
    %v2161 = vunpack.c.l.bf16 %v1583
    %v2162 = vunpack.c.l.bf16 %v1586
    %v2163 = vunpack.c.l.bf16 %v1589
    %v2164 = vunpack.c.l.bf16 %v1592
    %v2165 = vunpack.c.l.bf16 %v1595
    %v2166 = vunpack.c.l.bf16 %v1598
    %v2167 = vunpack.c.l.bf16 %v1601
    %v2168 = vunpack.c.l.bf16 %v1604
    %v2169 = vunpack.c.l.bf16 %v1607
    %v2170 = vunpack.c.l.bf16 %v1610
    %v2171 = vunpack.c.l.bf16 %v1613
    %v2172 = vunpack.c.l.bf16 %v1616
    %v2173 = vunpack.c.l.bf16 %v1619
    %v2174 = vunpack.c.l.bf16 %v1622
    %v2175 = vunpack.c.l.bf16 %v1625
    %v2176 = vunpack.c.l.bf16 %v1628
    %v2177 = vunpack.c.l.bf16 %v1631
    %v2178 = vunpack.c.l.bf16 %v1634
    %v2179 = vunpack.c.l.bf16 %v1637
    %v2180 = vunpack.c.l.bf16 %v1640
    %v2181 = vunpack.c.l.bf16 %v1643
    %v2182 = vunpack.c.l.bf16 %v1646
    %v2183 = vunpack.c.l.bf16 %v1649
    %v2184 = vunpack.c.l.bf16 %v1652
    %v2185 = vunpack.c.l.bf16 %v1655
    %v2186 = vunpack.c.l.bf16 %v1658
    %v2187 = vunpack.c.l.bf16 %v1661
    %v2188 = vunpack.c.l.bf16 %v1664
    %v2189 = vunpack.c.l.bf16 %v1667
    %v2190 = vunpack.c.l.bf16 %v1670
    %v2191 = vunpack.c.l.bf16 %v1673
    %v2192 = vunpack.c.l.bf16 %v1676
    %v2193 = vunpack.c.l.bf16 %v1679
    %v2194 = vunpack.c.l.bf16 %v1682
    %v2451 = vrot.slane %v1939, 7
    %v2452 = vrot.slane %v2451, 2
    %v2453 = vrot.slane %v1940, 7
    %v2454 = vrot.slane %v2453, 2
    %v2455 = vrot.slane %v1941, 7
    %v2456 = vrot.slane %v2455, 2
    %v2457 = vrot.slane %v1942, 7
    %v2458 = vrot.slane %v2457, 2
    %v2459 = vrot.slane %v1943, 7
    %v2460 = vrot.slane %v2459, 2
    %v2461 = vrot.slane %v1944, 7
    %v2462 = vrot.slane %v2461, 2
    %v2463 = vrot.slane %v1945, 7
    %v2464 = vrot.slane %v2463, 2
    %v2465 = vrot.slane %v1946, 7
    %v2466 = vrot.slane %v2465, 2
    %v2467 = vrot.slane %v1947, 7
    %v2468 = vrot.slane %v2467, 2
    %v2469 = vrot.slane %v1948, 7
    %v2470 = vrot.slane %v2469, 2
    %v2471 = vrot.slane %v1949, 7
    %v2472 = vrot.slane %v2471, 2
    %v2473 = vrot.slane %v1950, 7
    %v2474 = vrot.slane %v2473, 2
    %v2475 = vrot.slane %v1951, 7
    %v2476 = vrot.slane %v2475, 2
    %v2477 = vrot.slane %v1952, 7
    %v2478 = vrot.slane %v2477, 2
    %v2479 = vrot.slane %v1953, 7
    %v2480 = vrot.slane %v2479, 2
    %v2481 = vrot.slane %v1954, 7
    %v2482 = vrot.slane %v2481, 2
    %v2483 = vrot.slane %v1955, 7
    %v2484 = vrot.slane %v2483, 2
    %v2485 = vrot.slane %v1956, 7
    %v2486 = vrot.slane %v2485, 2
    %v2487 = vrot.slane %v1957, 7
    %v2488 = vrot.slane %v2487, 2
    %v2489 = vrot.slane %v1958, 7
    %v2490 = vrot.slane %v2489, 2
    %v2491 = vrot.slane %v1959, 7
    %v2492 = vrot.slane %v2491, 2
    %v2493 = vrot.slane %v1960, 7
    %v2494 = vrot.slane %v2493, 2
    %v2495 = vrot.slane %v1961, 7
    %v2496 = vrot.slane %v2495, 2
    %v2497 = vrot.slane %v1962, 7
    %v2498 = vrot.slane %v2497, 2
    %v2499 = vrot.slane %v1963, 7
    %v2500 = vrot.slane %v2499, 2
    %v2501 = vrot.slane %v1964, 7
    %v2502 = vrot.slane %v2501, 2
    %v2503 = vrot.slane %v1965, 7
    %v2504 = vrot.slane %v2503, 2
    %v2505 = vrot.slane %v1966, 7
    %v2506 = vrot.slane %v2505, 2
    %v2507 = vrot.slane %v1967, 7
    %v2508 = vrot.slane %v2507, 2
    %v2509 = vrot.slane %v1968, 7
    %v2510 = vrot.slane %v2509, 2
    %v2511 = vrot.slane %v1969, 7
    %v2512 = vrot.slane %v2511, 2
    %v2513 = vrot.slane %v1970, 7
    %v2514 = vrot.slane %v2513, 2
    %v2515 = vrot.slane %v1971, 7
    %v2516 = vrot.slane %v2515, 2
    %v2517 = vrot.slane %v1972, 7
    %v2518 = vrot.slane %v2517, 2
    %v2519 = vrot.slane %v1973, 7
    %v2520 = vrot.slane %v2519, 2
    %v2521 = vrot.slane %v1974, 7
    %v2522 = vrot.slane %v2521, 2
    %v2523 = vrot.slane %v1975, 7
    %v2524 = vrot.slane %v2523, 2
    %v2525 = vrot.slane %v1976, 7
    %v2526 = vrot.slane %v2525, 2
    %v2527 = vrot.slane %v1977, 7
    %v2528 = vrot.slane %v2527, 2
    %v2529 = vrot.slane %v1978, 7
    %v2530 = vrot.slane %v2529, 2
    %v2531 = vrot.slane %v1979, 7
    %v2532 = vrot.slane %v2531, 2
    %v2533 = vrot.slane %v1980, 7
    %v2534 = vrot.slane %v2533, 2
    %v2535 = vrot.slane %v1981, 7
    %v2536 = vrot.slane %v2535, 2
    %v2537 = vrot.slane %v1982, 7
    %v2538 = vrot.slane %v2537, 2
    %v2539 = vrot.slane %v1983, 7
    %v2540 = vrot.slane %v2539, 2
    %v2541 = vrot.slane %v1984, 7
    %v2542 = vrot.slane %v2541, 2
    %v2543 = vrot.slane %v1985, 7
    %v2544 = vrot.slane %v2543, 2
    %v2545 = vrot.slane %v1986, 7
    %v2546 = vrot.slane %v2545, 2
    %v2547 = vrot.slane %v1987, 7
    %v2548 = vrot.slane %v2547, 2
    %v2549 = vrot.slane %v1988, 7
    %v2550 = vrot.slane %v2549, 2
    %v2551 = vrot.slane %v1989, 7
    %v2552 = vrot.slane %v2551, 2
    %v2553 = vrot.slane %v1990, 7
    %v2554 = vrot.slane %v2553, 2
    %v2555 = vrot.slane %v1991, 7
    %v2556 = vrot.slane %v2555, 2
    %v2557 = vrot.slane %v1992, 7
    %v2558 = vrot.slane %v2557, 2
    %v2559 = vrot.slane %v1993, 7
    %v2560 = vrot.slane %v2559, 2
    %v2561 = vrot.slane %v1994, 7
    %v2562 = vrot.slane %v2561, 2
    %v2563 = vrot.slane %v1995, 7
    %v2564 = vrot.slane %v2563, 2
    %v2565 = vrot.slane %v1996, 7
    %v2566 = vrot.slane %v2565, 2
    %v2567 = vrot.slane %v1997, 7
    %v2568 = vrot.slane %v2567, 2
    %v2569 = vrot.slane %v1998, 7
    %v2570 = vrot.slane %v2569, 2
    %v2571 = vrot.slane %v1999, 7
    %v2572 = vrot.slane %v2571, 2
    %v2573 = vrot.slane %v2000, 7
    %v2574 = vrot.slane %v2573, 2
    %v2575 = vrot.slane %v2001, 7
    %v2576 = vrot.slane %v2575, 2
    %v2577 = vrot.slane %v2002, 7
    %v2578 = vrot.slane %v2577, 2
    %v2579 = vrot.slane %v2003, 7
    %v2580 = vrot.slane %v2579, 2
    %v2581 = vrot.slane %v2004, 7
    %v2582 = vrot.slane %v2581, 2
    %v2583 = vrot.slane %v2005, 7
    %v2584 = vrot.slane %v2583, 2
    %v2585 = vrot.slane %v2006, 7
    %v2586 = vrot.slane %v2585, 2
    %v2587 = vrot.slane %v2007, 7
    %v2588 = vrot.slane %v2587, 2
    %v2589 = vrot.slane %v2008, 7
    %v2590 = vrot.slane %v2589, 2
    %v2591 = vrot.slane %v2009, 7
    %v2592 = vrot.slane %v2591, 2
    %v2593 = vrot.slane %v2010, 7
    %v2594 = vrot.slane %v2593, 2
    %v2595 = vrot.slane %v2011, 7
    %v2596 = vrot.slane %v2595, 2
    %v2597 = vrot.slane %v2012, 7
    %v2598 = vrot.slane %v2597, 2
    %v2599 = vrot.slane %v2013, 7
    %v2600 = vrot.slane %v2599, 2
    %v2601 = vrot.slane %v2014, 7
    %v2602 = vrot.slane %v2601, 2
    %v2603 = vrot.slane %v2015, 7
    %v2604 = vrot.slane %v2603, 2
    %v2605 = vrot.slane %v2016, 7
    %v2606 = vrot.slane %v2605, 2
    %v2607 = vrot.slane %v2017, 7
    %v2608 = vrot.slane %v2607, 2
    %v2609 = vrot.slane %v2018, 7
    %v2610 = vrot.slane %v2609, 2
    %v2611 = vrot.slane %v2019, 7
    %v2612 = vrot.slane %v2611, 2
    %v2613 = vrot.slane %v2020, 7
    %v2614 = vrot.slane %v2613, 2
    %v2615 = vrot.slane %v2021, 7
    %v2616 = vrot.slane %v2615, 2
    %v2617 = vrot.slane %v2022, 7
    %v2618 = vrot.slane %v2617, 2
    %v2619 = vrot.slane %v2023, 7
    %v2620 = vrot.slane %v2619, 2
    %v2621 = vrot.slane %v2024, 7
    %v2622 = vrot.slane %v2621, 2
    %v2623 = vrot.slane %v2025, 7
    %v2624 = vrot.slane %v2623, 2
    %v2625 = vrot.slane %v2026, 7
    %v2626 = vrot.slane %v2625, 2
    %v2627 = vrot.slane %v2027, 7
    %v2628 = vrot.slane %v2627, 2
    %v2629 = vrot.slane %v2028, 7
    %v2630 = vrot.slane %v2629, 2
    %v2631 = vrot.slane %v2029, 7
    %v2632 = vrot.slane %v2631, 2
    %v2633 = vrot.slane %v2030, 7
    %v2634 = vrot.slane %v2633, 2
    %v2635 = vrot.slane %v2031, 7
    %v2636 = vrot.slane %v2635, 2
    %v2637 = vrot.slane %v2032, 7
    %v2638 = vrot.slane %v2637, 2
    %v2639 = vrot.slane %v2033, 7
    %v2640 = vrot.slane %v2639, 2
    %v2641 = vrot.slane %v2034, 7
    %v2642 = vrot.slane %v2641, 2
    %v2643 = vrot.slane %v2035, 7
    %v2644 = vrot.slane %v2643, 2
    %v2645 = vrot.slane %v2036, 7
    %v2646 = vrot.slane %v2645, 2
    %v2647 = vrot.slane %v2037, 7
    %v2648 = vrot.slane %v2647, 2
    %v2649 = vrot.slane %v2038, 7
    %v2650 = vrot.slane %v2649, 2
    %v2651 = vrot.slane %v2039, 7
    %v2652 = vrot.slane %v2651, 2
    %v2653 = vrot.slane %v2040, 7
    %v2654 = vrot.slane %v2653, 2
    %v2655 = vrot.slane %v2041, 7
    %v2656 = vrot.slane %v2655, 2
    %v2657 = vrot.slane %v2042, 7
    %v2658 = vrot.slane %v2657, 2
    %v2659 = vrot.slane %v2043, 7
    %v2660 = vrot.slane %v2659, 2
    %v2661 = vrot.slane %v2044, 7
    %v2662 = vrot.slane %v2661, 2
    %v2663 = vrot.slane %v2045, 7
    %v2664 = vrot.slane %v2663, 2
    %v2665 = vrot.slane %v2046, 7
    %v2666 = vrot.slane %v2665, 2
    %v2667 = vrot.slane %v2047, 7
    %v2668 = vrot.slane %v2667, 2
    %v2669 = vrot.slane %v2048, 7
    %v2670 = vrot.slane %v2669, 2
    %v2671 = vrot.slane %v2049, 7
    %v2672 = vrot.slane %v2671, 2
    %v2673 = vrot.slane %v2050, 7
    %v2674 = vrot.slane %v2673, 2
    %v2675 = vrot.slane %v2051, 7
    %v2676 = vrot.slane %v2675, 2
    %v2677 = vrot.slane %v2052, 7
    %v2678 = vrot.slane %v2677, 2
    %v2679 = vrot.slane %v2053, 7
    %v2680 = vrot.slane %v2679, 2
    %v2681 = vrot.slane %v2054, 7
    %v2682 = vrot.slane %v2681, 2
    %v2683 = vrot.slane %v2055, 7
    %v2684 = vrot.slane %v2683, 2
    %v2685 = vrot.slane %v2056, 7
    %v2686 = vrot.slane %v2685, 2
    %v2687 = vrot.slane %v2057, 7
    %v2688 = vrot.slane %v2687, 2
    %v2689 = vrot.slane %v2058, 7
    %v2690 = vrot.slane %v2689, 2
    %v2691 = vrot.slane %v2059, 7
    %v2692 = vrot.slane %v2691, 2
    %v2693 = vrot.slane %v2060, 7
    %v2694 = vrot.slane %v2693, 2
    %v2695 = vrot.slane %v2061, 7
    %v2696 = vrot.slane %v2695, 2
    %v2697 = vrot.slane %v2062, 7
    %v2698 = vrot.slane %v2697, 2
    %v2699 = vrot.slane %v2063, 7
    %v2700 = vrot.slane %v2699, 2
    %v2701 = vrot.slane %v2064, 7
    %v2702 = vrot.slane %v2701, 2
    %v2703 = vrot.slane %v2065, 7
    %v2704 = vrot.slane %v2703, 2
    %v2705 = vrot.slane %v2066, 7
    %v2706 = vrot.slane %v2705, 2
    %v2707 = vrot.slane %v2067, 7
    %v2708 = vrot.slane %v2707, 2
    %v2709 = vrot.slane %v2068, 7
    %v2710 = vrot.slane %v2709, 2
    %v2711 = vrot.slane %v2069, 7
    %v2712 = vrot.slane %v2711, 2
    %v2713 = vrot.slane %v2070, 7
    %v2714 = vrot.slane %v2713, 2
    %v2715 = vrot.slane %v2071, 7
    %v2716 = vrot.slane %v2715, 2
    %v2717 = vrot.slane %v2072, 7
    %v2718 = vrot.slane %v2717, 2
    %v2719 = vrot.slane %v2073, 7
    %v2720 = vrot.slane %v2719, 2
    %v2721 = vrot.slane %v2074, 7
    %v2722 = vrot.slane %v2721, 2
    %v2723 = vrot.slane %v2075, 7
    %v2724 = vrot.slane %v2723, 2
    %v2725 = vrot.slane %v2076, 7
    %v2726 = vrot.slane %v2725, 2
    %v2727 = vrot.slane %v2077, 7
    %v2728 = vrot.slane %v2727, 2
    %v2729 = vrot.slane %v2078, 7
    %v2730 = vrot.slane %v2729, 2
    %v2731 = vrot.slane %v2079, 7
    %v2732 = vrot.slane %v2731, 2
    %v2733 = vrot.slane %v2080, 7
    %v2734 = vrot.slane %v2733, 2
    %v2735 = vrot.slane %v2081, 7
    %v2736 = vrot.slane %v2735, 2
    %v2737 = vrot.slane %v2082, 7
    %v2738 = vrot.slane %v2737, 2
    %v2739 = vrot.slane %v2083, 7
    %v2740 = vrot.slane %v2739, 2
    %v2741 = vrot.slane %v2084, 7
    %v2742 = vrot.slane %v2741, 2
    %v2743 = vrot.slane %v2085, 7
    %v2744 = vrot.slane %v2743, 2
    %v2745 = vrot.slane %v2086, 7
    %v2746 = vrot.slane %v2745, 2
    %v2747 = vrot.slane %v2087, 7
    %v2748 = vrot.slane %v2747, 2
    %v2749 = vrot.slane %v2088, 7
    %v2750 = vrot.slane %v2749, 2
    %v2751 = vrot.slane %v2089, 7
    %v2752 = vrot.slane %v2751, 2
    %v2753 = vrot.slane %v2090, 7
    %v2754 = vrot.slane %v2753, 2
    %v2755 = vrot.slane %v2091, 7
    %v2756 = vrot.slane %v2755, 2
    %v2757 = vrot.slane %v2092, 7
    %v2758 = vrot.slane %v2757, 2
    %v2759 = vrot.slane %v2093, 7
    %v2760 = vrot.slane %v2759, 2
    %v2761 = vrot.slane %v2094, 7
    %v2762 = vrot.slane %v2761, 2
    %v2763 = vrot.slane %v2095, 7
    %v2764 = vrot.slane %v2763, 2
    %v2765 = vrot.slane %v2096, 7
    %v2766 = vrot.slane %v2765, 2
    %v2767 = vrot.slane %v2097, 7
    %v2768 = vrot.slane %v2767, 2
    %v2769 = vrot.slane %v2098, 7
    %v2770 = vrot.slane %v2769, 2
    %v2771 = vrot.slane %v2099, 7
    %v2772 = vrot.slane %v2771, 2
    %v2773 = vrot.slane %v2100, 7
    %v2774 = vrot.slane %v2773, 2
    %v2775 = vrot.slane %v2101, 7
    %v2776 = vrot.slane %v2775, 2
    %v2777 = vrot.slane %v2102, 7
    %v2778 = vrot.slane %v2777, 2
    %v2779 = vrot.slane %v2103, 7
    %v2780 = vrot.slane %v2779, 2
    %v2781 = vrot.slane %v2104, 7
    %v2782 = vrot.slane %v2781, 2
    %v2783 = vrot.slane %v2105, 7
    %v2784 = vrot.slane %v2783, 2
    %v2785 = vrot.slane %v2106, 7
    %v2786 = vrot.slane %v2785, 2
    %v2787 = vrot.slane %v2107, 7
    %v2788 = vrot.slane %v2787, 2
    %v2789 = vrot.slane %v2108, 7
    %v2790 = vrot.slane %v2789, 2
    %v2791 = vrot.slane %v2109, 7
    %v2792 = vrot.slane %v2791, 2
    %v2793 = vrot.slane %v2110, 7
    %v2794 = vrot.slane %v2793, 2
    %v2795 = vrot.slane %v2111, 7
    %v2796 = vrot.slane %v2795, 2
    %v2797 = vrot.slane %v2112, 7
    %v2798 = vrot.slane %v2797, 2
    %v2799 = vrot.slane %v2113, 7
    %v2800 = vrot.slane %v2799, 2
    %v2801 = vrot.slane %v2114, 7
    %v2802 = vrot.slane %v2801, 2
    %v2803 = vrot.slane %v2115, 7
    %v2804 = vrot.slane %v2803, 2
    %v2805 = vrot.slane %v2116, 7
    %v2806 = vrot.slane %v2805, 2
    %v2807 = vrot.slane %v2117, 7
    %v2808 = vrot.slane %v2807, 2
    %v2809 = vrot.slane %v2118, 7
    %v2810 = vrot.slane %v2809, 2
    %v2811 = vrot.slane %v2119, 7
    %v2812 = vrot.slane %v2811, 2
    %v2813 = vrot.slane %v2120, 7
    %v2814 = vrot.slane %v2813, 2
    %v2815 = vrot.slane %v2121, 7
    %v2816 = vrot.slane %v2815, 2
    %v2817 = vrot.slane %v2122, 7
    %v2818 = vrot.slane %v2817, 2
    %v2819 = vrot.slane %v2123, 7
    %v2820 = vrot.slane %v2819, 2
    %v2821 = vrot.slane %v2124, 7
    %v2822 = vrot.slane %v2821, 2
    %v2823 = vrot.slane %v2125, 7
    %v2824 = vrot.slane %v2823, 2
    %v2825 = vrot.slane %v2126, 7
    %v2826 = vrot.slane %v2825, 2
    %v2827 = vrot.slane %v2127, 7
    %v2828 = vrot.slane %v2827, 2
    %v2829 = vrot.slane %v2128, 7
    %v2830 = vrot.slane %v2829, 2
    %v2831 = vrot.slane %v2129, 7
    %v2832 = vrot.slane %v2831, 2
    %v2833 = vrot.slane %v2130, 7
    %v2834 = vrot.slane %v2833, 2
    %v2835 = vrot.slane %v2131, 7
    %v2836 = vrot.slane %v2835, 2
    %v2837 = vrot.slane %v2132, 7
    %v2838 = vrot.slane %v2837, 2
    %v2839 = vrot.slane %v2133, 7
    %v2840 = vrot.slane %v2839, 2
    %v2841 = vrot.slane %v2134, 7
    %v2842 = vrot.slane %v2841, 2
    %v2843 = vrot.slane %v2135, 7
    %v2844 = vrot.slane %v2843, 2
    %v2845 = vrot.slane %v2136, 7
    %v2846 = vrot.slane %v2845, 2
    %v2847 = vrot.slane %v2137, 7
    %v2848 = vrot.slane %v2847, 2
    %v2849 = vrot.slane %v2138, 7
    %v2850 = vrot.slane %v2849, 2
    %v2851 = vrot.slane %v2139, 7
    %v2852 = vrot.slane %v2851, 2
    %v2853 = vrot.slane %v2140, 7
    %v2854 = vrot.slane %v2853, 2
    %v2855 = vrot.slane %v2141, 7
    %v2856 = vrot.slane %v2855, 2
    %v2857 = vrot.slane %v2142, 7
    %v2858 = vrot.slane %v2857, 2
    %v2859 = vrot.slane %v2143, 7
    %v2860 = vrot.slane %v2859, 2
    %v2861 = vrot.slane %v2144, 7
    %v2862 = vrot.slane %v2861, 2
    %v2863 = vrot.slane %v2145, 7
    %v2864 = vrot.slane %v2863, 2
    %v2865 = vrot.slane %v2146, 7
    %v2866 = vrot.slane %v2865, 2
    %v2867 = vrot.slane %v2147, 7
    %v2868 = vrot.slane %v2867, 2
    %v2869 = vrot.slane %v2148, 7
    %v2870 = vrot.slane %v2869, 2
    %v2871 = vrot.slane %v2149, 7
    %v2872 = vrot.slane %v2871, 2
    %v2873 = vrot.slane %v2150, 7
    %v2874 = vrot.slane %v2873, 2
    %v2875 = vrot.slane %v2151, 7
    %v2876 = vrot.slane %v2875, 2
    %v2877 = vrot.slane %v2152, 7
    %v2878 = vrot.slane %v2877, 2
    %v2879 = vrot.slane %v2153, 7
    %v2880 = vrot.slane %v2879, 2
    %v2881 = vrot.slane %v2154, 7
    %v2882 = vrot.slane %v2881, 2
    %v2883 = vrot.slane %v2155, 7
    %v2884 = vrot.slane %v2883, 2
    %v2885 = vrot.slane %v2156, 7
    %v2886 = vrot.slane %v2885, 2
    %v2887 = vrot.slane %v2157, 7
    %v2888 = vrot.slane %v2887, 2
    %v2889 = vrot.slane %v2158, 7
    %v2890 = vrot.slane %v2889, 2
    %v2891 = vrot.slane %v2159, 7
    %v2892 = vrot.slane %v2891, 2
    %v2893 = vrot.slane %v2160, 7
    %v2894 = vrot.slane %v2893, 2
    %v2895 = vrot.slane %v2161, 7
    %v2896 = vrot.slane %v2895, 2
    %v2897 = vrot.slane %v2162, 7
    %v2898 = vrot.slane %v2897, 2
    %v2899 = vrot.slane %v2163, 7
    %v2900 = vrot.slane %v2899, 2
    %v2901 = vrot.slane %v2164, 7
    %v2902 = vrot.slane %v2901, 2
    %v2903 = vrot.slane %v2165, 7
    %v2904 = vrot.slane %v2903, 2
    %v2905 = vrot.slane %v2166, 7
    %v2906 = vrot.slane %v2905, 2
    %v2907 = vrot.slane %v2167, 7
    %v2908 = vrot.slane %v2907, 2
    %v2909 = vrot.slane %v2168, 7
    %v2910 = vrot.slane %v2909, 2
    %v2911 = vrot.slane %v2169, 7
    %v2912 = vrot.slane %v2911, 2
    %v2913 = vrot.slane %v2170, 7
    %v2914 = vrot.slane %v2913, 2
    %v2915 = vrot.slane %v2171, 7
    %v2916 = vrot.slane %v2915, 2
    %v2917 = vrot.slane %v2172, 7
    %v2918 = vrot.slane %v2917, 2
    %v2919 = vrot.slane %v2173, 7
    %v2920 = vrot.slane %v2919, 2
    %v2921 = vrot.slane %v2174, 7
    %v2922 = vrot.slane %v2921, 2
    %v2923 = vrot.slane %v2175, 7
    %v2924 = vrot.slane %v2923, 2
    %v2925 = vrot.slane %v2176, 7
    %v2926 = vrot.slane %v2925, 2
    %v2927 = vrot.slane %v2177, 7
    %v2928 = vrot.slane %v2927, 2
    %v2929 = vrot.slane %v2178, 7
    %v2930 = vrot.slane %v2929, 2
    %v2931 = vrot.slane %v2179, 7
    %v2932 = vrot.slane %v2931, 2
    %v2933 = vrot.slane %v2180, 7
    %v2934 = vrot.slane %v2933, 2
    %v2935 = vrot.slane %v2181, 7
    %v2936 = vrot.slane %v2935, 2
    %v2937 = vrot.slane %v2182, 7
    %v2938 = vrot.slane %v2937, 2
    %v2939 = vrot.slane %v2183, 7
    %v2940 = vrot.slane %v2939, 2
    %v2941 = vrot.slane %v2184, 7
    %v2942 = vrot.slane %v2941, 2
    %v2943 = vrot.slane %v2185, 7
    %v2944 = vrot.slane %v2943, 2
    %v2945 = vrot.slane %v2186, 7
    %v2946 = vrot.slane %v2945, 2
    %v2947 = vrot.slane %v2187, 7
    %v2948 = vrot.slane %v2947, 2
    %v2949 = vrot.slane %v2188, 7
    %v2950 = vrot.slane %v2949, 2
    %v2951 = vrot.slane %v2189, 7
    %v2952 = vrot.slane %v2951, 2
    %v2953 = vrot.slane %v2190, 7
    %v2954 = vrot.slane %v2953, 2
    %v2955 = vrot.slane %v2191, 7
    %v2956 = vrot.slane %v2955, 2
    %v2957 = vrot.slane %v2192, 7
    %v2958 = vrot.slane %v2957, 2
    %v2959 = vrot.slane %v2193, 7
    %v2960 = vrot.slane %v2959, 2
    %v2961 = vrot.slane %v2194, 7
    %v2962 = vrot.slane %v2961, 2
    %v3219 = vmax.f32 %v1939, %v2452
    %v3220 = vmax.f32 %v1940, %v2454
    %v3221 = vmax.f32 %v1941, %v2456
    %v3222 = vmax.f32 %v1942, %v2458
    %v3223 = vmax.f32 %v1943, %v2460
    %v3224 = vmax.f32 %v1944, %v2462
    %v3225 = vmax.f32 %v1945, %v2464
    %v3226 = vmax.f32 %v1946, %v2466
    %v3227 = vmax.f32 %v1947, %v2468
    %v3228 = vmax.f32 %v1948, %v2470
    %v3229 = vmax.f32 %v1949, %v2472
    %v3230 = vmax.f32 %v1950, %v2474
    %v3231 = vmax.f32 %v1951, %v2476
    %v3232 = vmax.f32 %v1952, %v2478
    %v3233 = vmax.f32 %v1953, %v2480
    %v3234 = vmax.f32 %v1954, %v2482
    %v3235 = vmax.f32 %v1955, %v2484
    %v3236 = vmax.f32 %v1956, %v2486
    %v3237 = vmax.f32 %v1957, %v2488
    %v3238 = vmax.f32 %v1958, %v2490
    %v3239 = vmax.f32 %v1959, %v2492
    %v3240 = vmax.f32 %v1960, %v2494
    %v3241 = vmax.f32 %v1961, %v2496
    %v3242 = vmax.f32 %v1962, %v2498
    %v3243 = vmax.f32 %v1963, %v2500
    %v3244 = vmax.f32 %v1964, %v2502
    %v3245 = vmax.f32 %v1965, %v2504
    %v3246 = vmax.f32 %v1966, %v2506
    %v3247 = vmax.f32 %v1967, %v2508
    %v3248 = vmax.f32 %v1968, %v2510
    %v3249 = vmax.f32 %v1969, %v2512
    %v3250 = vmax.f32 %v1970, %v2514
    %v3251 = vmax.f32 %v1971, %v2516
    %v3252 = vmax.f32 %v1972, %v2518
    %v3253 = vmax.f32 %v1973, %v2520
    %v3254 = vmax.f32 %v1974, %v2522
    %v3255 = vmax.f32 %v1975, %v2524
    %v3256 = vmax.f32 %v1976, %v2526
    %v3257 = vmax.f32 %v1977, %v2528
    %v3258 = vmax.f32 %v1978, %v2530
    %v3259 = vmax.f32 %v1979, %v2532
    %v3260 = vmax.f32 %v1980, %v2534
    %v3261 = vmax.f32 %v1981, %v2536
    %v3262 = vmax.f32 %v1982, %v2538
    %v3263 = vmax.f32 %v1983, %v2540
    %v3264 = vmax.f32 %v1984, %v2542
    %v3265 = vmax.f32 %v1985, %v2544
    %v3266 = vmax.f32 %v1986, %v2546
    %v3267 = vmax.f32 %v1987, %v2548
    %v3268 = vmax.f32 %v1988, %v2550
    %v3269 = vmax.f32 %v1989, %v2552
    %v3270 = vmax.f32 %v1990, %v2554
    %v3271 = vmax.f32 %v1991, %v2556
    %v3272 = vmax.f32 %v1992, %v2558
    %v3273 = vmax.f32 %v1993, %v2560
    %v3274 = vmax.f32 %v1994, %v2562
    %v3275 = vmax.f32 %v1995, %v2564
    %v3276 = vmax.f32 %v1996, %v2566
    %v3277 = vmax.f32 %v1997, %v2568
    %v3278 = vmax.f32 %v1998, %v2570
    %v3279 = vmax.f32 %v1999, %v2572
    %v3280 = vmax.f32 %v2000, %v2574
    %v3281 = vmax.f32 %v2001, %v2576
    %v3282 = vmax.f32 %v2002, %v2578
    %v3283 = vmax.f32 %v2003, %v2580
    %v3284 = vmax.f32 %v2004, %v2582
    %v3285 = vmax.f32 %v2005, %v2584
    %v3286 = vmax.f32 %v2006, %v2586
    %v3287 = vmax.f32 %v2007, %v2588
    %v3288 = vmax.f32 %v2008, %v2590
    %v3289 = vmax.f32 %v2009, %v2592
    %v3290 = vmax.f32 %v2010, %v2594
    %v3291 = vmax.f32 %v2011, %v2596
    %v3292 = vmax.f32 %v2012, %v2598
    %v3293 = vmax.f32 %v2013, %v2600
    %v3294 = vmax.f32 %v2014, %v2602
    %v3295 = vmax.f32 %v2015, %v2604
    %v3296 = vmax.f32 %v2016, %v2606
    %v3297 = vmax.f32 %v2017, %v2608
    %v3298 = vmax.f32 %v2018, %v2610
    %v3299 = vmax.f32 %v2019, %v2612
    %v3300 = vmax.f32 %v2020, %v2614
    %v3301 = vmax.f32 %v2021, %v2616
    %v3302 = vmax.f32 %v2022, %v2618
    %v3303 = vmax.f32 %v2023, %v2620
    %v3304 = vmax.f32 %v2024, %v2622
    %v3305 = vmax.f32 %v2025, %v2624
    %v3306 = vmax.f32 %v2026, %v2626
    %v3307 = vmax.f32 %v2027, %v2628
    %v3308 = vmax.f32 %v2028, %v2630
    %v3309 = vmax.f32 %v2029, %v2632
    %v3310 = vmax.f32 %v2030, %v2634
    %v3311 = vmax.f32 %v2031, %v2636
    %v3312 = vmax.f32 %v2032, %v2638
    %v3313 = vmax.f32 %v2033, %v2640
    %v3314 = vmax.f32 %v2034, %v2642
    %v3315 = vmax.f32 %v2035, %v2644
    %v3316 = vmax.f32 %v2036, %v2646
    %v3317 = vmax.f32 %v2037, %v2648
    %v3318 = vmax.f32 %v2038, %v2650
    %v3319 = vmax.f32 %v2039, %v2652
    %v3320 = vmax.f32 %v2040, %v2654
    %v3321 = vmax.f32 %v2041, %v2656
    %v3322 = vmax.f32 %v2042, %v2658
    %v3323 = vmax.f32 %v2043, %v2660
    %v3324 = vmax.f32 %v2044, %v2662
    %v3325 = vmax.f32 %v2045, %v2664
    %v3326 = vmax.f32 %v2046, %v2666
    %v3327 = vmax.f32 %v2047, %v2668
    %v3328 = vmax.f32 %v2048, %v2670
    %v3329 = vmax.f32 %v2049, %v2672
    %v3330 = vmax.f32 %v2050, %v2674
    %v3331 = vmax.f32 %v2051, %v2676
    %v3332 = vmax.f32 %v2052, %v2678
    %v3333 = vmax.f32 %v2053, %v2680
    %v3334 = vmax.f32 %v2054, %v2682
    %v3335 = vmax.f32 %v2055, %v2684
    %v3336 = vmax.f32 %v2056, %v2686
    %v3337 = vmax.f32 %v2057, %v2688
    %v3338 = vmax.f32 %v2058, %v2690
    %v3339 = vmax.f32 %v2059, %v2692
    %v3340 = vmax.f32 %v2060, %v2694
    %v3341 = vmax.f32 %v2061, %v2696
    %v3342 = vmax.f32 %v2062, %v2698
    %v3343 = vmax.f32 %v2063, %v2700
    %v3344 = vmax.f32 %v2064, %v2702
    %v3345 = vmax.f32 %v2065, %v2704
    %v3346 = vmax.f32 %v2066, %v2706
    %v3347 = vmax.f32 %v2067, %v2708
    %v3348 = vmax.f32 %v2068, %v2710
    %v3349 = vmax.f32 %v2069, %v2712
    %v3350 = vmax.f32 %v2070, %v2714
    %v3351 = vmax.f32 %v2071, %v2716
    %v3352 = vmax.f32 %v2072, %v2718
    %v3353 = vmax.f32 %v2073, %v2720
    %v3354 = vmax.f32 %v2074, %v2722
    %v3355 = vmax.f32 %v2075, %v2724
    %v3356 = vmax.f32 %v2076, %v2726
    %v3357 = vmax.f32 %v2077, %v2728
    %v3358 = vmax.f32 %v2078, %v2730
    %v3359 = vmax.f32 %v2079, %v2732
    %v3360 = vmax.f32 %v2080, %v2734
    %v3361 = vmax.f32 %v2081, %v2736
    %v3362 = vmax.f32 %v2082, %v2738
    %v3363 = vmax.f32 %v2083, %v2740
    %v3364 = vmax.f32 %v2084, %v2742
    %v3365 = vmax.f32 %v2085, %v2744
    %v3366 = vmax.f32 %v2086, %v2746
    %v3367 = vmax.f32 %v2087, %v2748
    %v3368 = vmax.f32 %v2088, %v2750
    %v3369 = vmax.f32 %v2089, %v2752
    %v3370 = vmax.f32 %v2090, %v2754
    %v3371 = vmax.f32 %v2091, %v2756
    %v3372 = vmax.f32 %v2092, %v2758
    %v3373 = vmax.f32 %v2093, %v2760
    %v3374 = vmax.f32 %v2094, %v2762
    %v3375 = vmax.f32 %v2095, %v2764
    %v3376 = vmax.f32 %v2096, %v2766
    %v3377 = vmax.f32 %v2097, %v2768
    %v3378 = vmax.f32 %v2098, %v2770
    %v3379 = vmax.f32 %v2099, %v2772
    %v3380 = vmax.f32 %v2100, %v2774
    %v3381 = vmax.f32 %v2101, %v2776
    %v3382 = vmax.f32 %v2102, %v2778
    %v3383 = vmax.f32 %v2103, %v2780
    %v3384 = vmax.f32 %v2104, %v2782
    %v3385 = vmax.f32 %v2105, %v2784
    %v3386 = vmax.f32 %v2106, %v2786
    %v3387 = vmax.f32 %v2107, %v2788
    %v3388 = vmax.f32 %v2108, %v2790
    %v3389 = vmax.f32 %v2109, %v2792
    %v3390 = vmax.f32 %v2110, %v2794
    %v3391 = vmax.f32 %v2111, %v2796
    %v3392 = vmax.f32 %v2112, %v2798
    %v3393 = vmax.f32 %v2113, %v2800
    %v3394 = vmax.f32 %v2114, %v2802
    %v3395 = vmax.f32 %v2115, %v2804
    %v3396 = vmax.f32 %v2116, %v2806
    %v3397 = vmax.f32 %v2117, %v2808
    %v3398 = vmax.f32 %v2118, %v2810
    %v3399 = vmax.f32 %v2119, %v2812
    %v3400 = vmax.f32 %v2120, %v2814
    %v3401 = vmax.f32 %v2121, %v2816
    %v3402 = vmax.f32 %v2122, %v2818
    %v3403 = vmax.f32 %v2123, %v2820
    %v3404 = vmax.f32 %v2124, %v2822
    %v3405 = vmax.f32 %v2125, %v2824
    %v3406 = vmax.f32 %v2126, %v2826
    %v3407 = vmax.f32 %v2127, %v2828
    %v3408 = vmax.f32 %v2128, %v2830
    %v3409 = vmax.f32 %v2129, %v2832
    %v3410 = vmax.f32 %v2130, %v2834
    %v3411 = vmax.f32 %v2131, %v2836
    %v3412 = vmax.f32 %v2132, %v2838
    %v3413 = vmax.f32 %v2133, %v2840
    %v3414 = vmax.f32 %v2134, %v2842
    %v3415 = vmax.f32 %v2135, %v2844
    %v3416 = vmax.f32 %v2136, %v2846
    %v3417 = vmax.f32 %v2137, %v2848
    %v3418 = vmax.f32 %v2138, %v2850
    %v3419 = vmax.f32 %v2139, %v2852
    %v3420 = vmax.f32 %v2140, %v2854
    %v3421 = vmax.f32 %v2141, %v2856
    %v3422 = vmax.f32 %v2142, %v2858
    %v3423 = vmax.f32 %v2143, %v2860
    %v3424 = vmax.f32 %v2144, %v2862
    %v3425 = vmax.f32 %v2145, %v2864
    %v3426 = vmax.f32 %v2146, %v2866
    %v3427 = vmax.f32 %v2147, %v2868
    %v3428 = vmax.f32 %v2148, %v2870
    %v3429 = vmax.f32 %v2149, %v2872
    %v3430 = vmax.f32 %v2150, %v2874
    %v3431 = vmax.f32 %v2151, %v2876
    %v3432 = vmax.f32 %v2152, %v2878
    %v3433 = vmax.f32 %v2153, %v2880
    %v3434 = vmax.f32 %v2154, %v2882
    %v3435 = vmax.f32 %v2155, %v2884
    %v3436 = vmax.f32 %v2156, %v2886
    %v3437 = vmax.f32 %v2157, %v2888
    %v3438 = vmax.f32 %v2158, %v2890
    %v3439 = vmax.f32 %v2159, %v2892
    %v3440 = vmax.f32 %v2160, %v2894
    %v3441 = vmax.f32 %v2161, %v2896
    %v3442 = vmax.f32 %v2162, %v2898
    %v3443 = vmax.f32 %v2163, %v2900
    %v3444 = vmax.f32 %v2164, %v2902
    %v3445 = vmax.f32 %v2165, %v2904
    %v3446 = vmax.f32 %v2166, %v2906
    %v3447 = vmax.f32 %v2167, %v2908
    %v3448 = vmax.f32 %v2168, %v2910
    %v3449 = vmax.f32 %v2169, %v2912
    %v3450 = vmax.f32 %v2170, %v2914
    %v3451 = vmax.f32 %v2171, %v2916
    %v3452 = vmax.f32 %v2172, %v2918
    %v3453 = vmax.f32 %v2173, %v2920
    %v3454 = vmax.f32 %v2174, %v2922
    %v3455 = vmax.f32 %v2175, %v2924
    %v3456 = vmax.f32 %v2176, %v2926
    %v3457 = vmax.f32 %v2177, %v2928
    %v3458 = vmax.f32 %v2178, %v2930
    %v3459 = vmax.f32 %v2179, %v2932
    %v3460 = vmax.f32 %v2180, %v2934
    %v3461 = vmax.f32 %v2181, %v2936
    %v3462 = vmax.f32 %v2182, %v2938
    %v3463 = vmax.f32 %v2183, %v2940
    %v3464 = vmax.f32 %v2184, %v2942
    %v3465 = vmax.f32 %v2185, %v2944
    %v3466 = vmax.f32 %v2186, %v2946
    %v3467 = vmax.f32 %v2187, %v2948
    %v3468 = vmax.f32 %v2188, %v2950
    %v3469 = vmax.f32 %v2189, %v2952
    %v3470 = vmax.f32 %v2190, %v2954
    %v3471 = vmax.f32 %v2191, %v2956
    %v3472 = vmax.f32 %v2192, %v2958
    %v3473 = vmax.f32 %v2193, %v2960
    %v3474 = vmax.f32 %v2194, %v2962
    %v3475 = vpack.c.bf16 %v3219, %v3219
    %v3476 = vpack.c.bf16 %v3220, %v3220
    %v3477 = vpack.c.bf16 %v3221, %v3221
    %v3478 = vpack.c.bf16 %v3222, %v3222
    %v3479 = vpack.c.bf16 %v3223, %v3223
    %v3480 = vpack.c.bf16 %v3224, %v3224
    %v3481 = vpack.c.bf16 %v3225, %v3225
    %v3482 = vpack.c.bf16 %v3226, %v3226
    %v3483 = vpack.c.bf16 %v3227, %v3227
    %v3484 = vpack.c.bf16 %v3228, %v3228
    %v3485 = vpack.c.bf16 %v3229, %v3229
    %v3486 = vpack.c.bf16 %v3230, %v3230
    %v3487 = vpack.c.bf16 %v3231, %v3231
    %v3488 = vpack.c.bf16 %v3232, %v3232
    %v3489 = vpack.c.bf16 %v3233, %v3233
    %v3490 = vpack.c.bf16 %v3234, %v3234
    %v3491 = vpack.c.bf16 %v3235, %v3235
    %v3492 = vpack.c.bf16 %v3236, %v3236
    %v3493 = vpack.c.bf16 %v3237, %v3237
    %v3494 = vpack.c.bf16 %v3238, %v3238
    %v3495 = vpack.c.bf16 %v3239, %v3239
    %v3496 = vpack.c.bf16 %v3240, %v3240
    %v3497 = vpack.c.bf16 %v3241, %v3241
    %v3498 = vpack.c.bf16 %v3242, %v3242
    %v3499 = vpack.c.bf16 %v3243, %v3243
    %v3500 = vpack.c.bf16 %v3244, %v3244
    %v3501 = vpack.c.bf16 %v3245, %v3245
    %v3502 = vpack.c.bf16 %v3246, %v3246
    %v3503 = vpack.c.bf16 %v3247, %v3247
    %v3504 = vpack.c.bf16 %v3248, %v3248
    %v3505 = vpack.c.bf16 %v3249, %v3249
    %v3506 = vpack.c.bf16 %v3250, %v3250
    %v3507 = vpack.c.bf16 %v3251, %v3251
    %v3508 = vpack.c.bf16 %v3252, %v3252
    %v3509 = vpack.c.bf16 %v3253, %v3253
    %v3510 = vpack.c.bf16 %v3254, %v3254
    %v3511 = vpack.c.bf16 %v3255, %v3255
    %v3512 = vpack.c.bf16 %v3256, %v3256
    %v3513 = vpack.c.bf16 %v3257, %v3257
    %v3514 = vpack.c.bf16 %v3258, %v3258
    %v3515 = vpack.c.bf16 %v3259, %v3259
    %v3516 = vpack.c.bf16 %v3260, %v3260
    %v3517 = vpack.c.bf16 %v3261, %v3261
    %v3518 = vpack.c.bf16 %v3262, %v3262
    %v3519 = vpack.c.bf16 %v3263, %v3263
    %v3520 = vpack.c.bf16 %v3264, %v3264
    %v3521 = vpack.c.bf16 %v3265, %v3265
    %v3522 = vpack.c.bf16 %v3266, %v3266
    %v3523 = vpack.c.bf16 %v3267, %v3267
    %v3524 = vpack.c.bf16 %v3268, %v3268
    %v3525 = vpack.c.bf16 %v3269, %v3269
    %v3526 = vpack.c.bf16 %v3270, %v3270
    %v3527 = vpack.c.bf16 %v3271, %v3271
    %v3528 = vpack.c.bf16 %v3272, %v3272
    %v3529 = vpack.c.bf16 %v3273, %v3273
    %v3530 = vpack.c.bf16 %v3274, %v3274
    %v3531 = vpack.c.bf16 %v3275, %v3275
    %v3532 = vpack.c.bf16 %v3276, %v3276
    %v3533 = vpack.c.bf16 %v3277, %v3277
    %v3534 = vpack.c.bf16 %v3278, %v3278
    %v3535 = vpack.c.bf16 %v3279, %v3279
    %v3536 = vpack.c.bf16 %v3280, %v3280
    %v3537 = vpack.c.bf16 %v3281, %v3281
    %v3538 = vpack.c.bf16 %v3282, %v3282
    %v3539 = vpack.c.bf16 %v3283, %v3283
    %v3540 = vpack.c.bf16 %v3284, %v3284
    %v3541 = vpack.c.bf16 %v3285, %v3285
    %v3542 = vpack.c.bf16 %v3286, %v3286
    %v3543 = vpack.c.bf16 %v3287, %v3287
    %v3544 = vpack.c.bf16 %v3288, %v3288
    %v3545 = vpack.c.bf16 %v3289, %v3289
    %v3546 = vpack.c.bf16 %v3290, %v3290
    %v3547 = vpack.c.bf16 %v3291, %v3291
    %v3548 = vpack.c.bf16 %v3292, %v3292
    %v3549 = vpack.c.bf16 %v3293, %v3293
    %v3550 = vpack.c.bf16 %v3294, %v3294
    %v3551 = vpack.c.bf16 %v3295, %v3295
    %v3552 = vpack.c.bf16 %v3296, %v3296
    %v3553 = vpack.c.bf16 %v3297, %v3297
    %v3554 = vpack.c.bf16 %v3298, %v3298
    %v3555 = vpack.c.bf16 %v3299, %v3299
    %v3556 = vpack.c.bf16 %v3300, %v3300
    %v3557 = vpack.c.bf16 %v3301, %v3301
    %v3558 = vpack.c.bf16 %v3302, %v3302
    %v3559 = vpack.c.bf16 %v3303, %v3303
    %v3560 = vpack.c.bf16 %v3304, %v3304
    %v3561 = vpack.c.bf16 %v3305, %v3305
    %v3562 = vpack.c.bf16 %v3306, %v3306
    %v3563 = vpack.c.bf16 %v3307, %v3307
    %v3564 = vpack.c.bf16 %v3308, %v3308
    %v3565 = vpack.c.bf16 %v3309, %v3309
    %v3566 = vpack.c.bf16 %v3310, %v3310
    %v3567 = vpack.c.bf16 %v3311, %v3311
    %v3568 = vpack.c.bf16 %v3312, %v3312
    %v3569 = vpack.c.bf16 %v3313, %v3313
    %v3570 = vpack.c.bf16 %v3314, %v3314
    %v3571 = vpack.c.bf16 %v3315, %v3315
    %v3572 = vpack.c.bf16 %v3316, %v3316
    %v3573 = vpack.c.bf16 %v3317, %v3317
    %v3574 = vpack.c.bf16 %v3318, %v3318
    %v3575 = vpack.c.bf16 %v3319, %v3319
    %v3576 = vpack.c.bf16 %v3320, %v3320
    %v3577 = vpack.c.bf16 %v3321, %v3321
    %v3578 = vpack.c.bf16 %v3322, %v3322
    %v3579 = vpack.c.bf16 %v3323, %v3323
    %v3580 = vpack.c.bf16 %v3324, %v3324
    %v3581 = vpack.c.bf16 %v3325, %v3325
    %v3582 = vpack.c.bf16 %v3326, %v3326
    %v3583 = vpack.c.bf16 %v3327, %v3327
    %v3584 = vpack.c.bf16 %v3328, %v3328
    %v3585 = vpack.c.bf16 %v3329, %v3329
    %v3586 = vpack.c.bf16 %v3330, %v3330
    %v3587 = vpack.c.bf16 %v3331, %v3331
    %v3588 = vpack.c.bf16 %v3332, %v3332
    %v3589 = vpack.c.bf16 %v3333, %v3333
    %v3590 = vpack.c.bf16 %v3334, %v3334
    %v3591 = vpack.c.bf16 %v3335, %v3335
    %v3592 = vpack.c.bf16 %v3336, %v3336
    %v3593 = vpack.c.bf16 %v3337, %v3337
    %v3594 = vpack.c.bf16 %v3338, %v3338
    %v3595 = vpack.c.bf16 %v3339, %v3339
    %v3596 = vpack.c.bf16 %v3340, %v3340
    %v3597 = vpack.c.bf16 %v3341, %v3341
    %v3598 = vpack.c.bf16 %v3342, %v3342
    %v3599 = vpack.c.bf16 %v3343, %v3343
    %v3600 = vpack.c.bf16 %v3344, %v3344
    %v3601 = vpack.c.bf16 %v3345, %v3345
    %v3602 = vpack.c.bf16 %v3346, %v3346
    %v3603 = vpack.c.bf16 %v3347, %v3347
    %v3604 = vpack.c.bf16 %v3348, %v3348
    %v3605 = vpack.c.bf16 %v3349, %v3349
    %v3606 = vpack.c.bf16 %v3350, %v3350
    %v3607 = vpack.c.bf16 %v3351, %v3351
    %v3608 = vpack.c.bf16 %v3352, %v3352
    %v3609 = vpack.c.bf16 %v3353, %v3353
    %v3610 = vpack.c.bf16 %v3354, %v3354
    %v3611 = vpack.c.bf16 %v3355, %v3355
    %v3612 = vpack.c.bf16 %v3356, %v3356
    %v3613 = vpack.c.bf16 %v3357, %v3357
    %v3614 = vpack.c.bf16 %v3358, %v3358
    %v3615 = vpack.c.bf16 %v3359, %v3359
    %v3616 = vpack.c.bf16 %v3360, %v3360
    %v3617 = vpack.c.bf16 %v3361, %v3361
    %v3618 = vpack.c.bf16 %v3362, %v3362
    %v3619 = vpack.c.bf16 %v3363, %v3363
    %v3620 = vpack.c.bf16 %v3364, %v3364
    %v3621 = vpack.c.bf16 %v3365, %v3365
    %v3622 = vpack.c.bf16 %v3366, %v3366
    %v3623 = vpack.c.bf16 %v3367, %v3367
    %v3624 = vpack.c.bf16 %v3368, %v3368
    %v3625 = vpack.c.bf16 %v3369, %v3369
    %v3626 = vpack.c.bf16 %v3370, %v3370
    %v3627 = vpack.c.bf16 %v3371, %v3371
    %v3628 = vpack.c.bf16 %v3372, %v3372
    %v3629 = vpack.c.bf16 %v3373, %v3373
    %v3630 = vpack.c.bf16 %v3374, %v3374
    %v3631 = vpack.c.bf16 %v3375, %v3375
    %v3632 = vpack.c.bf16 %v3376, %v3376
    %v3633 = vpack.c.bf16 %v3377, %v3377
    %v3634 = vpack.c.bf16 %v3378, %v3378
    %v3635 = vpack.c.bf16 %v3379, %v3379
    %v3636 = vpack.c.bf16 %v3380, %v3380
    %v3637 = vpack.c.bf16 %v3381, %v3381
    %v3638 = vpack.c.bf16 %v3382, %v3382
    %v3639 = vpack.c.bf16 %v3383, %v3383
    %v3640 = vpack.c.bf16 %v3384, %v3384
    %v3641 = vpack.c.bf16 %v3385, %v3385
    %v3642 = vpack.c.bf16 %v3386, %v3386
    %v3643 = vpack.c.bf16 %v3387, %v3387
    %v3644 = vpack.c.bf16 %v3388, %v3388
    %v3645 = vpack.c.bf16 %v3389, %v3389
    %v3646 = vpack.c.bf16 %v3390, %v3390
    %v3647 = vpack.c.bf16 %v3391, %v3391
    %v3648 = vpack.c.bf16 %v3392, %v3392
    %v3649 = vpack.c.bf16 %v3393, %v3393
    %v3650 = vpack.c.bf16 %v3394, %v3394
    %v3651 = vpack.c.bf16 %v3395, %v3395
    %v3652 = vpack.c.bf16 %v3396, %v3396
    %v3653 = vpack.c.bf16 %v3397, %v3397
    %v3654 = vpack.c.bf16 %v3398, %v3398
    %v3655 = vpack.c.bf16 %v3399, %v3399
    %v3656 = vpack.c.bf16 %v3400, %v3400
    %v3657 = vpack.c.bf16 %v3401, %v3401
    %v3658 = vpack.c.bf16 %v3402, %v3402
    %v3659 = vpack.c.bf16 %v3403, %v3403
    %v3660 = vpack.c.bf16 %v3404, %v3404
    %v3661 = vpack.c.bf16 %v3405, %v3405
    %v3662 = vpack.c.bf16 %v3406, %v3406
    %v3663 = vpack.c.bf16 %v3407, %v3407
    %v3664 = vpack.c.bf16 %v3408, %v3408
    %v3665 = vpack.c.bf16 %v3409, %v3409
    %v3666 = vpack.c.bf16 %v3410, %v3410
    %v3667 = vpack.c.bf16 %v3411, %v3411
    %v3668 = vpack.c.bf16 %v3412, %v3412
    %v3669 = vpack.c.bf16 %v3413, %v3413
    %v3670 = vpack.c.bf16 %v3414, %v3414
    %v3671 = vpack.c.bf16 %v3415, %v3415
    %v3672 = vpack.c.bf16 %v3416, %v3416
    %v3673 = vpack.c.bf16 %v3417, %v3417
    %v3674 = vpack.c.bf16 %v3418, %v3418
    %v3675 = vpack.c.bf16 %v3419, %v3419
    %v3676 = vpack.c.bf16 %v3420, %v3420
    %v3677 = vpack.c.bf16 %v3421, %v3421
    %v3678 = vpack.c.bf16 %v3422, %v3422
    %v3679 = vpack.c.bf16 %v3423, %v3423
    %v3680 = vpack.c.bf16 %v3424, %v3424
    %v3681 = vpack.c.bf16 %v3425, %v3425
    %v3682 = vpack.c.bf16 %v3426, %v3426
    %v3683 = vpack.c.bf16 %v3427, %v3427
    %v3684 = vpack.c.bf16 %v3428, %v3428
    %v3685 = vpack.c.bf16 %v3429, %v3429
    %v3686 = vpack.c.bf16 %v3430, %v3430
    %v3687 = vpack.c.bf16 %v3431, %v3431
    %v3688 = vpack.c.bf16 %v3432, %v3432
    %v3689 = vpack.c.bf16 %v3433, %v3433
    %v3690 = vpack.c.bf16 %v3434, %v3434
    %v3691 = vpack.c.bf16 %v3435, %v3435
    %v3692 = vpack.c.bf16 %v3436, %v3436
    %v3693 = vpack.c.bf16 %v3437, %v3437
    %v3694 = vpack.c.bf16 %v3438, %v3438
    %v3695 = vpack.c.bf16 %v3439, %v3439
    %v3696 = vpack.c.bf16 %v3440, %v3440
    %v3697 = vpack.c.bf16 %v3441, %v3441
    %v3698 = vpack.c.bf16 %v3442, %v3442
    %v3699 = vpack.c.bf16 %v3443, %v3443
    %v3700 = vpack.c.bf16 %v3444, %v3444
    %v3701 = vpack.c.bf16 %v3445, %v3445
    %v3702 = vpack.c.bf16 %v3446, %v3446
    %v3703 = vpack.c.bf16 %v3447, %v3447
    %v3704 = vpack.c.bf16 %v3448, %v3448
    %v3705 = vpack.c.bf16 %v3449, %v3449
    %v3706 = vpack.c.bf16 %v3450, %v3450
    %v3707 = vpack.c.bf16 %v3451, %v3451
    %v3708 = vpack.c.bf16 %v3452, %v3452
    %v3709 = vpack.c.bf16 %v3453, %v3453
    %v3710 = vpack.c.bf16 %v3454, %v3454
    %v3711 = vpack.c.bf16 %v3455, %v3455
    %v3712 = vpack.c.bf16 %v3456, %v3456
    %v3713 = vpack.c.bf16 %v3457, %v3457
    %v3714 = vpack.c.bf16 %v3458, %v3458
    %v3715 = vpack.c.bf16 %v3459, %v3459
    %v3716 = vpack.c.bf16 %v3460, %v3460
    %v3717 = vpack.c.bf16 %v3461, %v3461
    %v3718 = vpack.c.bf16 %v3462, %v3462
    %v3719 = vpack.c.bf16 %v3463, %v3463
    %v3720 = vpack.c.bf16 %v3464, %v3464
    %v3721 = vpack.c.bf16 %v3465, %v3465
    %v3722 = vpack.c.bf16 %v3466, %v3466
    %v3723 = vpack.c.bf16 %v3467, %v3467
    %v3724 = vpack.c.bf16 %v3468, %v3468
    %v3725 = vpack.c.bf16 %v3469, %v3469
    %v3726 = vpack.c.bf16 %v3470, %v3470
    %v3727 = vpack.c.bf16 %v3471, %v3471
    %v3728 = vpack.c.bf16 %v3472, %v3472
    %v3729 = vpack.c.bf16 %v3473, %v3473
    %v3730 = vpack.c.bf16 %v3474, %v3474
    %v3731 = vunpack.c.l.bf16 %v3475
    %v3732 = vunpack.c.l.bf16 %v3476
    %v3733 = vunpack.c.l.bf16 %v3477
    %v3734 = vunpack.c.l.bf16 %v3478
    %v3735 = vunpack.c.l.bf16 %v3479
    %v3736 = vunpack.c.l.bf16 %v3480
    %v3737 = vunpack.c.l.bf16 %v3481
    %v3738 = vunpack.c.l.bf16 %v3482
    %v3739 = vunpack.c.l.bf16 %v3491
    %v3740 = vunpack.c.l.bf16 %v3492
    %v3741 = vunpack.c.l.bf16 %v3493
    %v3742 = vunpack.c.l.bf16 %v3494
    %v3743 = vunpack.c.l.bf16 %v3495
    %v3744 = vunpack.c.l.bf16 %v3496
    %v3745 = vunpack.c.l.bf16 %v3497
    %v3746 = vunpack.c.l.bf16 %v3498
    %v3747 = vunpack.c.l.bf16 %v3507
    %v3748 = vunpack.c.l.bf16 %v3508
    %v3749 = vunpack.c.l.bf16 %v3509
    %v3750 = vunpack.c.l.bf16 %v3510
    %v3751 = vunpack.c.l.bf16 %v3511
    %v3752 = vunpack.c.l.bf16 %v3512
    %v3753 = vunpack.c.l.bf16 %v3513
    %v3754 = vunpack.c.l.bf16 %v3514
    %v3755 = vunpack.c.l.bf16 %v3523
    %v3756 = vunpack.c.l.bf16 %v3524
    %v3757 = vunpack.c.l.bf16 %v3525
    %v3758 = vunpack.c.l.bf16 %v3526
    %v3759 = vunpack.c.l.bf16 %v3527
    %v3760 = vunpack.c.l.bf16 %v3528
    %v3761 = vunpack.c.l.bf16 %v3529
    %v3762 = vunpack.c.l.bf16 %v3530
    %v3763 = vunpack.c.l.bf16 %v3539
    %v3764 = vunpack.c.l.bf16 %v3540
    %v3765 = vunpack.c.l.bf16 %v3541
    %v3766 = vunpack.c.l.bf16 %v3542
    %v3767 = vunpack.c.l.bf16 %v3543
    %v3768 = vunpack.c.l.bf16 %v3544
    %v3769 = vunpack.c.l.bf16 %v3545
    %v3770 = vunpack.c.l.bf16 %v3546
    %v3771 = vunpack.c.l.bf16 %v3555
    %v3772 = vunpack.c.l.bf16 %v3556
    %v3773 = vunpack.c.l.bf16 %v3557
    %v3774 = vunpack.c.l.bf16 %v3558
    %v3775 = vunpack.c.l.bf16 %v3559
    %v3776 = vunpack.c.l.bf16 %v3560
    %v3777 = vunpack.c.l.bf16 %v3561
    %v3778 = vunpack.c.l.bf16 %v3562
    %v3779 = vunpack.c.l.bf16 %v3571
    %v3780 = vunpack.c.l.bf16 %v3572
    %v3781 = vunpack.c.l.bf16 %v3573
    %v3782 = vunpack.c.l.bf16 %v3574
    %v3783 = vunpack.c.l.bf16 %v3575
    %v3784 = vunpack.c.l.bf16 %v3576
    %v3785 = vunpack.c.l.bf16 %v3577
    %v3786 = vunpack.c.l.bf16 %v3578
    %v3787 = vunpack.c.l.bf16 %v3587
    %v3788 = vunpack.c.l.bf16 %v3588
    %v3789 = vunpack.c.l.bf16 %v3589
    %v3790 = vunpack.c.l.bf16 %v3590
    %v3791 = vunpack.c.l.bf16 %v3591
    %v3792 = vunpack.c.l.bf16 %v3592
    %v3793 = vunpack.c.l.bf16 %v3593
    %v3794 = vunpack.c.l.bf16 %v3594
    %v3795 = vunpack.c.l.bf16 %v3603
    %v3796 = vunpack.c.l.bf16 %v3604
    %v3797 = vunpack.c.l.bf16 %v3605
    %v3798 = vunpack.c.l.bf16 %v3606
    %v3799 = vunpack.c.l.bf16 %v3607
    %v3800 = vunpack.c.l.bf16 %v3608
    %v3801 = vunpack.c.l.bf16 %v3609
    %v3802 = vunpack.c.l.bf16 %v3610
    %v3803 = vunpack.c.l.bf16 %v3619
    %v3804 = vunpack.c.l.bf16 %v3620
    %v3805 = vunpack.c.l.bf16 %v3621
    %v3806 = vunpack.c.l.bf16 %v3622
    %v3807 = vunpack.c.l.bf16 %v3623
    %v3808 = vunpack.c.l.bf16 %v3624
    %v3809 = vunpack.c.l.bf16 %v3625
    %v3810 = vunpack.c.l.bf16 %v3626
    %v3811 = vunpack.c.l.bf16 %v3635
    %v3812 = vunpack.c.l.bf16 %v3636
    %v3813 = vunpack.c.l.bf16 %v3637
    %v3814 = vunpack.c.l.bf16 %v3638
    %v3815 = vunpack.c.l.bf16 %v3639
    %v3816 = vunpack.c.l.bf16 %v3640
    %v3817 = vunpack.c.l.bf16 %v3641
    %v3818 = vunpack.c.l.bf16 %v3642
    %v3819 = vunpack.c.l.bf16 %v3651
    %v3820 = vunpack.c.l.bf16 %v3652
    %v3821 = vunpack.c.l.bf16 %v3653
    %v3822 = vunpack.c.l.bf16 %v3654
    %v3823 = vunpack.c.l.bf16 %v3655
    %v3824 = vunpack.c.l.bf16 %v3656
    %v3825 = vunpack.c.l.bf16 %v3657
    %v3826 = vunpack.c.l.bf16 %v3658
    %v3827 = vunpack.c.l.bf16 %v3667
    %v3828 = vunpack.c.l.bf16 %v3668
    %v3829 = vunpack.c.l.bf16 %v3669
    %v3830 = vunpack.c.l.bf16 %v3670
    %v3831 = vunpack.c.l.bf16 %v3671
    %v3832 = vunpack.c.l.bf16 %v3672
    %v3833 = vunpack.c.l.bf16 %v3673
    %v3834 = vunpack.c.l.bf16 %v3674
    %v3835 = vunpack.c.l.bf16 %v3683
    %v3836 = vunpack.c.l.bf16 %v3684
    %v3837 = vunpack.c.l.bf16 %v3685
    %v3838 = vunpack.c.l.bf16 %v3686
    %v3839 = vunpack.c.l.bf16 %v3687
    %v3840 = vunpack.c.l.bf16 %v3688
    %v3841 = vunpack.c.l.bf16 %v3689
    %v3842 = vunpack.c.l.bf16 %v3690
    %v3843 = vunpack.c.l.bf16 %v3699
    %v3844 = vunpack.c.l.bf16 %v3700
    %v3845 = vunpack.c.l.bf16 %v3701
    %v3846 = vunpack.c.l.bf16 %v3702
    %v3847 = vunpack.c.l.bf16 %v3703
    %v3848 = vunpack.c.l.bf16 %v3704
    %v3849 = vunpack.c.l.bf16 %v3705
    %v3850 = vunpack.c.l.bf16 %v3706
    %v3851 = vunpack.c.l.bf16 %v3715
    %v3852 = vunpack.c.l.bf16 %v3716
    %v3853 = vunpack.c.l.bf16 %v3717
    %v3854 = vunpack.c.l.bf16 %v3718
    %v3855 = vunpack.c.l.bf16 %v3719
    %v3856 = vunpack.c.l.bf16 %v3720
    %v3857 = vunpack.c.l.bf16 %v3721
    %v3858 = vunpack.c.l.bf16 %v3722
    %v3859 = vunpack.c.l.bf16 %v3483
    %v3860 = vunpack.c.l.bf16 %v3484
    %v3861 = vunpack.c.l.bf16 %v3485
    %v3862 = vunpack.c.l.bf16 %v3486
    %v3863 = vunpack.c.l.bf16 %v3487
    %v3864 = vunpack.c.l.bf16 %v3488
    %v3865 = vunpack.c.l.bf16 %v3489
    %v3866 = vunpack.c.l.bf16 %v3490
    %v3867 = vunpack.c.l.bf16 %v3499
    %v3868 = vunpack.c.l.bf16 %v3500
    %v3869 = vunpack.c.l.bf16 %v3501
    %v3870 = vunpack.c.l.bf16 %v3502
    %v3871 = vunpack.c.l.bf16 %v3503
    %v3872 = vunpack.c.l.bf16 %v3504
    %v3873 = vunpack.c.l.bf16 %v3505
    %v3874 = vunpack.c.l.bf16 %v3506
    %v3875 = vunpack.c.l.bf16 %v3515
    %v3876 = vunpack.c.l.bf16 %v3516
    %v3877 = vunpack.c.l.bf16 %v3517
    %v3878 = vunpack.c.l.bf16 %v3518
    %v3879 = vunpack.c.l.bf16 %v3519
    %v3880 = vunpack.c.l.bf16 %v3520
    %v3881 = vunpack.c.l.bf16 %v3521
    %v3882 = vunpack.c.l.bf16 %v3522
    %v3883 = vunpack.c.l.bf16 %v3531
    %v3884 = vunpack.c.l.bf16 %v3532
    %v3885 = vunpack.c.l.bf16 %v3533
    %v3886 = vunpack.c.l.bf16 %v3534
    %v3887 = vunpack.c.l.bf16 %v3535
    %v3888 = vunpack.c.l.bf16 %v3536
    %v3889 = vunpack.c.l.bf16 %v3537
    %v3890 = vunpack.c.l.bf16 %v3538
    %v3891 = vunpack.c.l.bf16 %v3547
    %v3892 = vunpack.c.l.bf16 %v3548
    %v3893 = vunpack.c.l.bf16 %v3549
    %v3894 = vunpack.c.l.bf16 %v3550
    %v3895 = vunpack.c.l.bf16 %v3551
    %v3896 = vunpack.c.l.bf16 %v3552
    %v3897 = vunpack.c.l.bf16 %v3553
    %v3898 = vunpack.c.l.bf16 %v3554
    %v3899 = vunpack.c.l.bf16 %v3563
    %v3900 = vunpack.c.l.bf16 %v3564
    %v3901 = vunpack.c.l.bf16 %v3565
    %v3902 = vunpack.c.l.bf16 %v3566
    %v3903 = vunpack.c.l.bf16 %v3567
    %v3904 = vunpack.c.l.bf16 %v3568
    %v3905 = vunpack.c.l.bf16 %v3569
    %v3906 = vunpack.c.l.bf16 %v3570
    %v3907 = vunpack.c.l.bf16 %v3579
    %v3908 = vunpack.c.l.bf16 %v3580
    %v3909 = vunpack.c.l.bf16 %v3581
    %v3910 = vunpack.c.l.bf16 %v3582
    %v3911 = vunpack.c.l.bf16 %v3583
    %v3912 = vunpack.c.l.bf16 %v3584
    %v3913 = vunpack.c.l.bf16 %v3585
    %v3914 = vunpack.c.l.bf16 %v3586
    %v3915 = vunpack.c.l.bf16 %v3595
    %v3916 = vunpack.c.l.bf16 %v3596
    %v3917 = vunpack.c.l.bf16 %v3597
    %v3918 = vunpack.c.l.bf16 %v3598
    %v3919 = vunpack.c.l.bf16 %v3599
    %v3920 = vunpack.c.l.bf16 %v3600
    %v3921 = vunpack.c.l.bf16 %v3601
    %v3922 = vunpack.c.l.bf16 %v3602
    %v3923 = vunpack.c.l.bf16 %v3611
    %v3924 = vunpack.c.l.bf16 %v3612
    %v3925 = vunpack.c.l.bf16 %v3613
    %v3926 = vunpack.c.l.bf16 %v3614
    %v3927 = vunpack.c.l.bf16 %v3615
    %v3928 = vunpack.c.l.bf16 %v3616
    %v3929 = vunpack.c.l.bf16 %v3617
    %v3930 = vunpack.c.l.bf16 %v3618
    %v3931 = vunpack.c.l.bf16 %v3627
    %v3932 = vunpack.c.l.bf16 %v3628
    %v3933 = vunpack.c.l.bf16 %v3629
    %v3934 = vunpack.c.l.bf16 %v3630
    %v3935 = vunpack.c.l.bf16 %v3631
    %v3936 = vunpack.c.l.bf16 %v3632
    %v3937 = vunpack.c.l.bf16 %v3633
    %v3938 = vunpack.c.l.bf16 %v3634
    %v3939 = vunpack.c.l.bf16 %v3643
    %v3940 = vunpack.c.l.bf16 %v3644
    %v3941 = vunpack.c.l.bf16 %v3645
    %v3942 = vunpack.c.l.bf16 %v3646
    %v3943 = vunpack.c.l.bf16 %v3647
    %v3944 = vunpack.c.l.bf16 %v3648
    %v3945 = vunpack.c.l.bf16 %v3649
    %v3946 = vunpack.c.l.bf16 %v3650
    %v3947 = vunpack.c.l.bf16 %v3659
    %v3948 = vunpack.c.l.bf16 %v3660
    %v3949 = vunpack.c.l.bf16 %v3661
    %v3950 = vunpack.c.l.bf16 %v3662
    %v3951 = vunpack.c.l.bf16 %v3663
    %v3952 = vunpack.c.l.bf16 %v3664
    %v3953 = vunpack.c.l.bf16 %v3665
    %v3954 = vunpack.c.l.bf16 %v3666
    %v3955 = vunpack.c.l.bf16 %v3675
    %v3956 = vunpack.c.l.bf16 %v3676
    %v3957 = vunpack.c.l.bf16 %v3677
    %v3958 = vunpack.c.l.bf16 %v3678
    %v3959 = vunpack.c.l.bf16 %v3679
    %v3960 = vunpack.c.l.bf16 %v3680
    %v3961 = vunpack.c.l.bf16 %v3681
    %v3962 = vunpack.c.l.bf16 %v3682
    %v3963 = vunpack.c.l.bf16 %v3691
    %v3964 = vunpack.c.l.bf16 %v3692
    %v3965 = vunpack.c.l.bf16 %v3693
    %v3966 = vunpack.c.l.bf16 %v3694
    %v3967 = vunpack.c.l.bf16 %v3695
    %v3968 = vunpack.c.l.bf16 %v3696
    %v3969 = vunpack.c.l.bf16 %v3697
    %v3970 = vunpack.c.l.bf16 %v3698
    %v3971 = vunpack.c.l.bf16 %v3707
    %v3972 = vunpack.c.l.bf16 %v3708
    %v3973 = vunpack.c.l.bf16 %v3709
    %v3974 = vunpack.c.l.bf16 %v3710
    %v3975 = vunpack.c.l.bf16 %v3711
    %v3976 = vunpack.c.l.bf16 %v3712
    %v3977 = vunpack.c.l.bf16 %v3713
    %v3978 = vunpack.c.l.bf16 %v3714
    %v3979 = vunpack.c.l.bf16 %v3723
    %v3980 = vunpack.c.l.bf16 %v3724
    %v3981 = vunpack.c.l.bf16 %v3725
    %v3982 = vunpack.c.l.bf16 %v3726
    %v3983 = vunpack.c.l.bf16 %v3727
    %v3984 = vunpack.c.l.bf16 %v3728
    %v3985 = vunpack.c.l.bf16 %v3729
    %v3986 = vunpack.c.l.bf16 %v3730
    %v3987 = vmax.f32 %v3731, %v3859
    %v3988 = vmax.f32 %v3732, %v3860
    %v3989 = vmax.f32 %v3733, %v3861
    %v3990 = vmax.f32 %v3734, %v3862
    %v3991 = vmax.f32 %v3735, %v3863
    %v3992 = vmax.f32 %v3736, %v3864
    %v3993 = vmax.f32 %v3737, %v3865
    %v3994 = vmax.f32 %v3738, %v3866
    %v3995 = vmax.f32 %v3739, %v3867
    %v3996 = vmax.f32 %v3740, %v3868
    %v3997 = vmax.f32 %v3741, %v3869
    %v3998 = vmax.f32 %v3742, %v3870
    %v3999 = vmax.f32 %v3743, %v3871
    %v4000 = vmax.f32 %v3744, %v3872
    %v4001 = vmax.f32 %v3745, %v3873
    %v4002 = vmax.f32 %v3746, %v3874
    %v4003 = vmax.f32 %v3747, %v3875
    %v4004 = vmax.f32 %v3748, %v3876
    %v4005 = vmax.f32 %v3749, %v3877
    %v4006 = vmax.f32 %v3750, %v3878
    %v4007 = vmax.f32 %v3751, %v3879
    %v4008 = vmax.f32 %v3752, %v3880
    %v4009 = vmax.f32 %v3753, %v3881
    %v4010 = vmax.f32 %v3754, %v3882
    %v4011 = vmax.f32 %v3755, %v3883
    %v4012 = vmax.f32 %v3756, %v3884
    %v4013 = vmax.f32 %v3757, %v3885
    %v4014 = vmax.f32 %v3758, %v3886
    %v4015 = vmax.f32 %v3759, %v3887
    %v4016 = vmax.f32 %v3760, %v3888
    %v4017 = vmax.f32 %v3761, %v3889
    %v4018 = vmax.f32 %v3762, %v3890
    %v4019 = vmax.f32 %v3763, %v3891
    %v4020 = vmax.f32 %v3764, %v3892
    %v4021 = vmax.f32 %v3765, %v3893
    %v4022 = vmax.f32 %v3766, %v3894
    %v4023 = vmax.f32 %v3767, %v3895
    %v4024 = vmax.f32 %v3768, %v3896
    %v4025 = vmax.f32 %v3769, %v3897
    %v4026 = vmax.f32 %v3770, %v3898
    %v4027 = vmax.f32 %v3771, %v3899
    %v4028 = vmax.f32 %v3772, %v3900
    %v4029 = vmax.f32 %v3773, %v3901
    %v4030 = vmax.f32 %v3774, %v3902
    %v4031 = vmax.f32 %v3775, %v3903
    %v4032 = vmax.f32 %v3776, %v3904
    %v4033 = vmax.f32 %v3777, %v3905
    %v4034 = vmax.f32 %v3778, %v3906
    %v4035 = vmax.f32 %v3779, %v3907
    %v4036 = vmax.f32 %v3780, %v3908
    %v4037 = vmax.f32 %v3781, %v3909
    %v4038 = vmax.f32 %v3782, %v3910
    %v4039 = vmax.f32 %v3783, %v3911
    %v4040 = vmax.f32 %v3784, %v3912
    %v4041 = vmax.f32 %v3785, %v3913
    %v4042 = vmax.f32 %v3786, %v3914
    %v4043 = vmax.f32 %v3787, %v3915
    %v4044 = vmax.f32 %v3788, %v3916
    %v4045 = vmax.f32 %v3789, %v3917
    %v4046 = vmax.f32 %v3790, %v3918
    %v4047 = vmax.f32 %v3791, %v3919
    %v4048 = vmax.f32 %v3792, %v3920
    %v4049 = vmax.f32 %v3793, %v3921
    %v4050 = vmax.f32 %v3794, %v3922
    %v4051 = vmax.f32 %v3795, %v3923
    %v4052 = vmax.f32 %v3796, %v3924
    %v4053 = vmax.f32 %v3797, %v3925
    %v4054 = vmax.f32 %v3798, %v3926
    %v4055 = vmax.f32 %v3799, %v3927
    %v4056 = vmax.f32 %v3800, %v3928
    %v4057 = vmax.f32 %v3801, %v3929
    %v4058 = vmax.f32 %v3802, %v3930
    %v4059 = vmax.f32 %v3803, %v3931
    %v4060 = vmax.f32 %v3804, %v3932
    %v4061 = vmax.f32 %v3805, %v3933
    %v4062 = vmax.f32 %v3806, %v3934
    %v4063 = vmax.f32 %v3807, %v3935
    %v4064 = vmax.f32 %v3808, %v3936
    %v4065 = vmax.f32 %v3809, %v3937
    %v4066 = vmax.f32 %v3810, %v3938
    %v4067 = vmax.f32 %v3811, %v3939
    %v4068 = vmax.f32 %v3812, %v3940
    %v4069 = vmax.f32 %v3813, %v3941
    %v4070 = vmax.f32 %v3814, %v3942
    %v4071 = vmax.f32 %v3815, %v3943
    %v4072 = vmax.f32 %v3816, %v3944
    %v4073 = vmax.f32 %v3817, %v3945
    %v4074 = vmax.f32 %v3818, %v3946
    %v4075 = vmax.f32 %v3819, %v3947
    %v4076 = vmax.f32 %v3820, %v3948
    %v4077 = vmax.f32 %v3821, %v3949
    %v4078 = vmax.f32 %v3822, %v3950
    %v4079 = vmax.f32 %v3823, %v3951
    %v4080 = vmax.f32 %v3824, %v3952
    %v4081 = vmax.f32 %v3825, %v3953
    %v4082 = vmax.f32 %v3826, %v3954
    %v4083 = vmax.f32 %v3827, %v3955
    %v4084 = vmax.f32 %v3828, %v3956
    %v4085 = vmax.f32 %v3829, %v3957
    %v4086 = vmax.f32 %v3830, %v3958
    %v4087 = vmax.f32 %v3831, %v3959
    %v4088 = vmax.f32 %v3832, %v3960
    %v4089 = vmax.f32 %v3833, %v3961
    %v4090 = vmax.f32 %v3834, %v3962
    %v4091 = vmax.f32 %v3835, %v3963
    %v4092 = vmax.f32 %v3836, %v3964
    %v4093 = vmax.f32 %v3837, %v3965
    %v4094 = vmax.f32 %v3838, %v3966
    %v4095 = vmax.f32 %v3839, %v3967
    %v4096 = vmax.f32 %v3840, %v3968
    %v4097 = vmax.f32 %v3841, %v3969
    %v4098 = vmax.f32 %v3842, %v3970
    %v4099 = vmax.f32 %v3843, %v3971
    %v4100 = vmax.f32 %v3844, %v3972
    %v4101 = vmax.f32 %v3845, %v3973
    %v4102 = vmax.f32 %v3846, %v3974
    %v4103 = vmax.f32 %v3847, %v3975
    %v4104 = vmax.f32 %v3848, %v3976
    %v4105 = vmax.f32 %v3849, %v3977
    %v4106 = vmax.f32 %v3850, %v3978
    %v4107 = vmax.f32 %v3851, %v3979
    %v4108 = vmax.f32 %v3852, %v3980
    %v4109 = vmax.f32 %v3853, %v3981
    %v4110 = vmax.f32 %v3854, %v3982
    %v4111 = vmax.f32 %v3855, %v3983
    %v4112 = vmax.f32 %v3856, %v3984
    %v4113 = vmax.f32 %v3857, %v3985
    %v4114 = vmax.f32 %v3858, %v3986
    %v4115 = vpack.c.bf16 %v3987, %v3987
    %v4116 = vpack.c.bf16 %v3988, %v3988
    %v4117 = vpack.c.bf16 %v3989, %v3989
    %v4118 = vpack.c.bf16 %v3990, %v3990
    %v4119 = vpack.c.bf16 %v3991, %v3991
    %v4120 = vpack.c.bf16 %v3992, %v3992
    %v4121 = vpack.c.bf16 %v3993, %v3993
    %v4122 = vpack.c.bf16 %v3994, %v3994
    %v4123 = vpack.c.bf16 %v3995, %v3995
    %v4124 = vpack.c.bf16 %v3996, %v3996
    %v4125 = vpack.c.bf16 %v3997, %v3997
    %v4126 = vpack.c.bf16 %v3998, %v3998
    %v4127 = vpack.c.bf16 %v3999, %v3999
    %v4128 = vpack.c.bf16 %v4000, %v4000
    %v4129 = vpack.c.bf16 %v4001, %v4001
    %v4130 = vpack.c.bf16 %v4002, %v4002
    %v4131 = vpack.c.bf16 %v4003, %v4003
    %v4132 = vpack.c.bf16 %v4004, %v4004
    %v4133 = vpack.c.bf16 %v4005, %v4005
    %v4134 = vpack.c.bf16 %v4006, %v4006
    %v4135 = vpack.c.bf16 %v4007, %v4007
    %v4136 = vpack.c.bf16 %v4008, %v4008
    %v4137 = vpack.c.bf16 %v4009, %v4009
    %v4138 = vpack.c.bf16 %v4010, %v4010
    %v4139 = vpack.c.bf16 %v4011, %v4011
    %v4140 = vpack.c.bf16 %v4012, %v4012
    %v4141 = vpack.c.bf16 %v4013, %v4013
    %v4142 = vpack.c.bf16 %v4014, %v4014
    %v4143 = vpack.c.bf16 %v4015, %v4015
    %v4144 = vpack.c.bf16 %v4016, %v4016
    %v4145 = vpack.c.bf16 %v4017, %v4017
    %v4146 = vpack.c.bf16 %v4018, %v4018
    %v4147 = vpack.c.bf16 %v4019, %v4019
    %v4148 = vpack.c.bf16 %v4020, %v4020
    %v4149 = vpack.c.bf16 %v4021, %v4021
    %v4150 = vpack.c.bf16 %v4022, %v4022
    %v4151 = vpack.c.bf16 %v4023, %v4023
    %v4152 = vpack.c.bf16 %v4024, %v4024
    %v4153 = vpack.c.bf16 %v4025, %v4025
    %v4154 = vpack.c.bf16 %v4026, %v4026
    %v4155 = vpack.c.bf16 %v4027, %v4027
    %v4156 = vpack.c.bf16 %v4028, %v4028
    %v4157 = vpack.c.bf16 %v4029, %v4029
    %v4158 = vpack.c.bf16 %v4030, %v4030
    %v4159 = vpack.c.bf16 %v4031, %v4031
    %v4160 = vpack.c.bf16 %v4032, %v4032
    %v4161 = vpack.c.bf16 %v4033, %v4033
    %v4162 = vpack.c.bf16 %v4034, %v4034
    %v4163 = vpack.c.bf16 %v4035, %v4035
    %v4164 = vpack.c.bf16 %v4036, %v4036
    %v4165 = vpack.c.bf16 %v4037, %v4037
    %v4166 = vpack.c.bf16 %v4038, %v4038
    %v4167 = vpack.c.bf16 %v4039, %v4039
    %v4168 = vpack.c.bf16 %v4040, %v4040
    %v4169 = vpack.c.bf16 %v4041, %v4041
    %v4170 = vpack.c.bf16 %v4042, %v4042
    %v4171 = vpack.c.bf16 %v4043, %v4043
    %v4172 = vpack.c.bf16 %v4044, %v4044
    %v4173 = vpack.c.bf16 %v4045, %v4045
    %v4174 = vpack.c.bf16 %v4046, %v4046
    %v4175 = vpack.c.bf16 %v4047, %v4047
    %v4176 = vpack.c.bf16 %v4048, %v4048
    %v4177 = vpack.c.bf16 %v4049, %v4049
    %v4178 = vpack.c.bf16 %v4050, %v4050
    %v4179 = vpack.c.bf16 %v4051, %v4051
    %v4180 = vpack.c.bf16 %v4052, %v4052
    %v4181 = vpack.c.bf16 %v4053, %v4053
    %v4182 = vpack.c.bf16 %v4054, %v4054
    %v4183 = vpack.c.bf16 %v4055, %v4055
    %v4184 = vpack.c.bf16 %v4056, %v4056
    %v4185 = vpack.c.bf16 %v4057, %v4057
    %v4186 = vpack.c.bf16 %v4058, %v4058
    %v4187 = vpack.c.bf16 %v4059, %v4059
    %v4188 = vpack.c.bf16 %v4060, %v4060
    %v4189 = vpack.c.bf16 %v4061, %v4061
    %v4190 = vpack.c.bf16 %v4062, %v4062
    %v4191 = vpack.c.bf16 %v4063, %v4063
    %v4192 = vpack.c.bf16 %v4064, %v4064
    %v4193 = vpack.c.bf16 %v4065, %v4065
    %v4194 = vpack.c.bf16 %v4066, %v4066
    %v4195 = vpack.c.bf16 %v4067, %v4067
    %v4196 = vpack.c.bf16 %v4068, %v4068
    %v4197 = vpack.c.bf16 %v4069, %v4069
    %v4198 = vpack.c.bf16 %v4070, %v4070
    %v4199 = vpack.c.bf16 %v4071, %v4071
    %v4200 = vpack.c.bf16 %v4072, %v4072
    %v4201 = vpack.c.bf16 %v4073, %v4073
    %v4202 = vpack.c.bf16 %v4074, %v4074
    %v4203 = vpack.c.bf16 %v4075, %v4075
    %v4204 = vpack.c.bf16 %v4076, %v4076
    %v4205 = vpack.c.bf16 %v4077, %v4077
    %v4206 = vpack.c.bf16 %v4078, %v4078
    %v4207 = vpack.c.bf16 %v4079, %v4079
    %v4208 = vpack.c.bf16 %v4080, %v4080
    %v4209 = vpack.c.bf16 %v4081, %v4081
    %v4210 = vpack.c.bf16 %v4082, %v4082
    %v4211 = vpack.c.bf16 %v4083, %v4083
    %v4212 = vpack.c.bf16 %v4084, %v4084
    %v4213 = vpack.c.bf16 %v4085, %v4085
    %v4214 = vpack.c.bf16 %v4086, %v4086
    %v4215 = vpack.c.bf16 %v4087, %v4087
    %v4216 = vpack.c.bf16 %v4088, %v4088
    %v4217 = vpack.c.bf16 %v4089, %v4089
    %v4218 = vpack.c.bf16 %v4090, %v4090
    %v4219 = vpack.c.bf16 %v4091, %v4091
    %v4220 = vpack.c.bf16 %v4092, %v4092
    %v4221 = vpack.c.bf16 %v4093, %v4093
    %v4222 = vpack.c.bf16 %v4094, %v4094
    %v4223 = vpack.c.bf16 %v4095, %v4095
    %v4224 = vpack.c.bf16 %v4096, %v4096
    %v4225 = vpack.c.bf16 %v4097, %v4097
    %v4226 = vpack.c.bf16 %v4098, %v4098
    %v4227 = vpack.c.bf16 %v4099, %v4099
    %v4228 = vpack.c.bf16 %v4100, %v4100
    %v4229 = vpack.c.bf16 %v4101, %v4101
    %v4230 = vpack.c.bf16 %v4102, %v4102
    %v4231 = vpack.c.bf16 %v4103, %v4103
    %v4232 = vpack.c.bf16 %v4104, %v4104
    %v4233 = vpack.c.bf16 %v4105, %v4105
    %v4234 = vpack.c.bf16 %v4106, %v4106
    %v4235 = vpack.c.bf16 %v4107, %v4107
    %v4236 = vpack.c.bf16 %v4108, %v4108
    %v4237 = vpack.c.bf16 %v4109, %v4109
    %v4238 = vpack.c.bf16 %v4110, %v4110
    %v4239 = vpack.c.bf16 %v4111, %v4111
    %v4240 = vpack.c.bf16 %v4112, %v4112
    %v4241 = vpack.c.bf16 %v4113, %v4113
    %v4242 = vpack.c.bf16 %v4114, %v4114
    %v4243 = vld [vmem:[%s3] sm:$0xf]
    %v4244 = vld [vmem:[%s3 + $0x4] sm:$0xf]
    %v4245 = vld [vmem:[%s3 + $0x8] sm:$0xf]
    %v4246 = vld [vmem:[%s3 + $0xc] sm:$0xf]
    %v4247 = vld [vmem:[%s3 + $0x10] sm:$0xf]
    %v4248 = vld [vmem:[%s3 + $0x14] sm:$0xf]
    %v4249 = vld [vmem:[%s3 + $0x18] sm:$0xf]
    %v4250 = vld [vmem:[%s3 + $0x1c] sm:$0xf]
    %v4251 = vld [vmem:[%s3 + $0x20] sm:$0xf]
    %v4252 = vld [vmem:[%s3 + $0x24] sm:$0xf]
    %v4253 = vld [vmem:[%s3 + $0x28] sm:$0xf]
    %v4254 = vld [vmem:[%s3 + $0x2c] sm:$0xf]
    %v4255 = vld [vmem:[%s3 + $0x30] sm:$0xf]
    %v4256 = vld [vmem:[%s3 + $0x34] sm:$0xf]
    %v4257 = vld [vmem:[%s3 + $0x38] sm:$0xf]
    %v4258 = vld [vmem:[%s3 + $0x3c] sm:$0xf]
    %v4259 = vld [vmem:[%s3 + $0x40] sm:$0xf]
    %v4260 = vld [vmem:[%s3 + $0x44] sm:$0xf]
    %v4261 = vld [vmem:[%s3 + $0x48] sm:$0xf]
    %v4262 = vld [vmem:[%s3 + $0x4c] sm:$0xf]
    %v4263 = vld [vmem:[%s3 + $0x50] sm:$0xf]
    %v4264 = vld [vmem:[%s3 + $0x54] sm:$0xf]
    %v4265 = vld [vmem:[%s3 + $0x58] sm:$0xf]
    %v4266 = vld [vmem:[%s3 + $0x5c] sm:$0xf]
    %v4267 = vld [vmem:[%s3 + $0x60] sm:$0xf]
    %v4268 = vld [vmem:[%s3 + $0x64] sm:$0xf]
    %v4269 = vld [vmem:[%s3 + $0x68] sm:$0xf]
    %v4270 = vld [vmem:[%s3 + $0x6c] sm:$0xf]
    %v4271 = vld [vmem:[%s3 + $0x70] sm:$0xf]
    %v4272 = vld [vmem:[%s3 + $0x74] sm:$0xf]
    %v4273 = vld [vmem:[%s3 + $0x78] sm:$0xf]
    %v4274 = vld [vmem:[%s3 + $0x7c] sm:$0xf]
    %v4275 = vld [vmem:[%s3 + $0x80] sm:$0xf]
    %v4276 = vld [vmem:[%s3 + $0x84] sm:$0xf]
    %v4277 = vld [vmem:[%s3 + $0x88] sm:$0xf]
    %v4278 = vld [vmem:[%s3 + $0x8c] sm:$0xf]
    %v4279 = vld [vmem:[%s3 + $0x90] sm:$0xf]
    %v4280 = vld [vmem:[%s3 + $0x94] sm:$0xf]
    %v4281 = vld [vmem:[%s3 + $0x98] sm:$0xf]
    %v4282 = vld [vmem:[%s3 + $0x9c] sm:$0xf]
    %v4283 = vld [vmem:[%s3 + $0xa0] sm:$0xf]
    %v4284 = vld [vmem:[%s3 + $0xa4] sm:$0xf]
    %v4285 = vld [vmem:[%s3 + $0xa8] sm:$0xf]
    %v4286 = vld [vmem:[%s3 + $0xac] sm:$0xf]
    %v4287 = vld [vmem:[%s3 + $0xb0] sm:$0xf]
    %v4288 = vld [vmem:[%s3 + $0xb4] sm:$0xf]
    %v4289 = vld [vmem:[%s3 + $0xb8] sm:$0xf]
    %v4290 = vld [vmem:[%s3 + $0xbc] sm:$0xf]
    %v4291 = vld [vmem:[%s3 + $0xc0] sm:$0xf]
    %v4292 = vld [vmem:[%s3 + $0xc4] sm:$0xf]
    %v4293 = vld [vmem:[%s3 + $0xc8] sm:$0xf]
    %v4294 = vld [vmem:[%s3 + $0xcc] sm:$0xf]
    %v4295 = vld [vmem:[%s3 + $0xd0] sm:$0xf]
    %v4296 = vld [vmem:[%s3 + $0xd4] sm:$0xf]
    %v4297 = vld [vmem:[%s3 + $0xd8] sm:$0xf]
    %v4298 = vld [vmem:[%s3 + $0xdc] sm:$0xf]
    %v4299 = vld [vmem:[%s3 + $0xe0] sm:$0xf]
    %v4300 = vld [vmem:[%s3 + $0xe4] sm:$0xf]
    %v4301 = vld [vmem:[%s3 + $0xe8] sm:$0xf]
    %v4302 = vld [vmem:[%s3 + $0xec] sm:$0xf]
    %v4303 = vld [vmem:[%s3 + $0xf0] sm:$0xf]
    %v4304 = vld [vmem:[%s3 + $0xf4] sm:$0xf]
    %v4305 = vld [vmem:[%s3 + $0xf8] sm:$0xf]
    %v4306 = vld [vmem:[%s3 + $0xfc] sm:$0xf]
    %v4307 = vld [vmem:[%s3 + $0x100] sm:$0xf]
    %v4308 = vld [vmem:[%s3 + $0x104] sm:$0xf]
    %v4309 = vld [vmem:[%s3 + $0x108] sm:$0xf]
    %v4310 = vld [vmem:[%s3 + $0x10c] sm:$0xf]
    %v4311 = vld [vmem:[%s3 + $0x110] sm:$0xf]
    %v4312 = vld [vmem:[%s3 + $0x114] sm:$0xf]
    %v4313 = vld [vmem:[%s3 + $0x118] sm:$0xf]
    %v4314 = vld [vmem:[%s3 + $0x11c] sm:$0xf]
    %v4315 = vld [vmem:[%s3 + $0x120] sm:$0xf]
    %v4316 = vld [vmem:[%s3 + $0x124] sm:$0xf]
    %v4317 = vld [vmem:[%s3 + $0x128] sm:$0xf]
    %v4318 = vld [vmem:[%s3 + $0x12c] sm:$0xf]
    %v4319 = vld [vmem:[%s3 + $0x130] sm:$0xf]
    %v4320 = vld [vmem:[%s3 + $0x134] sm:$0xf]
    %v4321 = vld [vmem:[%s3 + $0x138] sm:$0xf]
    %v4322 = vld [vmem:[%s3 + $0x13c] sm:$0xf]
    %v4323 = vld [vmem:[%s3 + $0x140] sm:$0xf]
    %v4324 = vld [vmem:[%s3 + $0x144] sm:$0xf]
    %v4325 = vld [vmem:[%s3 + $0x148] sm:$0xf]
    %v4326 = vld [vmem:[%s3 + $0x14c] sm:$0xf]
    %v4327 = vld [vmem:[%s3 + $0x150] sm:$0xf]
    %v4328 = vld [vmem:[%s3 + $0x154] sm:$0xf]
    %v4329 = vld [vmem:[%s3 + $0x158] sm:$0xf]
    %v4330 = vld [vmem:[%s3 + $0x15c] sm:$0xf]
    %v4331 = vld [vmem:[%s3 + $0x160] sm:$0xf]
    %v4332 = vld [vmem:[%s3 + $0x164] sm:$0xf]
    %v4333 = vld [vmem:[%s3 + $0x168] sm:$0xf]
    %v4334 = vld [vmem:[%s3 + $0x16c] sm:$0xf]
    %v4335 = vld [vmem:[%s3 + $0x170] sm:$0xf]
    %v4336 = vld [vmem:[%s3 + $0x174] sm:$0xf]
    %v4337 = vld [vmem:[%s3 + $0x178] sm:$0xf]
    %v4338 = vld [vmem:[%s3 + $0x17c] sm:$0xf]
    %v4339 = vld [vmem:[%s3 + $0x180] sm:$0xf]
    %v4340 = vld [vmem:[%s3 + $0x184] sm:$0xf]
    %v4341 = vld [vmem:[%s3 + $0x188] sm:$0xf]
    %v4342 = vld [vmem:[%s3 + $0x18c] sm:$0xf]
    %v4343 = vld [vmem:[%s3 + $0x190] sm:$0xf]
    %v4344 = vld [vmem:[%s3 + $0x194] sm:$0xf]
    %v4345 = vld [vmem:[%s3 + $0x198] sm:$0xf]
    %v4346 = vld [vmem:[%s3 + $0x19c] sm:$0xf]
    %v4347 = vld [vmem:[%s3 + $0x1a0] sm:$0xf]
    %v4348 = vld [vmem:[%s3 + $0x1a4] sm:$0xf]
    %v4349 = vld [vmem:[%s3 + $0x1a8] sm:$0xf]
    %v4350 = vld [vmem:[%s3 + $0x1ac] sm:$0xf]
    %v4351 = vld [vmem:[%s3 + $0x1b0] sm:$0xf]
    %v4352 = vld [vmem:[%s3 + $0x1b4] sm:$0xf]
    %v4353 = vld [vmem:[%s3 + $0x1b8] sm:$0xf]
    %v4354 = vld [vmem:[%s3 + $0x1bc] sm:$0xf]
    %v4355 = vld [vmem:[%s3 + $0x1c0] sm:$0xf]
    %v4356 = vld [vmem:[%s3 + $0x1c4] sm:$0xf]
    %v4357 = vld [vmem:[%s3 + $0x1c8] sm:$0xf]
    %v4358 = vld [vmem:[%s3 + $0x1cc] sm:$0xf]
    %v4359 = vld [vmem:[%s3 + $0x1d0] sm:$0xf]
    %v4360 = vld [vmem:[%s3 + $0x1d4] sm:$0xf]
    %v4361 = vld [vmem:[%s3 + $0x1d8] sm:$0xf]
    %v4362 = vld [vmem:[%s3 + $0x1dc] sm:$0xf]
    %v4363 = vld [vmem:[%s3 + $0x1e0] sm:$0xf]
    %v4364 = vld [vmem:[%s3 + $0x1e4] sm:$0xf]
    %v4365 = vld [vmem:[%s3 + $0x1e8] sm:$0xf]
    %v4366 = vld [vmem:[%s3 + $0x1ec] sm:$0xf]
    %v4367 = vld [vmem:[%s3 + $0x1f0] sm:$0xf]
    %v4368 = vld [vmem:[%s3 + $0x1f4] sm:$0xf]
    %v4369 = vld [vmem:[%s3 + $0x1f8] sm:$0xf]
    %v4370 = vld [vmem:[%s3 + $0x1fc] sm:$0xf]
    %v4371 = vld [vmem:[%s3 + $0x200] sm:$0xf]
    %v4372 = vld [vmem:[%s3 + $0x204] sm:$0xf]
    %v4373 = vld [vmem:[%s3 + $0x208] sm:$0xf]
    %v4374 = vld [vmem:[%s3 + $0x20c] sm:$0xf]
    %v4375 = vld [vmem:[%s3 + $0x210] sm:$0xf]
    %v4376 = vld [vmem:[%s3 + $0x214] sm:$0xf]
    %v4377 = vld [vmem:[%s3 + $0x218] sm:$0xf]
    %v4378 = vld [vmem:[%s3 + $0x21c] sm:$0xf]
    %v4379 = vld [vmem:[%s3 + $0x220] sm:$0xf]
    %v4380 = vld [vmem:[%s3 + $0x224] sm:$0xf]
    %v4381 = vld [vmem:[%s3 + $0x228] sm:$0xf]
    %v4382 = vld [vmem:[%s3 + $0x22c] sm:$0xf]
    %v4383 = vld [vmem:[%s3 + $0x230] sm:$0xf]
    %v4384 = vld [vmem:[%s3 + $0x234] sm:$0xf]
    %v4385 = vld [vmem:[%s3 + $0x238] sm:$0xf]
    %v4386 = vld [vmem:[%s3 + $0x23c] sm:$0xf]
    %v4387 = vld [vmem:[%s3 + $0x240] sm:$0xf]
    %v4388 = vld [vmem:[%s3 + $0x244] sm:$0xf]
    %v4389 = vld [vmem:[%s3 + $0x248] sm:$0xf]
    %v4390 = vld [vmem:[%s3 + $0x24c] sm:$0xf]
    %v4391 = vld [vmem:[%s3 + $0x250] sm:$0xf]
    %v4392 = vld [vmem:[%s3 + $0x254] sm:$0xf]
    %v4393 = vld [vmem:[%s3 + $0x258] sm:$0xf]
    %v4394 = vld [vmem:[%s3 + $0x25c] sm:$0xf]
    %v4395 = vld [vmem:[%s3 + $0x260] sm:$0xf]
    %v4396 = vld [vmem:[%s3 + $0x264] sm:$0xf]
    %v4397 = vld [vmem:[%s3 + $0x268] sm:$0xf]
    %v4398 = vld [vmem:[%s3 + $0x26c] sm:$0xf]
    %v4399 = vld [vmem:[%s3 + $0x270] sm:$0xf]
    %v4400 = vld [vmem:[%s3 + $0x274] sm:$0xf]
    %v4401 = vld [vmem:[%s3 + $0x278] sm:$0xf]
    %v4402 = vld [vmem:[%s3 + $0x27c] sm:$0xf]
    %v4403 = vld [vmem:[%s3 + $0x280] sm:$0xf]
    %v4404 = vld [vmem:[%s3 + $0x284] sm:$0xf]
    %v4405 = vld [vmem:[%s3 + $0x288] sm:$0xf]
    %v4406 = vld [vmem:[%s3 + $0x28c] sm:$0xf]
    %v4407 = vld [vmem:[%s3 + $0x290] sm:$0xf]
    %v4408 = vld [vmem:[%s3 + $0x294] sm:$0xf]
    %v4409 = vld [vmem:[%s3 + $0x298] sm:$0xf]
    %v4410 = vld [vmem:[%s3 + $0x29c] sm:$0xf]
    %v4411 = vld [vmem:[%s3 + $0x2a0] sm:$0xf]
    %v4412 = vld [vmem:[%s3 + $0x2a4] sm:$0xf]
    %v4413 = vld [vmem:[%s3 + $0x2a8] sm:$0xf]
    %v4414 = vld [vmem:[%s3 + $0x2ac] sm:$0xf]
    %v4415 = vld [vmem:[%s3 + $0x2b0] sm:$0xf]
    %v4416 = vld [vmem:[%s3 + $0x2b4] sm:$0xf]
    %v4417 = vld [vmem:[%s3 + $0x2b8] sm:$0xf]
    %v4418 = vld [vmem:[%s3 + $0x2bc] sm:$0xf]
    %v4419 = vld [vmem:[%s3 + $0x2c0] sm:$0xf]
    %v4420 = vld [vmem:[%s3 + $0x2c4] sm:$0xf]
    %v4421 = vld [vmem:[%s3 + $0x2c8] sm:$0xf]
    %v4422 = vld [vmem:[%s3 + $0x2cc] sm:$0xf]
    %v4423 = vld [vmem:[%s3 + $0x2d0] sm:$0xf]
    %v4424 = vld [vmem:[%s3 + $0x2d4] sm:$0xf]
    %v4425 = vld [vmem:[%s3 + $0x2d8] sm:$0xf]
    %v4426 = vld [vmem:[%s3 + $0x2dc] sm:$0xf]
    %v4427 = vld [vmem:[%s3 + $0x2e0] sm:$0xf]
    %v4428 = vld [vmem:[%s3 + $0x2e4] sm:$0xf]
    %v4429 = vld [vmem:[%s3 + $0x2e8] sm:$0xf]
    %v4430 = vld [vmem:[%s3 + $0x2ec] sm:$0xf]
    %v4431 = vld [vmem:[%s3 + $0x2f0] sm:$0xf]
    %v4432 = vld [vmem:[%s3 + $0x2f4] sm:$0xf]
    %v4433 = vld [vmem:[%s3 + $0x2f8] sm:$0xf]
    %v4434 = vld [vmem:[%s3 + $0x2fc] sm:$0xf]
    %v4435 = vld [vmem:[%s3 + $0x300] sm:$0xf]
    %v4436 = vld [vmem:[%s3 + $0x304] sm:$0xf]
    %v4437 = vld [vmem:[%s3 + $0x308] sm:$0xf]
    %v4438 = vld [vmem:[%s3 + $0x30c] sm:$0xf]
    %v4439 = vld [vmem:[%s3 + $0x310] sm:$0xf]
    %v4440 = vld [vmem:[%s3 + $0x314] sm:$0xf]
    %v4441 = vld [vmem:[%s3 + $0x318] sm:$0xf]
    %v4442 = vld [vmem:[%s3 + $0x31c] sm:$0xf]
    %v4443 = vld [vmem:[%s4] sm:$0x1]
    %v4572 = vunpack.c.l.b16 %v4115
    %v4573 = vunpack.c.l.b16 %v4116
    %v4574 = vunpack.c.l.b16 %v4117
    %v4575 = vunpack.c.l.b16 %v4118
    %v4576 = vunpack.c.l.b16 %v4119
    %v4577 = vunpack.c.l.b16 %v4120
    %v4578 = vunpack.c.l.b16 %v4121
    %v4579 = vunpack.c.l.b16 %v4122
    %v4580 = vunpack.c.l.b16 %v4123
    %v4581 = vunpack.c.l.b16 %v4124
    %v4582 = vunpack.c.l.b16 %v4125
    %v4583 = vunpack.c.l.b16 %v4126
    %v4584 = vunpack.c.l.b16 %v4127
    %v4585 = vunpack.c.l.b16 %v4128
    %v4586 = vunpack.c.l.b16 %v4129
    %v4587 = vunpack.c.l.b16 %v4130
    %v4588 = vunpack.c.l.b16 %v4131
    %v4589 = vunpack.c.l.b16 %v4132
    %v4590 = vunpack.c.l.b16 %v4133
    %v4591 = vunpack.c.l.b16 %v4134
    %v4592 = vunpack.c.l.b16 %v4135
    %v4593 = vunpack.c.l.b16 %v4136
    %v4594 = vunpack.c.l.b16 %v4137
    %v4595 = vunpack.c.l.b16 %v4138
    %v4596 = vunpack.c.l.b16 %v4139
    %v4597 = vunpack.c.l.b16 %v4140
    %v4598 = vunpack.c.l.b16 %v4141
    %v4599 = vunpack.c.l.b16 %v4142
    %v4600 = vunpack.c.l.b16 %v4143
    %v4601 = vunpack.c.l.b16 %v4144
    %v4602 = vunpack.c.l.b16 %v4145
    %v4603 = vunpack.c.l.b16 %v4146
    %v4604 = vunpack.c.l.b16 %v4147
    %v4605 = vunpack.c.l.b16 %v4148
    %v4606 = vunpack.c.l.b16 %v4149
    %v4607 = vunpack.c.l.b16 %v4150
    %v4608 = vunpack.c.l.b16 %v4151
    %v4609 = vunpack.c.l.b16 %v4152
    %v4610 = vunpack.c.l.b16 %v4153
    %v4611 = vunpack.c.l.b16 %v4154
    %v4612 = vunpack.c.l.b16 %v4155
    %v4613 = vunpack.c.l.b16 %v4156
    %v4614 = vunpack.c.l.b16 %v4157
    %v4615 = vunpack.c.l.b16 %v4158
    %v4616 = vunpack.c.l.b16 %v4159
    %v4617 = vunpack.c.l.b16 %v4160
    %v4618 = vunpack.c.l.b16 %v4161
    %v4619 = vunpack.c.l.b16 %v4162
    %v4620 = vunpack.c.l.b16 %v4163
    %v4621 = vunpack.c.l.b16 %v4164
    %v4622 = vunpack.c.l.b16 %v4165
    %v4623 = vunpack.c.l.b16 %v4166
    %v4624 = vunpack.c.l.b16 %v4167
    %v4625 = vunpack.c.l.b16 %v4168
    %v4626 = vunpack.c.l.b16 %v4169
    %v4627 = vunpack.c.l.b16 %v4170
    %v4628 = vunpack.c.l.b16 %v4171
    %v4629 = vunpack.c.l.b16 %v4172
    %v4630 = vunpack.c.l.b16 %v4173
    %v4631 = vunpack.c.l.b16 %v4174
    %v4632 = vunpack.c.l.b16 %v4175
    %v4633 = vunpack.c.l.b16 %v4176
    %v4634 = vunpack.c.l.b16 %v4177
    %v4635 = vunpack.c.l.b16 %v4178
    %v4636 = vunpack.c.l.b16 %v4179
    %v4637 = vunpack.c.l.b16 %v4180
    %v4638 = vunpack.c.l.b16 %v4181
    %v4639 = vunpack.c.l.b16 %v4182
    %v4640 = vunpack.c.l.b16 %v4183
    %v4641 = vunpack.c.l.b16 %v4184
    %v4642 = vunpack.c.l.b16 %v4185
    %v4643 = vunpack.c.l.b16 %v4186
    %v4644 = vunpack.c.l.b16 %v4187
    %v4645 = vunpack.c.l.b16 %v4188
    %v4646 = vunpack.c.l.b16 %v4189
    %v4647 = vunpack.c.l.b16 %v4190
    %v4648 = vunpack.c.l.b16 %v4191
    %v4649 = vunpack.c.l.b16 %v4192
    %v4650 = vunpack.c.l.b16 %v4193
    %v4651 = vunpack.c.l.b16 %v4194
    %v4652 = vunpack.c.l.b16 %v4195
    %v4653 = vunpack.c.l.b16 %v4196
    %v4654 = vunpack.c.l.b16 %v4197
    %v4655 = vunpack.c.l.b16 %v4198
    %v4656 = vunpack.c.l.b16 %v4199
    %v4657 = vunpack.c.l.b16 %v4200
    %v4658 = vunpack.c.l.b16 %v4201
    %v4659 = vunpack.c.l.b16 %v4202
    %v4660 = vunpack.c.l.b16 %v4203
    %v4661 = vunpack.c.l.b16 %v4204
    %v4662 = vunpack.c.l.b16 %v4205
    %v4663 = vunpack.c.l.b16 %v4206
    %v4664 = vunpack.c.l.b16 %v4207
    %v4665 = vunpack.c.l.b16 %v4208
    %v4666 = vunpack.c.l.b16 %v4209
    %v4667 = vunpack.c.l.b16 %v4210
    %v4668 = vunpack.c.l.b16 %v4211
    %v4669 = vunpack.c.l.b16 %v4212
    %v4670 = vunpack.c.l.b16 %v4213
    %v4671 = vunpack.c.l.b16 %v4214
    %v4672 = vunpack.c.l.b16 %v4215
    %v4673 = vunpack.c.l.b16 %v4216
    %v4674 = vunpack.c.l.b16 %v4217
    %v4675 = vunpack.c.l.b16 %v4218
    %v4676 = vunpack.c.l.b16 %v4219
    %v4677 = vunpack.c.l.b16 %v4220
    %v4678 = vunpack.c.l.b16 %v4221
    %v4679 = vunpack.c.l.b16 %v4222
    %v4680 = vunpack.c.l.b16 %v4223
    %v4681 = vunpack.c.l.b16 %v4224
    %v4682 = vunpack.c.l.b16 %v4225
    %v4683 = vunpack.c.l.b16 %v4226
    %v4684 = vunpack.c.l.b16 %v4227
    %v4685 = vunpack.c.l.b16 %v4228
    %v4686 = vunpack.c.l.b16 %v4229
    %v4687 = vunpack.c.l.b16 %v4230
    %v4688 = vunpack.c.l.b16 %v4231
    %v4689 = vunpack.c.l.b16 %v4232
    %v4690 = vunpack.c.l.b16 %v4233
    %v4691 = vunpack.c.l.b16 %v4234
    %v4692 = vunpack.c.l.b16 %v4235
    %v4693 = vunpack.c.l.b16 %v4236
    %v4694 = vunpack.c.l.b16 %v4237
    %v4695 = vunpack.c.l.b16 %v4238
    %v4696 = vunpack.c.l.b16 %v4239
    %v4697 = vunpack.c.l.b16 %v4240
    %v4698 = vunpack.c.l.b16 %v4241
    %v4699 = vunpack.c.l.b16 %v4242
    %v4700 = vpack.c.b16 %v4572, %v4572
    %v4701 = vpack.c.b16 %v4573, %v4573
    %v4702 = vpack.c.b16 %v4574, %v4574
    %v4703 = vpack.c.b16 %v4575, %v4575
    %v4704 = vpack.c.b16 %v4576, %v4576
    %v4705 = vpack.c.b16 %v4577, %v4577
    %v4706 = vpack.c.b16 %v4578, %v4578
    %v4707 = vpack.c.b16 %v4579, %v4579
    %v4708 = vpack.c.b16 %v4580, %v4580
    %v4709 = vpack.c.b16 %v4581, %v4581
    %v4710 = vpack.c.b16 %v4582, %v4582
    %v4711 = vpack.c.b16 %v4583, %v4583
    %v4712 = vpack.c.b16 %v4584, %v4584
    %v4713 = vpack.c.b16 %v4585, %v4585
    %v4714 = vpack.c.b16 %v4586, %v4586
    %v4715 = vpack.c.b16 %v4587, %v4587
    %v4716 = vpack.c.b16 %v4588, %v4588
    %v4717 = vpack.c.b16 %v4589, %v4589
    %v4718 = vpack.c.b16 %v4590, %v4590
    %v4719 = vpack.c.b16 %v4591, %v4591
    %v4720 = vpack.c.b16 %v4592, %v4592
    %v4721 = vpack.c.b16 %v4593, %v4593
    %v4722 = vpack.c.b16 %v4594, %v4594
    %v4723 = vpack.c.b16 %v4595, %v4595
    %v4724 = vpack.c.b16 %v4596, %v4596
    %v4725 = vpack.c.b16 %v4597, %v4597
    %v4726 = vpack.c.b16 %v4598, %v4598
    %v4727 = vpack.c.b16 %v4599, %v4599
    %v4728 = vpack.c.b16 %v4600, %v4600
    %v4729 = vpack.c.b16 %v4601, %v4601
    %v4730 = vpack.c.b16 %v4602, %v4602
    %v4731 = vpack.c.b16 %v4603, %v4603
    %v4732 = vpack.c.b16 %v4604, %v4604
    %v4733 = vpack.c.b16 %v4605, %v4605
    %v4734 = vpack.c.b16 %v4606, %v4606
    %v4735 = vpack.c.b16 %v4607, %v4607
    %v4736 = vpack.c.b16 %v4608, %v4608
    %v4737 = vpack.c.b16 %v4609, %v4609
    %v4738 = vpack.c.b16 %v4610, %v4610
    %v4739 = vpack.c.b16 %v4611, %v4611
    %v4740 = vpack.c.b16 %v4612, %v4612
    %v4741 = vpack.c.b16 %v4613, %v4613
    %v4742 = vpack.c.b16 %v4614, %v4614
    %v4743 = vpack.c.b16 %v4615, %v4615
    %v4744 = vpack.c.b16 %v4616, %v4616
    %v4745 = vpack.c.b16 %v4617, %v4617
    %v4746 = vpack.c.b16 %v4618, %v4618
    %v4747 = vpack.c.b16 %v4619, %v4619
    %v4748 = vpack.c.b16 %v4620, %v4620
    %v4749 = vpack.c.b16 %v4621, %v4621
    %v4750 = vpack.c.b16 %v4622, %v4622
    %v4751 = vpack.c.b16 %v4623, %v4623
    %v4752 = vpack.c.b16 %v4624, %v4624
    %v4753 = vpack.c.b16 %v4625, %v4625
    %v4754 = vpack.c.b16 %v4626, %v4626
    %v4755 = vpack.c.b16 %v4627, %v4627
    %v4756 = vpack.c.b16 %v4628, %v4628
    %v4757 = vpack.c.b16 %v4629, %v4629
    %v4758 = vpack.c.b16 %v4630, %v4630
    %v4759 = vpack.c.b16 %v4631, %v4631
    %v4760 = vpack.c.b16 %v4632, %v4632
    %v4761 = vpack.c.b16 %v4633, %v4633
    %v4762 = vpack.c.b16 %v4634, %v4634
    %v4763 = vpack.c.b16 %v4635, %v4635
    %v4764 = vpack.c.b16 %v4636, %v4636
    %v4765 = vpack.c.b16 %v4637, %v4637
    %v4766 = vpack.c.b16 %v4638, %v4638
    %v4767 = vpack.c.b16 %v4639, %v4639
    %v4768 = vpack.c.b16 %v4640, %v4640
    %v4769 = vpack.c.b16 %v4641, %v4641
    %v4770 = vpack.c.b16 %v4642, %v4642
    %v4771 = vpack.c.b16 %v4643, %v4643
    %v4772 = vpack.c.b16 %v4644, %v4644
    %v4773 = vpack.c.b16 %v4645, %v4645
    %v4774 = vpack.c.b16 %v4646, %v4646
    %v4775 = vpack.c.b16 %v4647, %v4647
    %v4776 = vpack.c.b16 %v4648, %v4648
    %v4777 = vpack.c.b16 %v4649, %v4649
    %v4778 = vpack.c.b16 %v4650, %v4650
    %v4779 = vpack.c.b16 %v4651, %v4651
    %v4780 = vpack.c.b16 %v4652, %v4652
    %v4781 = vpack.c.b16 %v4653, %v4653
    %v4782 = vpack.c.b16 %v4654, %v4654
    %v4783 = vpack.c.b16 %v4655, %v4655
    %v4784 = vpack.c.b16 %v4656, %v4656
    %v4785 = vpack.c.b16 %v4657, %v4657
    %v4786 = vpack.c.b16 %v4658, %v4658
    %v4787 = vpack.c.b16 %v4659, %v4659
    %v4788 = vpack.c.b16 %v4660, %v4660
    %v4789 = vpack.c.b16 %v4661, %v4661
    %v4790 = vpack.c.b16 %v4662, %v4662
    %v4791 = vpack.c.b16 %v4663, %v4663
    %v4792 = vpack.c.b16 %v4664, %v4664
    %v4793 = vpack.c.b16 %v4665, %v4665
    %v4794 = vpack.c.b16 %v4666, %v4666
    %v4795 = vpack.c.b16 %v4667, %v4667
    %v4796 = vpack.c.b16 %v4668, %v4668
    %v4797 = vpack.c.b16 %v4669, %v4669
    %v4798 = vpack.c.b16 %v4670, %v4670
    %v4799 = vpack.c.b16 %v4671, %v4671
    %v4800 = vpack.c.b16 %v4672, %v4672
    %v4801 = vpack.c.b16 %v4673, %v4673
    %v4802 = vpack.c.b16 %v4674, %v4674
    %v4803 = vpack.c.b16 %v4675, %v4675
    %v4804 = vpack.c.b16 %v4676, %v4676
    %v4805 = vpack.c.b16 %v4677, %v4677
    %v4806 = vpack.c.b16 %v4678, %v4678
    %v4807 = vpack.c.b16 %v4679, %v4679
    %v4808 = vpack.c.b16 %v4680, %v4680
    %v4809 = vpack.c.b16 %v4681, %v4681
    %v4810 = vpack.c.b16 %v4682, %v4682
    %v4811 = vpack.c.b16 %v4683, %v4683
    %v4812 = vpack.c.b16 %v4684, %v4684
    %v4813 = vpack.c.b16 %v4685, %v4685
    %v4814 = vpack.c.b16 %v4686, %v4686
    %v4815 = vpack.c.b16 %v4687, %v4687
    %v4816 = vpack.c.b16 %v4688, %v4688
    %v4817 = vpack.c.b16 %v4689, %v4689
    %v4818 = vpack.c.b16 %v4690, %v4690
    %v4819 = vpack.c.b16 %v4691, %v4691
    %v4820 = vpack.c.b16 %v4692, %v4692
    %v4821 = vpack.c.b16 %v4693, %v4693
    %v4822 = vpack.c.b16 %v4694, %v4694
    %v4823 = vpack.c.b16 %v4695, %v4695
    %v4824 = vpack.c.b16 %v4696, %v4696
    %v4825 = vpack.c.b16 %v4697, %v4697
    %v4826 = vpack.c.b16 %v4698, %v4698
    %v4827 = vpack.c.b16 %v4699, %v4699
    %v4828 = vunpack.c.l.b16 %v4700
    %v4829 = vunpack.c.l.b16 %v4701
    %v4830 = vunpack.c.l.b16 %v4702
    %v4831 = vunpack.c.l.b16 %v4703
    %v4832 = vunpack.c.l.b16 %v4704
    %v4833 = vunpack.c.l.b16 %v4705
    %v4834 = vunpack.c.l.b16 %v4706
    %v4835 = vunpack.c.l.b16 %v4707
    %v4836 = vunpack.c.l.b16 %v4708
    %v4837 = vunpack.c.l.b16 %v4709
    %v4838 = vunpack.c.l.b16 %v4710
    %v4839 = vunpack.c.l.b16 %v4711
    %v4840 = vunpack.c.l.b16 %v4712
    %v4841 = vunpack.c.l.b16 %v4713
    %v4842 = vunpack.c.l.b16 %v4714
    %v4843 = vunpack.c.l.b16 %v4715
    %v4844 = vunpack.c.l.b16 %v4716
    %v4845 = vunpack.c.l.b16 %v4717
    %v4846 = vunpack.c.l.b16 %v4718
    %v4847 = vunpack.c.l.b16 %v4719
    %v4848 = vunpack.c.l.b16 %v4720
    %v4849 = vunpack.c.l.b16 %v4721
    %v4850 = vunpack.c.l.b16 %v4722
    %v4851 = vunpack.c.l.b16 %v4723
    %v4852 = vunpack.c.l.b16 %v4724
    %v4853 = vunpack.c.l.b16 %v4725
    %v4854 = vunpack.c.l.b16 %v4726
    %v4855 = vunpack.c.l.b16 %v4727
    %v4856 = vunpack.c.l.b16 %v4728
    %v4857 = vunpack.c.l.b16 %v4729
    %v4858 = vunpack.c.l.b16 %v4730
    %v4859 = vunpack.c.l.b16 %v4731
    %v4860 = vunpack.c.l.b16 %v4732
    %v4861 = vunpack.c.l.b16 %v4733
    %v4862 = vunpack.c.l.b16 %v4734
    %v4863 = vunpack.c.l.b16 %v4735
    %v4864 = vunpack.c.l.b16 %v4736
    %v4865 = vunpack.c.l.b16 %v4737
    %v4866 = vunpack.c.l.b16 %v4738
    %v4867 = vunpack.c.l.b16 %v4739
    %v4868 = vunpack.c.l.b16 %v4740
    %v4869 = vunpack.c.l.b16 %v4741
    %v4870 = vunpack.c.l.b16 %v4742
    %v4871 = vunpack.c.l.b16 %v4743
    %v4872 = vunpack.c.l.b16 %v4744
    %v4873 = vunpack.c.l.b16 %v4745
    %v4874 = vunpack.c.l.b16 %v4746
    %v4875 = vunpack.c.l.b16 %v4747
    %v4876 = vunpack.c.l.b16 %v4748
    %v4877 = vunpack.c.l.b16 %v4749
    %v4878 = vunpack.c.l.b16 %v4750
    %v4879 = vunpack.c.l.b16 %v4751
    %v4880 = vunpack.c.l.b16 %v4752
    %v4881 = vunpack.c.l.b16 %v4753
    %v4882 = vunpack.c.l.b16 %v4754
    %v4883 = vunpack.c.l.b16 %v4755
    %v4884 = vunpack.c.l.b16 %v4756
    %v4885 = vunpack.c.l.b16 %v4757
    %v4886 = vunpack.c.l.b16 %v4758
    %v4887 = vunpack.c.l.b16 %v4759
    %v4888 = vunpack.c.l.b16 %v4760
    %v4889 = vunpack.c.l.b16 %v4761
    %v4890 = vunpack.c.l.b16 %v4762
    %v4891 = vunpack.c.l.b16 %v4763
    %v4892 = vunpack.c.l.b16 %v4764
    %v4893 = vunpack.c.l.b16 %v4765
    %v4894 = vunpack.c.l.b16 %v4766
    %v4895 = vunpack.c.l.b16 %v4767
    %v4896 = vunpack.c.l.b16 %v4768
    %v4897 = vunpack.c.l.b16 %v4769
    %v4898 = vunpack.c.l.b16 %v4770
    %v4899 = vunpack.c.l.b16 %v4771
    %v4900 = vunpack.c.l.b16 %v4772
    %v4901 = vunpack.c.l.b16 %v4773
    %v4902 = vunpack.c.l.b16 %v4774
    %v4903 = vunpack.c.l.b16 %v4775
    %v4904 = vunpack.c.l.b16 %v4776
    %v4905 = vunpack.c.l.b16 %v4777
    %v4906 = vunpack.c.l.b16 %v4778
    %v4907 = vunpack.c.l.b16 %v4779
    %v4908 = vunpack.c.l.b16 %v4780
    %v4909 = vunpack.c.l.b16 %v4781
    %v4910 = vunpack.c.l.b16 %v4782
    %v4911 = vunpack.c.l.b16 %v4783
    %v4912 = vunpack.c.l.b16 %v4784
    %v4913 = vunpack.c.l.b16 %v4785
    %v4914 = vunpack.c.l.b16 %v4786
    %v4915 = vunpack.c.l.b16 %v4787
    %v4916 = vunpack.c.l.b16 %v4788
    %v4917 = vunpack.c.l.b16 %v4789
    %v4918 = vunpack.c.l.b16 %v4790
    %v4919 = vunpack.c.l.b16 %v4791
    %v4920 = vunpack.c.l.b16 %v4792
    %v4921 = vunpack.c.l.b16 %v4793
    %v4922 = vunpack.c.l.b16 %v4794
    %v4923 = vunpack.c.l.b16 %v4795
    %v4924 = vunpack.c.l.b16 %v4796
    %v4925 = vunpack.c.l.b16 %v4797
    %v4926 = vunpack.c.l.b16 %v4798
    %v4927 = vunpack.c.l.b16 %v4799
    %v4928 = vunpack.c.l.b16 %v4800
    %v4929 = vunpack.c.l.b16 %v4801
    %v4930 = vunpack.c.l.b16 %v4802
    %v4931 = vunpack.c.l.b16 %v4803
    %v4932 = vunpack.c.l.b16 %v4804
    %v4933 = vunpack.c.l.b16 %v4805
    %v4934 = vunpack.c.l.b16 %v4806
    %v4935 = vunpack.c.l.b16 %v4807
    %v4936 = vunpack.c.l.b16 %v4808
    %v4937 = vunpack.c.l.b16 %v4809
    %v4938 = vunpack.c.l.b16 %v4810
    %v4939 = vunpack.c.l.b16 %v4811
    %v4940 = vunpack.c.l.b16 %v4812
    %v4941 = vunpack.c.l.b16 %v4813
    %v4942 = vunpack.c.l.b16 %v4814
    %v4943 = vunpack.c.l.b16 %v4815
    %v4944 = vunpack.c.l.b16 %v4816
    %v4945 = vunpack.c.l.b16 %v4817
    %v4946 = vunpack.c.l.b16 %v4818
    %v4947 = vunpack.c.l.b16 %v4819
    %v4948 = vunpack.c.l.b16 %v4820
    %v4949 = vunpack.c.l.b16 %v4821
    %v4950 = vunpack.c.l.b16 %v4822
    %v4951 = vunpack.c.l.b16 %v4823
    %v4952 = vunpack.c.l.b16 %v4824
    %v4953 = vunpack.c.l.b16 %v4825
    %v4954 = vunpack.c.l.b16 %v4826
    %v4955 = vunpack.c.l.b16 %v4827
    %v4956 = vrot.slane %v4828, 6
    %v4957 = vrot.slane %v4829, 5
    %v4958 = vsel %vm923, %v4957, %v4956
    %v4959 = vrot.slane %v4830, 4
    %vm4960 = vcmask 1044484
    %v4961 = vsel %vm4960, %v4959, %v4958
    %v4962 = vrot.slane %v4831, 3
    %vm4963 = vcmask 1045509
    %v4964 = vsel %vm4963, %v4962, %v4961
    %v4965 = vrot.slane %v4832, 2
    %vm4966 = vcmask 1046534
    %v4967 = vsel %vm4966, %v4965, %v4964
    %v4968 = vrot.slane %v4833, 1
    %vm4969 = vcmask 1047559
    %v4970 = vsel %vm4969, %v4968, %v4967
    %v4971 = vrot.slane %v4835, 7
    %v4972 = vsel %vm915, %v4971, %v4834
    %v4973 = vrot.slane %v4836, 6
    %v4974 = vrot.slane %v4837, 5
    %v4975 = vsel %vm923, %v4974, %v4973
    %v4976 = vrot.slane %v4838, 4
    %v4977 = vsel %vm4960, %v4976, %v4975
    %v4978 = vrot.slane %v4839, 3
    %v4979 = vsel %vm4963, %v4978, %v4977
    %v4980 = vrot.slane %v4840, 2
    %v4981 = vsel %vm4966, %v4980, %v4979
    %v4982 = vrot.slane %v4841, 1
    %v4983 = vsel %vm4969, %v4982, %v4981
    %v4984 = vrot.slane %v4843, 7
    %v4985 = vsel %vm915, %v4984, %v4842
    %v4986 = vrot.slane %v4844, 6
    %v4987 = vrot.slane %v4845, 5
    %v4988 = vsel %vm923, %v4987, %v4986
    %v4989 = vrot.slane %v4846, 4
    %v4990 = vsel %vm4960, %v4989, %v4988
    %v4991 = vrot.slane %v4847, 3
    %v4992 = vsel %vm4963, %v4991, %v4990
    %v4993 = vrot.slane %v4848, 2
    %v4994 = vsel %vm4966, %v4993, %v4992
    %v4995 = vrot.slane %v4849, 1
    %v4996 = vsel %vm4969, %v4995, %v4994
    %v4997 = vrot.slane %v4851, 7
    %v4998 = vsel %vm915, %v4997, %v4850
    %v4999 = vrot.slane %v4852, 6
    %v5000 = vrot.slane %v4853, 5
    %v5001 = vsel %vm923, %v5000, %v4999
    %v5002 = vrot.slane %v4854, 4
    %v5003 = vsel %vm4960, %v5002, %v5001
    %v5004 = vrot.slane %v4855, 3
    %v5005 = vsel %vm4963, %v5004, %v5003
    %v5006 = vrot.slane %v4856, 2
    %v5007 = vsel %vm4966, %v5006, %v5005
    %v5008 = vrot.slane %v4857, 1
    %v5009 = vsel %vm4969, %v5008, %v5007
    %v5010 = vrot.slane %v4859, 7
    %v5011 = vsel %vm915, %v5010, %v4858
    %v5012 = vrot.slane %v4860, 6
    %v5013 = vrot.slane %v4861, 5
    %v5014 = vsel %vm923, %v5013, %v5012
    %v5015 = vrot.slane %v4862, 4
    %v5016 = vsel %vm4960, %v5015, %v5014
    %v5017 = vrot.slane %v4863, 3
    %v5018 = vsel %vm4963, %v5017, %v5016
    %v5019 = vrot.slane %v4864, 2
    %v5020 = vsel %vm4966, %v5019, %v5018
    %v5021 = vrot.slane %v4865, 1
    %v5022 = vsel %vm4969, %v5021, %v5020
    %v5023 = vrot.slane %v4867, 7
    %v5024 = vsel %vm915, %v5023, %v4866
    %v5025 = vrot.slane %v4868, 6
    %v5026 = vrot.slane %v4869, 5
    %v5027 = vsel %vm923, %v5026, %v5025
    %v5028 = vrot.slane %v4870, 4
    %v5029 = vsel %vm4960, %v5028, %v5027
    %v5030 = vrot.slane %v4871, 3
    %v5031 = vsel %vm4963, %v5030, %v5029
    %v5032 = vrot.slane %v4872, 2
    %v5033 = vsel %vm4966, %v5032, %v5031
    %v5034 = vrot.slane %v4873, 1
    %v5035 = vsel %vm4969, %v5034, %v5033
    %v5036 = vrot.slane %v4875, 7
    %v5037 = vsel %vm915, %v5036, %v4874
    %v5038 = vrot.slane %v4876, 6
    %v5039 = vrot.slane %v4877, 5
    %v5040 = vsel %vm923, %v5039, %v5038
    %v5041 = vrot.slane %v4878, 4
    %v5042 = vsel %vm4960, %v5041, %v5040
    %v5043 = vrot.slane %v4879, 3
    %v5044 = vsel %vm4963, %v5043, %v5042
    %v5045 = vrot.slane %v4880, 2
    %v5046 = vsel %vm4966, %v5045, %v5044
    %v5047 = vrot.slane %v4881, 1
    %v5048 = vsel %vm4969, %v5047, %v5046
    %v5049 = vrot.slane %v4883, 7
    %v5050 = vsel %vm915, %v5049, %v4882
    %v5051 = vrot.slane %v4884, 6
    %v5052 = vrot.slane %v4885, 5
    %v5053 = vsel %vm923, %v5052, %v5051
    %v5054 = vrot.slane %v4886, 4
    %v5055 = vsel %vm4960, %v5054, %v5053
    %v5056 = vrot.slane %v4887, 3
    %v5057 = vsel %vm4963, %v5056, %v5055
    %v5058 = vrot.slane %v4888, 2
    %v5059 = vsel %vm4966, %v5058, %v5057
    %v5060 = vrot.slane %v4889, 1
    %v5061 = vsel %vm4969, %v5060, %v5059
    %v5062 = vrot.slane %v4891, 7
    %v5063 = vsel %vm915, %v5062, %v4890
    %v5064 = vrot.slane %v4892, 6
    %v5065 = vrot.slane %v4893, 5
    %v5066 = vsel %vm923, %v5065, %v5064
    %v5067 = vrot.slane %v4894, 4
    %v5068 = vsel %vm4960, %v5067, %v5066
    %v5069 = vrot.slane %v4895, 3
    %v5070 = vsel %vm4963, %v5069, %v5068
    %v5071 = vrot.slane %v4896, 2
    %v5072 = vsel %vm4966, %v5071, %v5070
    %v5073 = vrot.slane %v4897, 1
    %v5074 = vsel %vm4969, %v5073, %v5072
    %v5075 = vrot.slane %v4899, 7
    %v5076 = vsel %vm915, %v5075, %v4898
    %v5077 = vrot.slane %v4900, 6
    %v5078 = vrot.slane %v4901, 5
    %v5079 = vsel %vm923, %v5078, %v5077
    %v5080 = vrot.slane %v4902, 4
    %v5081 = vsel %vm4960, %v5080, %v5079
    %v5082 = vrot.slane %v4903, 3
    %v5083 = vsel %vm4963, %v5082, %v5081
    %v5084 = vrot.slane %v4904, 2
    %v5085 = vsel %vm4966, %v5084, %v5083
    %v5086 = vrot.slane %v4905, 1
    %v5087 = vsel %vm4969, %v5086, %v5085
    %v5088 = vrot.slane %v4907, 7
    %v5089 = vsel %vm915, %v5088, %v4906
    %v5090 = vrot.slane %v4908, 6
    %v5091 = vrot.slane %v4909, 5
    %v5092 = vsel %vm923, %v5091, %v5090
    %v5093 = vrot.slane %v4910, 4
    %v5094 = vsel %vm4960, %v5093, %v5092
    %v5095 = vrot.slane %v4911, 3
    %v5096 = vsel %vm4963, %v5095, %v5094
    %v5097 = vrot.slane %v4912, 2
    %v5098 = vsel %vm4966, %v5097, %v5096
    %v5099 = vrot.slane %v4913, 1
    %v5100 = vsel %vm4969, %v5099, %v5098
    %v5101 = vrot.slane %v4915, 7
    %v5102 = vsel %vm915, %v5101, %v4914
    %v5103 = vrot.slane %v4916, 6
    %v5104 = vrot.slane %v4917, 5
    %v5105 = vsel %vm923, %v5104, %v5103
    %v5106 = vrot.slane %v4918, 4
    %v5107 = vsel %vm4960, %v5106, %v5105
    %v5108 = vrot.slane %v4919, 3
    %v5109 = vsel %vm4963, %v5108, %v5107
    %v5110 = vrot.slane %v4920, 2
    %v5111 = vsel %vm4966, %v5110, %v5109
    %v5112 = vrot.slane %v4921, 1
    %v5113 = vsel %vm4969, %v5112, %v5111
    %v5114 = vrot.slane %v4923, 7
    %v5115 = vsel %vm915, %v5114, %v4922
    %v5116 = vrot.slane %v4924, 6
    %v5117 = vrot.slane %v4925, 5
    %v5118 = vsel %vm923, %v5117, %v5116
    %v5119 = vrot.slane %v4926, 4
    %v5120 = vsel %vm4960, %v5119, %v5118
    %v5121 = vrot.slane %v4927, 3
    %v5122 = vsel %vm4963, %v5121, %v5120
    %v5123 = vrot.slane %v4928, 2
    %v5124 = vsel %vm4966, %v5123, %v5122
    %v5125 = vrot.slane %v4929, 1
    %v5126 = vsel %vm4969, %v5125, %v5124
    %v5127 = vrot.slane %v4931, 7
    %v5128 = vsel %vm915, %v5127, %v4930
    %v5129 = vrot.slane %v4932, 6
    %v5130 = vrot.slane %v4933, 5
    %v5131 = vsel %vm923, %v5130, %v5129
    %v5132 = vrot.slane %v4934, 4
    %v5133 = vsel %vm4960, %v5132, %v5131
    %v5134 = vrot.slane %v4935, 3
    %v5135 = vsel %vm4963, %v5134, %v5133
    %v5136 = vrot.slane %v4936, 2
    %v5137 = vsel %vm4966, %v5136, %v5135
    %v5138 = vrot.slane %v4937, 1
    %v5139 = vsel %vm4969, %v5138, %v5137
    %v5140 = vrot.slane %v4939, 7
    %v5141 = vsel %vm915, %v5140, %v4938
    %v5142 = vrot.slane %v4940, 6
    %v5143 = vrot.slane %v4941, 5
    %v5144 = vsel %vm923, %v5143, %v5142
    %v5145 = vrot.slane %v4942, 4
    %v5146 = vsel %vm4960, %v5145, %v5144
    %v5147 = vrot.slane %v4943, 3
    %v5148 = vsel %vm4963, %v5147, %v5146
    %v5149 = vrot.slane %v4944, 2
    %v5150 = vsel %vm4966, %v5149, %v5148
    %v5151 = vrot.slane %v4945, 1
    %v5152 = vsel %vm4969, %v5151, %v5150
    %v5153 = vrot.slane %v4947, 7
    %v5154 = vsel %vm915, %v5153, %v4946
    %v5155 = vrot.slane %v4948, 6
    %v5156 = vrot.slane %v4949, 5
    %v5157 = vsel %vm923, %v5156, %v5155
    %v5158 = vrot.slane %v4950, 4
    %v5159 = vsel %vm4960, %v5158, %v5157
    %v5160 = vrot.slane %v4951, 3
    %v5161 = vsel %vm4963, %v5160, %v5159
    %v5162 = vrot.slane %v4952, 2
    %v5163 = vsel %vm4966, %v5162, %v5161
    %v5164 = vrot.slane %v4953, 1
    %v5165 = vsel %vm4969, %v5164, %v5163
    %v5166 = vrot.slane %v4955, 7
    %v5167 = vsel %vm915, %v5166, %v4954
    %v5168 = vpack.c.b16 %v4972, %v4970
    %v5169 = vpack.c.b16 %v4985, %v4983
    %v5170 = vpack.c.b16 %v4998, %v4996
    %v5171 = vpack.c.b16 %v5011, %v5009
    %v5172 = vpack.c.b16 %v5024, %v5022
    %v5173 = vpack.c.b16 %v5037, %v5035
    %v5174 = vpack.c.b16 %v5050, %v5048
    %v5175 = vpack.c.b16 %v5063, %v5061
    %v5176 = vpack.c.b16 %v5076, %v5074
    %v5177 = vpack.c.b16 %v5089, %v5087
    %v5178 = vpack.c.b16 %v5102, %v5100
    %v5179 = vpack.c.b16 %v5115, %v5113
    %v5180 = vpack.c.b16 %v5128, %v5126
    %v5181 = vpack.c.b16 %v5141, %v5139
    %v5182 = vpack.c.b16 %v5154, %v5152
    %v5183 = vpack.c.b16 %v5167, %v5165
    %v5186 = vsel %vm911, 0, %v5168
    %v5188 = vsel %vm911, 0, %v5169
    %v5190 = vsel %vm911, 0, %v5170
    %v5192 = vsel %vm911, 0, %v5171
    %v5194 = vsel %vm911, 0, %v5172
    %v5196 = vsel %vm911, 0, %v5173
    %v5198 = vsel %vm911, 0, %v5174
    %v5200 = vsel %vm911, 0, %v5175
    %v5202 = vsel %vm911, 0, %v5176
    %v5204 = vsel %vm911, 0, %v5177
    %v5206 = vsel %vm911, 0, %v5178
    %v5208 = vsel %vm911, 0, %v5179
    %v5210 = vsel %vm911, 0, %v5180
    %v5212 = vsel %vm911, 0, %v5181
    %v5214 = vsel %vm911, 0, %v5182
    %v5216 = vsel %vm911, 0, %v5183
    %vm5217 = vcmask 1044480
    %v5218 = vsel %vm5217, %v5186, 0
    %v5219 = vsel %vm5217, %v5188, 0
    %v5220 = vsel %vm5217, %v5190, 0
    %v5221 = vsel %vm5217, %v5192, 0
    %v5222 = vsel %vm5217, %v5194, 0
    %v5223 = vsel %vm5217, %v5196, 0
    %v5224 = vsel %vm5217, %v5198, 0
    %v5225 = vsel %vm5217, %v5200, 0
    %v5226 = vsel %vm5217, %v5202, 0
    %v5227 = vsel %vm5217, %v5204, 0
    %v5228 = vsel %vm5217, %v5206, 0
    %v5229 = vsel %vm5217, %v5208, 0
    %v5230 = vsel %vm5217, %v5210, 0
    %v5231 = vsel %vm5217, %v5212, 0
    %v5232 = vsel %vm5217, %v5214, 0
    %v5233 = vsel %vm5217, %v5216, 0
    %v5247 = vunpack.c.l.b16 0
    %v5248 = vunpack.c.h.b16 0
    %v5249 = vunpack.c.l.b16 %v5218
    %v5250 = vunpack.c.h.b16 %v5218
    %v5251 = vunpack.c.l.b16 %v5219
    %v5252 = vunpack.c.h.b16 %v5219
    %v5253 = vunpack.c.l.b16 %v5220
    %v5254 = vunpack.c.h.b16 %v5220
    %v5255 = vunpack.c.l.b16 %v5221
    %v5256 = vunpack.c.h.b16 %v5221
    %v5257 = vunpack.c.l.b16 %v5222
    %v5258 = vunpack.c.h.b16 %v5222
    %v5259 = vunpack.c.l.b16 %v5223
    %v5260 = vunpack.c.h.b16 %v5223
    %v5261 = vunpack.c.l.b16 %v5226
    %v5262 = vunpack.c.h.b16 %v5226
    %v5263 = vunpack.c.l.b16 %v5227
    %v5264 = vunpack.c.h.b16 %v5227
    %v5265 = vunpack.c.l.b16 %v5228
    %v5266 = vunpack.c.h.b16 %v5228
    %v5267 = vunpack.c.l.b16 %v5229
    %v5268 = vunpack.c.h.b16 %v5229
    %v5269 = vunpack.c.l.b16 %v5230
    %v5270 = vunpack.c.h.b16 %v5230
    %v5271 = vunpack.c.l.b16 %v5231
    %v5272 = vunpack.c.h.b16 %v5231
    %v5273 = vpack.c.b16 %v5247, %v5247
    %v5274 = vpack.c.b16 %v5248, %v5248
    %v5275 = vpack.c.b16 %v5249, %v5249
    %v5276 = vpack.c.b16 %v5250, %v5250
    %v5277 = vpack.c.b16 %v5251, %v5251
    %v5278 = vpack.c.b16 %v5252, %v5252
    %v5279 = vpack.c.b16 %v5253, %v5253
    %v5280 = vpack.c.b16 %v5254, %v5254
    %v5281 = vpack.c.b16 %v5255, %v5255
    %v5282 = vpack.c.b16 %v5256, %v5256
    %v5283 = vpack.c.b16 %v5257, %v5257
    %v5284 = vpack.c.b16 %v5258, %v5258
    %v5285 = vpack.c.b16 %v5259, %v5259
    %v5286 = vpack.c.b16 %v5260, %v5260
    %v5287 = vpack.c.b16 %v5261, %v5261
    %v5288 = vpack.c.b16 %v5262, %v5262
    %v5289 = vpack.c.b16 %v5263, %v5263
    %v5290 = vpack.c.b16 %v5264, %v5264
    %v5291 = vpack.c.b16 %v5265, %v5265
    %v5292 = vpack.c.b16 %v5266, %v5266
    %v5293 = vpack.c.b16 %v5267, %v5267
    %v5294 = vpack.c.b16 %v5268, %v5268
    %v5295 = vpack.c.b16 %v5269, %v5269
    %v5296 = vpack.c.b16 %v5270, %v5270
    %v5297 = vpack.c.b16 %v5271, %v5271
    %v5298 = vpack.c.b16 %v5272, %v5272
    %vm5299 = vsmask.f32 3328
    %vm5300 = vsmask.f32 7440
    %vm5301 = vmor %vm5299, %vm5300
    %v5303 = vshrl.u32 %v5273, 16
    %v5305 = vrot.slane %v5303, 4
    %v5306 = vshll.u32 %v5273, 16
    %v5308 = vrot.slane %v5306, 5
    %v5309 = vor.u32 %v5305, %v5308
    %v5310 = vrot.slane %v5309, 4
    %v5312 = vshll.u32 %v5274, 16
    %v5314 = vrot.slane %v5312, 5
    %v5315 = vsel %vm5301, %v5310, %v5314
    %v5317 = vshrl.u32 %v5275, 16
    %v5319 = vrot.slane %v5317, 4
    %v5320 = vshll.u32 %v5275, 16
    %v5322 = vrot.slane %v5320, 5
    %v5323 = vor.u32 %v5319, %v5322
    %v5324 = vrot.slane %v5323, 4
    %v5326 = vshll.u32 %v5276, 16
    %v5328 = vrot.slane %v5326, 5
    %v5329 = vsel %vm5301, %v5324, %v5328
    %v5331 = vshrl.u32 %v5277, 16
    %v5333 = vrot.slane %v5331, 4
    %v5334 = vshll.u32 %v5277, 16
    %v5336 = vrot.slane %v5334, 5
    %v5337 = vor.u32 %v5333, %v5336
    %v5338 = vrot.slane %v5337, 4
    %v5340 = vshll.u32 %v5278, 16
    %v5342 = vrot.slane %v5340, 5
    %v5343 = vsel %vm5301, %v5338, %v5342
    %v5345 = vshrl.u32 %v5279, 16
    %v5347 = vrot.slane %v5345, 4
    %v5348 = vshll.u32 %v5279, 16
    %v5350 = vrot.slane %v5348, 5
    %v5351 = vor.u32 %v5347, %v5350
    %v5352 = vrot.slane %v5351, 4
    %v5354 = vshll.u32 %v5280, 16
    %v5356 = vrot.slane %v5354, 5
    %v5357 = vsel %vm5301, %v5352, %v5356
    %v5359 = vshrl.u32 %v5281, 16
    %v5361 = vrot.slane %v5359, 4
    %v5362 = vshll.u32 %v5281, 16
    %v5364 = vrot.slane %v5362, 5
    %v5365 = vor.u32 %v5361, %v5364
    %v5366 = vrot.slane %v5365, 4
    %v5368 = vshll.u32 %v5282, 16
    %v5370 = vrot.slane %v5368, 5
    %v5371 = vsel %vm5301, %v5366, %v5370
    %v5373 = vshrl.u32 %v5283, 16
    %v5375 = vrot.slane %v5373, 4
    %v5376 = vshll.u32 %v5283, 16
    %v5378 = vrot.slane %v5376, 5
    %v5379 = vor.u32 %v5375, %v5378
    %v5380 = vrot.slane %v5379, 4
    %v5382 = vshll.u32 %v5284, 16
    %v5384 = vrot.slane %v5382, 5
    %v5385 = vsel %vm5301, %v5380, %v5384
    %v5387 = vshrl.u32 %v5285, 16
    %v5389 = vrot.slane %v5387, 4
    %v5390 = vshll.u32 %v5285, 16
    %v5392 = vrot.slane %v5390, 5
    %v5393 = vor.u32 %v5389, %v5392
    %v5394 = vrot.slane %v5393, 4
    %v5396 = vshll.u32 %v5286, 16
    %v5398 = vrot.slane %v5396, 5
    %v5399 = vsel %vm5301, %v5394, %v5398
    %v5401 = vshrl.u32 %v5287, 16
    %v5403 = vrot.slane %v5401, 4
    %v5404 = vshll.u32 %v5287, 16
    %v5406 = vrot.slane %v5404, 5
    %v5407 = vor.u32 %v5403, %v5406
    %v5408 = vrot.slane %v5407, 4
    %v5410 = vshll.u32 %v5288, 16
    %v5412 = vrot.slane %v5410, 5
    %v5413 = vsel %vm5301, %v5408, %v5412
    %v5415 = vshrl.u32 %v5289, 16
    %v5417 = vrot.slane %v5415, 4
    %v5418 = vshll.u32 %v5289, 16
    %v5420 = vrot.slane %v5418, 5
    %v5421 = vor.u32 %v5417, %v5420
    %v5422 = vrot.slane %v5421, 4
    %v5424 = vshll.u32 %v5290, 16
    %v5426 = vrot.slane %v5424, 5
    %v5427 = vsel %vm5301, %v5422, %v5426
    %v5429 = vshrl.u32 %v5291, 16
    %v5431 = vrot.slane %v5429, 4
    %v5432 = vshll.u32 %v5291, 16
    %v5434 = vrot.slane %v5432, 5
    %v5435 = vor.u32 %v5431, %v5434
    %v5436 = vrot.slane %v5435, 4
    %v5438 = vshll.u32 %v5292, 16
    %v5440 = vrot.slane %v5438, 5
    %v5441 = vsel %vm5301, %v5436, %v5440
    %v5443 = vshrl.u32 %v5293, 16
    %v5445 = vrot.slane %v5443, 4
    %v5446 = vshll.u32 %v5293, 16
    %v5448 = vrot.slane %v5446, 5
    %v5449 = vor.u32 %v5445, %v5448
    %v5450 = vrot.slane %v5449, 4
    %v5452 = vshll.u32 %v5294, 16
    %v5454 = vrot.slane %v5452, 5
    %v5455 = vsel %vm5301, %v5450, %v5454
    %v5457 = vshrl.u32 %v5295, 16
    %v5459 = vrot.slane %v5457, 4
    %v5460 = vshll.u32 %v5295, 16
    %v5462 = vrot.slane %v5460, 5
    %v5463 = vor.u32 %v5459, %v5462
    %v5464 = vrot.slane %v5463, 4
    %v5466 = vshll.u32 %v5296, 16
    %v5468 = vrot.slane %v5466, 5
    %v5469 = vsel %vm5301, %v5464, %v5468
    %v5471 = vshrl.u32 %v5297, 16
    %v5473 = vrot.slane %v5471, 4
    %v5474 = vshll.u32 %v5297, 16
    %v5476 = vrot.slane %v5474, 5
    %v5477 = vor.u32 %v5473, %v5476
    %v5478 = vrot.slane %v5477, 4
    %v5480 = vshll.u32 %v5298, 16
    %v5482 = vrot.slane %v5480, 5
    %v5483 = vsel %vm5301, %v5478, %v5482
    %vm5484 = vcmask 1042432
    %vm5485 = vcmask 1046532
    %vm5486 = vmor %vm5484, %vm5485
    %v5487 = vrot.slane %v5273, 5
    %v5488 = vrot.slane %v5487, 4
    %v5489 = vrot.slane %v5274, 5
    %v5490 = vsel %vm5486, %v5488, %v5489
    %v5491 = vrot.slane %v5275, 5
    %v5492 = vrot.slane %v5491, 4
    %v5493 = vrot.slane %v5276, 5
    %v5494 = vsel %vm5486, %v5492, %v5493
    %v5495 = vrot.slane %v5277, 5
    %v5496 = vrot.slane %v5495, 4
    %v5497 = vrot.slane %v5278, 5
    %v5498 = vsel %vm5486, %v5496, %v5497
    %v5499 = vrot.slane %v5279, 5
    %v5500 = vrot.slane %v5499, 4
    %v5501 = vrot.slane %v5280, 5
    %v5502 = vsel %vm5486, %v5500, %v5501
    %v5503 = vrot.slane %v5281, 5
    %v5504 = vrot.slane %v5503, 4
    %v5505 = vrot.slane %v5282, 5
    %v5506 = vsel %vm5486, %v5504, %v5505
    %v5507 = vrot.slane %v5283, 5
    %v5508 = vrot.slane %v5507, 4
    %v5509 = vrot.slane %v5284, 5
    %v5510 = vsel %vm5486, %v5508, %v5509
    %v5511 = vrot.slane %v5285, 5
    %v5512 = vrot.slane %v5511, 4
    %v5513 = vrot.slane %v5286, 5
    %v5514 = vsel %vm5486, %v5512, %v5513
    %v5515 = vrot.slane %v5287, 5
    %v5516 = vrot.slane %v5515, 4
    %v5517 = vrot.slane %v5288, 5
    %v5518 = vsel %vm5486, %v5516, %v5517
    %v5519 = vrot.slane %v5289, 5
    %v5520 = vrot.slane %v5519, 4
    %v5521 = vrot.slane %v5290, 5
    %v5522 = vsel %vm5486, %v5520, %v5521
    %v5523 = vrot.slane %v5291, 5
    %v5524 = vrot.slane %v5523, 4
    %v5525 = vrot.slane %v5292, 5
    %v5526 = vsel %vm5486, %v5524, %v5525
    %v5527 = vrot.slane %v5293, 5
    %v5528 = vrot.slane %v5527, 4
    %v5529 = vrot.slane %v5294, 5
    %v5530 = vsel %vm5486, %v5528, %v5529
    %v5531 = vrot.slane %v5295, 5
    %v5532 = vrot.slane %v5531, 4
    %v5533 = vrot.slane %v5296, 5
    %v5534 = vsel %vm5486, %v5532, %v5533
    %v5535 = vrot.slane %v5297, 5
    %v5536 = vrot.slane %v5535, 4
    %v5537 = vrot.slane %v5298, 5
    %v5538 = vsel %vm5486, %v5536, %v5537
    %vm5539 = vsmask.f32 2304
    %vm5540 = vsmask.f32 6416
    %vm5541 = vmor %vm5539, %vm5540
    %v5542 = vrot.slane %v5303, 5
    %v5543 = vrot.slane %v5306, 6
    %v5544 = vor.u32 %v5542, %v5543
    %v5545 = vrot.slane %v5544, 4
    %v5546 = vshrl.u32 %v5274, 16
    %v5548 = vrot.slane %v5546, 5
    %v5549 = vrot.slane %v5312, 6
    %v5550 = vor.u32 %v5548, %v5549
    %v5551 = vsel %vm5541, %v5545, %v5550
    %v5552 = vrot.slane %v5317, 5
    %v5553 = vrot.slane %v5320, 6
    %v5554 = vor.u32 %v5552, %v5553
    %v5555 = vrot.slane %v5554, 4
    %v5556 = vshrl.u32 %v5276, 16
    %v5558 = vrot.slane %v5556, 5
    %v5559 = vrot.slane %v5326, 6
    %v5560 = vor.u32 %v5558, %v5559
    %v5561 = vsel %vm5541, %v5555, %v5560
    %v5562 = vrot.slane %v5331, 5
    %v5563 = vrot.slane %v5334, 6
    %v5564 = vor.u32 %v5562, %v5563
    %v5565 = vrot.slane %v5564, 4
    %v5566 = vshrl.u32 %v5278, 16
    %v5568 = vrot.slane %v5566, 5
    %v5569 = vrot.slane %v5340, 6
    %v5570 = vor.u32 %v5568, %v5569
    %v5571 = vsel %vm5541, %v5565, %v5570
    %v5572 = vrot.slane %v5345, 5
    %v5573 = vrot.slane %v5348, 6
    %v5574 = vor.u32 %v5572, %v5573
    %v5575 = vrot.slane %v5574, 4
    %v5576 = vshrl.u32 %v5280, 16
    %v5578 = vrot.slane %v5576, 5
    %v5579 = vrot.slane %v5354, 6
    %v5580 = vor.u32 %v5578, %v5579
    %v5581 = vsel %vm5541, %v5575, %v5580
    %v5582 = vrot.slane %v5359, 5
    %v5583 = vrot.slane %v5362, 6
    %v5584 = vor.u32 %v5582, %v5583
    %v5585 = vrot.slane %v5584, 4
    %v5586 = vshrl.u32 %v5282, 16
    %v5588 = vrot.slane %v5586, 5
    %v5589 = vrot.slane %v5368, 6
    %v5590 = vor.u32 %v5588, %v5589
    %v5591 = vsel %vm5541, %v5585, %v5590
    %v5592 = vrot.slane %v5373, 5
    %v5593 = vrot.slane %v5376, 6
    %v5594 = vor.u32 %v5592, %v5593
    %v5595 = vrot.slane %v5594, 4
    %v5596 = vshrl.u32 %v5284, 16
    %v5598 = vrot.slane %v5596, 5
    %v5599 = vrot.slane %v5382, 6
    %v5600 = vor.u32 %v5598, %v5599
    %v5601 = vsel %vm5541, %v5595, %v5600
    %v5602 = vrot.slane %v5387, 5
    %v5603 = vrot.slane %v5390, 6
    %v5604 = vor.u32 %v5602, %v5603
    %v5605 = vrot.slane %v5604, 4
    %v5606 = vshrl.u32 %v5286, 16
    %v5608 = vrot.slane %v5606, 5
    %v5609 = vrot.slane %v5396, 6
    %v5610 = vor.u32 %v5608, %v5609
    %v5611 = vsel %vm5541, %v5605, %v5610
    %v5612 = vrot.slane %v5401, 5
    %v5613 = vrot.slane %v5404, 6
    %v5614 = vor.u32 %v5612, %v5613
    %v5615 = vrot.slane %v5614, 4
    %v5616 = vshrl.u32 %v5288, 16
    %v5618 = vrot.slane %v5616, 5
    %v5619 = vrot.slane %v5410, 6
    %v5620 = vor.u32 %v5618, %v5619
    %v5621 = vsel %vm5541, %v5615, %v5620
    %v5622 = vrot.slane %v5415, 5
    %v5623 = vrot.slane %v5418, 6
    %v5624 = vor.u32 %v5622, %v5623
    %v5625 = vrot.slane %v5624, 4
    %v5626 = vshrl.u32 %v5290, 16
    %v5628 = vrot.slane %v5626, 5
    %v5629 = vrot.slane %v5424, 6
    %v5630 = vor.u32 %v5628, %v5629
    %v5631 = vsel %vm5541, %v5625, %v5630
    %v5632 = vrot.slane %v5429, 5
    %v5633 = vrot.slane %v5432, 6
    %v5634 = vor.u32 %v5632, %v5633
    %v5635 = vrot.slane %v5634, 4
    %v5636 = vshrl.u32 %v5292, 16
    %v5638 = vrot.slane %v5636, 5
    %v5639 = vrot.slane %v5438, 6
    %v5640 = vor.u32 %v5638, %v5639
    %v5641 = vsel %vm5541, %v5635, %v5640
    %v5642 = vrot.slane %v5443, 5
    %v5643 = vrot.slane %v5446, 6
    %v5644 = vor.u32 %v5642, %v5643
    %v5645 = vrot.slane %v5644, 4
    %v5646 = vshrl.u32 %v5294, 16
    %v5648 = vrot.slane %v5646, 5
    %v5649 = vrot.slane %v5452, 6
    %v5650 = vor.u32 %v5648, %v5649
    %v5651 = vsel %vm5541, %v5645, %v5650
    %v5652 = vrot.slane %v5457, 5
    %v5653 = vrot.slane %v5460, 6
    %v5654 = vor.u32 %v5652, %v5653
    %v5655 = vrot.slane %v5654, 4
    %v5656 = vshrl.u32 %v5296, 16
    %v5658 = vrot.slane %v5656, 5
    %v5659 = vrot.slane %v5466, 6
    %v5660 = vor.u32 %v5658, %v5659
    %v5661 = vsel %vm5541, %v5655, %v5660
    %v5662 = vrot.slane %v5471, 5
    %v5663 = vrot.slane %v5474, 6
    %v5664 = vor.u32 %v5662, %v5663
    %v5665 = vrot.slane %v5664, 4
    %v5666 = vshrl.u32 %v5298, 16
    %v5668 = vrot.slane %v5666, 5
    %v5669 = vrot.slane %v5480, 6
    %v5670 = vor.u32 %v5668, %v5669
    %v5671 = vsel %vm5541, %v5665, %v5670
    %vm5672 = vcmask 1041408
    %vm5673 = vcmask 1045508
    %vm5674 = vmor %vm5672, %vm5673
    %v5675 = vrot.slane %v5273, 6
    %v5676 = vrot.slane %v5675, 4
    %v5677 = vrot.slane %v5274, 6
    %v5678 = vsel %vm5674, %v5676, %v5677
    %v5679 = vrot.slane %v5275, 6
    %v5680 = vrot.slane %v5679, 4
    %v5681 = vrot.slane %v5276, 6
    %v5682 = vsel %vm5674, %v5680, %v5681
    %v5683 = vrot.slane %v5277, 6
    %v5684 = vrot.slane %v5683, 4
    %v5685 = vrot.slane %v5278, 6
    %v5686 = vsel %vm5674, %v5684, %v5685
    %v5687 = vrot.slane %v5279, 6
    %v5688 = vrot.slane %v5687, 4
    %v5689 = vrot.slane %v5280, 6
    %v5690 = vsel %vm5674, %v5688, %v5689
    %v5691 = vrot.slane %v5281, 6
    %v5692 = vrot.slane %v5691, 4
    %v5693 = vrot.slane %v5282, 6
    %v5694 = vsel %vm5674, %v5692, %v5693
    %v5695 = vrot.slane %v5283, 6
    %v5696 = vrot.slane %v5695, 4
    %v5697 = vrot.slane %v5284, 6
    %v5698 = vsel %vm5674, %v5696, %v5697
    %v5699 = vrot.slane %v5285, 6
    %v5700 = vrot.slane %v5699, 4
    %v5701 = vrot.slane %v5286, 6
    %v5702 = vsel %vm5674, %v5700, %v5701
    %v5703 = vrot.slane %v5287, 6
    %v5704 = vrot.slane %v5703, 4
    %v5705 = vrot.slane %v5288, 6
    %v5706 = vsel %vm5674, %v5704, %v5705
    %v5707 = vrot.slane %v5289, 6
    %v5708 = vrot.slane %v5707, 4
    %v5709 = vrot.slane %v5290, 6
    %v5710 = vsel %vm5674, %v5708, %v5709
    %v5711 = vrot.slane %v5291, 6
    %v5712 = vrot.slane %v5711, 4
    %v5713 = vrot.slane %v5292, 6
    %v5714 = vsel %vm5674, %v5712, %v5713
    %v5715 = vrot.slane %v5293, 6
    %v5716 = vrot.slane %v5715, 4
    %v5717 = vrot.slane %v5294, 6
    %v5718 = vsel %vm5674, %v5716, %v5717
    %v5719 = vrot.slane %v5295, 6
    %v5720 = vrot.slane %v5719, 4
    %v5721 = vrot.slane %v5296, 6
    %v5722 = vsel %vm5674, %v5720, %v5721
    %v5723 = vrot.slane %v5297, 6
    %v5724 = vrot.slane %v5723, 4
    %v5725 = vrot.slane %v5298, 6
    %v5726 = vsel %vm5674, %v5724, %v5725
    %v5729 = vunpack.c.l.b16 %v5224
    %v5730 = vunpack.c.h.b16 %v5224
    %v5731 = vunpack.c.l.b16 %v5232
    %v5732 = vunpack.c.h.b16 %v5232
    %v5733 = vpack.c.b16 %v5729, %v5729
    %v5734 = vpack.c.b16 %v5730, %v5730
    %v5735 = vpack.c.b16 %v5731, %v5731
    %v5736 = vpack.c.b16 %v5732, %v5732
    %v5738 = vshrl.u32 %v5733, 16
    %v5740 = vrot.slane %v5738, 4
    %v5741 = vshll.u32 %v5733, 16
    %v5743 = vrot.slane %v5741, 5
    %v5744 = vor.u32 %v5740, %v5743
    %v5745 = vrot.slane %v5744, 4
    %v5747 = vshll.u32 %v5734, 16
    %v5749 = vrot.slane %v5747, 5
    %v5750 = vsel %vm5301, %v5745, %v5749
    %v5752 = vshrl.u32 %v5735, 16
    %v5754 = vrot.slane %v5752, 4
    %v5755 = vshll.u32 %v5735, 16
    %v5757 = vrot.slane %v5755, 5
    %v5758 = vor.u32 %v5754, %v5757
    %v5759 = vrot.slane %v5758, 4
    %v5761 = vshll.u32 %v5736, 16
    %v5763 = vrot.slane %v5761, 5
    %v5764 = vsel %vm5301, %v5759, %v5763
    %v5765 = vrot.slane %v5733, 5
    %v5766 = vrot.slane %v5765, 4
    %v5767 = vrot.slane %v5734, 5
    %v5768 = vsel %vm5486, %v5766, %v5767
    %v5769 = vrot.slane %v5735, 5
    %v5770 = vrot.slane %v5769, 4
    %v5771 = vrot.slane %v5736, 5
    %v5772 = vsel %vm5486, %v5770, %v5771
    %v5773 = vrot.slane %v5738, 5
    %v5774 = vrot.slane %v5741, 6
    %v5775 = vor.u32 %v5773, %v5774
    %v5776 = vrot.slane %v5775, 4
    %v5777 = vshrl.u32 %v5734, 16
    %v5779 = vrot.slane %v5777, 5
    %v5780 = vrot.slane %v5747, 6
    %v5781 = vor.u32 %v5779, %v5780
    %v5782 = vsel %vm5541, %v5776, %v5781
    %v5783 = vrot.slane %v5752, 5
    %v5784 = vrot.slane %v5755, 6
    %v5785 = vor.u32 %v5783, %v5784
    %v5786 = vrot.slane %v5785, 4
    %v5787 = vshrl.u32 %v5736, 16
    %v5789 = vrot.slane %v5787, 5
    %v5790 = vrot.slane %v5761, 6
    %v5791 = vor.u32 %v5789, %v5790
    %v5792 = vsel %vm5541, %v5786, %v5791
    %v5793 = vrot.slane %v5733, 6
    %v5794 = vrot.slane %v5793, 4
    %v5795 = vrot.slane %v5734, 6
    %v5796 = vsel %vm5674, %v5794, %v5795
    %v5797 = vrot.slane %v5735, 6
    %v5798 = vrot.slane %v5797, 4
    %v5799 = vrot.slane %v5736, 6
    %v5800 = vsel %vm5674, %v5798, %v5799
    %v5803 = vunpack.c.l.b16 %v5225
    %v5804 = vunpack.c.h.b16 %v5225
    %v5805 = vunpack.c.l.b16 %v5233
    %v5806 = vunpack.c.h.b16 %v5233
    %v5807 = vpack.c.b16 %v5803, %v5803
    %v5808 = vpack.c.b16 %v5804, %v5804
    %v5809 = vpack.c.b16 %v5805, %v5805
    %v5810 = vpack.c.b16 %v5806, %v5806
    %v5812 = vshrl.u32 %v5807, 16
    %v5814 = vrot.slane %v5812, 4
    %v5815 = vshll.u32 %v5807, 16
    %v5817 = vrot.slane %v5815, 5
    %v5818 = vor.u32 %v5814, %v5817
    %v5819 = vrot.slane %v5818, 4
    %v5821 = vshll.u32 %v5808, 16
    %v5823 = vrot.slane %v5821, 5
    %v5824 = vsel %vm5301, %v5819, %v5823
    %v5826 = vshrl.u32 %v5809, 16
    %v5828 = vrot.slane %v5826, 4
    %v5829 = vshll.u32 %v5809, 16
    %v5831 = vrot.slane %v5829, 5
    %v5832 = vor.u32 %v5828, %v5831
    %v5833 = vrot.slane %v5832, 4
    %v5835 = vshll.u32 %v5810, 16
    %v5837 = vrot.slane %v5835, 5
    %v5838 = vsel %vm5301, %v5833, %v5837
    %v5839 = vrot.slane %v5807, 5
    %v5840 = vrot.slane %v5839, 4
    %v5841 = vrot.slane %v5808, 5
    %v5842 = vsel %vm5486, %v5840, %v5841
    %v5843 = vrot.slane %v5809, 5
    %v5844 = vrot.slane %v5843, 4
    %v5845 = vrot.slane %v5810, 5
    %v5846 = vsel %vm5486, %v5844, %v5845
    %v5847 = vrot.slane %v5812, 5
    %v5848 = vrot.slane %v5815, 6
    %v5849 = vor.u32 %v5847, %v5848
    %v5850 = vrot.slane %v5849, 4
    %v5851 = vshrl.u32 %v5808, 16
    %v5853 = vrot.slane %v5851, 5
    %v5854 = vrot.slane %v5821, 6
    %v5855 = vor.u32 %v5853, %v5854
    %v5856 = vsel %vm5541, %v5850, %v5855
    %v5857 = vrot.slane %v5826, 5
    %v5858 = vrot.slane %v5829, 6
    %v5859 = vor.u32 %v5857, %v5858
    %v5860 = vrot.slane %v5859, 4
    %v5861 = vshrl.u32 %v5810, 16
    %v5863 = vrot.slane %v5861, 5
    %v5864 = vrot.slane %v5835, 6
    %v5865 = vor.u32 %v5863, %v5864
    %v5866 = vsel %vm5541, %v5860, %v5865
    %v5867 = vrot.slane %v5807, 6
    %v5868 = vrot.slane %v5867, 4
    %v5869 = vrot.slane %v5808, 6
    %v5870 = vsel %vm5674, %v5868, %v5869
    %v5871 = vrot.slane %v5809, 6
    %v5872 = vrot.slane %v5871, 4
    %v5873 = vrot.slane %v5810, 6
    %v5874 = vsel %vm5674, %v5872, %v5873
    %v5875 = vpack.c.b16 %v5251, %v5249
    %v5876 = vpack.c.b16 %v5255, %v5253
    %v5877 = vpack.c.b16 %v5259, %v5257
    %v5878 = vpack.c.b16 %v5263, %v5261
    %v5879 = vpack.c.b16 %v5267, %v5265
    %v5880 = vpack.c.b16 %v5271, %v5269
    %v5881 = vunpack.c.l.b16 %v5315
    %v5882 = vunpack.c.l.b16 %v5329
    %v5883 = vunpack.c.l.b16 %v5343
    %v5884 = vunpack.c.l.b16 %v5357
    %v5885 = vunpack.c.l.b16 %v5371
    %v5886 = vunpack.c.l.b16 %v5385
    %v5887 = vunpack.c.l.b16 %v5399
    %v5888 = vunpack.c.l.b16 %v5413
    %v5889 = vunpack.c.l.b16 %v5427
    %v5890 = vunpack.c.l.b16 %v5441
    %v5891 = vunpack.c.l.b16 %v5455
    %v5892 = vunpack.c.l.b16 %v5469
    %v5893 = vunpack.c.l.b16 %v5483
    %v5894 = vpack.c.b16 %v5881, %v5881
    %v5895 = vpack.c.b16 %v5883, %v5882
    %v5896 = vpack.c.b16 %v5885, %v5884
    %v5897 = vpack.c.b16 %v5887, %v5886
    %v5898 = vpack.c.b16 %v5889, %v5888
    %v5899 = vpack.c.b16 %v5891, %v5890
    %v5900 = vpack.c.b16 %v5893, %v5892
    %5901 = vrot.lane.b32.xlu0 %v5894, 64
    %v5902 = vpop.permute.xlu0 %5901
    %5903 = vrot.lane.b32.xlu0 %v5895, 64
    %v5904 = vpop.permute.xlu0 %5903
    %5905 = vrot.lane.b32.xlu0 %v5896, 64
    %v5906 = vpop.permute.xlu0 %5905
    %5907 = vrot.lane.b32.xlu0 %v5897, 64
    %v5908 = vpop.permute.xlu0 %5907
    %5909 = vrot.lane.b32.xlu0 %v5898, 64
    %v5910 = vpop.permute.xlu0 %5909
    %5911 = vrot.lane.b32.xlu0 %v5899, 64
    %v5912 = vpop.permute.xlu0 %5911
    %5913 = vrot.lane.b32.xlu0 %v5900, 64
    %v5914 = vpop.permute.xlu0 %5913
    %vm5915 = vcmask 523264
    %v5917 = vsel %vm5915, %v5273, %v5902
    %v5921 = vsel %vm5915, %v5875, %v5904
    %v5925 = vsel %vm5915, %v5876, %v5906
    %v5929 = vsel %vm5915, %v5877, %v5908
    %v5933 = vsel %vm5915, %v5878, %v5910
    %v5937 = vsel %vm5915, %v5879, %v5912
    %v5941 = vsel %vm5915, %v5880, %v5914
    %v5943 = vunpack.c.l.b16 %v5490
    %v5944 = vunpack.c.l.b16 %v5494
    %v5945 = vunpack.c.l.b16 %v5498
    %v5946 = vunpack.c.l.b16 %v5502
    %v5947 = vunpack.c.l.b16 %v5506
    %v5948 = vunpack.c.l.b16 %v5510
    %v5949 = vunpack.c.l.b16 %v5514
    %v5950 = vunpack.c.l.b16 %v5518
    %v5951 = vunpack.c.l.b16 %v5522
    %v5952 = vunpack.c.l.b16 %v5526
    %v5953 = vunpack.c.l.b16 %v5530
    %v5954 = vunpack.c.l.b16 %v5534
    %v5955 = vunpack.c.l.b16 %v5538
    %v5956 = vpack.c.b16 %v5943, %v5943
    %v5957 = vpack.c.b16 %v5945, %v5944
    %v5958 = vpack.c.b16 %v5947, %v5946
    %v5959 = vpack.c.b16 %v5949, %v5948
    %v5960 = vpack.c.b16 %v5951, %v5950
    %v5961 = vpack.c.b16 %v5953, %v5952
    %v5962 = vpack.c.b16 %v5955, %v5954
    %v5963 = vunpack.c.l.b16 %v5551
    %v5964 = vunpack.c.l.b16 %v5561
    %v5965 = vunpack.c.l.b16 %v5571
    %v5966 = vunpack.c.l.b16 %v5581
    %v5967 = vunpack.c.l.b16 %v5591
    %v5968 = vunpack.c.l.b16 %v5601
    %v5969 = vunpack.c.l.b16 %v5611
    %v5970 = vunpack.c.l.b16 %v5621
    %v5971 = vunpack.c.l.b16 %v5631
    %v5972 = vunpack.c.l.b16 %v5641
    %v5973 = vunpack.c.l.b16 %v5651
    %v5974 = vunpack.c.l.b16 %v5661
    %v5975 = vunpack.c.l.b16 %v5671
    %v5976 = vpack.c.b16 %v5963, %v5963
    %v5977 = vpack.c.b16 %v5965, %v5964
    %v5978 = vpack.c.b16 %v5967, %v5966
    %v5979 = vpack.c.b16 %v5969, %v5968
    %v5980 = vpack.c.b16 %v5971, %v5970
    %v5981 = vpack.c.b16 %v5973, %v5972
    %v5982 = vpack.c.b16 %v5975, %v5974
    %5983 = vrot.lane.b32.xlu0 %v5976, 64
    %v5984 = vpop.permute.xlu0 %5983
    %5985 = vrot.lane.b32.xlu0 %v5977, 64
    %v5986 = vpop.permute.xlu0 %5985
    %5987 = vrot.lane.b32.xlu0 %v5978, 64
    %v5988 = vpop.permute.xlu0 %5987
    %5989 = vrot.lane.b32.xlu0 %v5979, 64
    %v5990 = vpop.permute.xlu0 %5989
    %5991 = vrot.lane.b32.xlu0 %v5980, 64
    %v5992 = vpop.permute.xlu0 %5991
    %5993 = vrot.lane.b32.xlu0 %v5981, 64
    %v5994 = vpop.permute.xlu0 %5993
    %5995 = vrot.lane.b32.xlu0 %v5982, 64
    %v5996 = vpop.permute.xlu0 %5995
    %v5999 = vsel %vm5915, %v5956, %v5984
    %v6003 = vsel %vm5915, %v5957, %v5986
    %v6007 = vsel %vm5915, %v5958, %v5988
    %v6011 = vsel %vm5915, %v5959, %v5990
    %v6015 = vsel %vm5915, %v5960, %v5992
    %v6019 = vsel %vm5915, %v5961, %v5994
    %v6023 = vsel %vm5915, %v5962, %v5996
    %v6025 = vunpack.c.l.b16 %v5678
    %v6026 = vunpack.c.l.b16 %v5682
    %v6027 = vunpack.c.l.b16 %v5686
    %v6028 = vunpack.c.l.b16 %v5690
    %v6029 = vunpack.c.l.b16 %v5694
    %v6030 = vunpack.c.l.b16 %v5698
    %v6031 = vunpack.c.l.b16 %v5702
    %v6032 = vunpack.c.l.b16 %v5706
    %v6033 = vunpack.c.l.b16 %v5710
    %v6034 = vunpack.c.l.b16 %v5714
    %v6035 = vunpack.c.l.b16 %v5718
    %v6036 = vunpack.c.l.b16 %v5722
    %v6037 = vunpack.c.l.b16 %v5726
    %v6038 = vpack.c.b16 %v6025, %v6025
    %v6039 = vpack.c.b16 %v6027, %v6026
    %v6040 = vpack.c.b16 %v6029, %v6028
    %v6041 = vpack.c.b16 %v6031, %v6030
    %v6042 = vpack.c.b16 %v6033, %v6032
    %v6043 = vpack.c.b16 %v6035, %v6034
    %v6044 = vpack.c.b16 %v6037, %v6036
    %v6045 = vpack.c.b16 %v5249, %v5247
    %v6046 = vpack.c.b16 %v5253, %v5251
    %v6047 = vpack.c.b16 %v5257, %v5255
    %v6048 = vpack.c.b16 %v5729, %v5259
    %v6049 = vpack.c.b16 %v5261, %v5247
    %v6050 = vpack.c.b16 %v5265, %v5263
    %v6051 = vpack.c.b16 %v5269, %v5267
    %v6052 = vpack.c.b16 %v5731, %v5271
    %6053 = vrot.lane.b32.xlu0 %v6045, 64
    %v6054 = vpop.permute.xlu0 %6053
    %6055 = vrot.lane.b32.xlu0 %v6046, 64
    %v6056 = vpop.permute.xlu0 %6055
    %6057 = vrot.lane.b32.xlu0 %v6047, 64
    %v6058 = vpop.permute.xlu0 %6057
    %6059 = vrot.lane.b32.xlu0 %v6048, 64
    %v6060 = vpop.permute.xlu0 %6059
    %6061 = vrot.lane.b32.xlu0 %v6049, 64
    %v6062 = vpop.permute.xlu0 %6061
    %6063 = vrot.lane.b32.xlu0 %v6050, 64
    %v6064 = vpop.permute.xlu0 %6063
    %6065 = vrot.lane.b32.xlu0 %v6051, 64
    %v6066 = vpop.permute.xlu0 %6065
    %6067 = vrot.lane.b32.xlu0 %v6052, 64
    %v6068 = vpop.permute.xlu0 %6067
    %v6071 = vsel %vm5915, %v6038, %v6054
    %v6075 = vsel %vm5915, %v6039, %v6056
    %v6079 = vsel %vm5915, %v6040, %v6058
    %v6083 = vsel %vm5915, %v6041, %v6060
    %v6086 = vsel %vm5915, %v6038, %v6062
    %v6090 = vsel %vm5915, %v6042, %v6064
    %v6094 = vsel %vm5915, %v6043, %v6066
    %v6098 = vsel %vm5915, %v6044, %v6068
    %v6100 = vunpack.c.l.b16 %v5750
    %v6101 = vunpack.c.l.b16 %v5764
    %v6102 = vpack.c.b16 %v5882, %v5881
    %v6103 = vpack.c.b16 %v5884, %v5883
    %v6104 = vpack.c.b16 %v5886, %v5885
    %v6105 = vpack.c.b16 %v6100, %v5887
    %v6106 = vpack.c.b16 %v5888, %v5881
    %v6107 = vpack.c.b16 %v5890, %v5889
    %v6108 = vpack.c.b16 %v5892, %v5891
    %v6109 = vpack.c.b16 %v6101, %v5893
    %v6110 = vunpack.c.l.b16 %v5768
    %v6111 = vunpack.c.l.b16 %v5772
    %v6112 = vpack.c.b16 %v5944, %v5943
    %v6113 = vpack.c.b16 %v5946, %v5945
    %v6114 = vpack.c.b16 %v5948, %v5947
    %v6115 = vpack.c.b16 %v6110, %v5949
    %v6116 = vpack.c.b16 %v5950, %v5943
    %v6117 = vpack.c.b16 %v5952, %v5951
    %v6118 = vpack.c.b16 %v5954, %v5953
    %v6119 = vpack.c.b16 %v6111, %v5955
    %6120 = vrot.lane.b32.xlu0 %v6112, 64
    %v6121 = vpop.permute.xlu0 %6120
    %6122 = vrot.lane.b32.xlu0 %v6113, 64
    %v6123 = vpop.permute.xlu0 %6122
    %6124 = vrot.lane.b32.xlu0 %v6114, 64
    %v6125 = vpop.permute.xlu0 %6124
    %6126 = vrot.lane.b32.xlu0 %v6115, 64
    %v6127 = vpop.permute.xlu0 %6126
    %6128 = vrot.lane.b32.xlu0 %v6116, 64
    %v6129 = vpop.permute.xlu0 %6128
    %6130 = vrot.lane.b32.xlu0 %v6117, 64
    %v6131 = vpop.permute.xlu0 %6130
    %6132 = vrot.lane.b32.xlu0 %v6118, 64
    %v6133 = vpop.permute.xlu0 %6132
    %6134 = vrot.lane.b32.xlu0 %v6119, 64
    %v6135 = vpop.permute.xlu0 %6134
    %v6138 = vsel %vm5915, %v6102, %v6121
    %v6142 = vsel %vm5915, %v6103, %v6123
    %v6146 = vsel %vm5915, %v6104, %v6125
    %v6150 = vsel %vm5915, %v6105, %v6127
    %v6154 = vsel %vm5915, %v6106, %v6129
    %v6158 = vsel %vm5915, %v6107, %v6131
    %v6162 = vsel %vm5915, %v6108, %v6133
    %v6166 = vsel %vm5915, %v6109, %v6135
    %v6168 = vunpack.c.l.b16 %v5782
    %v6169 = vunpack.c.l.b16 %v5792
    %v6170 = vpack.c.b16 %v5964, %v5963
    %v6171 = vpack.c.b16 %v5966, %v5965
    %v6172 = vpack.c.b16 %v5968, %v5967
    %v6173 = vpack.c.b16 %v6168, %v5969
    %v6174 = vpack.c.b16 %v5970, %v5963
    %v6175 = vpack.c.b16 %v5972, %v5971
    %v6176 = vpack.c.b16 %v5974, %v5973
    %v6177 = vpack.c.b16 %v6169, %v5975
    %v6178 = vunpack.c.l.b16 %v5796
    %v6179 = vunpack.c.l.b16 %v5800
    %v6180 = vpack.c.b16 %v6026, %v6025
    %v6181 = vpack.c.b16 %v6028, %v6027
    %v6182 = vpack.c.b16 %v6030, %v6029
    %v6183 = vpack.c.b16 %v6178, %v6031
    %v6184 = vpack.c.b16 %v6032, %v6025
    %v6185 = vpack.c.b16 %v6034, %v6033
    %v6186 = vpack.c.b16 %v6036, %v6035
    %v6187 = vpack.c.b16 %v6179, %v6037
    %6188 = vrot.lane.b32.xlu0 %v6180, 64
    %v6189 = vpop.permute.xlu0 %6188
    %6190 = vrot.lane.b32.xlu0 %v6181, 64
    %v6191 = vpop.permute.xlu0 %6190
    %6192 = vrot.lane.b32.xlu0 %v6182, 64
    %v6193 = vpop.permute.xlu0 %6192
    %6194 = vrot.lane.b32.xlu0 %v6183, 64
    %v6195 = vpop.permute.xlu0 %6194
    %6196 = vrot.lane.b32.xlu0 %v6184, 64
    %v6197 = vpop.permute.xlu0 %6196
    %6198 = vrot.lane.b32.xlu0 %v6185, 64
    %v6199 = vpop.permute.xlu0 %6198
    %6200 = vrot.lane.b32.xlu0 %v6186, 64
    %v6201 = vpop.permute.xlu0 %6200
    %6202 = vrot.lane.b32.xlu0 %v6187, 64
    %v6203 = vpop.permute.xlu0 %6202
    %v6206 = vsel %vm5915, %v6170, %v6189
    %v6210 = vsel %vm5915, %v6171, %v6191
    %v6214 = vsel %vm5915, %v6172, %v6193
    %v6218 = vsel %vm5915, %v6173, %v6195
    %v6222 = vsel %vm5915, %v6174, %v6197
    %v6226 = vsel %vm5915, %v6175, %v6199
    %v6230 = vsel %vm5915, %v6176, %v6201
    %v6234 = vsel %vm5915, %v6177, %v6203
    %v6236 = vpack.c.b16 %v5803, %v5729
    %v6237 = vpack.c.b16 %v5805, %v5731
    %v6238 = vunpack.c.l.b16 %v5824
    %v6239 = vunpack.c.l.b16 %v5838
    %v6240 = vpack.c.b16 %v6238, %v6100
    %v6241 = vpack.c.b16 %v6239, %v6101
    %6242 = vrot.lane.b32.xlu0 %v6240, 64
    %v6243 = vpop.permute.xlu0 %6242
    %6244 = vrot.lane.b32.xlu0 %v6241, 64
    %v6245 = vpop.permute.xlu0 %6244
    %v6248 = vsel %vm5915, %v6236, %v6243
    %v6252 = vsel %vm5915, %v6237, %v6245
    %v6254 = vunpack.c.l.b16 %v5842
    %v6255 = vunpack.c.l.b16 %v5846
    %v6256 = vpack.c.b16 %v6254, %v6110
    %v6257 = vpack.c.b16 %v6255, %v6111
    %v6258 = vunpack.c.l.b16 %v5856
    %v6259 = vunpack.c.l.b16 %v5866
    %v6260 = vpack.c.b16 %v6258, %v6168
    %v6261 = vpack.c.b16 %v6259, %v6169
    %6262 = vrot.lane.b32.xlu0 %v6260, 64
    %v6263 = vpop.permute.xlu0 %6262
    %6264 = vrot.lane.b32.xlu0 %v6261, 64
    %v6265 = vpop.permute.xlu0 %6264
    %v6268 = vsel %vm5915, %v6256, %v6263
    %v6272 = vsel %vm5915, %v6257, %v6265
    %v6274 = vunpack.c.l.b16 %v5870
    %v6275 = vunpack.c.l.b16 %v5874
    %v6276 = vpack.c.b16 %v6274, %v6178
    %v6277 = vpack.c.b16 %v6275, %v6179
    %v6278 = vpack.c.b16 %v5247, %v5803
    %v6279 = vpack.c.b16 %v5247, %v5805
    %6280 = vrot.lane.b32.xlu0 %v6278, 64
    %v6281 = vpop.permute.xlu0 %6280
    %6282 = vrot.lane.b32.xlu0 %v6279, 64
    %v6283 = vpop.permute.xlu0 %6282
    %v6286 = vsel %vm5915, %v6276, %v6281
    %v6290 = vsel %vm5915, %v6277, %v6283
    %v6292 = vpack.c.b16 %v5881, %v6238
    %v6293 = vpack.c.b16 %v5881, %v6239
    %v6294 = vpack.c.b16 %v5943, %v6254
    %v6295 = vpack.c.b16 %v5943, %v6255
    %6296 = vrot.lane.b32.xlu0 %v6294, 64
    %v6297 = vpop.permute.xlu0 %6296
    %6298 = vrot.lane.b32.xlu0 %v6295, 64
    %v6299 = vpop.permute.xlu0 %6298
    %v6302 = vsel %vm5915, %v6292, %v6297
    %v6306 = vsel %vm5915, %v6293, %v6299
    %v6308 = vpack.c.b16 %v5963, %v6258
    %v6309 = vpack.c.b16 %v5963, %v6259
    %v6310 = vpack.c.b16 %v6025, %v6274
    %v6311 = vpack.c.b16 %v6025, %v6275
    %6312 = vrot.lane.b32.xlu0 %v6310, 64
    %v6313 = vpop.permute.xlu0 %6312
    %6314 = vrot.lane.b32.xlu0 %v6311, 64
    %v6315 = vpop.permute.xlu0 %6314
    %v6318 = vsel %vm5915, %v6308, %v6313
    %v6322 = vsel %vm5915, %v6309, %v6315
    %v6325 = vperm.slane %v4443, 0
    %v6527 = vunpack.c.l.b16 %v4243
    %v6528 = vunpack.c.l.b16 %v4244
    %v6529 = vunpack.c.l.b16 %v4245
    %v6530 = vunpack.c.l.b16 %v4246
    %v6531 = vunpack.c.l.b16 %v4247
    %v6532 = vunpack.c.l.b16 %v4248
    %v6533 = vunpack.c.l.b16 %v4249
    %v6534 = vunpack.c.l.b16 %v4250
    %v6535 = vunpack.c.l.b16 %v4251
    %v6536 = vunpack.c.l.b16 %v4252
    %v6537 = vunpack.c.l.b16 %v4253
    %v6538 = vunpack.c.l.b16 %v4254
    %v6539 = vunpack.c.l.b16 %v4255
    %v6540 = vunpack.c.l.b16 %v4256
    %v6541 = vunpack.c.l.b16 %v4257
    %v6542 = vunpack.c.l.b16 %v4258
    %v6543 = vunpack.c.l.b16 %v4259
    %v6544 = vunpack.c.l.b16 %v4260
    %v6545 = vunpack.c.l.b16 %v4261
    %v6546 = vunpack.c.l.b16 %v4262
    %v6547 = vunpack.c.l.b16 %v4263
    %v6548 = vunpack.c.l.b16 %v4264
    %v6549 = vunpack.c.l.b16 %v4265
    %v6550 = vunpack.c.l.b16 %v4266
    %v6551 = vunpack.c.l.b16 %v4267
    %v6552 = vunpack.c.l.b16 %v4268
    %v6553 = vunpack.c.l.b16 %v4269
    %v6554 = vunpack.c.l.b16 %v4270
    %v6555 = vunpack.c.l.b16 %v4271
    %v6556 = vunpack.c.l.b16 %v4272
    %v6557 = vunpack.c.l.b16 %v4273
    %v6558 = vunpack.c.l.b16 %v4274
    %v6559 = vunpack.c.l.b16 %v4275
    %v6560 = vunpack.c.l.b16 %v4276
    %v6561 = vunpack.c.l.b16 %v4277
    %v6562 = vunpack.c.l.b16 %v4278
    %v6563 = vunpack.c.l.b16 %v4279
    %v6564 = vunpack.c.l.b16 %v4280
    %v6565 = vunpack.c.l.b16 %v4281
    %v6566 = vunpack.c.l.b16 %v4282
    %v6567 = vunpack.c.l.b16 %v4283
    %v6568 = vunpack.c.l.b16 %v4284
    %v6569 = vunpack.c.l.b16 %v4285
    %v6570 = vunpack.c.l.b16 %v4286
    %v6571 = vunpack.c.l.b16 %v4287
    %v6572 = vunpack.c.l.b16 %v4288
    %v6573 = vunpack.c.l.b16 %v4289
    %v6574 = vunpack.c.l.b16 %v4290
    %v6575 = vunpack.c.l.b16 %v4291
    %v6576 = vunpack.c.l.b16 %v4292
    %v6577 = vunpack.c.l.b16 %v4293
    %v6578 = vunpack.c.l.b16 %v4294
    %v6579 = vunpack.c.l.b16 %v4295
    %v6580 = vunpack.c.l.b16 %v4296
    %v6581 = vunpack.c.l.b16 %v4297
    %v6582 = vunpack.c.l.b16 %v4298
    %v6583 = vunpack.c.l.b16 %v4299
    %v6584 = vunpack.c.l.b16 %v4300
    %v6585 = vunpack.c.l.b16 %v4301
    %v6586 = vunpack.c.l.b16 %v4302
    %v6587 = vunpack.c.l.b16 %v4303
    %v6588 = vunpack.c.l.b16 %v4304
    %v6589 = vunpack.c.l.b16 %v4305
    %v6590 = vunpack.c.l.b16 %v4306
    %v6591 = vunpack.c.l.b16 %v4307
    %v6592 = vunpack.c.l.b16 %v4308
    %v6593 = vunpack.c.l.b16 %v4309
    %v6594 = vunpack.c.l.b16 %v4310
    %v6595 = vunpack.c.l.b16 %v4311
    %v6596 = vunpack.c.l.b16 %v4312
    %v6597 = vunpack.c.l.b16 %v4313
    %v6598 = vunpack.c.l.b16 %v4314
    %v6599 = vunpack.c.l.b16 %v4315
    %v6600 = vunpack.c.l.b16 %v4316
    %v6601 = vunpack.c.l.b16 %v4317
    %v6602 = vunpack.c.l.b16 %v4318
    %v6603 = vunpack.c.l.b16 %v4319
    %v6604 = vunpack.c.l.b16 %v4320
    %v6605 = vunpack.c.l.b16 %v4321
    %v6606 = vunpack.c.l.b16 %v4322
    %v6607 = vunpack.c.l.b16 %v4323
    %v6608 = vunpack.c.l.b16 %v4324
    %v6609 = vunpack.c.l.b16 %v4325
    %v6610 = vunpack.c.l.b16 %v4326
    %v6611 = vunpack.c.l.b16 %v4327
    %v6612 = vunpack.c.l.b16 %v4328
    %v6613 = vunpack.c.l.b16 %v4329
    %v6614 = vunpack.c.l.b16 %v4330
    %v6615 = vunpack.c.l.b16 %v4331
    %v6616 = vunpack.c.l.b16 %v4332
    %v6617 = vunpack.c.l.b16 %v4333
    %v6618 = vunpack.c.l.b16 %v4334
    %v6619 = vunpack.c.l.b16 %v4335
    %v6620 = vunpack.c.l.b16 %v4336
    %v6621 = vunpack.c.l.b16 %v4337
    %v6622 = vunpack.c.l.b16 %v4338
    %v6623 = vunpack.c.l.b16 %v4339
    %v6624 = vunpack.c.l.b16 %v4340
    %v6625 = vunpack.c.l.b16 %v4341
    %v6626 = vunpack.c.l.b16 %v4342
    %v6627 = vunpack.c.l.b16 %v4343
    %v6628 = vunpack.c.l.b16 %v4344
    %v6629 = vunpack.c.l.b16 %v4345
    %v6630 = vunpack.c.l.b16 %v4346
    %v6631 = vunpack.c.l.b16 %v4347
    %v6632 = vunpack.c.l.b16 %v4348
    %v6633 = vunpack.c.l.b16 %v4349
    %v6634 = vunpack.c.l.b16 %v4350
    %v6635 = vunpack.c.l.b16 %v4351
    %v6636 = vunpack.c.l.b16 %v4352
    %v6637 = vunpack.c.l.b16 %v4353
    %v6638 = vunpack.c.l.b16 %v4354
    %v6639 = vunpack.c.l.b16 %v4355
    %v6640 = vunpack.c.l.b16 %v4356
    %v6641 = vunpack.c.l.b16 %v4357
    %v6642 = vunpack.c.l.b16 %v4358
    %v6643 = vunpack.c.l.b16 %v4359
    %v6644 = vunpack.c.l.b16 %v4360
    %v6645 = vunpack.c.l.b16 %v4361
    %v6646 = vunpack.c.l.b16 %v4362
    %v6647 = vunpack.c.l.b16 %v4363
    %v6648 = vunpack.c.l.b16 %v4364
    %v6649 = vunpack.c.l.b16 %v4365
    %v6650 = vunpack.c.l.b16 %v4366
    %v6651 = vunpack.c.l.b16 %v4367
    %v6652 = vunpack.c.l.b16 %v4368
    %v6653 = vunpack.c.l.b16 %v4369
    %v6654 = vunpack.c.l.b16 %v4370
    %v6655 = vunpack.c.l.b16 %v4371
    %v6656 = vunpack.c.l.b16 %v4372
    %v6657 = vunpack.c.l.b16 %v4373
    %v6658 = vunpack.c.l.b16 %v4374
    %v6659 = vunpack.c.l.b16 %v4375
    %v6660 = vunpack.c.l.b16 %v4376
    %v6661 = vunpack.c.l.b16 %v4377
    %v6662 = vunpack.c.l.b16 %v4378
    %v6663 = vunpack.c.l.b16 %v4379
    %v6664 = vunpack.c.l.b16 %v4380
    %v6665 = vunpack.c.l.b16 %v4381
    %v6666 = vunpack.c.l.b16 %v4382
    %v6667 = vunpack.c.l.b16 %v4383
    %v6668 = vunpack.c.l.b16 %v4384
    %v6669 = vunpack.c.l.b16 %v4385
    %v6670 = vunpack.c.l.b16 %v4386
    %v6671 = vunpack.c.l.b16 %v4387
    %v6672 = vunpack.c.l.b16 %v4388
    %v6673 = vunpack.c.l.b16 %v4389
    %v6674 = vunpack.c.l.b16 %v4390
    %v6675 = vunpack.c.l.b16 %v4391
    %v6676 = vunpack.c.l.b16 %v4392
    %v6677 = vunpack.c.l.b16 %v4393
    %v6678 = vunpack.c.l.b16 %v4394
    %v6679 = vunpack.c.l.b16 %v4395
    %v6680 = vunpack.c.l.b16 %v4396
    %v6681 = vunpack.c.l.b16 %v4397
    %v6682 = vunpack.c.l.b16 %v4398
    %v6683 = vunpack.c.l.b16 %v4399
    %v6684 = vunpack.c.l.b16 %v4400
    %v6685 = vunpack.c.l.b16 %v4401
    %v6686 = vunpack.c.l.b16 %v4402
    %v6687 = vunpack.c.l.b16 %v4403
    %v6688 = vunpack.c.l.b16 %v4404
    %v6689 = vunpack.c.l.b16 %v4405
    %v6690 = vunpack.c.l.b16 %v4406
    %v6691 = vunpack.c.l.b16 %v4407
    %v6692 = vunpack.c.l.b16 %v4408
    %v6693 = vunpack.c.l.b16 %v4409
    %v6694 = vunpack.c.l.b16 %v4410
    %v6695 = vunpack.c.l.b16 %v4411
    %v6696 = vunpack.c.l.b16 %v4412
    %v6697 = vunpack.c.l.b16 %v4413
    %v6698 = vunpack.c.l.b16 %v4414
    %v6699 = vunpack.c.l.b16 %v4415
    %v6700 = vunpack.c.l.b16 %v4416
    %v6701 = vunpack.c.l.b16 %v4417
    %v6702 = vunpack.c.l.b16 %v4418
    %v6703 = vunpack.c.l.b16 %v4419
    %v6704 = vunpack.c.l.b16 %v4420
    %v6705 = vunpack.c.l.b16 %v4421
    %v6706 = vunpack.c.l.b16 %v4422
    %v6707 = vunpack.c.l.b16 %v4423
    %v6708 = vunpack.c.l.b16 %v4424
    %v6709 = vunpack.c.l.b16 %v4425
    %v6710 = vunpack.c.l.b16 %v4426
    %v6711 = vunpack.c.l.b16 %v4427
    %v6712 = vunpack.c.l.b16 %v4428
    %v6713 = vunpack.c.l.b16 %v4429
    %v6714 = vunpack.c.l.b16 %v4430
    %v6715 = vunpack.c.l.b16 %v4431
    %v6716 = vunpack.c.l.b16 %v4432
    %v6717 = vunpack.c.l.b16 %v4433
    %v6718 = vunpack.c.l.b16 %v4434
    %v6719 = vunpack.c.l.b16 %v4435
    %v6720 = vunpack.c.l.b16 %v4436
    %v6721 = vunpack.c.l.b16 %v4437
    %v6722 = vunpack.c.l.b16 %v4438
    %v6723 = vunpack.c.l.b16 %v4439
    %v6724 = vunpack.c.l.b16 %v4440
    %v6725 = vunpack.c.l.b16 %v4441
    %v6726 = vunpack.c.l.b16 %v4442
    %v6727 = vpack.c.b16 %v6528, %v6527
    %v6728 = vpack.c.b16 %v6530, %v6529
    %v6729 = vpack.c.b16 %v6532, %v6531
    %v6730 = vpack.c.b16 %v6534, %v6533
    %v6731 = vpack.c.b16 %v6536, %v6535
    %v6732 = vpack.c.b16 %v6538, %v6537
    %v6733 = vpack.c.b16 %v6540, %v6539
    %v6734 = vpack.c.b16 %v6542, %v6541
    %v6735 = vpack.c.b16 %v6544, %v6543
    %v6736 = vpack.c.b16 %v6546, %v6545
    %v6737 = vpack.c.b16 %v6548, %v6547
    %v6738 = vpack.c.b16 %v6550, %v6549
    %v6739 = vpack.c.b16 %v6552, %v6551
    %v6740 = vpack.c.b16 %v6554, %v6553
    %v6741 = vpack.c.b16 %v6556, %v6555
    %v6742 = vpack.c.b16 %v6558, %v6557
    %v6743 = vpack.c.b16 %v6560, %v6559
    %v6744 = vpack.c.b16 %v6562, %v6561
    %v6745 = vpack.c.b16 %v6564, %v6563
    %v6746 = vpack.c.b16 %v6566, %v6565
    %v6747 = vpack.c.b16 %v6568, %v6567
    %v6748 = vpack.c.b16 %v6570, %v6569
    %v6749 = vpack.c.b16 %v6572, %v6571
    %v6750 = vpack.c.b16 %v6574, %v6573
    %v6751 = vpack.c.b16 %v6576, %v6575
    %v6752 = vpack.c.b16 %v6578, %v6577
    %v6753 = vpack.c.b16 %v6580, %v6579
    %v6754 = vpack.c.b16 %v6582, %v6581
    %v6755 = vpack.c.b16 %v6584, %v6583
    %v6756 = vpack.c.b16 %v6586, %v6585
    %v6757 = vpack.c.b16 %v6588, %v6587
    %v6758 = vpack.c.b16 %v6590, %v6589
    %v6759 = vpack.c.b16 %v6592, %v6591
    %v6760 = vpack.c.b16 %v6594, %v6593
    %v6761 = vpack.c.b16 %v6596, %v6595
    %v6762 = vpack.c.b16 %v6598, %v6597
    %v6763 = vpack.c.b16 %v6600, %v6599
    %v6764 = vpack.c.b16 %v6602, %v6601
    %v6765 = vpack.c.b16 %v6604, %v6603
    %v6766 = vpack.c.b16 %v6606, %v6605
    %v6767 = vpack.c.b16 %v6608, %v6607
    %v6768 = vpack.c.b16 %v6610, %v6609
    %v6769 = vpack.c.b16 %v6612, %v6611
    %v6770 = vpack.c.b16 %v6614, %v6613
    %v6771 = vpack.c.b16 %v6616, %v6615
    %v6772 = vpack.c.b16 %v6618, %v6617
    %v6773 = vpack.c.b16 %v6620, %v6619
    %v6774 = vpack.c.b16 %v6622, %v6621
    %v6775 = vpack.c.b16 %v6624, %v6623
    %v6776 = vpack.c.b16 %v6626, %v6625
    %v6777 = vpack.c.b16 %v6628, %v6627
    %v6778 = vpack.c.b16 %v6630, %v6629
    %v6779 = vpack.c.b16 %v6632, %v6631
    %v6780 = vpack.c.b16 %v6634, %v6633
    %v6781 = vpack.c.b16 %v6636, %v6635
    %v6782 = vpack.c.b16 %v6638, %v6637
    %v6783 = vpack.c.b16 %v6640, %v6639
    %v6784 = vpack.c.b16 %v6642, %v6641
    %v6785 = vpack.c.b16 %v6644, %v6643
    %v6786 = vpack.c.b16 %v6646, %v6645
    %v6787 = vpack.c.b16 %v6648, %v6647
    %v6788 = vpack.c.b16 %v6650, %v6649
    %v6789 = vpack.c.b16 %v6652, %v6651
    %v6790 = vpack.c.b16 %v6654, %v6653
    %v6791 = vpack.c.b16 %v6656, %v6655
    %v6792 = vpack.c.b16 %v6658, %v6657
    %v6793 = vpack.c.b16 %v6660, %v6659
    %v6794 = vpack.c.b16 %v6662, %v6661
    %v6795 = vpack.c.b16 %v6664, %v6663
    %v6796 = vpack.c.b16 %v6666, %v6665
    %v6797 = vpack.c.b16 %v6668, %v6667
    %v6798 = vpack.c.b16 %v6670, %v6669
    %v6799 = vpack.c.b16 %v6672, %v6671
    %v6800 = vpack.c.b16 %v6674, %v6673
    %v6801 = vpack.c.b16 %v6676, %v6675
    %v6802 = vpack.c.b16 %v6678, %v6677
    %v6803 = vpack.c.b16 %v6680, %v6679
    %v6804 = vpack.c.b16 %v6682, %v6681
    %v6805 = vpack.c.b16 %v6684, %v6683
    %v6806 = vpack.c.b16 %v6686, %v6685
    %v6807 = vpack.c.b16 %v6688, %v6687
    %v6808 = vpack.c.b16 %v6690, %v6689
    %v6809 = vpack.c.b16 %v6692, %v6691
    %v6810 = vpack.c.b16 %v6694, %v6693
    %v6811 = vpack.c.b16 %v6696, %v6695
    %v6812 = vpack.c.b16 %v6698, %v6697
    %v6813 = vpack.c.b16 %v6700, %v6699
    %v6814 = vpack.c.b16 %v6702, %v6701
    %v6815 = vpack.c.b16 %v6704, %v6703
    %v6816 = vpack.c.b16 %v6706, %v6705
    %v6817 = vpack.c.b16 %v6708, %v6707
    %v6818 = vpack.c.b16 %v6710, %v6709
    %v6819 = vpack.c.b16 %v6712, %v6711
    %v6820 = vpack.c.b16 %v6714, %v6713
    %v6821 = vpack.c.b16 %v6716, %v6715
    %v6822 = vpack.c.b16 %v6718, %v6717
    %v6823 = vpack.c.b16 %v6720, %v6719
    %v6824 = vpack.c.b16 %v6722, %v6721
    %v6825 = vpack.c.b16 %v6724, %v6723
    %v6826 = vpack.c.b16 %v6726, %v6725
    %v6927 = vsel %vm5915, %v6040, 0
    %v6929 = vsel %vm5915, %v6041, 0
    %v6931 = vsel %vm5915, %v6276, 0
    %v6933 = vsel %vm5915, %v6038, 0
    %v6935 = vsel %vm5915, %v6043, 0
    %v6937 = vsel %vm5915, %v6044, 0
    %v6939 = vsel %vm5915, %v6277, 0
    %6941 = vmatpush.bf16.msra.mxu0 %v6734
    %6942 = vmatpush.bf16.msra.mxu0 %v6733
    %6943 = vmatpush.bf16.msra.mxu0 %v6732
    %6944 = vmatpush.bf16.msra.mxu0 %v6731
    %6945 = vmatpush.bf16.msra.mxu0 %v6730
    %6946 = vmatpush.bf16.msra.mxu0 %v6729
    %6947 = vmatpush.bf16.msra.mxu0 %v6728
    %6948 = vmatpush.bf16.msra.mxu0 %v6727
    %6949 = vmatmul.bf16.gmra.mxu0 %v5917
    %v6950 = vpop.f32.mrf.mxu0
    %v6951 = vadd.f32 %v6325, %v6950
    %v6952 = vpop.f32.mrf.mxu0
    %v6953 = vadd.f32 %v6325, %v6952
    %6954 = vmatmul.bf16.gmra.mxu0 %v5921
    %v6955 = vpop.f32.mrf.mxu0
    %v6956 = vadd.f32 %v6325, %v6955
    %v6957 = vpop.f32.mrf.mxu0
    %v6958 = vadd.f32 %v6325, %v6957
    %6959 = vmatmul.bf16.gmra.mxu0 %v5925
    %v6960 = vpop.f32.mrf.mxu0
    %v6961 = vadd.f32 %v6325, %v6960
    %v6962 = vpop.f32.mrf.mxu0
    %v6963 = vadd.f32 %v6325, %v6962
    %6964 = vmatmul.bf16.gmra.mxu0 %v5929
    %v6965 = vpop.f32.mrf.mxu0
    %v6966 = vadd.f32 %v6325, %v6965
    %v6967 = vpop.f32.mrf.mxu0
    %v6968 = vadd.f32 %v6325, %v6967
    %6969 = vmatmul.bf16.gmra.mxu0 %v5917
    %v6970 = vpop.f32.mrf.mxu0
    %v6971 = vadd.f32 %v6325, %v6970
    %v6972 = vpop.f32.mrf.mxu0
    %v6973 = vadd.f32 %v6325, %v6972
    %6974 = vmatmul.bf16.gmra.mxu0 %v5933
    %v6975 = vpop.f32.mrf.mxu0
    %v6976 = vadd.f32 %v6325, %v6975
    %v6977 = vpop.f32.mrf.mxu0
    %v6978 = vadd.f32 %v6325, %v6977
    %6979 = vmatmul.bf16.gmra.mxu0 %v5937
    %v6980 = vpop.f32.mrf.mxu0
    %v6981 = vadd.f32 %v6325, %v6980
    %v6982 = vpop.f32.mrf.mxu0
    %v6983 = vadd.f32 %v6325, %v6982
    %6984 = vmatmul.bf16.gmra.mxu0 %v5941
    %v6985 = vpop.f32.mrf.mxu0
    %v6986 = vadd.f32 %v6325, %v6985
    %v6987 = vpop.f32.mrf.mxu0
    %v6988 = vadd.f32 %v6325, %v6987
    %6989 = vdwg.mxu0
    %6990 = vmatpush.bf16.msra.mxu0 %v6742
    %6991 = vmatpush.bf16.msra.mxu0 %v6741
    %6992 = vmatpush.bf16.msra.mxu0 %v6740
    %6993 = vmatpush.bf16.msra.mxu0 %v6739
    %6994 = vmatpush.bf16.msra.mxu0 %v6738
    %6995 = vmatpush.bf16.msra.mxu0 %v6737
    %6996 = vmatpush.bf16.msra.mxu0 %v6736
    %6997 = vmatpush.bf16.msra.mxu0 %v6735
    %6998 = vmatmul.bf16.gmra.mxu0 %v5999
    %v6999 = vpop.f32.mrf.mxu0
    %v7000 = vadd.f32 %v6951, %v6999
    %v7001 = vpop.f32.mrf.mxu0
    %v7002 = vadd.f32 %v6953, %v7001
    %7003 = vmatmul.bf16.gmra.mxu0 %v6003
    %v7004 = vpop.f32.mrf.mxu0
    %v7005 = vadd.f32 %v6956, %v7004
    %v7006 = vpop.f32.mrf.mxu0
    %v7007 = vadd.f32 %v6958, %v7006
    %7008 = vmatmul.bf16.gmra.mxu0 %v6007
    %v7009 = vpop.f32.mrf.mxu0
    %v7010 = vadd.f32 %v6961, %v7009
    %v7011 = vpop.f32.mrf.mxu0
    %v7012 = vadd.f32 %v6963, %v7011
    %7013 = vmatmul.bf16.gmra.mxu0 %v6011
    %v7014 = vpop.f32.mrf.mxu0
    %v7015 = vadd.f32 %v6966, %v7014
    %v7016 = vpop.f32.mrf.mxu0
    %v7017 = vadd.f32 %v6968, %v7016
    %7018 = vmatmul.bf16.gmra.mxu0 %v5999
    %v7019 = vpop.f32.mrf.mxu0
    %v7020 = vadd.f32 %v6971, %v7019
    %v7021 = vpop.f32.mrf.mxu0
    %v7022 = vadd.f32 %v6973, %v7021
    %7023 = vmatmul.bf16.gmra.mxu0 %v6015
    %v7024 = vpop.f32.mrf.mxu0
    %v7025 = vadd.f32 %v6976, %v7024
    %v7026 = vpop.f32.mrf.mxu0
    %v7027 = vadd.f32 %v6978, %v7026
    %7028 = vmatmul.bf16.gmra.mxu0 %v6019
    %v7029 = vpop.f32.mrf.mxu0
    %v7030 = vadd.f32 %v6981, %v7029
    %v7031 = vpop.f32.mrf.mxu0
    %v7032 = vadd.f32 %v6983, %v7031
    %7033 = vmatmul.bf16.gmra.mxu0 %v6023
    %v7034 = vpop.f32.mrf.mxu0
    %v7035 = vadd.f32 %v6986, %v7034
    %v7036 = vpop.f32.mrf.mxu0
    %v7037 = vadd.f32 %v6988, %v7036
    %7038 = vdwg.mxu0
    %7039 = vmatpush.bf16.msra.mxu0 %v6750
    %7040 = vmatpush.bf16.msra.mxu0 %v6749
    %7041 = vmatpush.bf16.msra.mxu0 %v6748
    %7042 = vmatpush.bf16.msra.mxu0 %v6747
    %7043 = vmatpush.bf16.msra.mxu0 %v6746
    %7044 = vmatpush.bf16.msra.mxu0 %v6745
    %7045 = vmatpush.bf16.msra.mxu0 %v6744
    %7046 = vmatpush.bf16.msra.mxu0 %v6743
    %7047 = vmatmul.bf16.gmra.mxu0 %v6071
    %v7048 = vpop.f32.mrf.mxu0
    %v7049 = vadd.f32 %v7000, %v7048
    %v7050 = vpop.f32.mrf.mxu0
    %v7051 = vadd.f32 %v7002, %v7050
    %7052 = vmatmul.bf16.gmra.mxu0 %v6075
    %v7053 = vpop.f32.mrf.mxu0
    %v7054 = vadd.f32 %v7005, %v7053
    %v7055 = vpop.f32.mrf.mxu0
    %v7056 = vadd.f32 %v7007, %v7055
    %7057 = vmatmul.bf16.gmra.mxu0 %v6079
    %v7058 = vpop.f32.mrf.mxu0
    %v7059 = vadd.f32 %v7010, %v7058
    %v7060 = vpop.f32.mrf.mxu0
    %v7061 = vadd.f32 %v7012, %v7060
    %7062 = vmatmul.bf16.gmra.mxu0 %v6083
    %v7063 = vpop.f32.mrf.mxu0
    %v7064 = vadd.f32 %v7015, %v7063
    %v7065 = vpop.f32.mrf.mxu0
    %v7066 = vadd.f32 %v7017, %v7065
    %7067 = vmatmul.bf16.gmra.mxu0 %v6086
    %v7068 = vpop.f32.mrf.mxu0
    %v7069 = vadd.f32 %v7020, %v7068
    %v7070 = vpop.f32.mrf.mxu0
    %v7071 = vadd.f32 %v7022, %v7070
    %7072 = vmatmul.bf16.gmra.mxu0 %v6090
    %v7073 = vpop.f32.mrf.mxu0
    %v7074 = vadd.f32 %v7025, %v7073
    %v7075 = vpop.f32.mrf.mxu0
    %v7076 = vadd.f32 %v7027, %v7075
    %7077 = vmatmul.bf16.gmra.mxu0 %v6094
    %v7078 = vpop.f32.mrf.mxu0
    %v7079 = vadd.f32 %v7030, %v7078
    %v7080 = vpop.f32.mrf.mxu0
    %v7081 = vadd.f32 %v7032, %v7080
    %7082 = vmatmul.bf16.gmra.mxu0 %v6098
    %v7083 = vpop.f32.mrf.mxu0
    %v7084 = vadd.f32 %v7035, %v7083
    %v7085 = vpop.f32.mrf.mxu0
    %v7086 = vadd.f32 %v7037, %v7085
    %7087 = vdwg.mxu0
    %7088 = vmatpush.bf16.msra.mxu0 %v6758
    %7089 = vmatpush.bf16.msra.mxu0 %v6757
    %7090 = vmatpush.bf16.msra.mxu0 %v6756
    %7091 = vmatpush.bf16.msra.mxu0 %v6755
    %7092 = vmatpush.bf16.msra.mxu0 %v6754
    %7093 = vmatpush.bf16.msra.mxu0 %v6753
    %7094 = vmatpush.bf16.msra.mxu0 %v6752
    %7095 = vmatpush.bf16.msra.mxu0 %v6751
    %7096 = vmatmul.bf16.gmra.mxu0 %v6138
    %v7097 = vpop.f32.mrf.mxu0
    %v7098 = vadd.f32 %v7049, %v7097
    %v7099 = vpop.f32.mrf.mxu0
    %v7100 = vadd.f32 %v7051, %v7099
    %7101 = vmatmul.bf16.gmra.mxu0 %v6142
    %v7102 = vpop.f32.mrf.mxu0
    %v7103 = vadd.f32 %v7054, %v7102
    %v7104 = vpop.f32.mrf.mxu0
    %v7105 = vadd.f32 %v7056, %v7104
    %7106 = vmatmul.bf16.gmra.mxu0 %v6146
    %v7107 = vpop.f32.mrf.mxu0
    %v7108 = vadd.f32 %v7059, %v7107
    %v7109 = vpop.f32.mrf.mxu0
    %v7110 = vadd.f32 %v7061, %v7109
    %7111 = vmatmul.bf16.gmra.mxu0 %v6150
    %v7112 = vpop.f32.mrf.mxu0
    %v7113 = vadd.f32 %v7064, %v7112
    %v7114 = vpop.f32.mrf.mxu0
    %v7115 = vadd.f32 %v7066, %v7114
    %7116 = vmatmul.bf16.gmra.mxu0 %v6154
    %v7117 = vpop.f32.mrf.mxu0
    %v7118 = vadd.f32 %v7069, %v7117
    %v7119 = vpop.f32.mrf.mxu0
    %v7120 = vadd.f32 %v7071, %v7119
    %7121 = vmatmul.bf16.gmra.mxu0 %v6158
    %v7122 = vpop.f32.mrf.mxu0
    %v7123 = vadd.f32 %v7074, %v7122
    %v7124 = vpop.f32.mrf.mxu0
    %v7125 = vadd.f32 %v7076, %v7124
    %7126 = vmatmul.bf16.gmra.mxu0 %v6162
    %v7127 = vpop.f32.mrf.mxu0
    %v7128 = vadd.f32 %v7079, %v7127
    %v7129 = vpop.f32.mrf.mxu0
    %v7130 = vadd.f32 %v7081, %v7129
    %7131 = vmatmul.bf16.gmra.mxu0 %v6166
    %v7132 = vpop.f32.mrf.mxu0
    %v7133 = vadd.f32 %v7084, %v7132
    %v7134 = vpop.f32.mrf.mxu0
    %v7135 = vadd.f32 %v7086, %v7134
    %7136 = vdwg.mxu0
    %7137 = vmatpush.bf16.msra.mxu0 %v6766
    %7138 = vmatpush.bf16.msra.mxu0 %v6765
    %7139 = vmatpush.bf16.msra.mxu0 %v6764
    %7140 = vmatpush.bf16.msra.mxu0 %v6763
    %7141 = vmatpush.bf16.msra.mxu0 %v6762
    %7142 = vmatpush.bf16.msra.mxu0 %v6761
    %7143 = vmatpush.bf16.msra.mxu0 %v6760
    %7144 = vmatpush.bf16.msra.mxu0 %v6759
    %7145 = vmatmul.bf16.gmra.mxu0 %v6206
    %v7146 = vpop.f32.mrf.mxu0
    %v7147 = vadd.f32 %v7098, %v7146
    %v7148 = vpop.f32.mrf.mxu0
    %v7149 = vadd.f32 %v7100, %v7148
    %7150 = vmatmul.bf16.gmra.mxu0 %v6210
    %v7151 = vpop.f32.mrf.mxu0
    %v7152 = vadd.f32 %v7103, %v7151
    %v7153 = vpop.f32.mrf.mxu0
    %v7154 = vadd.f32 %v7105, %v7153
    %7155 = vmatmul.bf16.gmra.mxu0 %v6214
    %v7156 = vpop.f32.mrf.mxu0
    %v7157 = vadd.f32 %v7108, %v7156
    %v7158 = vpop.f32.mrf.mxu0
    %v7159 = vadd.f32 %v7110, %v7158
    %7160 = vmatmul.bf16.gmra.mxu0 %v6218
    %v7161 = vpop.f32.mrf.mxu0
    %v7162 = vadd.f32 %v7113, %v7161
    %v7163 = vpop.f32.mrf.mxu0
    %v7164 = vadd.f32 %v7115, %v7163
    %7165 = vmatmul.bf16.gmra.mxu0 %v6222
    %v7166 = vpop.f32.mrf.mxu0
    %v7167 = vadd.f32 %v7118, %v7166
    %v7168 = vpop.f32.mrf.mxu0
    %v7169 = vadd.f32 %v7120, %v7168
    %7170 = vmatmul.bf16.gmra.mxu0 %v6226
    %v7171 = vpop.f32.mrf.mxu0
    %v7172 = vadd.f32 %v7123, %v7171
    %v7173 = vpop.f32.mrf.mxu0
    %v7174 = vadd.f32 %v7125, %v7173
    %7175 = vmatmul.bf16.gmra.mxu0 %v6230
    %v7176 = vpop.f32.mrf.mxu0
    %v7177 = vadd.f32 %v7128, %v7176
    %v7178 = vpop.f32.mrf.mxu0
    %v7179 = vadd.f32 %v7130, %v7178
    %7180 = vmatmul.bf16.gmra.mxu0 %v6234
    %v7181 = vpop.f32.mrf.mxu0
    %v7182 = vadd.f32 %v7133, %v7181
    %v7183 = vpop.f32.mrf.mxu0
    %v7184 = vadd.f32 %v7135, %v7183
    %7185 = vdwg.mxu0
    %7186 = vmatpush.bf16.msra.mxu0 %v6774
    %7187 = vmatpush.bf16.msra.mxu0 %v6773
    %7188 = vmatpush.bf16.msra.mxu0 %v6772
    %7189 = vmatpush.bf16.msra.mxu0 %v6771
    %7190 = vmatpush.bf16.msra.mxu0 %v6770
    %7191 = vmatpush.bf16.msra.mxu0 %v6769
    %7192 = vmatpush.bf16.msra.mxu0 %v6768
    %7193 = vmatpush.bf16.msra.mxu0 %v6767
    %7194 = vmatmul.bf16.gmra.mxu0 %v5921
    %v7195 = vpop.f32.mrf.mxu0
    %v7196 = vadd.f32 %v7147, %v7195
    %v7197 = vpop.f32.mrf.mxu0
    %v7198 = vadd.f32 %v7149, %v7197
    %7199 = vmatmul.bf16.gmra.mxu0 %v5925
    %v7200 = vpop.f32.mrf.mxu0
    %v7201 = vadd.f32 %v7152, %v7200
    %v7202 = vpop.f32.mrf.mxu0
    %v7203 = vadd.f32 %v7154, %v7202
    %7204 = vmatmul.bf16.gmra.mxu0 %v5929
    %v7205 = vpop.f32.mrf.mxu0
    %v7206 = vadd.f32 %v7157, %v7205
    %v7207 = vpop.f32.mrf.mxu0
    %v7208 = vadd.f32 %v7159, %v7207
    %7209 = vmatmul.bf16.gmra.mxu0 %v6248
    %v7210 = vpop.f32.mrf.mxu0
    %v7211 = vadd.f32 %v7162, %v7210
    %v7212 = vpop.f32.mrf.mxu0
    %v7213 = vadd.f32 %v7164, %v7212
    %7214 = vmatmul.bf16.gmra.mxu0 %v5933
    %v7215 = vpop.f32.mrf.mxu0
    %v7216 = vadd.f32 %v7167, %v7215
    %v7217 = vpop.f32.mrf.mxu0
    %v7218 = vadd.f32 %v7169, %v7217
    %7219 = vmatmul.bf16.gmra.mxu0 %v5937
    %v7220 = vpop.f32.mrf.mxu0
    %v7221 = vadd.f32 %v7172, %v7220
    %v7222 = vpop.f32.mrf.mxu0
    %v7223 = vadd.f32 %v7174, %v7222
    %7224 = vmatmul.bf16.gmra.mxu0 %v5941
    %v7225 = vpop.f32.mrf.mxu0
    %v7226 = vadd.f32 %v7177, %v7225
    %v7227 = vpop.f32.mrf.mxu0
    %v7228 = vadd.f32 %v7179, %v7227
    %7229 = vmatmul.bf16.gmra.mxu0 %v6252
    %v7230 = vpop.f32.mrf.mxu0
    %v7231 = vadd.f32 %v7182, %v7230
    %v7232 = vpop.f32.mrf.mxu0
    %v7233 = vadd.f32 %v7184, %v7232
    %7234 = vdwg.mxu0
    %7235 = vmatpush.bf16.msra.mxu0 %v6782
    %7236 = vmatpush.bf16.msra.mxu0 %v6781
    %7237 = vmatpush.bf16.msra.mxu0 %v6780
    %7238 = vmatpush.bf16.msra.mxu0 %v6779
    %7239 = vmatpush.bf16.msra.mxu0 %v6778
    %7240 = vmatpush.bf16.msra.mxu0 %v6777
    %7241 = vmatpush.bf16.msra.mxu0 %v6776
    %7242 = vmatpush.bf16.msra.mxu0 %v6775
    %7243 = vmatmul.bf16.gmra.mxu0 %v6003
    %v7244 = vpop.f32.mrf.mxu0
    %v7245 = vadd.f32 %v7196, %v7244
    %v7246 = vpop.f32.mrf.mxu0
    %v7247 = vadd.f32 %v7198, %v7246
    %7248 = vmatmul.bf16.gmra.mxu0 %v6007
    %v7249 = vpop.f32.mrf.mxu0
    %v7250 = vadd.f32 %v7201, %v7249
    %v7251 = vpop.f32.mrf.mxu0
    %v7252 = vadd.f32 %v7203, %v7251
    %7253 = vmatmul.bf16.gmra.mxu0 %v6011
    %v7254 = vpop.f32.mrf.mxu0
    %v7255 = vadd.f32 %v7206, %v7254
    %v7256 = vpop.f32.mrf.mxu0
    %v7257 = vadd.f32 %v7208, %v7256
    %7258 = vmatmul.bf16.gmra.mxu0 %v6268
    %v7259 = vpop.f32.mrf.mxu0
    %v7260 = vadd.f32 %v7211, %v7259
    %v7261 = vpop.f32.mrf.mxu0
    %v7262 = vadd.f32 %v7213, %v7261
    %7263 = vmatmul.bf16.gmra.mxu0 %v6015
    %v7264 = vpop.f32.mrf.mxu0
    %v7265 = vadd.f32 %v7216, %v7264
    %v7266 = vpop.f32.mrf.mxu0
    %v7267 = vadd.f32 %v7218, %v7266
    %7268 = vmatmul.bf16.gmra.mxu0 %v6019
    %v7269 = vpop.f32.mrf.mxu0
    %v7270 = vadd.f32 %v7221, %v7269
    %v7271 = vpop.f32.mrf.mxu0
    %v7272 = vadd.f32 %v7223, %v7271
    %7273 = vmatmul.bf16.gmra.mxu0 %v6023
    %v7274 = vpop.f32.mrf.mxu0
    %v7275 = vadd.f32 %v7226, %v7274
    %v7276 = vpop.f32.mrf.mxu0
    %v7277 = vadd.f32 %v7228, %v7276
    %7278 = vmatmul.bf16.gmra.mxu0 %v6272
    %v7279 = vpop.f32.mrf.mxu0
    %v7280 = vadd.f32 %v7231, %v7279
    %v7281 = vpop.f32.mrf.mxu0
    %v7282 = vadd.f32 %v7233, %v7281
    %7283 = vdwg.mxu0
    %7284 = vmatpush.bf16.msra.mxu0 %v6790
    %7285 = vmatpush.bf16.msra.mxu0 %v6789
    %7286 = vmatpush.bf16.msra.mxu0 %v6788
    %7287 = vmatpush.bf16.msra.mxu0 %v6787
    %7288 = vmatpush.bf16.msra.mxu0 %v6786
    %7289 = vmatpush.bf16.msra.mxu0 %v6785
    %7290 = vmatpush.bf16.msra.mxu0 %v6784
    %7291 = vmatpush.bf16.msra.mxu0 %v6783
    %7292 = vmatmul.bf16.gmra.mxu0 %v6075
    %v7293 = vpop.f32.mrf.mxu0
    %v7294 = vadd.f32 %v7245, %v7293
    %v7295 = vpop.f32.mrf.mxu0
    %v7296 = vadd.f32 %v7247, %v7295
    %7297 = vmatmul.bf16.gmra.mxu0 %v6079
    %v7298 = vpop.f32.mrf.mxu0
    %v7299 = vadd.f32 %v7250, %v7298
    %v7300 = vpop.f32.mrf.mxu0
    %v7301 = vadd.f32 %v7252, %v7300
    %7302 = vmatmul.bf16.gmra.mxu0 %v6083
    %v7303 = vpop.f32.mrf.mxu0
    %v7304 = vadd.f32 %v7255, %v7303
    %v7305 = vpop.f32.mrf.mxu0
    %v7306 = vadd.f32 %v7257, %v7305
    %7307 = vmatmul.bf16.gmra.mxu0 %v6286
    %v7308 = vpop.f32.mrf.mxu0
    %v7309 = vadd.f32 %v7260, %v7308
    %v7310 = vpop.f32.mrf.mxu0
    %v7311 = vadd.f32 %v7262, %v7310
    %7312 = vmatmul.bf16.gmra.mxu0 %v6090
    %v7313 = vpop.f32.mrf.mxu0
    %v7314 = vadd.f32 %v7265, %v7313
    %v7315 = vpop.f32.mrf.mxu0
    %v7316 = vadd.f32 %v7267, %v7315
    %7317 = vmatmul.bf16.gmra.mxu0 %v6094
    %v7318 = vpop.f32.mrf.mxu0
    %v7319 = vadd.f32 %v7270, %v7318
    %v7320 = vpop.f32.mrf.mxu0
    %v7321 = vadd.f32 %v7272, %v7320
    %7322 = vmatmul.bf16.gmra.mxu0 %v6098
    %v7323 = vpop.f32.mrf.mxu0
    %v7324 = vadd.f32 %v7275, %v7323
    %v7325 = vpop.f32.mrf.mxu0
    %v7326 = vadd.f32 %v7277, %v7325
    %7327 = vmatmul.bf16.gmra.mxu0 %v6290
    %v7328 = vpop.f32.mrf.mxu0
    %v7329 = vadd.f32 %v7280, %v7328
    %v7330 = vpop.f32.mrf.mxu0
    %v7331 = vadd.f32 %v7282, %v7330
    %7332 = vdwg.mxu0
    %7333 = vmatpush.bf16.msra.mxu0 %v6798
    %7334 = vmatpush.bf16.msra.mxu0 %v6797
    %7335 = vmatpush.bf16.msra.mxu0 %v6796
    %7336 = vmatpush.bf16.msra.mxu0 %v6795
    %7337 = vmatpush.bf16.msra.mxu0 %v6794
    %7338 = vmatpush.bf16.msra.mxu0 %v6793
    %7339 = vmatpush.bf16.msra.mxu0 %v6792
    %7340 = vmatpush.bf16.msra.mxu0 %v6791
    %7341 = vmatmul.bf16.gmra.mxu0 %v6142
    %v7342 = vpop.f32.mrf.mxu0
    %v7343 = vadd.f32 %v7294, %v7342
    %v7344 = vpop.f32.mrf.mxu0
    %v7345 = vadd.f32 %v7296, %v7344
    %7346 = vmatmul.bf16.gmra.mxu0 %v6146
    %v7347 = vpop.f32.mrf.mxu0
    %v7348 = vadd.f32 %v7299, %v7347
    %v7349 = vpop.f32.mrf.mxu0
    %v7350 = vadd.f32 %v7301, %v7349
    %7351 = vmatmul.bf16.gmra.mxu0 %v6150
    %v7352 = vpop.f32.mrf.mxu0
    %v7353 = vadd.f32 %v7304, %v7352
    %v7354 = vpop.f32.mrf.mxu0
    %v7355 = vadd.f32 %v7306, %v7354
    %7356 = vmatmul.bf16.gmra.mxu0 %v6302
    %v7357 = vpop.f32.mrf.mxu0
    %v7358 = vadd.f32 %v7309, %v7357
    %v7359 = vpop.f32.mrf.mxu0
    %v7360 = vadd.f32 %v7311, %v7359
    %7361 = vmatmul.bf16.gmra.mxu0 %v6158
    %v7362 = vpop.f32.mrf.mxu0
    %v7363 = vadd.f32 %v7314, %v7362
    %v7364 = vpop.f32.mrf.mxu0
    %v7365 = vadd.f32 %v7316, %v7364
    %7366 = vmatmul.bf16.gmra.mxu0 %v6162
    %v7367 = vpop.f32.mrf.mxu0
    %v7368 = vadd.f32 %v7319, %v7367
    %v7369 = vpop.f32.mrf.mxu0
    %v7370 = vadd.f32 %v7321, %v7369
    %7371 = vmatmul.bf16.gmra.mxu0 %v6166
    %v7372 = vpop.f32.mrf.mxu0
    %v7373 = vadd.f32 %v7324, %v7372
    %v7374 = vpop.f32.mrf.mxu0
    %v7375 = vadd.f32 %v7326, %v7374
    %7376 = vmatmul.bf16.gmra.mxu0 %v6306
    %v7377 = vpop.f32.mrf.mxu0
    %v7378 = vadd.f32 %v7329, %v7377
    %v7379 = vpop.f32.mrf.mxu0
    %v7380 = vadd.f32 %v7331, %v7379
    %7381 = vdwg.mxu0
    %7382 = vmatpush.bf16.msra.mxu0 %v6806
    %7383 = vmatpush.bf16.msra.mxu0 %v6805
    %7384 = vmatpush.bf16.msra.mxu0 %v6804
    %7385 = vmatpush.bf16.msra.mxu0 %v6803
    %7386 = vmatpush.bf16.msra.mxu0 %v6802
    %7387 = vmatpush.bf16.msra.mxu0 %v6801
    %7388 = vmatpush.bf16.msra.mxu0 %v6800
    %7389 = vmatpush.bf16.msra.mxu0 %v6799
    %7390 = vmatmul.bf16.gmra.mxu0 %v6210
    %v7391 = vpop.f32.mrf.mxu0
    %v7392 = vadd.f32 %v7343, %v7391
    %v7393 = vpop.f32.mrf.mxu0
    %v7394 = vadd.f32 %v7345, %v7393
    %7395 = vmatmul.bf16.gmra.mxu0 %v6214
    %v7396 = vpop.f32.mrf.mxu0
    %v7397 = vadd.f32 %v7348, %v7396
    %v7398 = vpop.f32.mrf.mxu0
    %v7399 = vadd.f32 %v7350, %v7398
    %7400 = vmatmul.bf16.gmra.mxu0 %v6218
    %v7401 = vpop.f32.mrf.mxu0
    %v7402 = vadd.f32 %v7353, %v7401
    %v7403 = vpop.f32.mrf.mxu0
    %v7404 = vadd.f32 %v7355, %v7403
    %7405 = vmatmul.bf16.gmra.mxu0 %v6318
    %v7406 = vpop.f32.mrf.mxu0
    %v7407 = vadd.f32 %v7358, %v7406
    %v7408 = vpop.f32.mrf.mxu0
    %v7409 = vadd.f32 %v7360, %v7408
    %7410 = vmatmul.bf16.gmra.mxu0 %v6226
    %v7411 = vpop.f32.mrf.mxu0
    %v7412 = vadd.f32 %v7363, %v7411
    %v7413 = vpop.f32.mrf.mxu0
    %v7414 = vadd.f32 %v7365, %v7413
    %7415 = vmatmul.bf16.gmra.mxu0 %v6230
    %v7416 = vpop.f32.mrf.mxu0
    %v7417 = vadd.f32 %v7368, %v7416
    %v7418 = vpop.f32.mrf.mxu0
    %v7419 = vadd.f32 %v7370, %v7418
    %7420 = vmatmul.bf16.gmra.mxu0 %v6234
    %v7421 = vpop.f32.mrf.mxu0
    %v7422 = vadd.f32 %v7373, %v7421
    %v7423 = vpop.f32.mrf.mxu0
    %v7424 = vadd.f32 %v7375, %v7423
    %7425 = vmatmul.bf16.gmra.mxu0 %v6322
    %v7426 = vpop.f32.mrf.mxu0
    %v7427 = vadd.f32 %v7378, %v7426
    %v7428 = vpop.f32.mrf.mxu0
    %v7429 = vadd.f32 %v7380, %v7428
    %7430 = vdwg.mxu0
    %7431 = vmatpush.bf16.msra.mxu0 %v6814
    %7432 = vmatpush.bf16.msra.mxu0 %v6813
    %7433 = vmatpush.bf16.msra.mxu0 %v6812
    %7434 = vmatpush.bf16.msra.mxu0 %v6811
    %7435 = vmatpush.bf16.msra.mxu0 %v6810
    %7436 = vmatpush.bf16.msra.mxu0 %v6809
    %7437 = vmatpush.bf16.msra.mxu0 %v6808
    %7438 = vmatpush.bf16.msra.mxu0 %v6807
    %7439 = vmatmul.bf16.gmra.mxu0 %v5925
    %v7440 = vpop.f32.mrf.mxu0
    %v7441 = vadd.f32 %v7392, %v7440
    %v7442 = vpop.f32.mrf.mxu0
    %v7443 = vadd.f32 %v7394, %v7442
    %7444 = vmatmul.bf16.gmra.mxu0 %v5929
    %v7445 = vpop.f32.mrf.mxu0
    %v7446 = vadd.f32 %v7397, %v7445
    %v7447 = vpop.f32.mrf.mxu0
    %v7448 = vadd.f32 %v7399, %v7447
    %7449 = vmatmul.bf16.gmra.mxu0 %v6248
    %v7450 = vpop.f32.mrf.mxu0
    %v7451 = vadd.f32 %v7402, %v7450
    %v7452 = vpop.f32.mrf.mxu0
    %v7453 = vadd.f32 %v7404, %v7452
    %7454 = vmatmul.bf16.gmra.mxu0 %v5917
    %v7455 = vpop.f32.mrf.mxu0
    %v7456 = vadd.f32 %v7407, %v7455
    %v7457 = vpop.f32.mrf.mxu0
    %v7458 = vadd.f32 %v7409, %v7457
    %7459 = vmatmul.bf16.gmra.mxu0 %v5937
    %v7460 = vpop.f32.mrf.mxu0
    %v7461 = vadd.f32 %v7412, %v7460
    %v7462 = vpop.f32.mrf.mxu0
    %v7463 = vadd.f32 %v7414, %v7462
    %7464 = vmatmul.bf16.gmra.mxu0 %v5941
    %v7465 = vpop.f32.mrf.mxu0
    %v7466 = vadd.f32 %v7417, %v7465
    %v7467 = vpop.f32.mrf.mxu0
    %v7468 = vadd.f32 %v7419, %v7467
    %7469 = vmatmul.bf16.gmra.mxu0 %v6252
    %v7470 = vpop.f32.mrf.mxu0
    %v7471 = vadd.f32 %v7422, %v7470
    %v7472 = vpop.f32.mrf.mxu0
    %v7473 = vadd.f32 %v7424, %v7472
    %7474 = vmatmul.bf16.gmra.mxu0 %v5917
    %v7475 = vpop.f32.mrf.mxu0
    %v7476 = vadd.f32 %v7427, %v7475
    %v7477 = vpop.f32.mrf.mxu0
    %v7478 = vadd.f32 %v7429, %v7477
    %7479 = vdwg.mxu0
    %7480 = vmatpush.bf16.msra.mxu0 %v6822
    %7481 = vmatpush.bf16.msra.mxu0 %v6821
    %7482 = vmatpush.bf16.msra.mxu0 %v6820
    %7483 = vmatpush.bf16.msra.mxu0 %v6819
    %7484 = vmatpush.bf16.msra.mxu0 %v6818
    %7485 = vmatpush.bf16.msra.mxu0 %v6817
    %7486 = vmatpush.bf16.msra.mxu0 %v6816
    %7487 = vmatpush.bf16.msra.mxu0 %v6815
    %7488 = vmatmul.bf16.gmra.mxu0 %v6007
    %v7489 = vpop.f32.mrf.mxu0
    %v7490 = vadd.f32 %v7441, %v7489
    %v7491 = vpop.f32.mrf.mxu0
    %v7492 = vadd.f32 %v7443, %v7491
    %7493 = vmatmul.bf16.gmra.mxu0 %v6011
    %v7494 = vpop.f32.mrf.mxu0
    %v7495 = vadd.f32 %v7446, %v7494
    %v7496 = vpop.f32.mrf.mxu0
    %v7497 = vadd.f32 %v7448, %v7496
    %7498 = vmatmul.bf16.gmra.mxu0 %v6268
    %v7499 = vpop.f32.mrf.mxu0
    %v7500 = vadd.f32 %v7451, %v7499
    %v7501 = vpop.f32.mrf.mxu0
    %v7502 = vadd.f32 %v7453, %v7501
    %7503 = vmatmul.bf16.gmra.mxu0 %v5999
    %v7504 = vpop.f32.mrf.mxu0
    %v7505 = vadd.f32 %v7456, %v7504
    %v7506 = vpop.f32.mrf.mxu0
    %v7507 = vadd.f32 %v7458, %v7506
    %7508 = vmatmul.bf16.gmra.mxu0 %v6019
    %v7509 = vpop.f32.mrf.mxu0
    %v7510 = vadd.f32 %v7461, %v7509
    %v7511 = vpop.f32.mrf.mxu0
    %v7512 = vadd.f32 %v7463, %v7511
    %7513 = vmatmul.bf16.gmra.mxu0 %v6023
    %v7514 = vpop.f32.mrf.mxu0
    %v7515 = vadd.f32 %v7466, %v7514
    %v7516 = vpop.f32.mrf.mxu0
    %v7517 = vadd.f32 %v7468, %v7516
    %7518 = vmatmul.bf16.gmra.mxu0 %v6272
    %v7519 = vpop.f32.mrf.mxu0
    %v7520 = vadd.f32 %v7471, %v7519
    %v7521 = vpop.f32.mrf.mxu0
    %v7522 = vadd.f32 %v7473, %v7521
    %7523 = vmatmul.bf16.gmra.mxu0 %v5999
    %v7524 = vpop.f32.mrf.mxu0
    %v7525 = vadd.f32 %v7476, %v7524
    %v7526 = vpop.f32.mrf.mxu0
    %v7527 = vadd.f32 %v7478, %v7526
    %7528 = vdwg.mxu0
    %7529 = vmatpush.bf16.msra.mxu0 0
    %7530 = vmatpush.bf16.msra.mxu0 0
    %7531 = vmatpush.bf16.msra.mxu0 0
    %7532 = vmatpush.bf16.msra.mxu0 0
    %7533 = vmatpush.bf16.msra.mxu0 %v6826
    %7534 = vmatpush.bf16.msra.mxu0 %v6825
    %7535 = vmatpush.bf16.msra.mxu0 %v6824
    %7536 = vmatpush.bf16.msra.mxu0 %v6823
    %7537 = vmatmul.bf16.gmra.mxu0 %v6927
    %v7538 = vpop.f32.mrf.mxu0
    %v7539 = vadd.f32 %v7490, %v7538
    %v7540 = vpop.f32.mrf.mxu0
    %v7541 = vadd.f32 %v7492, %v7540
    %7542 = vmatmul.bf16.gmra.mxu0 %v6929
    %v7543 = vpop.f32.mrf.mxu0
    %v7544 = vadd.f32 %v7495, %v7543
    %v7545 = vpop.f32.mrf.mxu0
    %v7546 = vadd.f32 %v7497, %v7545
    %7547 = vmatmul.bf16.gmra.mxu0 %v6931
    %v7548 = vpop.f32.mrf.mxu0
    %v7549 = vadd.f32 %v7500, %v7548
    %v7550 = vpop.f32.mrf.mxu0
    %v7551 = vadd.f32 %v7502, %v7550
    %7552 = vmatmul.bf16.gmra.mxu0 %v6933
    %v7553 = vpop.f32.mrf.mxu0
    %v7554 = vadd.f32 %v7505, %v7553
    %v7555 = vpop.f32.mrf.mxu0
    %v7556 = vadd.f32 %v7507, %v7555
    %7557 = vmatmul.bf16.gmra.mxu0 %v6935
    %v7558 = vpop.f32.mrf.mxu0
    %v7559 = vadd.f32 %v7510, %v7558
    %v7560 = vpop.f32.mrf.mxu0
    %v7561 = vadd.f32 %v7512, %v7560
    %7562 = vmatmul.bf16.gmra.mxu0 %v6937
    %v7563 = vpop.f32.mrf.mxu0
    %v7564 = vadd.f32 %v7515, %v7563
    %v7565 = vpop.f32.mrf.mxu0
    %v7566 = vadd.f32 %v7517, %v7565
    %7567 = vmatmul.bf16.gmra.mxu0 %v6939
    %v7568 = vpop.f32.mrf.mxu0
    %v7569 = vadd.f32 %v7520, %v7568
    %v7570 = vpop.f32.mrf.mxu0
    %v7571 = vadd.f32 %v7522, %v7570
    %7572 = vmatmul.bf16.gmra.mxu0 %v6933
    %v7573 = vpop.f32.mrf.mxu0
    %v7574 = vadd.f32 %v7525, %v7573
    %v7575 = vpop.f32.mrf.mxu0
    %v7576 = vadd.f32 %v7527, %v7575
    %7577 = vdwg.mxu0
    %vm7578 = vcmp.gt.f32.partialorder %v7539, 0.0
    %vm7579 = vcmp.gt.f32.partialorder %v7541, 0.0
    %vm7580 = vcmp.gt.f32.partialorder %v7544, 0.0
    %vm7581 = vcmp.gt.f32.partialorder %v7546, 0.0
    %vm7582 = vcmp.gt.f32.partialorder %v7549, 0.0
    %vm7583 = vcmp.gt.f32.partialorder %v7551, 0.0
    %vm7584 = vcmp.gt.f32.partialorder %v7554, 0.0
    %vm7585 = vcmp.gt.f32.partialorder %v7556, 0.0
    %vm7586 = vcmp.gt.f32.partialorder %v7559, 0.0
    %vm7587 = vcmp.gt.f32.partialorder %v7561, 0.0
    %vm7588 = vcmp.gt.f32.partialorder %v7564, 0.0
    %vm7589 = vcmp.gt.f32.partialorder %v7566, 0.0
    %vm7590 = vcmp.gt.f32.partialorder %v7569, 0.0
    %vm7591 = vcmp.gt.f32.partialorder %v7571, 0.0
    %vm7592 = vcmp.gt.f32.partialorder %v7574, 0.0
    %vm7593 = vcmp.gt.f32.partialorder %v7576, 0.0
    %v7594 = vmul.f32 %v7539, 0.2
    %v7595 = vmul.f32 %v7541, 0.2
    %v7596 = vmul.f32 %v7544, 0.2
    %v7597 = vmul.f32 %v7546, 0.2
    %v7598 = vmul.f32 %v7549, 0.2
    %v7599 = vmul.f32 %v7551, 0.2
    %v7600 = vmul.f32 %v7554, 0.2
    %v7601 = vmul.f32 %v7556, 0.2
    %v7602 = vmul.f32 %v7559, 0.2
    %v7603 = vmul.f32 %v7561, 0.2
    %v7604 = vmul.f32 %v7564, 0.2
    %v7605 = vmul.f32 %v7566, 0.2
    %v7606 = vmul.f32 %v7569, 0.2
    %v7607 = vmul.f32 %v7571, 0.2
    %v7608 = vmul.f32 %v7574, 0.2
    %v7609 = vmul.f32 %v7576, 0.2
    %v7610 = vsel %vm7578, %v7539, %v7594
    %v7611 = vsel %vm7579, %v7541, %v7595
    %v7612 = vsel %vm7580, %v7544, %v7596
    %v7613 = vsel %vm7581, %v7546, %v7597
    %v7614 = vsel %vm7582, %v7549, %v7598
    %v7615 = vsel %vm7583, %v7551, %v7599
    %v7616 = vsel %vm7584, %v7554, %v7600
    %v7617 = vsel %vm7585, %v7556, %v7601
    %v7618 = vsel %vm7586, %v7559, %v7602
    %v7619 = vsel %vm7587, %v7561, %v7603
    %v7620 = vsel %vm7588, %v7564, %v7604
    %v7621 = vsel %vm7589, %v7566, %v7605
    %v7622 = vsel %vm7590, %v7569, %v7606
    %v7623 = vsel %vm7591, %v7571, %v7607
    %v7624 = vsel %vm7592, %v7574, %v7608
    %v7625 = vsel %vm7593, %v7576, %v7609
    %v7626 = vpack.c.bf16 %v7610, %v7610
    %v7627 = vpack.c.bf16 %v7611, %v7611
    %v7628 = vpack.c.bf16 %v7612, %v7612
    %v7629 = vpack.c.bf16 %v7613, %v7613
    %v7630 = vpack.c.bf16 %v7614, %v7614
    %v7631 = vpack.c.bf16 %v7615, %v7615
    %v7632 = vpack.c.bf16 %v7616, %v7616
    %v7633 = vpack.c.bf16 %v7617, %v7617
    %v7634 = vpack.c.bf16 %v7618, %v7618
    %v7635 = vpack.c.bf16 %v7619, %v7619
    %v7636 = vpack.c.bf16 %v7620, %v7620
    %v7637 = vpack.c.bf16 %v7621, %v7621
    %v7638 = vpack.c.bf16 %v7622, %v7622
    %v7639 = vpack.c.bf16 %v7623, %v7623
    %v7640 = vpack.c.bf16 %v7624, %v7624
    %v7641 = vpack.c.bf16 %v7625, %v7625
    %v7642 = vunpack.c.l.bf16 %v7626
    %v7643 = vunpack.c.l.bf16 %v7628
    %v7644 = vunpack.c.l.bf16 %v7630
    %v7645 = vunpack.c.l.bf16 %v7632
    %v7646 = vunpack.c.l.bf16 %v7634
    %v7647 = vunpack.c.l.bf16 %v7636
    %v7648 = vunpack.c.l.bf16 %v7638
    %v7649 = vunpack.c.l.bf16 %v7640
    %v7650 = vunpack.c.l.bf16 %v7627
    %v7651 = vunpack.c.l.bf16 %v7629
    %v7652 = vunpack.c.l.bf16 %v7631
    %v7653 = vunpack.c.l.bf16 %v7633
    %v7654 = vunpack.c.l.bf16 %v7635
    %v7655 = vunpack.c.l.bf16 %v7637
    %v7656 = vunpack.c.l.bf16 %v7639
    %v7657 = vunpack.c.l.bf16 %v7641
    %v7658 = vmax.f32 %v7642, %v7650
    %v7659 = vmax.f32 %v7643, %v7651
    %v7660 = vmax.f32 %v7644, %v7652
    %v7661 = vmax.f32 %v7645, %v7653
    %v7662 = vmax.f32 %v7646, %v7654
    %v7663 = vmax.f32 %v7647, %v7655
    %v7664 = vmax.f32 %v7648, %v7656
    %v7665 = vmax.f32 %v7649, %v7657
    %v7666 = vpack.c.bf16 %v7658, %v7658
    %v7667 = vpack.c.bf16 %v7659, %v7659
    %v7668 = vpack.c.bf16 %v7660, %v7660
    %v7669 = vpack.c.bf16 %v7661, %v7661
    %v7670 = vpack.c.bf16 %v7662, %v7662
    %v7671 = vpack.c.bf16 %v7663, %v7663
    %v7672 = vpack.c.bf16 %v7664, %v7664
    %v7673 = vpack.c.bf16 %v7665, %v7665
    %v7674 = vld [vmem:[%s5] sm:$0xf]
    %v7675 = vld [vmem:[%s5 + $0x4] sm:$0xf]
    %v7676 = vld [vmem:[%s5 + $0x8] sm:$0xf]
    %v7677 = vld [vmem:[%s5 + $0xc] sm:$0xf]
    %v7678 = vld [vmem:[%s5 + $0x10] sm:$0xf]
    %v7679 = vld [vmem:[%s5 + $0x14] sm:$0xf]
    %v7680 = vld [vmem:[%s5 + $0x18] sm:$0xf]
    %v7681 = vld [vmem:[%s5 + $0x1c] sm:$0xf]
    %v7682 = vld [vmem:[%s5 + $0x20] sm:$0xf]
    %v7683 = vld [vmem:[%s5 + $0x24] sm:$0xf]
    %v7684 = vld [vmem:[%s5 + $0x28] sm:$0xf]
    %v7685 = vld [vmem:[%s5 + $0x2c] sm:$0xf]
    %v7686 = vld [vmem:[%s5 + $0x30] sm:$0xf]
    %v7687 = vld [vmem:[%s5 + $0x34] sm:$0xf]
    %v7688 = vld [vmem:[%s5 + $0x38] sm:$0xf]
    %v7689 = vld [vmem:[%s5 + $0x3c] sm:$0xf]
    %v7690 = vld [vmem:[%s5 + $0x40] sm:$0xf]
    %v7691 = vld [vmem:[%s5 + $0x44] sm:$0xf]
    %v7692 = vld [vmem:[%s5 + $0x48] sm:$0xf]
    %v7693 = vld [vmem:[%s5 + $0x4c] sm:$0xf]
    %v7694 = vld [vmem:[%s5 + $0x50] sm:$0xf]
    %v7695 = vld [vmem:[%s5 + $0x54] sm:$0xf]
    %v7696 = vld [vmem:[%s5 + $0x58] sm:$0xf]
    %v7697 = vld [vmem:[%s5 + $0x5c] sm:$0xf]
    %v7698 = vld [vmem:[%s5 + $0x60] sm:$0xf]
    %v7699 = vld [vmem:[%s5 + $0x64] sm:$0xf]
    %v7700 = vld [vmem:[%s5 + $0x68] sm:$0xf]
    %v7701 = vld [vmem:[%s5 + $0x6c] sm:$0xf]
    %v7702 = vld [vmem:[%s5 + $0x70] sm:$0xf]
    %v7703 = vld [vmem:[%s5 + $0x74] sm:$0xf]
    %v7704 = vld [vmem:[%s5 + $0x78] sm:$0xf]
    %v7705 = vld [vmem:[%s5 + $0x7c] sm:$0xf]
    %v7706 = vld [vmem:[%s5 + $0x80] sm:$0xf]
    %v7707 = vld [vmem:[%s5 + $0x84] sm:$0xf]
    %v7708 = vld [vmem:[%s5 + $0x88] sm:$0xf]
    %v7709 = vld [vmem:[%s5 + $0x8c] sm:$0xf]
    %v7710 = vld [vmem:[%s5 + $0x90] sm:$0xf]
    %v7711 = vld [vmem:[%s5 + $0x94] sm:$0xf]
    %v7712 = vld [vmem:[%s5 + $0x98] sm:$0xf]
    %v7713 = vld [vmem:[%s5 + $0x9c] sm:$0xf]
    %v7714 = vld [vmem:[%s5 + $0xa0] sm:$0xf]
    %v7715 = vld [vmem:[%s5 + $0xa4] sm:$0xf]
    %v7716 = vld [vmem:[%s5 + $0xa8] sm:$0xf]
    %v7717 = vld [vmem:[%s5 + $0xac] sm:$0xf]
    %v7718 = vld [vmem:[%s5 + $0xb0] sm:$0xf]
    %v7719 = vld [vmem:[%s5 + $0xb4] sm:$0xf]
    %v7720 = vld [vmem:[%s5 + $0xb8] sm:$0xf]
    %v7721 = vld [vmem:[%s5 + $0xbc] sm:$0xf]
    %v7722 = vld [vmem:[%s5 + $0xc0] sm:$0xf]
    %v7723 = vld [vmem:[%s5 + $0xc4] sm:$0xf]
    %v7724 = vld [vmem:[%s5 + $0xc8] sm:$0xf]
    %v7725 = vld [vmem:[%s5 + $0xcc] sm:$0xf]
    %v7726 = vld [vmem:[%s5 + $0xd0] sm:$0xf]
    %v7727 = vld [vmem:[%s5 + $0xd4] sm:$0xf]
    %v7728 = vld [vmem:[%s5 + $0xd8] sm:$0xf]
    %v7729 = vld [vmem:[%s5 + $0xdc] sm:$0xf]
    %v7730 = vld [vmem:[%s5 + $0xe0] sm:$0xf]
    %v7731 = vld [vmem:[%s5 + $0xe4] sm:$0xf]
    %v7732 = vld [vmem:[%s5 + $0xe8] sm:$0xf]
    %v7733 = vld [vmem:[%s5 + $0xec] sm:$0xf]
    %v7734 = vld [vmem:[%s5 + $0xf0] sm:$0xf]
    %v7735 = vld [vmem:[%s5 + $0xf4] sm:$0xf]
    %v7736 = vld [vmem:[%s5 + $0xf8] sm:$0xf]
    %v7737 = vld [vmem:[%s5 + $0xfc] sm:$0xf]
    %v7738 = vld [vmem:[%s5 + $0x100] sm:$0xf]
    %v7739 = vld [vmem:[%s5 + $0x104] sm:$0xf]
    %v7740 = vld [vmem:[%s5 + $0x108] sm:$0xf]
    %v7741 = vld [vmem:[%s5 + $0x10c] sm:$0xf]
    %v7742 = vld [vmem:[%s5 + $0x110] sm:$0xf]
    %v7743 = vld [vmem:[%s5 + $0x114] sm:$0xf]
    %v7744 = vld [vmem:[%s5 + $0x118] sm:$0xf]
    %v7745 = vld [vmem:[%s5 + $0x11c] sm:$0xf]
    %v7746 = vld [vmem:[%s6] sm:$0x1]
    %v7755 = vunpack.c.l.b16 %v7666
    %v7756 = vunpack.c.l.b16 %v7667
    %v7757 = vunpack.c.l.b16 %v7668
    %v7758 = vunpack.c.l.b16 %v7669
    %v7759 = vunpack.c.l.b16 %v7670
    %v7760 = vunpack.c.l.b16 %v7671
    %v7761 = vunpack.c.l.b16 %v7672
    %v7762 = vunpack.c.l.b16 %v7673
    %v7763 = vpack.c.b16 %v7755, %v7755
    %v7764 = vpack.c.b16 %v7756, %v7756
    %v7765 = vpack.c.b16 %v7757, %v7757
    %v7766 = vpack.c.b16 %v7758, %v7758
    %v7767 = vpack.c.b16 %v7759, %v7759
    %v7768 = vpack.c.b16 %v7760, %v7760
    %v7769 = vpack.c.b16 %v7761, %v7761
    %v7770 = vpack.c.b16 %v7762, %v7762
    %v7772 = vshrl.u32 %v7763, 16
    %v7774 = vrot.slane %v7772, 7
    %v7775 = vshll.u32 %v7763, 16
    %v7777 = vor.u32 %v7774, %v7775
    %v7779 = vshrl.u32 %v7764, 16
    %v7781 = vrot.slane %v7779, 7
    %v7782 = vshll.u32 %v7764, 16
    %v7784 = vor.u32 %v7781, %v7782
    %v7786 = vshrl.u32 %v7765, 16
    %v7788 = vrot.slane %v7786, 7
    %v7789 = vshll.u32 %v7765, 16
    %v7791 = vor.u32 %v7788, %v7789
    %v7793 = vshrl.u32 %v7766, 16
    %v7795 = vrot.slane %v7793, 7
    %v7796 = vshll.u32 %v7766, 16
    %v7798 = vor.u32 %v7795, %v7796
    %v7800 = vshrl.u32 %v7767, 16
    %v7802 = vrot.slane %v7800, 7
    %v7803 = vshll.u32 %v7767, 16
    %v7805 = vor.u32 %v7802, %v7803
    %v7807 = vshrl.u32 %v7768, 16
    %v7809 = vrot.slane %v7807, 7
    %v7810 = vshll.u32 %v7768, 16
    %v7812 = vor.u32 %v7809, %v7810
    %v7814 = vshrl.u32 %v7769, 16
    %v7816 = vrot.slane %v7814, 7
    %v7817 = vshll.u32 %v7769, 16
    %v7819 = vor.u32 %v7816, %v7817
    %v7821 = vshrl.u32 %v7770, 16
    %v7823 = vrot.slane %v7821, 7
    %v7824 = vshll.u32 %v7770, 16
    %v7826 = vor.u32 %v7823, %v7824
    %vm7835 = vcmask 1040384
    %vm7836 = vsmask.f32 256
    %vm7837 = vmand %vm7835, %vm7836
    %v7838 = vsel %vm7837, 0, %v7777
    %v7839 = vsel %vm7837, 0, %v7784
    %v7840 = vsel %vm7837, 0, %v7791
    %v7841 = vsel %vm7837, 0, %v7798
    %v7842 = vsel %vm7837, 0, %v7805
    %v7843 = vsel %vm7837, 0, %v7812
    %v7844 = vsel %vm7837, 0, %v7819
    %v7845 = vsel %vm7837, 0, %v7826
    %vm7846 = vcmask 1044480
    %vm7847 = vsmask.f32 4352
    %vm7848 = vmand %vm7846, %vm7847
    %v7849 = vsel %vm7848, %v7838, 0
    %v7850 = vsel %vm7848, %v7839, 0
    %v7851 = vsel %vm7848, %v7840, 0
    %v7852 = vsel %vm7848, %v7841, 0
    %v7853 = vsel %vm7848, %v7842, 0
    %v7854 = vsel %vm7848, %v7843, 0
    %v7855 = vsel %vm7848, %v7844, 0
    %v7856 = vsel %vm7848, %v7845, 0
    %v7863 = vunpack.c.l.b16 %v7849
    %v7864 = vunpack.c.h.b16 %v7849
    %v7865 = vunpack.c.l.b16 %v7850
    %v7866 = vunpack.c.h.b16 %v7850
    %v7867 = vunpack.c.l.b16 %v7851
    %v7868 = vunpack.c.h.b16 %v7851
    %v7869 = vunpack.c.l.b16 %v7853
    %v7870 = vunpack.c.h.b16 %v7853
    %v7871 = vunpack.c.l.b16 %v7854
    %v7872 = vunpack.c.h.b16 %v7854
    %v7873 = vunpack.c.l.b16 %v7855
    %v7874 = vunpack.c.h.b16 %v7855
    %v7875 = vpack.c.b16 %v7863, %v7863
    %v7876 = vpack.c.b16 %v7864, %v7864
    %v7877 = vpack.c.b16 %v7865, %v7865
    %v7878 = vpack.c.b16 %v7866, %v7866
    %v7879 = vpack.c.b16 %v7867, %v7867
    %v7880 = vpack.c.b16 %v7868, %v7868
    %v7881 = vpack.c.b16 %v7869, %v7869
    %v7882 = vpack.c.b16 %v7870, %v7870
    %v7883 = vpack.c.b16 %v7871, %v7871
    %v7884 = vpack.c.b16 %v7872, %v7872
    %v7885 = vpack.c.b16 %v7873, %v7873
    %v7886 = vpack.c.b16 %v7874, %v7874
    %v7888 = vshrl.u32 %v7875, 16
    %v7890 = vrot.slane %v7888, 4
    %v7891 = vshll.u32 %v7875, 16
    %v7893 = vrot.slane %v7891, 5
    %v7894 = vor.u32 %v7890, %v7893
    %v7895 = vrot.slane %v7894, 4
    %v7897 = vshll.u32 %v7876, 16
    %v7899 = vrot.slane %v7897, 5
    %v7900 = vsel %vm5301, %v7895, %v7899
    %v7902 = vshrl.u32 %v7877, 16
    %v7904 = vrot.slane %v7902, 4
    %v7905 = vshll.u32 %v7877, 16
    %v7907 = vrot.slane %v7905, 5
    %v7908 = vor.u32 %v7904, %v7907
    %v7909 = vrot.slane %v7908, 4
    %v7911 = vshll.u32 %v7878, 16
    %v7913 = vrot.slane %v7911, 5
    %v7914 = vsel %vm5301, %v7909, %v7913
    %v7916 = vshrl.u32 %v7879, 16
    %v7918 = vrot.slane %v7916, 4
    %v7919 = vshll.u32 %v7879, 16
    %v7921 = vrot.slane %v7919, 5
    %v7922 = vor.u32 %v7918, %v7921
    %v7923 = vrot.slane %v7922, 4
    %v7925 = vshll.u32 %v7880, 16
    %v7927 = vrot.slane %v7925, 5
    %v7928 = vsel %vm5301, %v7923, %v7927
    %v7930 = vshrl.u32 %v7881, 16
    %v7932 = vrot.slane %v7930, 4
    %v7933 = vshll.u32 %v7881, 16
    %v7935 = vrot.slane %v7933, 5
    %v7936 = vor.u32 %v7932, %v7935
    %v7937 = vrot.slane %v7936, 4
    %v7939 = vshll.u32 %v7882, 16
    %v7941 = vrot.slane %v7939, 5
    %v7942 = vsel %vm5301, %v7937, %v7941
    %v7944 = vshrl.u32 %v7883, 16
    %v7946 = vrot.slane %v7944, 4
    %v7947 = vshll.u32 %v7883, 16
    %v7949 = vrot.slane %v7947, 5
    %v7950 = vor.u32 %v7946, %v7949
    %v7951 = vrot.slane %v7950, 4
    %v7953 = vshll.u32 %v7884, 16
    %v7955 = vrot.slane %v7953, 5
    %v7956 = vsel %vm5301, %v7951, %v7955
    %v7958 = vshrl.u32 %v7885, 16
    %v7960 = vrot.slane %v7958, 4
    %v7961 = vshll.u32 %v7885, 16
    %v7963 = vrot.slane %v7961, 5
    %v7964 = vor.u32 %v7960, %v7963
    %v7965 = vrot.slane %v7964, 4
    %v7967 = vshll.u32 %v7886, 16
    %v7969 = vrot.slane %v7967, 5
    %v7970 = vsel %vm5301, %v7965, %v7969
    %v7971 = vrot.slane %v7875, 5
    %v7972 = vrot.slane %v7971, 4
    %v7973 = vrot.slane %v7876, 5
    %v7974 = vsel %vm5486, %v7972, %v7973
    %v7975 = vrot.slane %v7877, 5
    %v7976 = vrot.slane %v7975, 4
    %v7977 = vrot.slane %v7878, 5
    %v7978 = vsel %vm5486, %v7976, %v7977
    %v7979 = vrot.slane %v7879, 5
    %v7980 = vrot.slane %v7979, 4
    %v7981 = vrot.slane %v7880, 5
    %v7982 = vsel %vm5486, %v7980, %v7981
    %v7983 = vrot.slane %v7881, 5
    %v7984 = vrot.slane %v7983, 4
    %v7985 = vrot.slane %v7882, 5
    %v7986 = vsel %vm5486, %v7984, %v7985
    %v7987 = vrot.slane %v7883, 5
    %v7988 = vrot.slane %v7987, 4
    %v7989 = vrot.slane %v7884, 5
    %v7990 = vsel %vm5486, %v7988, %v7989
    %v7991 = vrot.slane %v7885, 5
    %v7992 = vrot.slane %v7991, 4
    %v7993 = vrot.slane %v7886, 5
    %v7994 = vsel %vm5486, %v7992, %v7993
    %v7997 = vunpack.c.l.b16 %v7852
    %v7998 = vunpack.c.h.b16 %v7852
    %v7999 = vunpack.c.l.b16 %v7856
    %v8000 = vunpack.c.h.b16 %v7856
    %v8001 = vpack.c.b16 %v7997, %v7997
    %v8002 = vpack.c.b16 %v7998, %v7998
    %v8003 = vpack.c.b16 %v7999, %v7999
    %v8004 = vpack.c.b16 %v8000, %v8000
    %v8006 = vshrl.u32 %v8001, 16
    %v8008 = vrot.slane %v8006, 4
    %v8009 = vshll.u32 %v8001, 16
    %v8011 = vrot.slane %v8009, 5
    %v8012 = vor.u32 %v8008, %v8011
    %v8013 = vrot.slane %v8012, 4
    %v8015 = vshll.u32 %v8002, 16
    %v8017 = vrot.slane %v8015, 5
    %v8018 = vsel %vm5301, %v8013, %v8017
    %v8020 = vshrl.u32 %v8003, 16
    %v8022 = vrot.slane %v8020, 4
    %v8023 = vshll.u32 %v8003, 16
    %v8025 = vrot.slane %v8023, 5
    %v8026 = vor.u32 %v8022, %v8025
    %v8027 = vrot.slane %v8026, 4
    %v8029 = vshll.u32 %v8004, 16
    %v8031 = vrot.slane %v8029, 5
    %v8032 = vsel %vm5301, %v8027, %v8031
    %v8033 = vrot.slane %v8001, 5
    %v8034 = vrot.slane %v8033, 4
    %v8035 = vrot.slane %v8002, 5
    %v8036 = vsel %vm5486, %v8034, %v8035
    %v8037 = vrot.slane %v8003, 5
    %v8038 = vrot.slane %v8037, 4
    %v8039 = vrot.slane %v8004, 5
    %v8040 = vsel %vm5486, %v8038, %v8039
    %v8041 = vpack.c.b16 %v7863, %v5247
    %v8042 = vpack.c.b16 %v7867, %v7865
    %v8043 = vpack.c.b16 %v7869, %v5247
    %v8044 = vpack.c.b16 %v7873, %v7871
    %v8045 = vunpack.c.l.b16 %v7900
    %v8046 = vunpack.c.l.b16 %v7914
    %v8047 = vunpack.c.l.b16 %v7928
    %v8048 = vunpack.c.l.b16 %v7942
    %v8049 = vunpack.c.l.b16 %v7956
    %v8050 = vunpack.c.l.b16 %v7970
    %v8051 = vpack.c.b16 %v8045, %v5881
    %v8052 = vpack.c.b16 %v8047, %v8046
    %v8053 = vpack.c.b16 %v8048, %v5881
    %v8054 = vpack.c.b16 %v8050, %v8049
    %8055 = vrot.lane.b32.xlu0 %v8051, 64
    %v8056 = vpop.permute.xlu0 %8055
    %8057 = vrot.lane.b32.xlu0 %v8052, 64
    %v8058 = vpop.permute.xlu0 %8057
    %8059 = vrot.lane.b32.xlu0 %v8053, 64
    %v8060 = vpop.permute.xlu0 %8059
    %8061 = vrot.lane.b32.xlu0 %v8054, 64
    %v8062 = vpop.permute.xlu0 %8061
    %v8065 = vsel %vm5915, %v8041, %v8056
    %v8069 = vsel %vm5915, %v8042, %v8058
    %v8073 = vsel %vm5915, %v8043, %v8060
    %v8077 = vsel %vm5915, %v8044, %v8062
    %v8079 = vunpack.c.l.b16 %v7974
    %v8080 = vunpack.c.l.b16 %v7978
    %v8081 = vunpack.c.l.b16 %v7982
    %v8082 = vunpack.c.l.b16 %v7986
    %v8083 = vunpack.c.l.b16 %v7990
    %v8084 = vunpack.c.l.b16 %v7994
    %v8085 = vpack.c.b16 %v8079, %v5943
    %v8086 = vpack.c.b16 %v8081, %v8080
    %v8087 = vpack.c.b16 %v8082, %v5943
    %v8088 = vpack.c.b16 %v8084, %v8083
    %v8089 = vpack.c.b16 %v7865, %v7863
    %v8090 = vpack.c.b16 %v7997, %v7867
    %v8091 = vpack.c.b16 %v7871, %v7869
    %v8092 = vpack.c.b16 %v7999, %v7873
    %8093 = vrot.lane.b32.xlu0 %v8089, 64
    %v8094 = vpop.permute.xlu0 %8093
    %8095 = vrot.lane.b32.xlu0 %v8090, 64
    %v8096 = vpop.permute.xlu0 %8095
    %8097 = vrot.lane.b32.xlu0 %v8091, 64
    %v8098 = vpop.permute.xlu0 %8097
    %8099 = vrot.lane.b32.xlu0 %v8092, 64
    %v8100 = vpop.permute.xlu0 %8099
    %v8103 = vsel %vm5915, %v8085, %v8094
    %v8107 = vsel %vm5915, %v8086, %v8096
    %v8111 = vsel %vm5915, %v8087, %v8098
    %v8115 = vsel %vm5915, %v8088, %v8100
    %v8117 = vunpack.c.l.b16 %v8018
    %v8118 = vunpack.c.l.b16 %v8032
    %v8119 = vpack.c.b16 %v8046, %v8045
    %v8120 = vpack.c.b16 %v8117, %v8047
    %v8121 = vpack.c.b16 %v8049, %v8048
    %v8122 = vpack.c.b16 %v8118, %v8050
    %v8123 = vunpack.c.l.b16 %v8036
    %v8124 = vunpack.c.l.b16 %v8040
    %v8125 = vpack.c.b16 %v8080, %v8079
    %v8126 = vpack.c.b16 %v8123, %v8081
    %v8127 = vpack.c.b16 %v8083, %v8082
    %v8128 = vpack.c.b16 %v8124, %v8084
    %8129 = vrot.lane.b32.xlu0 %v8125, 64
    %v8130 = vpop.permute.xlu0 %8129
    %8131 = vrot.lane.b32.xlu0 %v8126, 64
    %v8132 = vpop.permute.xlu0 %8131
    %8133 = vrot.lane.b32.xlu0 %v8127, 64
    %v8134 = vpop.permute.xlu0 %8133
    %8135 = vrot.lane.b32.xlu0 %v8128, 64
    %v8136 = vpop.permute.xlu0 %8135
    %v8139 = vsel %vm5915, %v8119, %v8130
    %v8143 = vsel %vm5915, %v8120, %v8132
    %v8147 = vsel %vm5915, %v8121, %v8134
    %v8151 = vsel %vm5915, %v8122, %v8136
    %v8153 = vpack.c.b16 %v5247, %v7997
    %v8154 = vpack.c.b16 %v5247, %v7999
    %v8155 = vpack.c.b16 %v5881, %v8117
    %v8156 = vpack.c.b16 %v5881, %v8118
    %8157 = vrot.lane.b32.xlu0 %v8155, 64
    %v8158 = vpop.permute.xlu0 %8157
    %8159 = vrot.lane.b32.xlu0 %v8156, 64
    %v8160 = vpop.permute.xlu0 %8159
    %v8163 = vsel %vm5915, %v8153, %v8158
    %v8167 = vsel %vm5915, %v8154, %v8160
    %v8169 = vpack.c.b16 %v5943, %v8123
    %v8170 = vpack.c.b16 %v5943, %v8124
    %v8172 = vperm.slane %v7746, 0
    %v8246 = vunpack.c.l.b16 %v7674
    %v8247 = vunpack.c.l.b16 %v7675
    %v8248 = vunpack.c.l.b16 %v7676
    %v8249 = vunpack.c.l.b16 %v7677
    %v8250 = vunpack.c.l.b16 %v7678
    %v8251 = vunpack.c.l.b16 %v7679
    %v8252 = vunpack.c.l.b16 %v7680
    %v8253 = vunpack.c.l.b16 %v7681
    %v8254 = vunpack.c.l.b16 %v7682
    %v8255 = vunpack.c.l.b16 %v7683
    %v8256 = vunpack.c.l.b16 %v7684
    %v8257 = vunpack.c.l.b16 %v7685
    %v8258 = vunpack.c.l.b16 %v7686
    %v8259 = vunpack.c.l.b16 %v7687
    %v8260 = vunpack.c.l.b16 %v7688
    %v8261 = vunpack.c.l.b16 %v7689
    %v8262 = vunpack.c.l.b16 %v7690
    %v8263 = vunpack.c.l.b16 %v7691
    %v8264 = vunpack.c.l.b16 %v7692
    %v8265 = vunpack.c.l.b16 %v7693
    %v8266 = vunpack.c.l.b16 %v7694
    %v8267 = vunpack.c.l.b16 %v7695
    %v8268 = vunpack.c.l.b16 %v7696
    %v8269 = vunpack.c.l.b16 %v7697
    %v8270 = vunpack.c.l.b16 %v7698
    %v8271 = vunpack.c.l.b16 %v7699
    %v8272 = vunpack.c.l.b16 %v7700
    %v8273 = vunpack.c.l.b16 %v7701
    %v8274 = vunpack.c.l.b16 %v7702
    %v8275 = vunpack.c.l.b16 %v7703
    %v8276 = vunpack.c.l.b16 %v7704
    %v8277 = vunpack.c.l.b16 %v7705
    %v8278 = vunpack.c.l.b16 %v7706
    %v8279 = vunpack.c.l.b16 %v7707
    %v8280 = vunpack.c.l.b16 %v7708
    %v8281 = vunpack.c.l.b16 %v7709
    %v8282 = vunpack.c.l.b16 %v7710
    %v8283 = vunpack.c.l.b16 %v7711
    %v8284 = vunpack.c.l.b16 %v7712
    %v8285 = vunpack.c.l.b16 %v7713
    %v8286 = vunpack.c.l.b16 %v7714
    %v8287 = vunpack.c.l.b16 %v7715
    %v8288 = vunpack.c.l.b16 %v7716
    %v8289 = vunpack.c.l.b16 %v7717
    %v8290 = vunpack.c.l.b16 %v7718
    %v8291 = vunpack.c.l.b16 %v7719
    %v8292 = vunpack.c.l.b16 %v7720
    %v8293 = vunpack.c.l.b16 %v7721
    %v8294 = vunpack.c.l.b16 %v7722
    %v8295 = vunpack.c.l.b16 %v7723
    %v8296 = vunpack.c.l.b16 %v7724
    %v8297 = vunpack.c.l.b16 %v7725
    %v8298 = vunpack.c.l.b16 %v7726
    %v8299 = vunpack.c.l.b16 %v7727
    %v8300 = vunpack.c.l.b16 %v7728
    %v8301 = vunpack.c.l.b16 %v7729
    %v8302 = vunpack.c.l.b16 %v7730
    %v8303 = vunpack.c.l.b16 %v7731
    %v8304 = vunpack.c.l.b16 %v7732
    %v8305 = vunpack.c.l.b16 %v7733
    %v8306 = vunpack.c.l.b16 %v7734
    %v8307 = vunpack.c.l.b16 %v7735
    %v8308 = vunpack.c.l.b16 %v7736
    %v8309 = vunpack.c.l.b16 %v7737
    %v8310 = vunpack.c.l.b16 %v7738
    %v8311 = vunpack.c.l.b16 %v7739
    %v8312 = vunpack.c.l.b16 %v7740
    %v8313 = vunpack.c.l.b16 %v7741
    %v8314 = vunpack.c.l.b16 %v7742
    %v8315 = vunpack.c.l.b16 %v7743
    %v8316 = vunpack.c.l.b16 %v7744
    %v8317 = vunpack.c.l.b16 %v7745
    %v8318 = vpack.c.b16 %v8247, %v8246
    %v8319 = vpack.c.b16 %v8249, %v8248
    %v8320 = vpack.c.b16 %v8251, %v8250
    %v8321 = vpack.c.b16 %v8253, %v8252
    %v8322 = vpack.c.b16 %v8255, %v8254
    %v8323 = vpack.c.b16 %v8257, %v8256
    %v8324 = vpack.c.b16 %v8259, %v8258
    %v8325 = vpack.c.b16 %v8261, %v8260
    %v8326 = vpack.c.b16 %v8263, %v8262
    %v8327 = vpack.c.b16 %v8265, %v8264
    %v8328 = vpack.c.b16 %v8267, %v8266
    %v8329 = vpack.c.b16 %v8269, %v8268
    %v8330 = vpack.c.b16 %v8271, %v8270
    %v8331 = vpack.c.b16 %v8273, %v8272
    %v8332 = vpack.c.b16 %v8275, %v8274
    %v8333 = vpack.c.b16 %v8277, %v8276
    %v8334 = vpack.c.b16 %v8279, %v8278
    %v8335 = vpack.c.b16 %v8281, %v8280
    %v8336 = vpack.c.b16 %v8283, %v8282
    %v8337 = vpack.c.b16 %v8285, %v8284
    %v8338 = vpack.c.b16 %v8287, %v8286
    %v8339 = vpack.c.b16 %v8289, %v8288
    %v8340 = vpack.c.b16 %v8291, %v8290
    %v8341 = vpack.c.b16 %v8293, %v8292
    %v8342 = vpack.c.b16 %v8295, %v8294
    %v8343 = vpack.c.b16 %v8297, %v8296
    %v8344 = vpack.c.b16 %v8299, %v8298
    %v8345 = vpack.c.b16 %v8301, %v8300
    %v8346 = vpack.c.b16 %v8303, %v8302
    %v8347 = vpack.c.b16 %v8305, %v8304
    %v8348 = vpack.c.b16 %v8307, %v8306
    %v8349 = vpack.c.b16 %v8309, %v8308
    %v8350 = vpack.c.b16 %v8311, %v8310
    %v8351 = vpack.c.b16 %v8313, %v8312
    %v8352 = vpack.c.b16 %v8315, %v8314
    %v8353 = vpack.c.b16 %v8317, %v8316
    %v8390 = vsel %vm5915, %v8086, 0
    %v8393 = vsel %vm5915, %v8169, 0
    %v8395 = vsel %vm5915, %v8088, 0
    %v8398 = vsel %vm5915, %v8170, 0
    %8400 = vmatpush.bf16.msra.mxu0 %v8325
    %8401 = vmatpush.bf16.msra.mxu0 %v8324
    %8402 = vmatpush.bf16.msra.mxu0 %v8323
    %8403 = vmatpush.bf16.msra.mxu0 %v8322
    %8404 = vmatpush.bf16.msra.mxu0 %v8321
    %8405 = vmatpush.bf16.msra.mxu0 %v8320
    %8406 = vmatpush.bf16.msra.mxu0 %v8319
    %8407 = vmatpush.bf16.msra.mxu0 %v8318
    %8408 = vmatmul.bf16.gmra.mxu0 %v8065
    %v8409 = vpop.f32.mrf.mxu0
    %v8410 = vadd.f32 %v8172, %v8409
    %v8411 = vpop.f32.mrf.mxu0
    %v8412 = vadd.f32 %v8172, %v8411
    %8413 = vmatmul.bf16.gmra.mxu0 %v8069
    %v8414 = vpop.f32.mrf.mxu0
    %v8415 = vadd.f32 %v8172, %v8414
    %v8416 = vpop.f32.mrf.mxu0
    %v8417 = vadd.f32 %v8172, %v8416
    %8418 = vmatmul.bf16.gmra.mxu0 %v8073
    %v8419 = vpop.f32.mrf.mxu0
    %v8420 = vadd.f32 %v8172, %v8419
    %v8421 = vpop.f32.mrf.mxu0
    %v8422 = vadd.f32 %v8172, %v8421
    %8423 = vmatmul.bf16.gmra.mxu0 %v8077
    %v8424 = vpop.f32.mrf.mxu0
    %v8425 = vadd.f32 %v8172, %v8424
    %v8426 = vpop.f32.mrf.mxu0
    %v8427 = vadd.f32 %v8172, %v8426
    %8428 = vdwg.mxu0
    %8429 = vmatpush.bf16.msra.mxu0 %v8333
    %8430 = vmatpush.bf16.msra.mxu0 %v8332
    %8431 = vmatpush.bf16.msra.mxu0 %v8331
    %8432 = vmatpush.bf16.msra.mxu0 %v8330
    %8433 = vmatpush.bf16.msra.mxu0 %v8329
    %8434 = vmatpush.bf16.msra.mxu0 %v8328
    %8435 = vmatpush.bf16.msra.mxu0 %v8327
    %8436 = vmatpush.bf16.msra.mxu0 %v8326
    %8437 = vmatmul.bf16.gmra.mxu0 %v8103
    %v8438 = vpop.f32.mrf.mxu0
    %v8439 = vadd.f32 %v8410, %v8438
    %v8440 = vpop.f32.mrf.mxu0
    %v8441 = vadd.f32 %v8412, %v8440
    %8442 = vmatmul.bf16.gmra.mxu0 %v8107
    %v8443 = vpop.f32.mrf.mxu0
    %v8444 = vadd.f32 %v8415, %v8443
    %v8445 = vpop.f32.mrf.mxu0
    %v8446 = vadd.f32 %v8417, %v8445
    %8447 = vmatmul.bf16.gmra.mxu0 %v8111
    %v8448 = vpop.f32.mrf.mxu0
    %v8449 = vadd.f32 %v8420, %v8448
    %v8450 = vpop.f32.mrf.mxu0
    %v8451 = vadd.f32 %v8422, %v8450
    %8452 = vmatmul.bf16.gmra.mxu0 %v8115
    %v8453 = vpop.f32.mrf.mxu0
    %v8454 = vadd.f32 %v8425, %v8453
    %v8455 = vpop.f32.mrf.mxu0
    %v8456 = vadd.f32 %v8427, %v8455
    %8457 = vdwg.mxu0
    %8458 = vmatpush.bf16.msra.mxu0 %v8341
    %8459 = vmatpush.bf16.msra.mxu0 %v8340
    %8460 = vmatpush.bf16.msra.mxu0 %v8339
    %8461 = vmatpush.bf16.msra.mxu0 %v8338
    %8462 = vmatpush.bf16.msra.mxu0 %v8337
    %8463 = vmatpush.bf16.msra.mxu0 %v8336
    %8464 = vmatpush.bf16.msra.mxu0 %v8335
    %8465 = vmatpush.bf16.msra.mxu0 %v8334
    %8466 = vmatmul.bf16.gmra.mxu0 %v8139
    %v8467 = vpop.f32.mrf.mxu0
    %v8468 = vadd.f32 %v8439, %v8467
    %v8469 = vpop.f32.mrf.mxu0
    %v8470 = vadd.f32 %v8441, %v8469
    %8471 = vmatmul.bf16.gmra.mxu0 %v8143
    %v8472 = vpop.f32.mrf.mxu0
    %v8473 = vadd.f32 %v8444, %v8472
    %v8474 = vpop.f32.mrf.mxu0
    %v8475 = vadd.f32 %v8446, %v8474
    %8476 = vmatmul.bf16.gmra.mxu0 %v8147
    %v8477 = vpop.f32.mrf.mxu0
    %v8478 = vadd.f32 %v8449, %v8477
    %v8479 = vpop.f32.mrf.mxu0
    %v8480 = vadd.f32 %v8451, %v8479
    %8481 = vmatmul.bf16.gmra.mxu0 %v8151
    %v8482 = vpop.f32.mrf.mxu0
    %v8483 = vadd.f32 %v8454, %v8482
    %v8484 = vpop.f32.mrf.mxu0
    %v8485 = vadd.f32 %v8456, %v8484
    %8486 = vdwg.mxu0
    %8487 = vmatpush.bf16.msra.mxu0 %v8349
    %8488 = vmatpush.bf16.msra.mxu0 %v8348
    %8489 = vmatpush.bf16.msra.mxu0 %v8347
    %8490 = vmatpush.bf16.msra.mxu0 %v8346
    %8491 = vmatpush.bf16.msra.mxu0 %v8345
    %8492 = vmatpush.bf16.msra.mxu0 %v8344
    %8493 = vmatpush.bf16.msra.mxu0 %v8343
    %8494 = vmatpush.bf16.msra.mxu0 %v8342
    %8495 = vmatmul.bf16.gmra.mxu0 %v8069
    %v8496 = vpop.f32.mrf.mxu0
    %v8497 = vadd.f32 %v8468, %v8496
    %v8498 = vpop.f32.mrf.mxu0
    %v8499 = vadd.f32 %v8470, %v8498
    %8500 = vmatmul.bf16.gmra.mxu0 %v8163
    %v8501 = vpop.f32.mrf.mxu0
    %v8502 = vadd.f32 %v8473, %v8501
    %v8503 = vpop.f32.mrf.mxu0
    %v8504 = vadd.f32 %v8475, %v8503
    %8505 = vmatmul.bf16.gmra.mxu0 %v8077
    %v8506 = vpop.f32.mrf.mxu0
    %v8507 = vadd.f32 %v8478, %v8506
    %v8508 = vpop.f32.mrf.mxu0
    %v8509 = vadd.f32 %v8480, %v8508
    %8510 = vmatmul.bf16.gmra.mxu0 %v8167
    %v8511 = vpop.f32.mrf.mxu0
    %v8512 = vadd.f32 %v8483, %v8511
    %v8513 = vpop.f32.mrf.mxu0
    %v8514 = vadd.f32 %v8485, %v8513
    %8515 = vdwg.mxu0
    %8516 = vmatpush.bf16.msra.mxu0 0
    %8517 = vmatpush.bf16.msra.mxu0 0
    %8518 = vmatpush.bf16.msra.mxu0 0
    %8519 = vmatpush.bf16.msra.mxu0 0
    %8520 = vmatpush.bf16.msra.mxu0 %v8353
    %8521 = vmatpush.bf16.msra.mxu0 %v8352
    %8522 = vmatpush.bf16.msra.mxu0 %v8351
    %8523 = vmatpush.bf16.msra.mxu0 %v8350
    %8524 = vmatmul.bf16.gmra.mxu0 %v8390
    %v8525 = vpop.f32.mrf.mxu0
    %v8526 = vadd.f32 %v8497, %v8525
    %v8527 = vpop.f32.mrf.mxu0
    %v8528 = vadd.f32 %v8499, %v8527
    %8529 = vmatmul.bf16.gmra.mxu0 %v8393
    %v8530 = vpop.f32.mrf.mxu0
    %v8531 = vadd.f32 %v8502, %v8530
    %v8532 = vpop.f32.mrf.mxu0
    %v8533 = vadd.f32 %v8504, %v8532
    %8534 = vmatmul.bf16.gmra.mxu0 %v8395
    %v8535 = vpop.f32.mrf.mxu0
    %v8536 = vadd.f32 %v8507, %v8535
    %v8537 = vpop.f32.mrf.mxu0
    %v8538 = vadd.f32 %v8509, %v8537
    %8539 = vmatmul.bf16.gmra.mxu0 %v8398
    %v8540 = vpop.f32.mrf.mxu0
    %v8541 = vadd.f32 %v8512, %v8540
    %v8542 = vpop.f32.mrf.mxu0
    %v8543 = vadd.f32 %v8514, %v8542
    %8544 = vdwg.mxu0
    %vm8545 = vcmp.gt.f32.partialorder %v8526, 0.0
    %vm8546 = vcmp.gt.f32.partialorder %v8528, 0.0
    %vm8547 = vcmp.gt.f32.partialorder %v8531, 0.0
    %vm8548 = vcmp.gt.f32.partialorder %v8533, 0.0
    %vm8549 = vcmp.gt.f32.partialorder %v8536, 0.0
    %vm8550 = vcmp.gt.f32.partialorder %v8538, 0.0
    %vm8551 = vcmp.gt.f32.partialorder %v8541, 0.0
    %vm8552 = vcmp.gt.f32.partialorder %v8543, 0.0
    %v8553 = vmul.f32 %v8526, 0.2
    %v8554 = vmul.f32 %v8528, 0.2
    %v8555 = vmul.f32 %v8531, 0.2
    %v8556 = vmul.f32 %v8533, 0.2
    %v8557 = vmul.f32 %v8536, 0.2
    %v8558 = vmul.f32 %v8538, 0.2
    %v8559 = vmul.f32 %v8541, 0.2
    %v8560 = vmul.f32 %v8543, 0.2
    %v8561 = vsel %vm8545, %v8526, %v8553
    %v8562 = vsel %vm8546, %v8528, %v8554
    %v8563 = vsel %vm8547, %v8531, %v8555
    %v8564 = vsel %vm8548, %v8533, %v8556
    %v8565 = vsel %vm8549, %v8536, %v8557
    %v8566 = vsel %vm8550, %v8538, %v8558
    %v8567 = vsel %vm8551, %v8541, %v8559
    %v8568 = vsel %vm8552, %v8543, %v8560
    %v8569 = vpack.c.bf16 %v8561, %v8561
    %v8570 = vpack.c.bf16 %v8562, %v8562
    %v8571 = vpack.c.bf16 %v8563, %v8563
    %v8572 = vpack.c.bf16 %v8564, %v8564
    %v8573 = vpack.c.bf16 %v8565, %v8565
    %v8574 = vpack.c.bf16 %v8566, %v8566
    %v8575 = vpack.c.bf16 %v8567, %v8567
    %v8576 = vpack.c.bf16 %v8568, %v8568
    %v8577 = vunpack.c.l.bf16 %v8569
    %v8578 = vunpack.c.l.bf16 %v8571
    %v8579 = vunpack.c.l.bf16 %v8573
    %v8580 = vunpack.c.l.bf16 %v8575
    %v8581 = vunpack.c.l.bf16 %v8570
    %v8582 = vunpack.c.l.bf16 %v8572
    %v8583 = vunpack.c.l.bf16 %v8574
    %v8584 = vunpack.c.l.bf16 %v8576
    %v8585 = vmax.f32 %v8577, %v8581
    %v8586 = vmax.f32 %v8578, %v8582
    %v8587 = vmax.f32 %v8579, %v8583
    %v8588 = vmax.f32 %v8580, %v8584
    %v8589 = vpack.c.bf16 %v8585, %v8585
    %v8590 = vpack.c.bf16 %v8586, %v8586
    %v8591 = vpack.c.bf16 %v8587, %v8587
    %v8592 = vpack.c.bf16 %v8588, %v8588
    %v8593 = vld [vmem:[%s7] sm:$0xf]
    %v8594 = vld [vmem:[%s7 + $0x4] sm:$0xf]
    %v8595 = vld [vmem:[%s7 + $0x8] sm:$0xf]
    %v8596 = vld [vmem:[%s7 + $0xc] sm:$0xf]
    %v8597 = vld [vmem:[%s7 + $0x10] sm:$0xf]
    %v8598 = vld [vmem:[%s7 + $0x14] sm:$0xf]
    %v8599 = vld [vmem:[%s7 + $0x18] sm:$0xf]
    %v8600 = vld [vmem:[%s7 + $0x1c] sm:$0xf]
    %v8601 = vld [vmem:[%s7 + $0x20] sm:$0xf]
    %v8602 = vld [vmem:[%s7 + $0x24] sm:$0xf]
    %v8603 = vld [vmem:[%s7 + $0x28] sm:$0xf]
    %v8604 = vld [vmem:[%s7 + $0x2c] sm:$0xf]
    %v8605 = vld [vmem:[%s7 + $0x30] sm:$0xf]
    %v8606 = vld [vmem:[%s7 + $0x34] sm:$0xf]
    %v8607 = vld [vmem:[%s7 + $0x38] sm:$0xf]
    %v8608 = vld [vmem:[%s7 + $0x3c] sm:$0xf]
    %v8609 = vld [vmem:[%s7 + $0x40] sm:$0xf]
    %v8610 = vld [vmem:[%s7 + $0x44] sm:$0xf]
    %v8611 = vld [vmem:[%s7 + $0x48] sm:$0xf]
    %v8612 = vld [vmem:[%s7 + $0x4c] sm:$0xf]
    %v8613 = vld [vmem:[%s7 + $0x50] sm:$0xf]
    %v8614 = vld [vmem:[%s7 + $0x54] sm:$0xf]
    %v8615 = vld [vmem:[%s7 + $0x58] sm:$0xf]
    %v8616 = vld [vmem:[%s7 + $0x5c] sm:$0xf]
    %v8617 = vld [vmem:[%s7 + $0x60] sm:$0xf]
    %v8618 = vld [vmem:[%s7 + $0x64] sm:$0xf]
    %v8619 = vld [vmem:[%s7 + $0x68] sm:$0xf]
    %v8620 = vld [vmem:[%s7 + $0x6c] sm:$0xf]
    %v8621 = vld [vmem:[%s7 + $0x70] sm:$0xf]
    %v8622 = vld [vmem:[%s7 + $0x74] sm:$0xf]
    %v8623 = vld [vmem:[%s7 + $0x78] sm:$0xf]
    %v8624 = vld [vmem:[%s7 + $0x7c] sm:$0xf]
    %v8625 = vld [vmem:[%s7 + $0x80] sm:$0xf]
    %v8626 = vld [vmem:[%s7 + $0x84] sm:$0xf]
    %v8627 = vld [vmem:[%s7 + $0x88] sm:$0xf]
    %v8628 = vld [vmem:[%s7 + $0x8c] sm:$0xf]
    %v8629 = vld [vmem:[%s7 + $0x90] sm:$0xf]
    %v8630 = vld [vmem:[%s7 + $0x94] sm:$0xf]
    %v8631 = vld [vmem:[%s7 + $0x98] sm:$0xf]
    %v8632 = vld [vmem:[%s7 + $0x9c] sm:$0xf]
    %v8633 = vld [vmem:[%s7 + $0xa0] sm:$0xf]
    %v8634 = vld [vmem:[%s7 + $0xa4] sm:$0xf]
    %v8635 = vld [vmem:[%s7 + $0xa8] sm:$0xf]
    %v8636 = vld [vmem:[%s7 + $0xac] sm:$0xf]
    %v8637 = vld [vmem:[%s7 + $0xb0] sm:$0xf]
    %v8638 = vld [vmem:[%s7 + $0xb4] sm:$0xf]
    %v8639 = vld [vmem:[%s7 + $0xb8] sm:$0xf]
    %v8640 = vld [vmem:[%s7 + $0xbc] sm:$0xf]
    %v8641 = vld [vmem:[%s7 + $0xc0] sm:$0xf]
    %v8642 = vld [vmem:[%s7 + $0xc4] sm:$0xf]
    %v8643 = vld [vmem:[%s7 + $0xc8] sm:$0xf]
    %v8644 = vld [vmem:[%s7 + $0xcc] sm:$0xf]
    %v8645 = vld [vmem:[%s7 + $0xd0] sm:$0xf]
    %v8646 = vld [vmem:[%s7 + $0xd4] sm:$0xf]
    %v8647 = vld [vmem:[%s7 + $0xd8] sm:$0xf]
    %v8648 = vld [vmem:[%s7 + $0xdc] sm:$0xf]
    %v8649 = vld [vmem:[%s7 + $0xe0] sm:$0xf]
    %v8650 = vld [vmem:[%s7 + $0xe4] sm:$0xf]
    %v8651 = vld [vmem:[%s7 + $0xe8] sm:$0xf]
    %v8652 = vld [vmem:[%s7 + $0xec] sm:$0xf]
    %v8653 = vld [vmem:[%s7 + $0xf0] sm:$0xf]
    %v8654 = vld [vmem:[%s7 + $0xf4] sm:$0xf]
    %v8655 = vld [vmem:[%s7 + $0xf8] sm:$0xf]
    %v8656 = vld [vmem:[%s7 + $0xfc] sm:$0xf]
    %v8657 = vld [vmem:[%s7 + $0x100] sm:$0xf]
    %v8658 = vld [vmem:[%s7 + $0x104] sm:$0xf]
    %v8659 = vld [vmem:[%s7 + $0x108] sm:$0xf]
    %v8660 = vld [vmem:[%s7 + $0x10c] sm:$0xf]
    %v8661 = vld [vmem:[%s7 + $0x110] sm:$0xf]
    %v8662 = vld [vmem:[%s7 + $0x114] sm:$0xf]
    %v8663 = vld [vmem:[%s7 + $0x118] sm:$0xf]
    %v8664 = vld [vmem:[%s7 + $0x11c] sm:$0xf]
    %v8665 = vld [vmem:[%s7 + $0x120] sm:$0xf]
    %v8666 = vld [vmem:[%s7 + $0x124] sm:$0xf]
    %v8667 = vld [vmem:[%s7 + $0x128] sm:$0xf]
    %v8668 = vld [vmem:[%s7 + $0x12c] sm:$0xf]
    %v8669 = vld [vmem:[%s7 + $0x130] sm:$0xf]
    %v8670 = vld [vmem:[%s7 + $0x134] sm:$0xf]
    %v8671 = vld [vmem:[%s7 + $0x138] sm:$0xf]
    %v8672 = vld [vmem:[%s7 + $0x13c] sm:$0xf]
    %v8673 = vld [vmem:[%s7 + $0x140] sm:$0xf]
    %v8674 = vld [vmem:[%s7 + $0x144] sm:$0xf]
    %v8675 = vld [vmem:[%s7 + $0x148] sm:$0xf]
    %v8676 = vld [vmem:[%s7 + $0x14c] sm:$0xf]
    %v8677 = vld [vmem:[%s7 + $0x150] sm:$0xf]
    %v8678 = vld [vmem:[%s7 + $0x154] sm:$0xf]
    %v8679 = vld [vmem:[%s7 + $0x158] sm:$0xf]
    %v8680 = vld [vmem:[%s7 + $0x15c] sm:$0xf]
    %v8681 = vld [vmem:[%s7 + $0x160] sm:$0xf]
    %v8682 = vld [vmem:[%s7 + $0x164] sm:$0xf]
    %v8683 = vld [vmem:[%s7 + $0x168] sm:$0xf]
    %v8684 = vld [vmem:[%s7 + $0x16c] sm:$0xf]
    %v8685 = vld [vmem:[%s7 + $0x170] sm:$0xf]
    %v8686 = vld [vmem:[%s7 + $0x174] sm:$0xf]
    %v8687 = vld [vmem:[%s7 + $0x178] sm:$0xf]
    %v8688 = vld [vmem:[%s7 + $0x17c] sm:$0xf]
    %v8689 = vld [vmem:[%s7 + $0x180] sm:$0xf]
    %v8690 = vld [vmem:[%s7 + $0x184] sm:$0xf]
    %v8691 = vld [vmem:[%s7 + $0x188] sm:$0xf]
    %v8692 = vld [vmem:[%s7 + $0x18c] sm:$0xf]
    %v8693 = vld [vmem:[%s7 + $0x190] sm:$0xf]
    %v8694 = vld [vmem:[%s7 + $0x194] sm:$0xf]
    %v8695 = vld [vmem:[%s7 + $0x198] sm:$0xf]
    %v8696 = vld [vmem:[%s7 + $0x19c] sm:$0xf]
    %v8697 = vld [vmem:[%s7 + $0x1a0] sm:$0xf]
    %v8698 = vld [vmem:[%s7 + $0x1a4] sm:$0xf]
    %v8699 = vld [vmem:[%s7 + $0x1a8] sm:$0xf]
    %v8700 = vld [vmem:[%s7 + $0x1ac] sm:$0xf]
    %v8701 = vld [vmem:[%s7 + $0x1b0] sm:$0xf]
    %v8702 = vld [vmem:[%s7 + $0x1b4] sm:$0xf]
    %v8703 = vld [vmem:[%s7 + $0x1b8] sm:$0xf]
    %v8704 = vld [vmem:[%s7 + $0x1bc] sm:$0xf]
    %v8705 = vld [vmem:[%s7 + $0x1c0] sm:$0xf]
    %v8706 = vld [vmem:[%s7 + $0x1c4] sm:$0xf]
    %v8707 = vld [vmem:[%s7 + $0x1c8] sm:$0xf]
    %v8708 = vld [vmem:[%s7 + $0x1cc] sm:$0xf]
    %v8709 = vld [vmem:[%s7 + $0x1d0] sm:$0xf]
    %v8710 = vld [vmem:[%s7 + $0x1d4] sm:$0xf]
    %v8711 = vld [vmem:[%s7 + $0x1d8] sm:$0xf]
    %v8712 = vld [vmem:[%s7 + $0x1dc] sm:$0xf]
    %v8713 = vld [vmem:[%s7 + $0x1e0] sm:$0xf]
    %v8714 = vld [vmem:[%s7 + $0x1e4] sm:$0xf]
    %v8715 = vld [vmem:[%s7 + $0x1e8] sm:$0xf]
    %v8716 = vld [vmem:[%s7 + $0x1ec] sm:$0xf]
    %v8717 = vld [vmem:[%s7 + $0x1f0] sm:$0xf]
    %v8718 = vld [vmem:[%s7 + $0x1f4] sm:$0xf]
    %v8719 = vld [vmem:[%s7 + $0x1f8] sm:$0xf]
    %v8720 = vld [vmem:[%s7 + $0x1fc] sm:$0xf]
    %v8721 = vld [vmem:[%s7 + $0x200] sm:$0xf]
    %v8722 = vld [vmem:[%s7 + $0x204] sm:$0xf]
    %v8723 = vld [vmem:[%s7 + $0x208] sm:$0xf]
    %v8724 = vld [vmem:[%s7 + $0x20c] sm:$0xf]
    %v8725 = vld [vmem:[%s7 + $0x210] sm:$0xf]
    %v8726 = vld [vmem:[%s7 + $0x214] sm:$0xf]
    %v8727 = vld [vmem:[%s7 + $0x218] sm:$0xf]
    %v8728 = vld [vmem:[%s7 + $0x21c] sm:$0xf]
    %v8729 = vld [vmem:[%s7 + $0x220] sm:$0xf]
    %v8730 = vld [vmem:[%s7 + $0x224] sm:$0xf]
    %v8731 = vld [vmem:[%s7 + $0x228] sm:$0xf]
    %v8732 = vld [vmem:[%s7 + $0x22c] sm:$0xf]
    %v8733 = vld [vmem:[%s7 + $0x230] sm:$0xf]
    %v8734 = vld [vmem:[%s7 + $0x234] sm:$0xf]
    %v8735 = vld [vmem:[%s7 + $0x238] sm:$0xf]
    %v8736 = vld [vmem:[%s7 + $0x23c] sm:$0xf]
    %v8737 = vld [vmem:[%s8] sm:$0x1]
    %v8742 = vunpack.c.l.b16 %v8589
    %v8743 = vunpack.c.l.b16 %v8590
    %v8744 = vunpack.c.l.b16 %v8591
    %v8745 = vunpack.c.l.b16 %v8592
    %v8746 = vpack.c.b16 %v8742, %v8742
    %v8747 = vpack.c.b16 %v8743, %v8743
    %v8748 = vpack.c.b16 %v8744, %v8744
    %v8749 = vpack.c.b16 %v8745, %v8745
    %v8751 = vshrl.u32 %v8746, 16
    %v8753 = vrot.slane %v8751, 7
    %v8754 = vshll.u32 %v8746, 16
    %v8756 = vor.u32 %v8753, %v8754
    %v8758 = vshrl.u32 %v8747, 16
    %v8760 = vrot.slane %v8758, 7
    %v8761 = vshll.u32 %v8747, 16
    %v8763 = vor.u32 %v8760, %v8761
    %v8765 = vshrl.u32 %v8748, 16
    %v8767 = vrot.slane %v8765, 7
    %v8768 = vshll.u32 %v8748, 16
    %v8770 = vor.u32 %v8767, %v8768
    %v8772 = vshrl.u32 %v8749, 16
    %v8774 = vrot.slane %v8772, 7
    %v8775 = vshll.u32 %v8749, 16
    %v8777 = vor.u32 %v8774, %v8775
    %v8782 = vsel %vm7837, 0, %v8756
    %v8783 = vsel %vm7837, 0, %v8763
    %v8784 = vsel %vm7837, 0, %v8770
    %v8785 = vsel %vm7837, 0, %v8777
    %v8786 = vsel %vm7848, %v8782, 0
    %v8787 = vsel %vm7848, %v8783, 0
    %v8788 = vsel %vm7848, %v8784, 0
    %v8789 = vsel %vm7848, %v8785, 0
    %v8792 = vunpack.c.l.b16 %v8786
    %v8793 = vunpack.c.h.b16 %v8786
    %v8794 = vunpack.c.l.b16 %v8788
    %v8795 = vunpack.c.h.b16 %v8788
    %v8796 = vpack.c.b16 %v8792, %v8792
    %v8797 = vpack.c.b16 %v8793, %v8793
    %v8798 = vpack.c.b16 %v8794, %v8794
    %v8799 = vpack.c.b16 %v8795, %v8795
    %v8801 = vshrl.u32 %v8796, 16
    %v8803 = vrot.slane %v8801, 4
    %v8804 = vshll.u32 %v8796, 16
    %v8806 = vrot.slane %v8804, 5
    %v8807 = vor.u32 %v8803, %v8806
    %v8808 = vrot.slane %v8807, 4
    %v8810 = vshll.u32 %v8797, 16
    %v8812 = vrot.slane %v8810, 5
    %v8813 = vsel %vm5301, %v8808, %v8812
    %v8815 = vshrl.u32 %v8798, 16
    %v8817 = vrot.slane %v8815, 4
    %v8818 = vshll.u32 %v8798, 16
    %v8820 = vrot.slane %v8818, 5
    %v8821 = vor.u32 %v8817, %v8820
    %v8822 = vrot.slane %v8821, 4
    %v8824 = vshll.u32 %v8799, 16
    %v8826 = vrot.slane %v8824, 5
    %v8827 = vsel %vm5301, %v8822, %v8826
    %v8828 = vrot.slane %v8796, 5
    %v8829 = vrot.slane %v8828, 4
    %v8830 = vrot.slane %v8797, 5
    %v8831 = vsel %vm5486, %v8829, %v8830
    %v8832 = vrot.slane %v8798, 5
    %v8833 = vrot.slane %v8832, 4
    %v8834 = vrot.slane %v8799, 5
    %v8835 = vsel %vm5486, %v8833, %v8834
    %v8838 = vunpack.c.l.b16 %v8787
    %v8839 = vunpack.c.h.b16 %v8787
    %v8840 = vunpack.c.l.b16 %v8789
    %v8841 = vunpack.c.h.b16 %v8789
    %v8842 = vpack.c.b16 %v8838, %v8838
    %v8843 = vpack.c.b16 %v8839, %v8839
    %v8844 = vpack.c.b16 %v8840, %v8840
    %v8845 = vpack.c.b16 %v8841, %v8841
    %v8847 = vshrl.u32 %v8842, 16
    %v8849 = vrot.slane %v8847, 4
    %v8850 = vshll.u32 %v8842, 16
    %v8852 = vrot.slane %v8850, 5
    %v8853 = vor.u32 %v8849, %v8852
    %v8854 = vrot.slane %v8853, 4
    %v8856 = vshll.u32 %v8843, 16
    %v8858 = vrot.slane %v8856, 5
    %v8859 = vsel %vm5301, %v8854, %v8858
    %v8861 = vshrl.u32 %v8844, 16
    %v8863 = vrot.slane %v8861, 4
    %v8864 = vshll.u32 %v8844, 16
    %v8866 = vrot.slane %v8864, 5
    %v8867 = vor.u32 %v8863, %v8866
    %v8868 = vrot.slane %v8867, 4
    %v8870 = vshll.u32 %v8845, 16
    %v8872 = vrot.slane %v8870, 5
    %v8873 = vsel %vm5301, %v8868, %v8872
    %v8874 = vrot.slane %v8842, 5
    %v8875 = vrot.slane %v8874, 4
    %v8876 = vrot.slane %v8843, 5
    %v8877 = vsel %vm5486, %v8875, %v8876
    %v8878 = vrot.slane %v8844, 5
    %v8879 = vrot.slane %v8878, 4
    %v8880 = vrot.slane %v8845, 5
    %v8881 = vsel %vm5486, %v8879, %v8880
    %v8882 = vpack.c.b16 %v8792, %v5247
    %v8883 = vpack.c.b16 %v8794, %v5247
    %v8886 = vunpack.c.l.b16 %v8813
    %v8887 = vunpack.c.l.b16 %v8827
    %v8888 = vpack.c.b16 %v8886, %v5881
    %v8889 = vpack.c.b16 %v8887, %v5881
    %v8892 = vunpack.c.l.b16 %v8831
    %v8893 = vunpack.c.l.b16 %v8835
    %v8894 = vpack.c.b16 %v8892, %v5943
    %v8895 = vpack.c.b16 %v8893, %v5943
    %v8898 = vpack.c.b16 %v8838, %v8792
    %v8899 = vpack.c.b16 %v8840, %v8794
    %v8902 = vunpack.c.l.b16 %v8859
    %v8903 = vunpack.c.l.b16 %v8873
    %v8904 = vpack.c.b16 %v8902, %v8886
    %v8905 = vpack.c.b16 %v8903, %v8887
    %v8908 = vunpack.c.l.b16 %v8877
    %v8909 = vunpack.c.l.b16 %v8881
    %v8910 = vpack.c.b16 %v8908, %v8892
    %v8911 = vpack.c.b16 %v8909, %v8893
    %v8914 = vpack.c.b16 %v5247, %v8838
    %v8915 = vpack.c.b16 %v5247, %v8840
    %v8918 = vpack.c.b16 %v5881, %v8902
    %v8919 = vpack.c.b16 %v5881, %v8903
    %v8922 = vpack.c.b16 %v5943, %v8908
    %v8923 = vpack.c.b16 %v5943, %v8909
    %v8927 = vperm.slane %v8737, 0
    %v9073 = vunpack.c.l.b16 %v8593
    %v9074 = vunpack.c.l.b16 %v8594
    %v9075 = vunpack.c.l.b16 %v8595
    %v9076 = vunpack.c.l.b16 %v8596
    %v9077 = vunpack.c.l.b16 %v8597
    %v9078 = vunpack.c.l.b16 %v8598
    %v9079 = vunpack.c.l.b16 %v8599
    %v9080 = vunpack.c.l.b16 %v8600
    %v9081 = vunpack.c.l.b16 %v8601
    %v9082 = vunpack.c.l.b16 %v8602
    %v9083 = vunpack.c.l.b16 %v8603
    %v9084 = vunpack.c.l.b16 %v8604
    %v9085 = vunpack.c.l.b16 %v8605
    %v9086 = vunpack.c.l.b16 %v8606
    %v9087 = vunpack.c.l.b16 %v8607
    %v9088 = vunpack.c.l.b16 %v8608
    %v9089 = vunpack.c.l.b16 %v8609
    %v9090 = vunpack.c.l.b16 %v8610
    %v9091 = vunpack.c.l.b16 %v8611
    %v9092 = vunpack.c.l.b16 %v8612
    %v9093 = vunpack.c.l.b16 %v8613
    %v9094 = vunpack.c.l.b16 %v8614
    %v9095 = vunpack.c.l.b16 %v8615
    %v9096 = vunpack.c.l.b16 %v8616
    %v9097 = vunpack.c.l.b16 %v8617
    %v9098 = vunpack.c.l.b16 %v8618
    %v9099 = vunpack.c.l.b16 %v8619
    %v9100 = vunpack.c.l.b16 %v8620
    %v9101 = vunpack.c.l.b16 %v8621
    %v9102 = vunpack.c.l.b16 %v8622
    %v9103 = vunpack.c.l.b16 %v8623
    %v9104 = vunpack.c.l.b16 %v8624
    %v9105 = vunpack.c.l.b16 %v8625
    %v9106 = vunpack.c.l.b16 %v8626
    %v9107 = vunpack.c.l.b16 %v8627
    %v9108 = vunpack.c.l.b16 %v8628
    %v9109 = vunpack.c.l.b16 %v8629
    %v9110 = vunpack.c.l.b16 %v8630
    %v9111 = vunpack.c.l.b16 %v8631
    %v9112 = vunpack.c.l.b16 %v8632
    %v9113 = vunpack.c.l.b16 %v8633
    %v9114 = vunpack.c.l.b16 %v8634
    %v9115 = vunpack.c.l.b16 %v8635
    %v9116 = vunpack.c.l.b16 %v8636
    %v9117 = vunpack.c.l.b16 %v8637
    %v9118 = vunpack.c.l.b16 %v8638
    %v9119 = vunpack.c.l.b16 %v8639
    %v9120 = vunpack.c.l.b16 %v8640
    %v9121 = vunpack.c.l.b16 %v8641
    %v9122 = vunpack.c.l.b16 %v8642
    %v9123 = vunpack.c.l.b16 %v8643
    %v9124 = vunpack.c.l.b16 %v8644
    %v9125 = vunpack.c.l.b16 %v8645
    %v9126 = vunpack.c.l.b16 %v8646
    %v9127 = vunpack.c.l.b16 %v8647
    %v9128 = vunpack.c.l.b16 %v8648
    %v9129 = vunpack.c.l.b16 %v8649
    %v9130 = vunpack.c.l.b16 %v8650
    %v9131 = vunpack.c.l.b16 %v8651
    %v9132 = vunpack.c.l.b16 %v8652
    %v9133 = vunpack.c.l.b16 %v8653
    %v9134 = vunpack.c.l.b16 %v8654
    %v9135 = vunpack.c.l.b16 %v8655
    %v9136 = vunpack.c.l.b16 %v8656
    %v9137 = vunpack.c.l.b16 %v8657
    %v9138 = vunpack.c.l.b16 %v8658
    %v9139 = vunpack.c.l.b16 %v8659
    %v9140 = vunpack.c.l.b16 %v8660
    %v9141 = vunpack.c.l.b16 %v8661
    %v9142 = vunpack.c.l.b16 %v8662
    %v9143 = vunpack.c.l.b16 %v8663
    %v9144 = vunpack.c.l.b16 %v8664
    %v9145 = vunpack.c.l.b16 %v8665
    %v9146 = vunpack.c.l.b16 %v8666
    %v9147 = vunpack.c.l.b16 %v8667
    %v9148 = vunpack.c.l.b16 %v8668
    %v9149 = vunpack.c.l.b16 %v8669
    %v9150 = vunpack.c.l.b16 %v8670
    %v9151 = vunpack.c.l.b16 %v8671
    %v9152 = vunpack.c.l.b16 %v8672
    %v9153 = vunpack.c.l.b16 %v8673
    %v9154 = vunpack.c.l.b16 %v8674
    %v9155 = vunpack.c.l.b16 %v8675
    %v9156 = vunpack.c.l.b16 %v8676
    %v9157 = vunpack.c.l.b16 %v8677
    %v9158 = vunpack.c.l.b16 %v8678
    %v9159 = vunpack.c.l.b16 %v8679
    %v9160 = vunpack.c.l.b16 %v8680
    %v9161 = vunpack.c.l.b16 %v8681
    %v9162 = vunpack.c.l.b16 %v8682
    %v9163 = vunpack.c.l.b16 %v8683
    %v9164 = vunpack.c.l.b16 %v8684
    %v9165 = vunpack.c.l.b16 %v8685
    %v9166 = vunpack.c.l.b16 %v8686
    %v9167 = vunpack.c.l.b16 %v8687
    %v9168 = vunpack.c.l.b16 %v8688
    %v9169 = vunpack.c.l.b16 %v8689
    %v9170 = vunpack.c.l.b16 %v8690
    %v9171 = vunpack.c.l.b16 %v8691
    %v9172 = vunpack.c.l.b16 %v8692
    %v9173 = vunpack.c.l.b16 %v8693
    %v9174 = vunpack.c.l.b16 %v8694
    %v9175 = vunpack.c.l.b16 %v8695
    %v9176 = vunpack.c.l.b16 %v8696
    %v9177 = vunpack.c.l.b16 %v8697
    %v9178 = vunpack.c.l.b16 %v8698
    %v9179 = vunpack.c.l.b16 %v8699
    %v9180 = vunpack.c.l.b16 %v8700
    %v9181 = vunpack.c.l.b16 %v8701
    %v9182 = vunpack.c.l.b16 %v8702
    %v9183 = vunpack.c.l.b16 %v8703
    %v9184 = vunpack.c.l.b16 %v8704
    %v9185 = vunpack.c.l.b16 %v8705
    %v9186 = vunpack.c.l.b16 %v8706
    %v9187 = vunpack.c.l.b16 %v8707
    %v9188 = vunpack.c.l.b16 %v8708
    %v9189 = vunpack.c.l.b16 %v8709
    %v9190 = vunpack.c.l.b16 %v8710
    %v9191 = vunpack.c.l.b16 %v8711
    %v9192 = vunpack.c.l.b16 %v8712
    %v9193 = vunpack.c.l.b16 %v8713
    %v9194 = vunpack.c.l.b16 %v8714
    %v9195 = vunpack.c.l.b16 %v8715
    %v9196 = vunpack.c.l.b16 %v8716
    %v9197 = vunpack.c.l.b16 %v8717
    %v9198 = vunpack.c.l.b16 %v8718
    %v9199 = vunpack.c.l.b16 %v8719
    %v9200 = vunpack.c.l.b16 %v8720
    %v9201 = vunpack.c.l.b16 %v8721
    %v9202 = vunpack.c.l.b16 %v8722
    %v9203 = vunpack.c.l.b16 %v8723
    %v9204 = vunpack.c.l.b16 %v8724
    %v9205 = vunpack.c.l.b16 %v8725
    %v9206 = vunpack.c.l.b16 %v8726
    %v9207 = vunpack.c.l.b16 %v8727
    %v9208 = vunpack.c.l.b16 %v8728
    %v9209 = vunpack.c.l.b16 %v8729
    %v9210 = vunpack.c.l.b16 %v8730
    %v9211 = vunpack.c.l.b16 %v8731
    %v9212 = vunpack.c.l.b16 %v8732
    %v9213 = vunpack.c.l.b16 %v8733
    %v9214 = vunpack.c.l.b16 %v8734
    %v9215 = vunpack.c.l.b16 %v8735
    %v9216 = vunpack.c.l.b16 %v8736
    %v9217 = vpack.c.b16 %v9074, %v9073
    %v9218 = vpack.c.b16 %v9076, %v9075
    %v9219 = vpack.c.b16 %v9078, %v9077
    %v9220 = vpack.c.b16 %v9080, %v9079
    %v9221 = vpack.c.b16 %v9082, %v9081
    %v9222 = vpack.c.b16 %v9084, %v9083
    %v9223 = vpack.c.b16 %v9086, %v9085
    %v9224 = vpack.c.b16 %v9088, %v9087
    %v9225 = vpack.c.b16 %v9090, %v9089
    %v9226 = vpack.c.b16 %v9092, %v9091
    %v9227 = vpack.c.b16 %v9094, %v9093
    %v9228 = vpack.c.b16 %v9096, %v9095
    %v9229 = vpack.c.b16 %v9098, %v9097
    %v9230 = vpack.c.b16 %v9100, %v9099
    %v9231 = vpack.c.b16 %v9102, %v9101
    %v9232 = vpack.c.b16 %v9104, %v9103
    %v9233 = vpack.c.b16 %v9106, %v9105
    %v9234 = vpack.c.b16 %v9108, %v9107
    %v9235 = vpack.c.b16 %v9110, %v9109
    %v9236 = vpack.c.b16 %v9112, %v9111
    %v9237 = vpack.c.b16 %v9114, %v9113
    %v9238 = vpack.c.b16 %v9116, %v9115
    %v9239 = vpack.c.b16 %v9118, %v9117
    %v9240 = vpack.c.b16 %v9120, %v9119
    %v9241 = vpack.c.b16 %v9122, %v9121
    %v9242 = vpack.c.b16 %v9124, %v9123
    %v9243 = vpack.c.b16 %v9126, %v9125
    %v9244 = vpack.c.b16 %v9128, %v9127
    %v9245 = vpack.c.b16 %v9130, %v9129
    %v9246 = vpack.c.b16 %v9132, %v9131
    %v9247 = vpack.c.b16 %v9134, %v9133
    %v9248 = vpack.c.b16 %v9136, %v9135
    %v9249 = vpack.c.b16 %v9138, %v9137
    %v9250 = vpack.c.b16 %v9140, %v9139
    %v9251 = vpack.c.b16 %v9142, %v9141
    %v9252 = vpack.c.b16 %v9144, %v9143
    %v9253 = vpack.c.b16 %v9146, %v9145
    %v9254 = vpack.c.b16 %v9148, %v9147
    %v9255 = vpack.c.b16 %v9150, %v9149
    %v9256 = vpack.c.b16 %v9152, %v9151
    %v9257 = vpack.c.b16 %v9154, %v9153
    %v9258 = vpack.c.b16 %v9156, %v9155
    %v9259 = vpack.c.b16 %v9158, %v9157
    %v9260 = vpack.c.b16 %v9160, %v9159
    %v9261 = vpack.c.b16 %v9162, %v9161
    %v9262 = vpack.c.b16 %v9164, %v9163
    %v9263 = vpack.c.b16 %v9166, %v9165
    %v9264 = vpack.c.b16 %v9168, %v9167
    %v9265 = vpack.c.b16 %v9170, %v9169
    %v9266 = vpack.c.b16 %v9172, %v9171
    %v9267 = vpack.c.b16 %v9174, %v9173
    %v9268 = vpack.c.b16 %v9176, %v9175
    %v9269 = vpack.c.b16 %v9178, %v9177
    %v9270 = vpack.c.b16 %v9180, %v9179
    %v9271 = vpack.c.b16 %v9182, %v9181
    %v9272 = vpack.c.b16 %v9184, %v9183
    %v9273 = vpack.c.b16 %v9186, %v9185
    %v9274 = vpack.c.b16 %v9188, %v9187
    %v9275 = vpack.c.b16 %v9190, %v9189
    %v9276 = vpack.c.b16 %v9192, %v9191
    %v9277 = vpack.c.b16 %v9194, %v9193
    %v9278 = vpack.c.b16 %v9196, %v9195
    %v9279 = vpack.c.b16 %v9198, %v9197
    %v9280 = vpack.c.b16 %v9200, %v9199
    %v9281 = vpack.c.b16 %v9202, %v9201
    %v9282 = vpack.c.b16 %v9204, %v9203
    %v9283 = vpack.c.b16 %v9206, %v9205
    %v9284 = vpack.c.b16 %v9208, %v9207
    %v9285 = vpack.c.b16 %v9210, %v9209
    %v9286 = vpack.c.b16 %v9212, %v9211
    %v9287 = vpack.c.b16 %v9214, %v9213
    %v9288 = vpack.c.b16 %v9216, %v9215
    %9361 = vmatpush.bf16.msra.mxu0 %v9224
    %9362 = vmatpush.bf16.msra.mxu0 %v9223
    %9363 = vmatpush.bf16.msra.mxu0 %v9222
    %9364 = vmatpush.bf16.msra.mxu0 %v9221
    %9365 = vmatpush.bf16.msra.mxu0 %v9220
    %9366 = vmatpush.bf16.msra.mxu0 %v9219
    %9367 = vmatpush.bf16.msra.mxu0 %v9218
    %9368 = vmatpush.bf16.msra.mxu0 %v9217
    %9369 = vmatmul.bf16.gmra.mxu0 %v8882
    %v9370 = vpop.f32.mrf.mxu0
    %v9371 = vadd.f32 %v8927, %v9370
    %v9372 = vpop.f32.mrf.mxu0
    %v9373 = vadd.f32 %v8927, %v9372
    %9374 = vmatmul.bf16.gmra.mxu0 %v8883
    %v9375 = vpop.f32.mrf.mxu0
    %v9376 = vadd.f32 %v8927, %v9375
    %v9377 = vpop.f32.mrf.mxu0
    %v9378 = vadd.f32 %v8927, %v9377
    %9379 = vdwg.mxu0
    %9380 = vmatpush.bf16.msra.mxu0 %v9232
    %9381 = vmatpush.bf16.msra.mxu0 %v9231
    %9382 = vmatpush.bf16.msra.mxu0 %v9230
    %9383 = vmatpush.bf16.msra.mxu0 %v9229
    %9384 = vmatpush.bf16.msra.mxu0 %v9228
    %9385 = vmatpush.bf16.msra.mxu0 %v9227
    %9386 = vmatpush.bf16.msra.mxu0 %v9226
    %9387 = vmatpush.bf16.msra.mxu0 %v9225
    %9388 = vmatmul.bf16.gmra.mxu0 %v8888
    %v9389 = vpop.f32.mrf.mxu0
    %v9390 = vadd.f32 %v9371, %v9389
    %v9391 = vpop.f32.mrf.mxu0
    %v9392 = vadd.f32 %v9373, %v9391
    %9393 = vmatmul.bf16.gmra.mxu0 %v8889
    %v9394 = vpop.f32.mrf.mxu0
    %v9395 = vadd.f32 %v9376, %v9394
    %v9396 = vpop.f32.mrf.mxu0
    %v9397 = vadd.f32 %v9378, %v9396
    %9398 = vdwg.mxu0
    %9399 = vmatpush.bf16.msra.mxu0 %v9240
    %9400 = vmatpush.bf16.msra.mxu0 %v9239
    %9401 = vmatpush.bf16.msra.mxu0 %v9238
    %9402 = vmatpush.bf16.msra.mxu0 %v9237
    %9403 = vmatpush.bf16.msra.mxu0 %v9236
    %9404 = vmatpush.bf16.msra.mxu0 %v9235
    %9405 = vmatpush.bf16.msra.mxu0 %v9234
    %9406 = vmatpush.bf16.msra.mxu0 %v9233
    %9407 = vmatmul.bf16.gmra.mxu0 %v8894
    %v9408 = vpop.f32.mrf.mxu0
    %v9409 = vadd.f32 %v9390, %v9408
    %v9410 = vpop.f32.mrf.mxu0
    %v9411 = vadd.f32 %v9392, %v9410
    %9412 = vmatmul.bf16.gmra.mxu0 %v8895
    %v9413 = vpop.f32.mrf.mxu0
    %v9414 = vadd.f32 %v9395, %v9413
    %v9415 = vpop.f32.mrf.mxu0
    %v9416 = vadd.f32 %v9397, %v9415
    %9417 = vdwg.mxu0
    %9418 = vmatpush.bf16.msra.mxu0 %v9248
    %9419 = vmatpush.bf16.msra.mxu0 %v9247
    %9420 = vmatpush.bf16.msra.mxu0 %v9246
    %9421 = vmatpush.bf16.msra.mxu0 %v9245
    %9422 = vmatpush.bf16.msra.mxu0 %v9244
    %9423 = vmatpush.bf16.msra.mxu0 %v9243
    %9424 = vmatpush.bf16.msra.mxu0 %v9242
    %9425 = vmatpush.bf16.msra.mxu0 %v9241
    %9426 = vmatmul.bf16.gmra.mxu0 %v8898
    %v9427 = vpop.f32.mrf.mxu0
    %v9428 = vadd.f32 %v9409, %v9427
    %v9429 = vpop.f32.mrf.mxu0
    %v9430 = vadd.f32 %v9411, %v9429
    %9431 = vmatmul.bf16.gmra.mxu0 %v8899
    %v9432 = vpop.f32.mrf.mxu0
    %v9433 = vadd.f32 %v9414, %v9432
    %v9434 = vpop.f32.mrf.mxu0
    %v9435 = vadd.f32 %v9416, %v9434
    %9436 = vdwg.mxu0
    %9437 = vmatpush.bf16.msra.mxu0 %v9256
    %9438 = vmatpush.bf16.msra.mxu0 %v9255
    %9439 = vmatpush.bf16.msra.mxu0 %v9254
    %9440 = vmatpush.bf16.msra.mxu0 %v9253
    %9441 = vmatpush.bf16.msra.mxu0 %v9252
    %9442 = vmatpush.bf16.msra.mxu0 %v9251
    %9443 = vmatpush.bf16.msra.mxu0 %v9250
    %9444 = vmatpush.bf16.msra.mxu0 %v9249
    %9445 = vmatmul.bf16.gmra.mxu0 %v8904
    %v9446 = vpop.f32.mrf.mxu0
    %v9447 = vadd.f32 %v9428, %v9446
    %v9448 = vpop.f32.mrf.mxu0
    %v9449 = vadd.f32 %v9430, %v9448
    %9450 = vmatmul.bf16.gmra.mxu0 %v8905
    %v9451 = vpop.f32.mrf.mxu0
    %v9452 = vadd.f32 %v9433, %v9451
    %v9453 = vpop.f32.mrf.mxu0
    %v9454 = vadd.f32 %v9435, %v9453
    %9455 = vdwg.mxu0
    %9456 = vmatpush.bf16.msra.mxu0 %v9264
    %9457 = vmatpush.bf16.msra.mxu0 %v9263
    %9458 = vmatpush.bf16.msra.mxu0 %v9262
    %9459 = vmatpush.bf16.msra.mxu0 %v9261
    %9460 = vmatpush.bf16.msra.mxu0 %v9260
    %9461 = vmatpush.bf16.msra.mxu0 %v9259
    %9462 = vmatpush.bf16.msra.mxu0 %v9258
    %9463 = vmatpush.bf16.msra.mxu0 %v9257
    %9464 = vmatmul.bf16.gmra.mxu0 %v8910
    %v9465 = vpop.f32.mrf.mxu0
    %v9466 = vadd.f32 %v9447, %v9465
    %v9467 = vpop.f32.mrf.mxu0
    %v9468 = vadd.f32 %v9449, %v9467
    %9469 = vmatmul.bf16.gmra.mxu0 %v8911
    %v9470 = vpop.f32.mrf.mxu0
    %v9471 = vadd.f32 %v9452, %v9470
    %v9472 = vpop.f32.mrf.mxu0
    %v9473 = vadd.f32 %v9454, %v9472
    %9474 = vdwg.mxu0
    %9475 = vmatpush.bf16.msra.mxu0 %v9272
    %9476 = vmatpush.bf16.msra.mxu0 %v9271
    %9477 = vmatpush.bf16.msra.mxu0 %v9270
    %9478 = vmatpush.bf16.msra.mxu0 %v9269
    %9479 = vmatpush.bf16.msra.mxu0 %v9268
    %9480 = vmatpush.bf16.msra.mxu0 %v9267
    %9481 = vmatpush.bf16.msra.mxu0 %v9266
    %9482 = vmatpush.bf16.msra.mxu0 %v9265
    %9483 = vmatmul.bf16.gmra.mxu0 %v8914
    %v9484 = vpop.f32.mrf.mxu0
    %v9485 = vadd.f32 %v9466, %v9484
    %v9486 = vpop.f32.mrf.mxu0
    %v9487 = vadd.f32 %v9468, %v9486
    %9488 = vmatmul.bf16.gmra.mxu0 %v8915
    %v9489 = vpop.f32.mrf.mxu0
    %v9490 = vadd.f32 %v9471, %v9489
    %v9491 = vpop.f32.mrf.mxu0
    %v9492 = vadd.f32 %v9473, %v9491
    %9493 = vdwg.mxu0
    %9494 = vmatpush.bf16.msra.mxu0 %v9280
    %9495 = vmatpush.bf16.msra.mxu0 %v9279
    %9496 = vmatpush.bf16.msra.mxu0 %v9278
    %9497 = vmatpush.bf16.msra.mxu0 %v9277
    %9498 = vmatpush.bf16.msra.mxu0 %v9276
    %9499 = vmatpush.bf16.msra.mxu0 %v9275
    %9500 = vmatpush.bf16.msra.mxu0 %v9274
    %9501 = vmatpush.bf16.msra.mxu0 %v9273
    %9502 = vmatmul.bf16.gmra.mxu0 %v8918
    %v9503 = vpop.f32.mrf.mxu0
    %v9504 = vadd.f32 %v9485, %v9503
    %v9505 = vpop.f32.mrf.mxu0
    %v9506 = vadd.f32 %v9487, %v9505
    %9507 = vmatmul.bf16.gmra.mxu0 %v8919
    %v9508 = vpop.f32.mrf.mxu0
    %v9509 = vadd.f32 %v9490, %v9508
    %v9510 = vpop.f32.mrf.mxu0
    %v9511 = vadd.f32 %v9492, %v9510
    %9512 = vdwg.mxu0
    %9513 = vmatpush.bf16.msra.mxu0 %v9288
    %9514 = vmatpush.bf16.msra.mxu0 %v9287
    %9515 = vmatpush.bf16.msra.mxu0 %v9286
    %9516 = vmatpush.bf16.msra.mxu0 %v9285
    %9517 = vmatpush.bf16.msra.mxu0 %v9284
    %9518 = vmatpush.bf16.msra.mxu0 %v9283
    %9519 = vmatpush.bf16.msra.mxu0 %v9282
    %9520 = vmatpush.bf16.msra.mxu0 %v9281
    %9521 = vmatmul.bf16.gmra.mxu0 %v8922
    %v9522 = vpop.f32.mrf.mxu0
    %v9523 = vadd.f32 %v9504, %v9522
    %v9524 = vpop.f32.mrf.mxu0
    %v9525 = vadd.f32 %v9506, %v9524
    %9526 = vmatmul.bf16.gmra.mxu0 %v8923
    %v9527 = vpop.f32.mrf.mxu0
    %v9528 = vadd.f32 %v9509, %v9527
    %v9529 = vpop.f32.mrf.mxu0
    %v9530 = vadd.f32 %v9511, %v9529
    %9531 = vdwg.mxu0
    %vm9532 = vcmp.gt.f32.partialorder %v9523, 0.0
    %vm9533 = vcmp.gt.f32.partialorder %v9525, 0.0
    %vm9534 = vcmp.gt.f32.partialorder %v9528, 0.0
    %vm9535 = vcmp.gt.f32.partialorder %v9530, 0.0
    %v9536 = vmul.f32 %v9523, 0.2
    %v9537 = vmul.f32 %v9525, 0.2
    %v9538 = vmul.f32 %v9528, 0.2
    %v9539 = vmul.f32 %v9530, 0.2
    %v9540 = vsel %vm9532, %v9523, %v9536
    %v9541 = vsel %vm9533, %v9525, %v9537
    %v9542 = vsel %vm9534, %v9528, %v9538
    %v9543 = vsel %vm9535, %v9530, %v9539
    %v9544 = vmax.f32 %v9540, %v9541
    %v9545 = vmax.f32 %v9542, %v9543
    %9546 = vst [vmem:[#allocation2] sm:$0xff] %v9544
    %9547 = vst [vmem:[#allocation2 + $0x8] sm:$0xff] %v9545
    // Predicated region
    $region38: #{cnn_forward.1} parent=1 // pred_check
      _
    $region39: #{cnn_forward.1} parent=1 // pred_check_branch
      %9549 = sbr.rel (0) target = $region41
    $region40: #{cnn_forward.1} parent=1 // pred_region
      %9551 = vsyncadd [#allocation3], 0
      %s9552 = sshll.u32 [#allocation2], 4
      %s9553 = int_to_ptr.vmem [resolvable:$true] %s9552
      %s9554 = sshll.u32 %s9, 4
      %s9555 = int_to_ptr.hbm [resolvable:$true] %s9554
      %9560 = dma.vmem_to_hbm [thread:$0]  %s9553, 256, %s9555, [#allocation3], 128, 128, 8
    $region41: #{cnn_forward.1} parent=1 // pred_fallthru
      _
    // Predicated region
    $region42: #{cnn_forward.1} parent=1 // pred_check
      _
    $region43: #{cnn_forward.1} parent=1 // pred_check_branch
      %9562 = sbr.rel (0) target = $region45
    $region44: #{cnn_forward.1} parent=1 // pred_region
      %9564 = dma.done [#allocation3], 256
    $region45: #{cnn_forward.1} parent=1 // pred_fallthru
      _
    %9565 = vsyncpa [#allocation3], 1

</llo_original>
